<compile_context>
chip_gen: v7x
topology: tpu7x:2x2x1
jax: 0.10.0
libtpu: 0.0.40
codegen_flags: <defaults>
</compile_context>

<pallas_src>
import functools

import jax
import jax.numpy as jnp
from jax.experimental import pallas as pl
from jax.experimental.pallas import tpu as pltpu

EPS = 1e-5

# Scoped-VMEM request that is valid on every generation (v5e/v6e: 128 MiB
# physical, v7x: 64 MiB physical / 32 MiB default scoped); tile sizes are
# chosen to stay far below it.
_VMEM_LIMIT = 32 * 1024 * 1024


# ----------------------------------------------------------------------------
# Kernels
# ----------------------------------------------------------------------------
def _affine_relu(y, s, b, relu=True):
    y = y * s + b
    return jnp.maximum(y, 0.0) if relu else y


def _ib_kernel(xp_ref, xc_ref, xn_ref,
               w1_ref, s1_ref, b1_ref,
               wd_ref, sd_ref, bd_ref,
               w3_ref, s3_ref, b3_ref,
               w4_ref, s4_ref, b4_ref,
               *rest, P, W, C, IC, CS):
    """Fused InvertedBottleneck on one (batch, row-tile) block.

    Blocks hold P = TH*W flattened spatial rows with C channels on the lane
    axis.  xp/xn are the neighbouring row tiles; only one image row of each is
    used as the depthwise-3x3 halo.  When CS is not None the Block-level skip
    (x_orig @ skip_w) is fused in as well (used for IB2).
    """
    if CS is None:
        (o_ref,) = rest
        xs_ref = ws_ref = None
    else:
        xs_ref, ws_ref, o_ref = rest

    i = pl.program_id(1)
    ni = pl.num_programs(1)

    # ---- halo image rows from the neighbouring row tiles --------------------
    top = xp_ref[0, P - W:, :]                  # last image row of tile i-1 (W, C)
    bot = xn_ref[0, :W, :]                      # first image row of tile i+1 (W, C)
    xc = xc_ref[0]                              # this tile                   (P, C)
    x_halo = jnp.concatenate([top, xc, bot], axis=0)            # (P+2W, C)

    # ---- 1x1 expand conv + BN + ReLU (one MXU matmul, halo rows included) ---
    h = jnp.dot(x_halo, w1_ref[...], preferred_element_type=jnp.float32)
    h = _affine_relu(h, s1_ref[...], b1_ref[...])               # (P+2W, IC)

    # Halo rows are *zero padding* of the intermediate at the image border.
    r = jax.lax.broadcasted_iota(jnp.int32, (P + 2 * W, 1), 0)
    valid = jnp.logical_and(jnp.logical_or(r >= W, i > 0),
                            jnp.logical_or(r < P + W, i < ni - 1))
    h = jnp.where(valid, h, 0.0)

    # ---- depthwise 3x3 + BN + ReLU (VPU; taps = row-shifted VMEM slices) ----
    zrow = jnp.zeros((1, IC), jnp.float32)
    hp = jnp.concatenate([zrow, h, zrow], axis=0)               # (P+2W+2, IC)
    col = jax.lax.broadcasted_iota(jnp.int32, (P, 1), 0) % W
    wd = wd_ref[...]                                            # (9, IC), loaded once
    acc = jnp.zeros((P, IC), jnp.float32)
    for dh in range(3):
        for dw in range(3):
            s0 = dh * W + dw
            tap = hp[s0:s0 + P, :]                              # (P, IC)
            if dw == 0:        # column -1 -> image padding
                tap = jnp.where(col != 0, tap, 0.0)
            elif dw == 2:      # column W  -> image padding
                tap = jnp.where(col != W - 1, tap, 0.0)
            acc = acc + tap * wd[3 * dh + dw:3 * dh + dw + 1, :]
    d = _affine_relu(acc, sd_ref[...], bd_ref[...])             # (P, IC)

    # ---- 1x1 conv + BN + ReLU ------------------------------------------------
    g = jnp.dot(d, w3_ref[...], preferred_element_type=jnp.float32)
    g = _affine_relu(g, s3_ref[...], b3_ref[...])               # (P, IC)

    # ---- 1x1 projection + BN + residual (+ fused Block skip) ------------------
    y = jnp.dot(g, w4_ref[...], preferred_element_type=jnp.float32)
    y = y * s4_ref[...] + b4_ref[...] + xc                      # (P, C)
    if CS is not None:
        y = y + jnp.dot(xs_ref[0], ws_ref[...],
                        preferred_element_type=jnp.float32)
    o_ref[0] = y.astype(o_ref.dtype)


def _transit_kernel(xp_ref, xc_ref, xn_ref, w_ref, s_ref, b_ref, o_ref,
                    *, P, W, C, CO):
    """Dense 3x3 conv (pad=1) + BN + ReLU on one (batch, row-tile) block."""
    i = pl.program_id(1)
    ni = pl.num_programs(1)

    top = xp_ref[0, P - W:, :]
    top = jnp.where(i > 0, top, 0.0)            # image-border zero padding
    bot = xn_ref[0, :W, :]
    bot = jnp.where(i < ni - 1, bot, 0.0)
    xh = jnp.concatenate([top, xc_ref[0], bot], axis=0)         # (P+2W, C)
    zrow = jnp.zeros((1, C), jnp.float32)
    xhp = jnp.concatenate([zrow, xh, zrow], axis=0)             # (P+2W+2, C)

    col = jax.lax.broadcasted_iota(jnp.int32, (P, 1), 0) % W
    w = w_ref[...]                                              # (9, C, CO)
    acc = jnp.zeros((P, CO), jnp.float32)
    # NOTE: for channel counts that are multiples of 128 the 9 taps should be
    # lane-concatenated into one (P, 9*C) @ (9*C, CO) matmul; with the tiny
    # channel counts of this demo we keep 9 accumulated MXU calls (the taps are
    # VMEM-resident either way -- no HBM blow-up).
    for dh in range(3):
        for dw in range(3):
            s0 = dh * W + dw
            tap = xhp[s0:s0 + P, :]                             # (P, C)
            if dw == 0:
                tap = jnp.where(col != 0, tap, 0.0)
            elif dw == 2:
                tap = jnp.where(col != W - 1, tap, 0.0)
            acc = acc + jnp.dot(tap, w[3 * dh + dw],
                                preferred_element_type=jnp.float32)
    y = _affine_relu(acc, s_ref[...], b_ref[...])
    o_ref[0] = y.astype(o_ref.dtype)


# ----------------------------------------------------------------------------
# pallas_call wrappers (grid / BlockSpec plumbing)
# ----------------------------------------------------------------------------
def _row_block_specs(P, C, n_row_blocks):
    """prev / center / next row-tile views of a (N, H*W, C) activation."""
    center = pl.BlockSpec((1, P, C), lambda n, i: (n, i, 0))
    prev = pl.BlockSpec((1, P, C), lambda n, i: (n, jnp.maximum(i - 1, 0), 0))
    nxt = pl.BlockSpec(
        (1, P, C), lambda n, i: (n, jnp.minimum(i + 1, n_row_blocks - 1), 0))
    return prev, center, nxt


def _full_spec(shape):
    nd = len(shape)
    return pl.BlockSpec(shape, lambda n, i: (0,) * nd)   # weights stay resident


def _compiler_params():
    return pltpu.CompilerParams(
        dimension_semantics=("parallel", "parallel"),
        vmem_limit_bytes=_VMEM_LIMIT)


def _pick_block_rows(H, W, widest_c):
    """Largest multiple-of-8 divisor of H whose fused intermediates stay well
    inside scoped VMEM (conservative enough for the 64 MiB v7x budget)."""
    if H % 8 != 0:
        return H                       # whole-image row block (still legal)
    budget = 4 * 1024 * 1024           # bytes for the f32 in-kernel intermediates
    best = 8
    for th in range(8, H + 1, 8):
        if H % th == 0 and 4 * th * W * widest_c * 4 <= budget:
            best = th
    return best


def ib_fused(x, p, H, W, *, block_rows=None, skip=None, skip_w=None):
    """Fused InvertedBottleneck.  x: (N, H*W, C) -> (N, H*W, C)."""
    N, HW, C = x.shape
    IC = p["w1"].shape[1]
    TH = block_rows if block_rows is not None else _pick_block_rows(H, W, IC)
    assert H % TH == 0 and (TH % 8 == 0 or TH == H)
    P = TH * W
    n_row = H // TH
    CS = None if skip is None else skip_w.shape[0]

    prev, center, nxt = _row_block_specs(P, C, n_row)
    in_specs = [
        prev, center, nxt,
        _full_spec((C, IC)), _full_spec((1, IC)), _full_spec((1, IC)),
        _full_spec((9, IC)), _full_spec((1, IC)), _full_spec((1, IC)),
        _full_spec((IC, IC)), _full_spec((1, IC)), _full_spec((1, IC)),
        _full_spec((IC, C)), _full_spec((1, C)), _full_spec((1, C)),
    ]
    args = [
        x, x, x,
        p["w1"], p["s1"].reshape(1, IC), p["b1"].reshape(1, IC),
        p["wd"].reshape(9, IC), p["sd"].reshape(1, IC), p["bd"].reshape(1, IC),
        p["w3"], p["s3"].reshape(1, IC), p["b3"].reshape(1, IC),
        p["w4"], p["s4"].reshape(1, C), p["b4"].reshape(1, C),
    ]
    if skip is not None:
        in_specs += [pl.BlockSpec((1, P, CS), lambda n, i: (n, i, 0)),
                     _full_spec((CS, C))]
        args += [skip, skip_w]

    kernel = functools.partial(_ib_kernel, P=P, W=W, C=C, IC=IC, CS=CS)
    return pl.pallas_call(
        kernel,
        grid=(N, n_row),
        in_specs=in_specs,
        out_specs=pl.BlockSpec((1, P, C), lambda n, i: (n, i, 0)),
        out_shape=jax.ShapeDtypeStruct((N, HW, C), jnp.float32),
        compiler_params=_compiler_params(),
    )(*args)


def transit_fused(x, w, scale, bias, H, W, *, block_rows=None):
    """Dense 3x3 conv (pad=1) + BN + ReLU.  x: (N, H*W, Cin) -> (N, H*W, Cout)."""
    N, HW, C = x.shape
    CO = w.shape[-1]
    TH = (block_rows if block_rows is not None
          else _pick_block_rows(H, W, max(C, CO)))
    assert H % TH == 0 and (TH % 8 == 0 or TH == H)
    P = TH * W
    n_row = H // TH

    prev, center, nxt = _row_block_specs(P, C, n_row)
    w9 = w.reshape(9, C, CO)
    kernel = functools.partial(_transit_kernel, P=P, W=W, C=C, CO=CO)
    return pl.pallas_call(
        kernel,
        grid=(N, n_row),
        in_specs=[prev, center, nxt,
                  _full_spec((9, C, CO)), _full_spec((1, CO)), _full_spec((1, CO))],
        out_specs=pl.BlockSpec((1, P, CO), lambda n, i: (n, i, 0)),
        out_shape=jax.ShapeDtypeStruct((N, HW, CO), jnp.float32),
        compiler_params=_compiler_params(),
    )(x, x, x, w9, scale.reshape(1, CO), bias.reshape(1, CO))


# ----------------------------------------------------------------------------
# Block forward (mirrors the PyTorch graph, inference mode)
# ----------------------------------------------------------------------------
def block_forward(x_nchw, params, *, block_rows=None):
    N, Cin, H, W = x_nchw.shape
    Cout = params["skip_w"].shape[1]
    x = jnp.transpose(x_nchw, (0, 2, 3, 1)).reshape(N, H * W, Cin)  # NCHW -> rows
    o = ib_fused(x, params["ib1"], H, W, block_rows=block_rows)          # IB1
    o = transit_fused(o, params["t_w"], params["t_s"], params["t_b"],
                      H, W, block_rows=block_rows)                       # Transit
    o = ib_fused(o, params["ib2"], H, W, block_rows=block_rows,
                 skip=x, skip_w=params["skip_w"])                        # IB2 += conv1x1(x)
    return jnp.transpose(o.reshape(N, H, W, Cout), (0, 3, 1, 2))         # -> NCHW


# ----------------------------------------------------------------------------
# Pure-JAX reference (for the built-in correctness check)
# ----------------------------------------------------------------------------
def _conv_ref(x, w_hwio, groups=1, padding=((0, 0), (0, 0))):
    return jax.lax.conv_general_dilated(
        x, w_hwio, window_strides=(1, 1), padding=padding,
        dimension_numbers=("NHWC", "HWIO", "NHWC"),
        feature_group_count=groups,
        precision=jax.lax.Precision.HIGHEST)


def _ib_ref(x, p):
    ic = p["w1"].shape[1]
    h = jnp.maximum(_conv_ref(x, p["w1"][None, None]) * p["s1"] + p["b1"], 0.0)
    h = jnp.maximum(_conv_ref(h, p["wd"][:, :, None, :], groups=ic,
                              padding=((1, 1), (1, 1))) * p["sd"] + p["bd"], 0.0)
    h = jnp.maximum(_conv_ref(h, p["w3"][None, None]) * p["s3"] + p["b3"], 0.0)
    h = _conv_ref(h, p["w4"][None, None]) * p["s4"] + p["b4"]
    return h + x


def block_forward_ref(x_nchw, params):
    x = jnp.transpose(x_nchw, (0, 2, 3, 1))
    o = _ib_ref(x, params["ib1"])
    o = jnp.maximum(_conv_ref(o, params["t_w"], padding=((1, 1), (1, 1)))
                    * params["t_s"] + params["t_b"], 0.0)
    o = _ib_ref(o, params["ib2"])
    o = o + _conv_ref(x, params["skip_w"][None, None])
    return jnp.transpose(o, (0, 3, 1, 2))


# ----------------------------------------------------------------------------
# Deterministic synthetic parameters (eval-mode BN folded to scale/bias)
# ----------------------------------------------------------------------------
def init_block_params(key, cin, cout):
    keys = iter(jax.random.split(key, 64))

    def conv_w(ci, co):   # 1x1 conv weight, layout (Cin, Cout)
        return jax.random.normal(next(keys), (ci, co), jnp.float32) / jnp.sqrt(float(ci))

    def dw_w(c):          # depthwise 3x3 weight, layout (3, 3, C)
        return jax.random.normal(next(keys), (3, 3, c), jnp.float32) / 3.0

    def conv3_w(ci, co):  # dense 3x3 weight, layout (3, 3, Cin, Cout)
        return jax.random.normal(next(keys), (3, 3, ci, co), jnp.float32) / jnp.sqrt(9.0 * ci)

    def bn(c):            # folded eval-mode BatchNorm -> (scale, bias)
        gamma = jax.random.uniform(next(keys), (c,), jnp.float32, 0.8, 1.2)
        beta = jax.random.normal(next(keys), (c,), jnp.float32) * 0.1
        mean = jax.random.normal(next(keys), (c,), jnp.float32) * 0.1
        var = jax.random.uniform(next(keys), (c,), jnp.float32, 0.5, 1.5)
        scale = gamma / jnp.sqrt(var + EPS)
        bias = beta - mean * scale
        return scale, bias

    def ib(ci):
        inter = 4 * ci
        s1, b1 = bn(inter)
        sd, bd = bn(inter)
        s3, b3 = bn(inter)
        s4, b4 = bn(ci)
        return dict(
            w1=conv_w(ci, inter), s1=s1, b1=b1,
            wd=dw_w(inter), sd=sd, bd=bd,
            w3=conv_w(inter, inter), s3=s3, b3=b3,
            w4=conv_w(inter, ci), s4=s4, b4=b4,
        )

    t_s, t_b = bn(cout)
    return dict(
        ib1=ib(cin),
        t_w=conv3_w(cin, cout), t_s=t_s, t_b=t_b,
        ib2=ib(cout),
        skip_w=conv_w(cin, cout),
    )


# TODO(synk): training-mode BatchNorm statistics updates and Dropout RNG are not
# implemented (inference semantics only), matching the folded-BN formulation.

if __name__ == "__main__":
    key = jax.random.PRNGKey(0)
    kx, kp = jax.random.split(key)

    N, Cin, H, W = 2, 4, 16, 16
    Cout = 8

    x = jax.random.normal(kx, (N, Cin, H, W), jnp.float32)
    params = init_block_params(kp, Cin, Cout)

    # block_rows=8 -> (batch=2, row_tiles=2) grid per stage, exercising the
    # halo exchange between row tiles.
    fwd = jax.jit(functools.partial(block_forward, block_rows=8))
    y = jax.block_until_ready(fwd(x, params))
    assert y.shape == (N, Cout, H, W), y.shape
    assert bool(jnp.all(jnp.isfinite(y)))

    # Correctness check against a pure-JAX (lax.conv) reference.
    y_ref = jax.block_until_ready(jax.jit(block_forward_ref)(x, params))
    rel_err = float(jnp.linalg.norm(y - y_ref) / (jnp.linalg.norm(y_ref) + 1e-6))
    assert rel_err < 1e-2, f"mismatch vs reference: rel_err={rel_err}"

    print("KERNEL_OK")
</pallas_src>

<mosaic_0001>
module attributes {stable_mosaic.version = 11 : i64} {
  func.func @_transit_kernel(%arg0: i32, %arg1: i32, %arg2: memref<1x128x4xf32, #tpu.memory_space<vmem>>, %arg3: memref<1x128x4xf32, #tpu.memory_space<vmem>>, %arg4: memref<1x128x4xf32, #tpu.memory_space<vmem>>, %arg5: memref<9x4x8xf32, #tpu.memory_space<vmem>>, %arg6: memref<1x8xf32, #tpu.memory_space<vmem>>, %arg7: memref<1x8xf32, #tpu.memory_space<vmem>>, %arg8: memref<1x128x8xf32, #tpu.memory_space<vmem>>) attributes {dimension_semantics = [#tpu.dimension_semantics<parallel>, #tpu.dimension_semantics<parallel>], iteration_bounds = array<i64: 2, 2>, scalar_prefetch = 0 : i64, scratch_operands = 0 : i64, tpu.core_type = #tpu.core_type<tc>, window_params = [{transform_indices = @transform_0, window_bounds = array<i64: 1, 128, 4>}, {transform_indices = @transform_1, window_bounds = array<i64: 1, 128, 4>}, {transform_indices = @transform_2, window_bounds = array<i64: 1, 128, 4>}, {pipeline_mode = #tpu.pipeline_mode<synchronous>, transform_indices = @transform_3, window_bounds = array<i64: 9, 4, 8>}, {pipeline_mode = #tpu.pipeline_mode<synchronous>, transform_indices = @transform_4, window_bounds = array<i64: 1, 8>}, {pipeline_mode = #tpu.pipeline_mode<synchronous>, transform_indices = @transform_5, window_bounds = array<i64: 1, 8>}, {transform_indices = @transform_6, window_bounds = array<i64: 1, 128, 8>}]} {
    %c0 = arith.constant 0 : index
    %c112 = arith.constant 112 : index
    %c0_0 = arith.constant 0 : index
    %0 = vector.load %arg2[%c0, %c112, %c0_0] : memref<1x128x4xf32, #tpu.memory_space<vmem>>, vector<1x16x4xf32>
    %1 = vector.shape_cast %0 : vector<1x16x4xf32> to vector<16x4xf32>
    %c0_i32 = arith.constant 0 : i32
    %2 = arith.cmpi sgt, %arg1, %c0_i32 : i32
    %cst = arith.constant 0.000000e+00 : f32
    %3 = vector.broadcast %cst : f32 to vector<16x4xf32>
    %4 = arith.select %2, %1, %3 : vector<16x4xf32>
    %c0_1 = arith.constant 0 : index
    %c0_2 = arith.constant 0 : index
    %c0_3 = arith.constant 0 : index
    %5 = vector.load %arg4[%c0_1, %c0_2, %c0_3] : memref<1x128x4xf32, #tpu.memory_space<vmem>>, vector<1x16x4xf32>
    %6 = vector.shape_cast %5 : vector<1x16x4xf32> to vector<16x4xf32>
    %c1_i32 = arith.constant 1 : i32
    %7 = arith.cmpi slt, %arg1, %c1_i32 : i32
    %cst_4 = arith.constant 0.000000e+00 : f32
    %8 = vector.broadcast %cst_4 : f32 to vector<16x4xf32>
    %9 = arith.select %7, %6, %8 : vector<16x4xf32>
    %c0_5 = arith.constant 0 : index
    %c0_6 = arith.constant 0 : index
    %c0_7 = arith.constant 0 : index
    %10 = vector.load %arg3[%c0_5, %c0_6, %c0_7] : memref<1x128x4xf32, #tpu.memory_space<vmem>>, vector<1x128x4xf32>
    %11 = vector.shape_cast %10 : vector<1x128x4xf32> to vector<128x4xf32>
    %12 = tpu.concatenate %4, %11, %9 in 0 : vector<16x4xf32>, vector<128x4xf32>, vector<16x4xf32> -> vector<160x4xf32>
    %cst_8 = arith.constant 0.000000e+00 : f32
    %13 = vector.broadcast %cst_8 : f32 to vector<1x4xf32>
    %14 = tpu.concatenate %13, %12, %13 in 0 : vector<1x4xf32>, vector<160x4xf32>, vector<1x4xf32> -> vector<162x4xf32>
    %15 = tpu.iota {dimensions = array<i32: 0>} : vector<128x1xi32>
    %c16_i32 = arith.constant 16 : i32
    %c0_i32_9 = arith.constant 0 : i32
    %16 = arith.cmpi eq, %c16_i32, %c0_i32_9 : i32
    %c1_i32_10 = arith.constant 1 : i32
    %17 = arith.select %16, %c1_i32_10, %c16_i32 : i32
    %18 = vector.broadcast %17 : i32 to vector<128x1xi32>
    %19 = arith.remsi %15, %18 : vector<128x1xi32>
    %c0_i32_11 = arith.constant 0 : i32
    %20 = vector.broadcast %c0_i32_11 : i32 to vector<128x1xi32>
    %21 = arith.cmpi ne, %19, %20 : vector<128x1xi32>
    %c0_i32_12 = arith.constant 0 : i32
    %22 = vector.broadcast %c0_i32_12 : i32 to vector<128x1xi32>
    %23 = arith.cmpi slt, %19, %22 : vector<128x1xi32>
    %c0_i32_13 = arith.constant 0 : i32
    %24 = arith.cmpi slt, %17, %c0_i32_13 : i32
    %25 = vector.broadcast %24 : i1 to vector<128x1xi1>
    %26 = vector.broadcast %25 : vector<128x1xi1> to vector<128x1xi1>
    %27 = arith.xori %23, %26 : vector<128x1xi1>
    %28 = arith.andi %27, %21 : vector<128x1xi1>
    %29 = vector.broadcast %17 : i32 to vector<128x1xi32>
    %30 = arith.addi %19, %29 : vector<128x1xi32>
    %31 = arith.select %28, %30, %19 : vector<128x1xi1>, vector<128x1xi32>
    %c0_14 = arith.constant 0 : index
    %c0_15 = arith.constant 0 : index
    %c0_16 = arith.constant 0 : index
    %32 = vector.load %arg5[%c0_14, %c0_15, %c0_16] : memref<9x4x8xf32, #tpu.memory_space<vmem>>, vector<9x4x8xf32>
    %cst_17 = arith.constant 0.000000e+00 : f32
    %33 = vector.broadcast %cst_17 : f32 to vector<128x8xf32>
    %34 = vector.extract_strided_slice %14 {offsets = [0, 0], sizes = [128, 4], strides = [1, 1]} : vector<162x4xf32> to vector<128x4xf32>
    %c0_i32_18 = arith.constant 0 : i32
    %35 = vector.broadcast %c0_i32_18 : i32 to vector<128x1xi32>
    %36 = arith.cmpi ne, %31, %35 : vector<128x1xi32>
    %cst_19 = arith.constant 0.000000e+00 : f32
    %37 = vector.shape_cast %36 : vector<128x1xi1> to vector<128x1xi1>
    %38 = vector.broadcast %37 : vector<128x1xi1> to vector<128x4xi1>
    %39 = vector.broadcast %cst_19 : f32 to vector<128x4xf32>
    %40 = arith.select %38, %34, %39 : vector<128x4xi1>, vector<128x4xf32>
    %41 = vector.extract_strided_slice %32 {offsets = [0, 0, 0], sizes = [1, 4, 8], strides = [1, 1, 1]} : vector<9x4x8xf32> to vector<1x4x8xf32>
    %42 = vector.shape_cast %41 : vector<1x4x8xf32> to vector<4x8xf32>
    %cst_20 = arith.constant dense<0.000000e+00> : vector<128x8xf32>
    %43 = tpu.matmul %40, %42, %cst_20 {dimension_numbers = #tpu.dot_dimension_numbers<[1], [0], [0], [1], [0, 0, 1, 1], [], []>} : vector<128x4xf32>, vector<4x8xf32>, vector<128x8xf32> -> vector<128x8xf32>
    %44 = arith.addf %33, %43 : vector<128x8xf32>
    %45 = vector.extract_strided_slice %14 {offsets = [1, 0], sizes = [128, 4], strides = [1, 1]} : vector<162x4xf32> to vector<128x4xf32>
    %46 = vector.extract_strided_slice %32 {offsets = [1, 0, 0], sizes = [1, 4, 8], strides = [1, 1, 1]} : vector<9x4x8xf32> to vector<1x4x8xf32>
    %47 = vector.shape_cast %46 : vector<1x4x8xf32> to vector<4x8xf32>
    %cst_21 = arith.constant dense<0.000000e+00> : vector<128x8xf32>
    %48 = tpu.matmul %45, %47, %cst_21 {dimension_numbers = #tpu.dot_dimension_numbers<[1], [0], [0], [1], [0, 0, 1, 1], [], []>} : vector<128x4xf32>, vector<4x8xf32>, vector<128x8xf32> -> vector<128x8xf32>
    %49 = arith.addf %44, %48 : vector<128x8xf32>
    %50 = vector.extract_strided_slice %14 {offsets = [2, 0], sizes = [128, 4], strides = [1, 1]} : vector<162x4xf32> to vector<128x4xf32>
    %c15_i32 = arith.constant 15 : i32
    %51 = vector.broadcast %c15_i32 : i32 to vector<128x1xi32>
    %52 = arith.cmpi ne, %31, %51 : vector<128x1xi32>
    %cst_22 = arith.constant 0.000000e+00 : f32
    %53 = vector.shape_cast %52 : vector<128x1xi1> to vector<128x1xi1>
    %54 = vector.broadcast %53 : vector<128x1xi1> to vector<128x4xi1>
    %55 = vector.broadcast %cst_22 : f32 to vector<128x4xf32>
    %56 = arith.select %54, %50, %55 : vector<128x4xi1>, vector<128x4xf32>
    %57 = vector.extract_strided_slice %32 {offsets = [2, 0, 0], sizes = [1, 4, 8], strides = [1, 1, 1]} : vector<9x4x8xf32> to vector<1x4x8xf32>
    %58 = vector.shape_cast %57 : vector<1x4x8xf32> to vector<4x8xf32>
    %cst_23 = arith.constant dense<0.000000e+00> : vector<128x8xf32>
    %59 = tpu.matmul %56, %58, %cst_23 {dimension_numbers = #tpu.dot_dimension_numbers<[1], [0], [0], [1], [0, 0, 1, 1], [], []>} : vector<128x4xf32>, vector<4x8xf32>, vector<128x8xf32> -> vector<128x8xf32>
    %60 = arith.addf %49, %59 : vector<128x8xf32>
    %61 = vector.extract_strided_slice %14 {offsets = [16, 0], sizes = [128, 4], strides = [1, 1]} : vector<162x4xf32> to vector<128x4xf32>
    %c0_i32_24 = arith.constant 0 : i32
    %62 = vector.broadcast %c0_i32_24 : i32 to vector<128x1xi32>
    %63 = arith.cmpi ne, %31, %62 : vector<128x1xi32>
    %cst_25 = arith.constant 0.000000e+00 : f32
    %64 = vector.shape_cast %63 : vector<128x1xi1> to vector<128x1xi1>
    %65 = vector.broadcast %64 : vector<128x1xi1> to vector<128x4xi1>
    %66 = vector.broadcast %cst_25 : f32 to vector<128x4xf32>
    %67 = arith.select %65, %61, %66 : vector<128x4xi1>, vector<128x4xf32>
    %68 = vector.extract_strided_slice %32 {offsets = [3, 0, 0], sizes = [1, 4, 8], strides = [1, 1, 1]} : vector<9x4x8xf32> to vector<1x4x8xf32>
    %69 = vector.shape_cast %68 : vector<1x4x8xf32> to vector<4x8xf32>
    %cst_26 = arith.constant dense<0.000000e+00> : vector<128x8xf32>
    %70 = tpu.matmul %67, %69, %cst_26 {dimension_numbers = #tpu.dot_dimension_numbers<[1], [0], [0], [1], [0, 0, 1, 1], [], []>} : vector<128x4xf32>, vector<4x8xf32>, vector<128x8xf32> -> vector<128x8xf32>
    %71 = arith.addf %60, %70 : vector<128x8xf32>
    %72 = vector.extract_strided_slice %14 {offsets = [17, 0], sizes = [128, 4], strides = [1, 1]} : vector<162x4xf32> to vector<128x4xf32>
    %73 = vector.extract_strided_slice %32 {offsets = [4, 0, 0], sizes = [1, 4, 8], strides = [1, 1, 1]} : vector<9x4x8xf32> to vector<1x4x8xf32>
    %74 = vector.shape_cast %73 : vector<1x4x8xf32> to vector<4x8xf32>
    %cst_27 = arith.constant dense<0.000000e+00> : vector<128x8xf32>
    %75 = tpu.matmul %72, %74, %cst_27 {dimension_numbers = #tpu.dot_dimension_numbers<[1], [0], [0], [1], [0, 0, 1, 1], [], []>} : vector<128x4xf32>, vector<4x8xf32>, vector<128x8xf32> -> vector<128x8xf32>
    %76 = arith.addf %71, %75 : vector<128x8xf32>
    %77 = vector.extract_strided_slice %14 {offsets = [18, 0], sizes = [128, 4], strides = [1, 1]} : vector<162x4xf32> to vector<128x4xf32>
    %c15_i32_28 = arith.constant 15 : i32
    %78 = vector.broadcast %c15_i32_28 : i32 to vector<128x1xi32>
    %79 = arith.cmpi ne, %31, %78 : vector<128x1xi32>
    %cst_29 = arith.constant 0.000000e+00 : f32
    %80 = vector.shape_cast %79 : vector<128x1xi1> to vector<128x1xi1>
    %81 = vector.broadcast %80 : vector<128x1xi1> to vector<128x4xi1>
    %82 = vector.broadcast %cst_29 : f32 to vector<128x4xf32>
    %83 = arith.select %81, %77, %82 : vector<128x4xi1>, vector<128x4xf32>
    %84 = vector.extract_strided_slice %32 {offsets = [5, 0, 0], sizes = [1, 4, 8], strides = [1, 1, 1]} : vector<9x4x8xf32> to vector<1x4x8xf32>
    %85 = vector.shape_cast %84 : vector<1x4x8xf32> to vector<4x8xf32>
    %cst_30 = arith.constant dense<0.000000e+00> : vector<128x8xf32>
    %86 = tpu.matmul %83, %85, %cst_30 {dimension_numbers = #tpu.dot_dimension_numbers<[1], [0], [0], [1], [0, 0, 1, 1], [], []>} : vector<128x4xf32>, vector<4x8xf32>, vector<128x8xf32> -> vector<128x8xf32>
    %87 = arith.addf %76, %86 : vector<128x8xf32>
    %88 = vector.extract_strided_slice %14 {offsets = [32, 0], sizes = [128, 4], strides = [1, 1]} : vector<162x4xf32> to vector<128x4xf32>
    %c0_i32_31 = arith.constant 0 : i32
    %89 = vector.broadcast %c0_i32_31 : i32 to vector<128x1xi32>
    %90 = arith.cmpi ne, %31, %89 : vector<128x1xi32>
    %cst_32 = arith.constant 0.000000e+00 : f32
    %91 = vector.shape_cast %90 : vector<128x1xi1> to vector<128x1xi1>
    %92 = vector.broadcast %91 : vector<128x1xi1> to vector<128x4xi1>
    %93 = vector.broadcast %cst_32 : f32 to vector<128x4xf32>
    %94 = arith.select %92, %88, %93 : vector<128x4xi1>, vector<128x4xf32>
    %95 = vector.extract_strided_slice %32 {offsets = [6, 0, 0], sizes = [1, 4, 8], strides = [1, 1, 1]} : vector<9x4x8xf32> to vector<1x4x8xf32>
    %96 = vector.shape_cast %95 : vector<1x4x8xf32> to vector<4x8xf32>
    %cst_33 = arith.constant dense<0.000000e+00> : vector<128x8xf32>
    %97 = tpu.matmul %94, %96, %cst_33 {dimension_numbers = #tpu.dot_dimension_numbers<[1], [0], [0], [1], [0, 0, 1, 1], [], []>} : vector<128x4xf32>, vector<4x8xf32>, vector<128x8xf32> -> vector<128x8xf32>
    %98 = arith.addf %87, %97 : vector<128x8xf32>
    %99 = vector.extract_strided_slice %14 {offsets = [33, 0], sizes = [128, 4], strides = [1, 1]} : vector<162x4xf32> to vector<128x4xf32>
    %100 = vector.extract_strided_slice %32 {offsets = [7, 0, 0], sizes = [1, 4, 8], strides = [1, 1, 1]} : vector<9x4x8xf32> to vector<1x4x8xf32>
    %101 = vector.shape_cast %100 : vector<1x4x8xf32> to vector<4x8xf32>
    %cst_34 = arith.constant dense<0.000000e+00> : vector<128x8xf32>
    %102 = tpu.matmul %99, %101, %cst_34 {dimension_numbers = #tpu.dot_dimension_numbers<[1], [0], [0], [1], [0, 0, 1, 1], [], []>} : vector<128x4xf32>, vector<4x8xf32>, vector<128x8xf32> -> vector<128x8xf32>
    %103 = arith.addf %98, %102 : vector<128x8xf32>
    %104 = vector.extract_strided_slice %14 {offsets = [34, 0], sizes = [128, 4], strides = [1, 1]} : vector<162x4xf32> to vector<128x4xf32>
    %c15_i32_35 = arith.constant 15 : i32
    %105 = vector.broadcast %c15_i32_35 : i32 to vector<128x1xi32>
    %106 = arith.cmpi ne, %31, %105 : vector<128x1xi32>
    %cst_36 = arith.constant 0.000000e+00 : f32
    %107 = vector.shape_cast %106 : vector<128x1xi1> to vector<128x1xi1>
    %108 = vector.broadcast %107 : vector<128x1xi1> to vector<128x4xi1>
    %109 = vector.broadcast %cst_36 : f32 to vector<128x4xf32>
    %110 = arith.select %108, %104, %109 : vector<128x4xi1>, vector<128x4xf32>
    %111 = vector.extract_strided_slice %32 {offsets = [8, 0, 0], sizes = [1, 4, 8], strides = [1, 1, 1]} : vector<9x4x8xf32> to vector<1x4x8xf32>
    %112 = vector.shape_cast %111 : vector<1x4x8xf32> to vector<4x8xf32>
    %cst_37 = arith.constant dense<0.000000e+00> : vector<128x8xf32>
    %113 = tpu.matmul %110, %112, %cst_37 {dimension_numbers = #tpu.dot_dimension_numbers<[1], [0], [0], [1], [0, 0, 1, 1], [], []>} : vector<128x4xf32>, vector<4x8xf32>, vector<128x8xf32> -> vector<128x8xf32>
    %114 = arith.addf %103, %113 : vector<128x8xf32>
    %c0_38 = arith.constant 0 : index
    %c0_39 = arith.constant 0 : index
    %115 = vector.load %arg6[%c0_38, %c0_39] : memref<1x8xf32, #tpu.memory_space<vmem>>, vector<1x8xf32>
    %c0_40 = arith.constant 0 : index
    %c0_41 = arith.constant 0 : index
    %116 = vector.load %arg7[%c0_40, %c0_41] : memref<1x8xf32, #tpu.memory_space<vmem>>, vector<1x8xf32>
    %117 = vector.broadcast %115 : vector<1x8xf32> to vector<128x8xf32>
    %118 = arith.mulf %114, %117 : vector<128x8xf32>
    %119 = vector.broadcast %116 : vector<1x8xf32> to vector<128x8xf32>
    %120 = arith.addf %118, %119 : vector<128x8xf32>
    %cst_42 = arith.constant 0.000000e+00 : f32
    %121 = vector.broadcast %cst_42 : f32 to vector<128x8xf32>
    %122 = arith.maximumf %120, %121 : vector<128x8xf32>
    %c0_43 = arith.constant 0 : index
    %c0_44 = arith.constant 0 : index
    %c0_45 = arith.constant 0 : index
    %123 = vector.load %arg8[%c0_43, %c0_44, %c0_45] : memref<1x128x8xf32, #tpu.memory_space<vmem>>, vector<1x128x8xf32>
    %124 = vector.shape_cast %123 : vector<1x128x8xf32> to vector<128x8xf32>
    %125 = vector.shape_cast %122 : vector<128x8xf32> to vector<1x128x8xf32>
    tpu.vector_store %arg8[%c0_43, %c0_44, %c0_45], %125 {strides = array<i32>} : memref<1x128x8xf32, #tpu.memory_space<vmem>>, vector<1x128x8xf32>,
    return
  }
  func.func @transform_0(%arg0: i32, %arg1: i32) -> (i32, i32, i32) {
    %c1_i32 = arith.constant 1 : i32
    %0 = arith.subi %arg1, %c1_i32 : i32
    %c0_i32 = arith.constant 0 : i32
    %1 = arith.maxsi %0, %c0_i32 : i32
    %c0_i32_0 = arith.constant 0 : i32
    %c0_i32_1 = arith.constant 0 : i32
    return %arg0, %1, %c0_i32_0 : i32, i32, i32
  }
  func.func @transform_1(%arg0: i32, %arg1: i32) -> (i32, i32, i32) {
    %c0_i32 = arith.constant 0 : i32
    %c0_i32_0 = arith.constant 0 : i32
    return %arg0, %arg1, %c0_i32 : i32, i32, i32
  }
  func.func @transform_2(%arg0: i32, %arg1: i32) -> (i32, i32, i32) {
    %c1_i32 = arith.constant 1 : i32
    %0 = arith.addi %arg1, %c1_i32 : i32
    %c1_i32_0 = arith.constant 1 : i32
    %1 = arith.minsi %0, %c1_i32_0 : i32
    %c0_i32 = arith.constant 0 : i32
    %c0_i32_1 = arith.constant 0 : i32
    return %arg0, %1, %c0_i32 : i32, i32, i32
  }
  func.func @transform_3(%arg0: i32, %arg1: i32) -> (i32, i32, i32) {
    %c0_i32 = arith.constant 0 : i32
    %c0_i32_0 = arith.constant 0 : i32
    %c0_i32_1 = arith.constant 0 : i32
    %c0_i32_2 = arith.constant 0 : i32
    return %c0_i32, %c0_i32_0, %c0_i32_1 : i32, i32, i32
  }
  func.func @transform_4(%arg0: i32, %arg1: i32) -> (i32, i32) {
    %c0_i32 = arith.constant 0 : i32
    %c0_i32_0 = arith.constant 0 : i32
    %c0_i32_1 = arith.constant 0 : i32
    return %c0_i32, %c0_i32_0 : i32, i32
  }
  func.func @transform_5(%arg0: i32, %arg1: i32) -> (i32, i32) {
    %c0_i32 = arith.constant 0 : i32
    %c0_i32_0 = arith.constant 0 : i32
    %c0_i32_1 = arith.constant 0 : i32
    return %c0_i32, %c0_i32_0 : i32, i32
  }
  func.func @transform_6(%arg0: i32, %arg1: i32) -> (i32, i32, i32) {
    %c0_i32 = arith.constant 0 : i32
    %c0_i32_0 = arith.constant 0 : i32
    return %arg0, %arg1, %c0_i32 : i32, i32, i32
  }
}

module attributes {stable_mosaic.version = 11 : i64} {
  func.func @_ib_kernel(%arg0: i32, %arg1: i32, %arg2: memref<1x128x4xf32, #tpu.memory_space<vmem>>, %arg3: memref<1x128x4xf32, #tpu.memory_space<vmem>>, %arg4: memref<1x128x4xf32, #tpu.memory_space<vmem>>, %arg5: memref<4x16xf32, #tpu.memory_space<vmem>>, %arg6: memref<1x16xf32, #tpu.memory_space<vmem>>, %arg7: memref<1x16xf32, #tpu.memory_space<vmem>>, %arg8: memref<9x16xf32, #tpu.memory_space<vmem>>, %arg9: memref<1x16xf32, #tpu.memory_space<vmem>>, %arg10: memref<1x16xf32, #tpu.memory_space<vmem>>, %arg11: memref<16x16xf32, #tpu.memory_space<vmem>>, %arg12: memref<1x16xf32, #tpu.memory_space<vmem>>, %arg13: memref<1x16xf32, #tpu.memory_space<vmem>>, %arg14: memref<16x4xf32, #tpu.memory_space<vmem>>, %arg15: memref<1x4xf32, #tpu.memory_space<vmem>>, %arg16: memref<1x4xf32, #tpu.memory_space<vmem>>, %arg17: memref<1x128x4xf32, #tpu.memory_space<vmem>>) attributes {dimension_semantics = [#tpu.dimension_semantics<parallel>, #tpu.dimension_semantics<parallel>], iteration_bounds = array<i64: 2, 2>, scalar_prefetch = 0 : i64, scratch_operands = 0 : i64, tpu.core_type = #tpu.core_type<tc>, window_params = [{transform_indices = @transform_0, window_bounds = array<i64: 1, 128, 4>}, {transform_indices = @transform_1, window_bounds = array<i64: 1, 128, 4>}, {transform_indices = @transform_2, window_bounds = array<i64: 1, 128, 4>}, {pipeline_mode = #tpu.pipeline_mode<synchronous>, transform_indices = @transform_3, window_bounds = array<i64: 4, 16>}, {pipeline_mode = #tpu.pipeline_mode<synchronous>, transform_indices = @transform_4, window_bounds = array<i64: 1, 16>}, {pipeline_mode = #tpu.pipeline_mode<synchronous>, transform_indices = @transform_5, window_bounds = array<i64: 1, 16>}, {pipeline_mode = #tpu.pipeline_mode<synchronous>, transform_indices = @transform_6, window_bounds = array<i64: 9, 16>}, {pipeline_mode = #tpu.pipeline_mode<synchronous>, transform_indices = @transform_7, window_bounds = array<i64: 1, 16>}, {pipeline_mode = #tpu.pipeline_mode<synchronous>, transform_indices = @transform_8, window_bounds = array<i64: 1, 16>}, {pipeline_mode = #tpu.pipeline_mode<synchronous>, transform_indices = @transform_9, window_bounds = array<i64: 16, 16>}, {pipeline_mode = #tpu.pipeline_mode<synchronous>, transform_indices = @transform_10, window_bounds = array<i64: 1, 16>}, {pipeline_mode = #tpu.pipeline_mode<synchronous>, transform_indices = @transform_11, window_bounds = array<i64: 1, 16>}, {pipeline_mode = #tpu.pipeline_mode<synchronous>, transform_indices = @transform_12, window_bounds = array<i64: 16, 4>}, {pipeline_mode = #tpu.pipeline_mode<synchronous>, transform_indices = @transform_13, window_bounds = array<i64: 1, 4>}, {pipeline_mode = #tpu.pipeline_mode<synchronous>, transform_indices = @transform_14, window_bounds = array<i64: 1, 4>}, {transform_indices = @transform_15, window_bounds = array<i64: 1, 128, 4>}]} {
    %c0 = arith.constant 0 : index
    %c112 = arith.constant 112 : index
    %c0_0 = arith.constant 0 : index
    %0 = vector.load %arg2[%c0, %c112, %c0_0] : memref<1x128x4xf32, #tpu.memory_space<vmem>>, vector<1x16x4xf32>
    %1 = vector.shape_cast %0 : vector<1x16x4xf32> to vector<16x4xf32>
    %c0_1 = arith.constant 0 : index
    %c0_2 = arith.constant 0 : index
    %c0_3 = arith.constant 0 : index
    %2 = vector.load %arg4[%c0_1, %c0_2, %c0_3] : memref<1x128x4xf32, #tpu.memory_space<vmem>>, vector<1x16x4xf32>
    %3 = vector.shape_cast %2 : vector<1x16x4xf32> to vector<16x4xf32>
    %c0_4 = arith.constant 0 : index
    %c0_5 = arith.constant 0 : index
    %c0_6 = arith.constant 0 : index
    %4 = vector.load %arg3[%c0_4, %c0_5, %c0_6] : memref<1x128x4xf32, #tpu.memory_space<vmem>>, vector<1x128x4xf32>
    %5 = vector.shape_cast %4 : vector<1x128x4xf32> to vector<128x4xf32>
    %6 = tpu.concatenate %1, %5, %3 in 0 : vector<16x4xf32>, vector<128x4xf32>, vector<16x4xf32> -> vector<160x4xf32>
    %c0_7 = arith.constant 0 : index
    %c0_8 = arith.constant 0 : index
    %7 = vector.load %arg5[%c0_7, %c0_8] : memref<4x16xf32, #tpu.memory_space<vmem>>, vector<4x16xf32>
    %cst = arith.constant dense<0.000000e+00> : vector<160x16xf32>
    %8 = tpu.matmul %6, %7, %cst {dimension_numbers = #tpu.dot_dimension_numbers<[1], [0], [0], [1], [0, 0, 1, 1], [], []>} : vector<160x4xf32>, vector<4x16xf32>, vector<160x16xf32> -> vector<160x16xf32>
    %c0_9 = arith.constant 0 : index
    %c0_10 = arith.constant 0 : index
    %9 = vector.load %arg6[%c0_9, %c0_10] : memref<1x16xf32, #tpu.memory_space<vmem>>, vector<1x16xf32>
    %c0_11 = arith.constant 0 : index
    %c0_12 = arith.constant 0 : index
    %10 = vector.load %arg7[%c0_11, %c0_12] : memref<1x16xf32, #tpu.memory_space<vmem>>, vector<1x16xf32>
    %11 = vector.broadcast %9 : vector<1x16xf32> to vector<160x16xf32>
    %12 = arith.mulf %8, %11 : vector<160x16xf32>
    %13 = vector.broadcast %10 : vector<1x16xf32> to vector<160x16xf32>
    %14 = arith.addf %12, %13 : vector<160x16xf32>
    %cst_13 = arith.constant 0.000000e+00 : f32
    %15 = vector.broadcast %cst_13 : f32 to vector<160x16xf32>
    %16 = arith.maximumf %14, %15 : vector<160x16xf32>
    %17 = tpu.iota {dimensions = array<i32: 0>} : vector<160x1xi32>
    %c16_i32 = arith.constant 16 : i32
    %18 = vector.broadcast %c16_i32 : i32 to vector<160x1xi32>
    %19 = arith.cmpi sge, %17, %18 : vector<160x1xi32>
    %c0_i32 = arith.constant 0 : i32
    %20 = arith.cmpi sgt, %arg1, %c0_i32 : i32
    %21 = vector.broadcast %20 : i1 to vector<160x1xi1>
    %22 = arith.ori %19, %21 : vector<160x1xi1>
    %c144_i32 = arith.constant 144 : i32
    %23 = vector.broadcast %c144_i32 : i32 to vector<160x1xi32>
    %24 = arith.cmpi slt, %17, %23 : vector<160x1xi32>
    %c1_i32 = arith.constant 1 : i32
    %25 = arith.cmpi slt, %arg1, %c1_i32 : i32
    %26 = vector.broadcast %25 : i1 to vector<160x1xi1>
    %27 = arith.ori %24, %26 : vector<160x1xi1>
    %28 = arith.andi %22, %27 : vector<160x1xi1>
    %cst_14 = arith.constant 0.000000e+00 : f32
    %29 = vector.shape_cast %28 : vector<160x1xi1> to vector<160x1xi1>
    %30 = vector.broadcast %29 : vector<160x1xi1> to vector<160x16xi1>
    %31 = vector.broadcast %cst_14 : f32 to vector<160x16xf32>
    %32 = arith.select %30, %16, %31 : vector<160x16xi1>, vector<160x16xf32>
    %cst_15 = arith.constant 0.000000e+00 : f32
    %33 = vector.broadcast %cst_15 : f32 to vector<1x16xf32>
    %34 = tpu.concatenate %33, %32, %33 in 0 : vector<1x16xf32>, vector<160x16xf32>, vector<1x16xf32> -> vector<162x16xf32>
    %35 = tpu.iota {dimensions = array<i32: 0>} : vector<128x1xi32>
    %c16_i32_16 = arith.constant 16 : i32
    %c0_i32_17 = arith.constant 0 : i32
    %36 = arith.cmpi eq, %c16_i32_16, %c0_i32_17 : i32
    %c1_i32_18 = arith.constant 1 : i32
    %37 = arith.select %36, %c1_i32_18, %c16_i32_16 : i32
    %38 = vector.broadcast %37 : i32 to vector<128x1xi32>
    %39 = arith.remsi %35, %38 : vector<128x1xi32>
    %c0_i32_19 = arith.constant 0 : i32
    %40 = vector.broadcast %c0_i32_19 : i32 to vector<128x1xi32>
    %41 = arith.cmpi ne, %39, %40 : vector<128x1xi32>
    %c0_i32_20 = arith.constant 0 : i32
    %42 = vector.broadcast %c0_i32_20 : i32 to vector<128x1xi32>
    %43 = arith.cmpi slt, %39, %42 : vector<128x1xi32>
    %c0_i32_21 = arith.constant 0 : i32
    %44 = arith.cmpi slt, %37, %c0_i32_21 : i32
    %45 = vector.broadcast %44 : i1 to vector<128x1xi1>
    %46 = vector.broadcast %45 : vector<128x1xi1> to vector<128x1xi1>
    %47 = arith.xori %43, %46 : vector<128x1xi1>
    %48 = arith.andi %47, %41 : vector<128x1xi1>
    %49 = vector.broadcast %37 : i32 to vector<128x1xi32>
    %50 = arith.addi %39, %49 : vector<128x1xi32>
    %51 = arith.select %48, %50, %39 : vector<128x1xi1>, vector<128x1xi32>
    %c0_22 = arith.constant 0 : index
    %c0_23 = arith.constant 0 : index
    %52 = vector.load %arg8[%c0_22, %c0_23] : memref<9x16xf32, #tpu.memory_space<vmem>>, vector<9x16xf32>
    %cst_24 = arith.constant 0.000000e+00 : f32
    %53 = vector.broadcast %cst_24 : f32 to vector<128x16xf32>
    %54 = vector.extract_strided_slice %34 {offsets = [0, 0], sizes = [128, 16], strides = [1, 1]} : vector<162x16xf32> to vector<128x16xf32>
    %c0_i32_25 = arith.constant 0 : i32
    %55 = vector.broadcast %c0_i32_25 : i32 to vector<128x1xi32>
    %56 = arith.cmpi ne, %51, %55 : vector<128x1xi32>
    %cst_26 = arith.constant 0.000000e+00 : f32
    %57 = vector.shape_cast %56 : vector<128x1xi1> to vector<128x1xi1>
    %58 = vector.broadcast %57 : vector<128x1xi1> to vector<128x16xi1>
    %59 = vector.broadcast %cst_26 : f32 to vector<128x16xf32>
    %60 = arith.select %58, %54, %59 : vector<128x16xi1>, vector<128x16xf32>
    %61 = vector.extract_strided_slice %52 {offsets = [0, 0], sizes = [1, 16], strides = [1, 1]} : vector<9x16xf32> to vector<1x16xf32>
    %62 = vector.broadcast %61 : vector<1x16xf32> to vector<128x16xf32>
    %63 = arith.mulf %60, %62 : vector<128x16xf32>
    %64 = arith.addf %53, %63 : vector<128x16xf32>
    %65 = vector.extract_strided_slice %34 {offsets = [1, 0], sizes = [128, 16], strides = [1, 1]} : vector<162x16xf32> to vector<128x16xf32>
    %66 = vector.extract_strided_slice %52 {offsets = [1, 0], sizes = [1, 16], strides = [1, 1]} : vector<9x16xf32> to vector<1x16xf32>
    %67 = vector.broadcast %66 : vector<1x16xf32> to vector<128x16xf32>
    %68 = arith.mulf %65, %67 : vector<128x16xf32>
    %69 = arith.addf %64, %68 : vector<128x16xf32>
    %70 = vector.extract_strided_slice %34 {offsets = [2, 0], sizes = [128, 16], strides = [1, 1]} : vector<162x16xf32> to vector<128x16xf32>
    %c15_i32 = arith.constant 15 : i32
    %71 = vector.broadcast %c15_i32 : i32 to vector<128x1xi32>
    %72 = arith.cmpi ne, %51, %71 : vector<128x1xi32>
    %cst_27 = arith.constant 0.000000e+00 : f32
    %73 = vector.shape_cast %72 : vector<128x1xi1> to vector<128x1xi1>
    %74 = vector.broadcast %73 : vector<128x1xi1> to vector<128x16xi1>
    %75 = vector.broadcast %cst_27 : f32 to vector<128x16xf32>
    %76 = arith.select %74, %70, %75 : vector<128x16xi1>, vector<128x16xf32>
    %77 = vector.extract_strided_slice %52 {offsets = [2, 0], sizes = [1, 16], strides = [1, 1]} : vector<9x16xf32> to vector<1x16xf32>
    %78 = vector.broadcast %77 : vector<1x16xf32> to vector<128x16xf32>
    %79 = arith.mulf %76, %78 : vector<128x16xf32>
    %80 = arith.addf %69, %79 : vector<128x16xf32>
    %81 = vector.extract_strided_slice %34 {offsets = [16, 0], sizes = [128, 16], strides = [1, 1]} : vector<162x16xf32> to vector<128x16xf32>
    %c0_i32_28 = arith.constant 0 : i32
    %82 = vector.broadcast %c0_i32_28 : i32 to vector<128x1xi32>
    %83 = arith.cmpi ne, %51, %82 : vector<128x1xi32>
    %cst_29 = arith.constant 0.000000e+00 : f32
    %84 = vector.shape_cast %83 : vector<128x1xi1> to vector<128x1xi1>
    %85 = vector.broadcast %84 : vector<128x1xi1> to vector<128x16xi1>
    %86 = vector.broadcast %cst_29 : f32 to vector<128x16xf32>
    %87 = arith.select %85, %81, %86 : vector<128x16xi1>, vector<128x16xf32>
    %88 = vector.extract_strided_slice %52 {offsets = [3, 0], sizes = [1, 16], strides = [1, 1]} : vector<9x16xf32> to vector<1x16xf32>
    %89 = vector.broadcast %88 : vector<1x16xf32> to vector<128x16xf32>
    %90 = arith.mulf %87, %89 : vector<128x16xf32>
    %91 = arith.addf %80, %90 : vector<128x16xf32>
    %92 = vector.extract_strided_slice %34 {offsets = [17, 0], sizes = [128, 16], strides = [1, 1]} : vector<162x16xf32> to vector<128x16xf32>
    %93 = vector.extract_strided_slice %52 {offsets = [4, 0], sizes = [1, 16], strides = [1, 1]} : vector<9x16xf32> to vector<1x16xf32>
    %94 = vector.broadcast %93 : vector<1x16xf32> to vector<128x16xf32>
    %95 = arith.mulf %92, %94 : vector<128x16xf32>
    %96 = arith.addf %91, %95 : vector<128x16xf32>
    %97 = vector.extract_strided_slice %34 {offsets = [18, 0], sizes = [128, 16], strides = [1, 1]} : vector<162x16xf32> to vector<128x16xf32>
    %c15_i32_30 = arith.constant 15 : i32
    %98 = vector.broadcast %c15_i32_30 : i32 to vector<128x1xi32>
    %99 = arith.cmpi ne, %51, %98 : vector<128x1xi32>
    %cst_31 = arith.constant 0.000000e+00 : f32
    %100 = vector.shape_cast %99 : vector<128x1xi1> to vector<128x1xi1>
    %101 = vector.broadcast %100 : vector<128x1xi1> to vector<128x16xi1>
    %102 = vector.broadcast %cst_31 : f32 to vector<128x16xf32>
    %103 = arith.select %101, %97, %102 : vector<128x16xi1>, vector<128x16xf32>
    %104 = vector.extract_strided_slice %52 {offsets = [5, 0], sizes = [1, 16], strides = [1, 1]} : vector<9x16xf32> to vector<1x16xf32>
    %105 = vector.broadcast %104 : vector<1x16xf32> to vector<128x16xf32>
    %106 = arith.mulf %103, %105 : vector<128x16xf32>
    %107 = arith.addf %96, %106 : vector<128x16xf32>
    %108 = vector.extract_strided_slice %34 {offsets = [32, 0], sizes = [128, 16], strides = [1, 1]} : vector<162x16xf32> to vector<128x16xf32>
    %c0_i32_32 = arith.constant 0 : i32
    %109 = vector.broadcast %c0_i32_32 : i32 to vector<128x1xi32>
    %110 = arith.cmpi ne, %51, %109 : vector<128x1xi32>
    %cst_33 = arith.constant 0.000000e+00 : f32
    %111 = vector.shape_cast %110 : vector<128x1xi1> to vector<128x1xi1>
    %112 = vector.broadcast %111 : vector<128x1xi1> to vector<128x16xi1>
    %113 = vector.broadcast %cst_33 : f32 to vector<128x16xf32>
    %114 = arith.select %112, %108, %113 : vector<128x16xi1>, vector<128x16xf32>
    %115 = vector.extract_strided_slice %52 {offsets = [6, 0], sizes = [1, 16], strides = [1, 1]} : vector<9x16xf32> to vector<1x16xf32>
    %116 = vector.broadcast %115 : vector<1x16xf32> to vector<128x16xf32>
    %117 = arith.mulf %114, %116 : vector<128x16xf32>
    %118 = arith.addf %107, %117 : vector<128x16xf32>
    %119 = vector.extract_strided_slice %34 {offsets = [33, 0], sizes = [128, 16], strides = [1, 1]} : vector<162x16xf32> to vector<128x16xf32>
    %120 = vector.extract_strided_slice %52 {offsets = [7, 0], sizes = [1, 16], strides = [1, 1]} : vector<9x16xf32> to vector<1x16xf32>
    %121 = vector.broadcast %120 : vector<1x16xf32> to vector<128x16xf32>
    %122 = arith.mulf %119, %121 : vector<128x16xf32>
    %123 = arith.addf %118, %122 : vector<128x16xf32>
    %124 = vector.extract_strided_slice %34 {offsets = [34, 0], sizes = [128, 16], strides = [1, 1]} : vector<162x16xf32> to vector<128x16xf32>
    %c15_i32_34 = arith.constant 15 : i32
    %125 = vector.broadcast %c15_i32_34 : i32 to vector<128x1xi32>
    %126 = arith.cmpi ne, %51, %125 : vector<128x1xi32>
    %cst_35 = arith.constant 0.000000e+00 : f32
    %127 = vector.shape_cast %126 : vector<128x1xi1> to vector<128x1xi1>
    %128 = vector.broadcast %127 : vector<128x1xi1> to vector<128x16xi1>
    %129 = vector.broadcast %cst_35 : f32 to vector<128x16xf32>
    %130 = arith.select %128, %124, %129 : vector<128x16xi1>, vector<128x16xf32>
    %131 = vector.extract_strided_slice %52 {offsets = [8, 0], sizes = [1, 16], strides = [1, 1]} : vector<9x16xf32> to vector<1x16xf32>
    %132 = vector.broadcast %131 : vector<1x16xf32> to vector<128x16xf32>
    %133 = arith.mulf %130, %132 : vector<128x16xf32>
    %134 = arith.addf %123, %133 : vector<128x16xf32>
    %c0_36 = arith.constant 0 : index
    %c0_37 = arith.constant 0 : index
    %135 = vector.load %arg9[%c0_36, %c0_37] : memref<1x16xf32, #tpu.memory_space<vmem>>, vector<1x16xf32>
    %c0_38 = arith.constant 0 : index
    %c0_39 = arith.constant 0 : index
    %136 = vector.load %arg10[%c0_38, %c0_39] : memref<1x16xf32, #tpu.memory_space<vmem>>, vector<1x16xf32>
    %137 = vector.broadcast %135 : vector<1x16xf32> to vector<128x16xf32>
    %138 = arith.mulf %134, %137 : vector<128x16xf32>
    %139 = vector.broadcast %136 : vector<1x16xf32> to vector<128x16xf32>
    %140 = arith.addf %138, %139 : vector<128x16xf32>
    %cst_40 = arith.constant 0.000000e+00 : f32
    %141 = vector.broadcast %cst_40 : f32 to vector<128x16xf32>
    %142 = arith.maximumf %140, %141 : vector<128x16xf32>
    %c0_41 = arith.constant 0 : index
    %c0_42 = arith.constant 0 : index
    %143 = vector.load %arg11[%c0_41, %c0_42] : memref<16x16xf32, #tpu.memory_space<vmem>>, vector<16x16xf32>
    %cst_43 = arith.constant dense<0.000000e+00> : vector<128x16xf32>
    %144 = tpu.matmul %142, %143, %cst_43 {dimension_numbers = #tpu.dot_dimension_numbers<[1], [0], [0], [1], [0, 0, 1, 1], [], []>} : vector<128x16xf32>, vector<16x16xf32>, vector<128x16xf32> -> vector<128x16xf32>
    %c0_44 = arith.constant 0 : index
    %c0_45 = arith.constant 0 : index
    %145 = vector.load %arg12[%c0_44, %c0_45] : memref<1x16xf32, #tpu.memory_space<vmem>>, vector<1x16xf32>
    %c0_46 = arith.constant 0 : index
    %c0_47 = arith.constant 0 : index
    %146 = vector.load %arg13[%c0_46, %c0_47] : memref<1x16xf32, #tpu.memory_space<vmem>>, vector<1x16xf32>
    %147 = vector.broadcast %145 : vector<1x16xf32> to vector<128x16xf32>
    %148 = arith.mulf %144, %147 : vector<128x16xf32>
    %149 = vector.broadcast %146 : vector<1x16xf32> to vector<128x16xf32>
    %150 = arith.addf %148, %149 : vector<128x16xf32>
    %cst_48 = arith.constant 0.000000e+00 : f32
    %151 = vector.broadcast %cst_48 : f32 to vector<128x16xf32>
    %152 = arith.maximumf %150, %151 : vector<128x16xf32>
    %c0_49 = arith.constant 0 : index
    %c0_50 = arith.constant 0 : index
    %153 = vector.load %arg14[%c0_49, %c0_50] : memref<16x4xf32, #tpu.memory_space<vmem>>, vector<16x4xf32>
    %cst_51 = arith.constant dense<0.000000e+00> : vector<128x4xf32>
    %154 = tpu.matmul %152, %153, %cst_51 {dimension_numbers = #tpu.dot_dimension_numbers<[1], [0], [0], [1], [0, 0, 1, 1], [], []>} : vector<128x16xf32>, vector<16x4xf32>, vector<128x4xf32> -> vector<128x4xf32>
    %c0_52 = arith.constant 0 : index
    %c0_53 = arith.constant 0 : index
    %155 = vector.load %arg15[%c0_52, %c0_53] : memref<1x4xf32, #tpu.memory_space<vmem>>, vector<1x4xf32>
    %156 = vector.broadcast %155 : vector<1x4xf32> to vector<128x4xf32>
    %157 = arith.mulf %154, %156 : vector<128x4xf32>
    %c0_54 = arith.constant 0 : index
    %c0_55 = arith.constant 0 : index
    %158 = vector.load %arg16[%c0_54, %c0_55] : memref<1x4xf32, #tpu.memory_space<vmem>>, vector<1x4xf32>
    %159 = vector.broadcast %158 : vector<1x4xf32> to vector<128x4xf32>
    %160 = arith.addf %157, %159 : vector<128x4xf32>
    %161 = arith.addf %160, %5 : vector<128x4xf32>
    %c0_56 = arith.constant 0 : index
    %c0_57 = arith.constant 0 : index
    %c0_58 = arith.constant 0 : index
    %162 = vector.load %arg17[%c0_56, %c0_57, %c0_58] : memref<1x128x4xf32, #tpu.memory_space<vmem>>, vector<1x128x4xf32>
    %163 = vector.shape_cast %162 : vector<1x128x4xf32> to vector<128x4xf32>
    %164 = vector.shape_cast %161 : vector<128x4xf32> to vector<1x128x4xf32>
    tpu.vector_store %arg17[%c0_56, %c0_57, %c0_58], %164 {strides = array<i32>} : memref<1x128x4xf32, #tpu.memory_space<vmem>>, vector<1x128x4xf32>,
    return
  }
  func.func @transform_0(%arg0: i32, %arg1: i32) -> (i32, i32, i32) {
    %c1_i32 = arith.constant 1 : i32
    %0 = arith.subi %arg1, %c1_i32 : i32
    %c0_i32 = arith.constant 0 : i32
    %1 = arith.maxsi %0, %c0_i32 : i32
    %c0_i32_0 = arith.constant 0 : i32
    %c0_i32_1 = arith.constant 0 : i32
    return %arg0, %1, %c0_i32_0 : i32, i32, i32
  }
  func.func @transform_1(%arg0: i32, %arg1: i32) -> (i32, i32, i32) {
    %c0_i32 = arith.constant 0 : i32
    %c0_i32_0 = arith.constant 0 : i32
    return %arg0, %arg1, %c0_i32 : i32, i32, i32
  }
  func.func @transform_2(%arg0: i32, %arg1: i32) -> (i32, i32, i32) {
    %c1_i32 = arith.constant 1 : i32
    %0 = arith.addi %arg1, %c1_i32 : i32
    %c1_i32_0 = arith.constant 1 : i32
    %1 = arith.minsi %0, %c1_i32_0 : i32
    %c0_i32 = arith.constant 0 : i32
    %c0_i32_1 = arith.constant 0 : i32
    return %arg0, %1, %c0_i32 : i32, i32, i32
  }
  func.func @transform_3(%arg0: i32, %arg1: i32) -> (i32, i32) {
    %c0_i32 = arith.constant 0 : i32
    %c0_i32_0 = arith.constant 0 : i32
    %c0_i32_1 = arith.constant 0 : i32
    return %c0_i32, %c0_i32_0 : i32, i32
  }
  func.func @transform_4(%arg0: i32, %arg1: i32) -> (i32, i32) {
    %c0_i32 = arith.constant 0 : i32
    %c0_i32_0 = arith.constant 0 : i32
    %c0_i32_1 = arith.constant 0 : i32
    return %c0_i32, %c0_i32_0 : i32, i32
  }
  func.func @transform_5(%arg0: i32, %arg1: i32) -> (i32, i32) {
    %c0_i32 = arith.constant 0 : i32
    %c0_i32_0 = arith.constant 0 : i32
    %c0_i32_1 = arith.constant 0 : i32
    return %c0_i32, %c0_i32_0 : i32, i32
  }
  func.func @transform_6(%arg0: i32, %arg1: i32) -> (i32, i32) {
    %c0_i32 = arith.constant 0 : i32
    %c0_i32_0 = arith.constant 0 : i32
    %c0_i32_1 = arith.constant 0 : i32
    return %c0_i32, %c0_i32_0 : i32, i32
  }
  func.func @transform_7(%arg0: i32, %arg1: i32) -> (i32, i32) {
    %c0_i32 = arith.constant 0 : i32
    %c0_i32_0 = arith.constant 0 : i32
    %c0_i32_1 = arith.constant 0 : i32
    return %c0_i32, %c0_i32_0 : i32, i32
  }
  func.func @transform_8(%arg0: i32, %arg1: i32) -> (i32, i32) {
    %c0_i32 = arith.constant 0 : i32
    %c0_i32_0 = arith.constant 0 : i32
    %c0_i32_1 = arith.constant 0 : i32
    return %c0_i32, %c0_i32_0 : i32, i32
  }
  func.func @transform_9(%arg0: i32, %arg1: i32) -> (i32, i32) {
    %c0_i32 = arith.constant 0 : i32
    %c0_i32_0 = arith.constant 0 : i32
    %c0_i32_1 = arith.constant 0 : i32
    return %c0_i32, %c0_i32_0 : i32, i32
  }
  func.func @transform_10(%arg0: i32, %arg1: i32) -> (i32, i32) {
    %c0_i32 = arith.constant 0 : i32
    %c0_i32_0 = arith.constant 0 : i32
    %c0_i32_1 = arith.constant 0 : i32
    return %c0_i32, %c0_i32_0 : i32, i32
  }
  func.func @transform_11(%arg0: i32, %arg1: i32) -> (i32, i32) {
    %c0_i32 = arith.constant 0 : i32
    %c0_i32_0 = arith.constant 0 : i32
    %c0_i32_1 = arith.constant 0 : i32
    return %c0_i32, %c0_i32_0 : i32, i32
  }
  func.func @transform_12(%arg0: i32, %arg1: i32) -> (i32, i32) {
    %c0_i32 = arith.constant 0 : i32
    %c0_i32_0 = arith.constant 0 : i32
    %c0_i32_1 = arith.constant 0 : i32
    return %c0_i32, %c0_i32_0 : i32, i32
  }
  func.func @transform_13(%arg0: i32, %arg1: i32) -> (i32, i32) {
    %c0_i32 = arith.constant 0 : i32
    %c0_i32_0 = arith.constant 0 : i32
    %c0_i32_1 = arith.constant 0 : i32
    return %c0_i32, %c0_i32_0 : i32, i32
  }
  func.func @transform_14(%arg0: i32, %arg1: i32) -> (i32, i32) {
    %c0_i32 = arith.constant 0 : i32
    %c0_i32_0 = arith.constant 0 : i32
    %c0_i32_1 = arith.constant 0 : i32
    return %c0_i32, %c0_i32_0 : i32, i32
  }
  func.func @transform_15(%arg0: i32, %arg1: i32) -> (i32, i32, i32) {
    %c0_i32 = arith.constant 0 : i32
    %c0_i32_0 = arith.constant 0 : i32
    return %arg0, %arg1, %c0_i32 : i32, i32, i32
  }
}

module attributes {stable_mosaic.version = 11 : i64} {
  func.func @_ib_kernel(%arg0: i32, %arg1: i32, %arg2: memref<1x128x8xf32, #tpu.memory_space<vmem>>, %arg3: memref<1x128x8xf32, #tpu.memory_space<vmem>>, %arg4: memref<1x128x8xf32, #tpu.memory_space<vmem>>, %arg5: memref<8x32xf32, #tpu.memory_space<vmem>>, %arg6: memref<1x32xf32, #tpu.memory_space<vmem>>, %arg7: memref<1x32xf32, #tpu.memory_space<vmem>>, %arg8: memref<9x32xf32, #tpu.memory_space<vmem>>, %arg9: memref<1x32xf32, #tpu.memory_space<vmem>>, %arg10: memref<1x32xf32, #tpu.memory_space<vmem>>, %arg11: memref<32x32xf32, #tpu.memory_space<vmem>>, %arg12: memref<1x32xf32, #tpu.memory_space<vmem>>, %arg13: memref<1x32xf32, #tpu.memory_space<vmem>>, %arg14: memref<32x8xf32, #tpu.memory_space<vmem>>, %arg15: memref<1x8xf32, #tpu.memory_space<vmem>>, %arg16: memref<1x8xf32, #tpu.memory_space<vmem>>, %arg17: memref<1x128x4xf32, #tpu.memory_space<vmem>>, %arg18: memref<4x8xf32, #tpu.memory_space<vmem>>, %arg19: memref<1x128x8xf32, #tpu.memory_space<vmem>>) attributes {dimension_semantics = [#tpu.dimension_semantics<parallel>, #tpu.dimension_semantics<parallel>], iteration_bounds = array<i64: 2, 2>, scalar_prefetch = 0 : i64, scratch_operands = 0 : i64, tpu.core_type = #tpu.core_type<tc>, window_params = [{transform_indices = @transform_0, window_bounds = array<i64: 1, 128, 8>}, {transform_indices = @transform_1, window_bounds = array<i64: 1, 128, 8>}, {transform_indices = @transform_2, window_bounds = array<i64: 1, 128, 8>}, {pipeline_mode = #tpu.pipeline_mode<synchronous>, transform_indices = @transform_3, window_bounds = array<i64: 8, 32>}, {pipeline_mode = #tpu.pipeline_mode<synchronous>, transform_indices = @transform_4, window_bounds = array<i64: 1, 32>}, {pipeline_mode = #tpu.pipeline_mode<synchronous>, transform_indices = @transform_5, window_bounds = array<i64: 1, 32>}, {pipeline_mode = #tpu.pipeline_mode<synchronous>, transform_indices = @transform_6, window_bounds = array<i64: 9, 32>}, {pipeline_mode = #tpu.pipeline_mode<synchronous>, transform_indices = @transform_7, window_bounds = array<i64: 1, 32>}, {pipeline_mode = #tpu.pipeline_mode<synchronous>, transform_indices = @transform_8, window_bounds = array<i64: 1, 32>}, {pipeline_mode = #tpu.pipeline_mode<synchronous>, transform_indices = @transform_9, window_bounds = array<i64: 32, 32>}, {pipeline_mode = #tpu.pipeline_mode<synchronous>, transform_indices = @transform_10, window_bounds = array<i64: 1, 32>}, {pipeline_mode = #tpu.pipeline_mode<synchronous>, transform_indices = @transform_11, window_bounds = array<i64: 1, 32>}, {pipeline_mode = #tpu.pipeline_mode<synchronous>, transform_indices = @transform_12, window_bounds = array<i64: 32, 8>}, {pipeline_mode = #tpu.pipeline_mode<synchronous>, transform_indices = @transform_13, window_bounds = array<i64: 1, 8>}, {pipeline_mode = #tpu.pipeline_mode<synchronous>, transform_indices = @transform_14, window_bounds = array<i64: 1, 8>}, {transform_indices = @transform_15, window_bounds = array<i64: 1, 128, 4>}, {pipeline_mode = #tpu.pipeline_mode<synchronous>, transform_indices = @transform_16, window_bounds = array<i64: 4, 8>}, {transform_indices = @transform_17, window_bounds = array<i64: 1, 128, 8>}]} {
    %c0 = arith.constant 0 : index
    %c112 = arith.constant 112 : index
    %c0_0 = arith.constant 0 : index
    %0 = vector.load %arg2[%c0, %c112, %c0_0] : memref<1x128x8xf32, #tpu.memory_space<vmem>>, vector<1x16x8xf32>
    %1 = vector.shape_cast %0 : vector<1x16x8xf32> to vector<16x8xf32>
    %c0_1 = arith.constant 0 : index
    %c0_2 = arith.constant 0 : index
    %c0_3 = arith.constant 0 : index
    %2 = vector.load %arg4[%c0_1, %c0_2, %c0_3] : memref<1x128x8xf32, #tpu.memory_space<vmem>>, vector<1x16x8xf32>
    %3 = vector.shape_cast %2 : vector<1x16x8xf32> to vector<16x8xf32>
    %c0_4 = arith.constant 0 : index
    %c0_5 = arith.constant 0 : index
    %c0_6 = arith.constant 0 : index
    %4 = vector.load %arg3[%c0_4, %c0_5, %c0_6] : memref<1x128x8xf32, #tpu.memory_space<vmem>>, vector<1x128x8xf32>
    %5 = vector.shape_cast %4 : vector<1x128x8xf32> to vector<128x8xf32>
    %6 = tpu.concatenate %1, %5, %3 in 0 : vector<16x8xf32>, vector<128x8xf32>, vector<16x8xf32> -> vector<160x8xf32>
    %c0_7 = arith.constant 0 : index
    %c0_8 = arith.constant 0 : index
    %7 = vector.load %arg5[%c0_7, %c0_8] : memref<8x32xf32, #tpu.memory_space<vmem>>, vector<8x32xf32>
    %cst = arith.constant dense<0.000000e+00> : vector<160x32xf32>
    %8 = tpu.matmul %6, %7, %cst {dimension_numbers = #tpu.dot_dimension_numbers<[1], [0], [0], [1], [0, 0, 1, 1], [], []>} : vector<160x8xf32>, vector<8x32xf32>, vector<160x32xf32> -> vector<160x32xf32>
    %c0_9 = arith.constant 0 : index
    %c0_10 = arith.constant 0 : index
    %9 = vector.load %arg6[%c0_9, %c0_10] : memref<1x32xf32, #tpu.memory_space<vmem>>, vector<1x32xf32>
    %c0_11 = arith.constant 0 : index
    %c0_12 = arith.constant 0 : index
    %10 = vector.load %arg7[%c0_11, %c0_12] : memref<1x32xf32, #tpu.memory_space<vmem>>, vector<1x32xf32>
    %11 = vector.broadcast %9 : vector<1x32xf32> to vector<160x32xf32>
    %12 = arith.mulf %8, %11 : vector<160x32xf32>
    %13 = vector.broadcast %10 : vector<1x32xf32> to vector<160x32xf32>
    %14 = arith.addf %12, %13 : vector<160x32xf32>
    %cst_13 = arith.constant 0.000000e+00 : f32
    %15 = vector.broadcast %cst_13 : f32 to vector<160x32xf32>
    %16 = arith.maximumf %14, %15 : vector<160x32xf32>
    %17 = tpu.iota {dimensions = array<i32: 0>} : vector<160x1xi32>
    %c16_i32 = arith.constant 16 : i32
    %18 = vector.broadcast %c16_i32 : i32 to vector<160x1xi32>
    %19 = arith.cmpi sge, %17, %18 : vector<160x1xi32>
    %c0_i32 = arith.constant 0 : i32
    %20 = arith.cmpi sgt, %arg1, %c0_i32 : i32
    %21 = vector.broadcast %20 : i1 to vector<160x1xi1>
    %22 = arith.ori %19, %21 : vector<160x1xi1>
    %c144_i32 = arith.constant 144 : i32
    %23 = vector.broadcast %c144_i32 : i32 to vector<160x1xi32>
    %24 = arith.cmpi slt, %17, %23 : vector<160x1xi32>
    %c1_i32 = arith.constant 1 : i32
    %25 = arith.cmpi slt, %arg1, %c1_i32 : i32
    %26 = vector.broadcast %25 : i1 to vector<160x1xi1>
    %27 = arith.ori %24, %26 : vector<160x1xi1>
    %28 = arith.andi %22, %27 : vector<160x1xi1>
    %cst_14 = arith.constant 0.000000e+00 : f32
    %29 = vector.shape_cast %28 : vector<160x1xi1> to vector<160x1xi1>
    %30 = vector.broadcast %29 : vector<160x1xi1> to vector<160x32xi1>
    %31 = vector.broadcast %cst_14 : f32 to vector<160x32xf32>
    %32 = arith.select %30, %16, %31 : vector<160x32xi1>, vector<160x32xf32>
    %cst_15 = arith.constant 0.000000e+00 : f32
    %33 = vector.broadcast %cst_15 : f32 to vector<1x32xf32>
    %34 = tpu.concatenate %33, %32, %33 in 0 : vector<1x32xf32>, vector<160x32xf32>, vector<1x32xf32> -> vector<162x32xf32>
    %35 = tpu.iota {dimensions = array<i32: 0>} : vector<128x1xi32>
    %c16_i32_16 = arith.constant 16 : i32
    %c0_i32_17 = arith.constant 0 : i32
    %36 = arith.cmpi eq, %c16_i32_16, %c0_i32_17 : i32
    %c1_i32_18 = arith.constant 1 : i32
    %37 = arith.select %36, %c1_i32_18, %c16_i32_16 : i32
    %38 = vector.broadcast %37 : i32 to vector<128x1xi32>
    %39 = arith.remsi %35, %38 : vector<128x1xi32>
    %c0_i32_19 = arith.constant 0 : i32
    %40 = vector.broadcast %c0_i32_19 : i32 to vector<128x1xi32>
    %41 = arith.cmpi ne, %39, %40 : vector<128x1xi32>
    %c0_i32_20 = arith.constant 0 : i32
    %42 = vector.broadcast %c0_i32_20 : i32 to vector<128x1xi32>
    %43 = arith.cmpi slt, %39, %42 : vector<128x1xi32>
    %c0_i32_21 = arith.constant 0 : i32
    %44 = arith.cmpi slt, %37, %c0_i32_21 : i32
    %45 = vector.broadcast %44 : i1 to vector<128x1xi1>
    %46 = vector.broadcast %45 : vector<128x1xi1> to vector<128x1xi1>
    %47 = arith.xori %43, %46 : vector<128x1xi1>
    %48 = arith.andi %47, %41 : vector<128x1xi1>
    %49 = vector.broadcast %37 : i32 to vector<128x1xi32>
    %50 = arith.addi %39, %49 : vector<128x1xi32>
    %51 = arith.select %48, %50, %39 : vector<128x1xi1>, vector<128x1xi32>
    %c0_22 = arith.constant 0 : index
    %c0_23 = arith.constant 0 : index
    %52 = vector.load %arg8[%c0_22, %c0_23] : memref<9x32xf32, #tpu.memory_space<vmem>>, vector<9x32xf32>
    %cst_24 = arith.constant 0.000000e+00 : f32
    %53 = vector.broadcast %cst_24 : f32 to vector<128x32xf32>
    %54 = vector.extract_strided_slice %34 {offsets = [0, 0], sizes = [128, 32], strides = [1, 1]} : vector<162x32xf32> to vector<128x32xf32>
    %c0_i32_25 = arith.constant 0 : i32
    %55 = vector.broadcast %c0_i32_25 : i32 to vector<128x1xi32>
    %56 = arith.cmpi ne, %51, %55 : vector<128x1xi32>
    %cst_26 = arith.constant 0.000000e+00 : f32
    %57 = vector.shape_cast %56 : vector<128x1xi1> to vector<128x1xi1>
    %58 = vector.broadcast %57 : vector<128x1xi1> to vector<128x32xi1>
    %59 = vector.broadcast %cst_26 : f32 to vector<128x32xf32>
    %60 = arith.select %58, %54, %59 : vector<128x32xi1>, vector<128x32xf32>
    %61 = vector.extract_strided_slice %52 {offsets = [0, 0], sizes = [1, 32], strides = [1, 1]} : vector<9x32xf32> to vector<1x32xf32>
    %62 = vector.broadcast %61 : vector<1x32xf32> to vector<128x32xf32>
    %63 = arith.mulf %60, %62 : vector<128x32xf32>
    %64 = arith.addf %53, %63 : vector<128x32xf32>
    %65 = vector.extract_strided_slice %34 {offsets = [1, 0], sizes = [128, 32], strides = [1, 1]} : vector<162x32xf32> to vector<128x32xf32>
    %66 = vector.extract_strided_slice %52 {offsets = [1, 0], sizes = [1, 32], strides = [1, 1]} : vector<9x32xf32> to vector<1x32xf32>
    %67 = vector.broadcast %66 : vector<1x32xf32> to vector<128x32xf32>
    %68 = arith.mulf %65, %67 : vector<128x32xf32>
    %69 = arith.addf %64, %68 : vector<128x32xf32>
    %70 = vector.extract_strided_slice %34 {offsets = [2, 0], sizes = [128, 32], strides = [1, 1]} : vector<162x32xf32> to vector<128x32xf32>
    %c15_i32 = arith.constant 15 : i32
    %71 = vector.broadcast %c15_i32 : i32 to vector<128x1xi32>
    %72 = arith.cmpi ne, %51, %71 : vector<128x1xi32>
    %cst_27 = arith.constant 0.000000e+00 : f32
    %73 = vector.shape_cast %72 : vector<128x1xi1> to vector<128x1xi1>
    %74 = vector.broadcast %73 : vector<128x1xi1> to vector<128x32xi1>
    %75 = vector.broadcast %cst_27 : f32 to vector<128x32xf32>
    %76 = arith.select %74, %70, %75 : vector<128x32xi1>, vector<128x32xf32>
    %77 = vector.extract_strided_slice %52 {offsets = [2, 0], sizes = [1, 32], strides = [1, 1]} : vector<9x32xf32> to vector<1x32xf32>
    %78 = vector.broadcast %77 : vector<1x32xf32> to vector<128x32xf32>
    %79 = arith.mulf %76, %78 : vector<128x32xf32>
    %80 = arith.addf %69, %79 : vector<128x32xf32>
    %81 = vector.extract_strided_slice %34 {offsets = [16, 0], sizes = [128, 32], strides = [1, 1]} : vector<162x32xf32> to vector<128x32xf32>
    %c0_i32_28 = arith.constant 0 : i32
    %82 = vector.broadcast %c0_i32_28 : i32 to vector<128x1xi32>
    %83 = arith.cmpi ne, %51, %82 : vector<128x1xi32>
    %cst_29 = arith.constant 0.000000e+00 : f32
    %84 = vector.shape_cast %83 : vector<128x1xi1> to vector<128x1xi1>
    %85 = vector.broadcast %84 : vector<128x1xi1> to vector<128x32xi1>
    %86 = vector.broadcast %cst_29 : f32 to vector<128x32xf32>
    %87 = arith.select %85, %81, %86 : vector<128x32xi1>, vector<128x32xf32>
    %88 = vector.extract_strided_slice %52 {offsets = [3, 0], sizes = [1, 32], strides = [1, 1]} : vector<9x32xf32> to vector<1x32xf32>
    %89 = vector.broadcast %88 : vector<1x32xf32> to vector<128x32xf32>
    %90 = arith.mulf %87, %89 : vector<128x32xf32>
    %91 = arith.addf %80, %90 : vector<128x32xf32>
    %92 = vector.extract_strided_slice %34 {offsets = [17, 0], sizes = [128, 32], strides = [1, 1]} : vector<162x32xf32> to vector<128x32xf32>
    %93 = vector.extract_strided_slice %52 {offsets = [4, 0], sizes = [1, 32], strides = [1, 1]} : vector<9x32xf32> to vector<1x32xf32>
    %94 = vector.broadcast %93 : vector<1x32xf32> to vector<128x32xf32>
    %95 = arith.mulf %92, %94 : vector<128x32xf32>
    %96 = arith.addf %91, %95 : vector<128x32xf32>
    %97 = vector.extract_strided_slice %34 {offsets = [18, 0], sizes = [128, 32], strides = [1, 1]} : vector<162x32xf32> to vector<128x32xf32>
    %c15_i32_30 = arith.constant 15 : i32
    %98 = vector.broadcast %c15_i32_30 : i32 to vector<128x1xi32>
    %99 = arith.cmpi ne, %51, %98 : vector<128x1xi32>
    %cst_31 = arith.constant 0.000000e+00 : f32
    %100 = vector.shape_cast %99 : vector<128x1xi1> to vector<128x1xi1>
    %101 = vector.broadcast %100 : vector<128x1xi1> to vector<128x32xi1>
    %102 = vector.broadcast %cst_31 : f32 to vector<128x32xf32>
    %103 = arith.select %101, %97, %102 : vector<128x32xi1>, vector<128x32xf32>
    %104 = vector.extract_strided_slice %52 {offsets = [5, 0], sizes = [1, 32], strides = [1, 1]} : vector<9x32xf32> to vector<1x32xf32>
    %105 = vector.broadcast %104 : vector<1x32xf32> to vector<128x32xf32>
    %106 = arith.mulf %103, %105 : vector<128x32xf32>
    %107 = arith.addf %96, %106 : vector<128x32xf32>
    %108 = vector.extract_strided_slice %34 {offsets = [32, 0], sizes = [128, 32], strides = [1, 1]} : vector<162x32xf32> to vector<128x32xf32>
    %c0_i32_32 = arith.constant 0 : i32
    %109 = vector.broadcast %c0_i32_32 : i32 to vector<128x1xi32>
    %110 = arith.cmpi ne, %51, %109 : vector<128x1xi32>
    %cst_33 = arith.constant 0.000000e+00 : f32
    %111 = vector.shape_cast %110 : vector<128x1xi1> to vector<128x1xi1>
    %112 = vector.broadcast %111 : vector<128x1xi1> to vector<128x32xi1>
    %113 = vector.broadcast %cst_33 : f32 to vector<128x32xf32>
    %114 = arith.select %112, %108, %113 : vector<128x32xi1>, vector<128x32xf32>
    %115 = vector.extract_strided_slice %52 {offsets = [6, 0], sizes = [1, 32], strides = [1, 1]} : vector<9x32xf32> to vector<1x32xf32>
    %116 = vector.broadcast %115 : vector<1x32xf32> to vector<128x32xf32>
    %117 = arith.mulf %114, %116 : vector<128x32xf32>
    %118 = arith.addf %107, %117 : vector<128x32xf32>
    %119 = vector.extract_strided_slice %34 {offsets = [33, 0], sizes = [128, 32], strides = [1, 1]} : vector<162x32xf32> to vector<128x32xf32>
    %120 = vector.extract_strided_slice %52 {offsets = [7, 0], sizes = [1, 32], strides = [1, 1]} : vector<9x32xf32> to vector<1x32xf32>
    %121 = vector.broadcast %120 : vector<1x32xf32> to vector<128x32xf32>
    %122 = arith.mulf %119, %121 : vector<128x32xf32>
    %123 = arith.addf %118, %122 : vector<128x32xf32>
    %124 = vector.extract_strided_slice %34 {offsets = [34, 0], sizes = [128, 32], strides = [1, 1]} : vector<162x32xf32> to vector<128x32xf32>
    %c15_i32_34 = arith.constant 15 : i32
    %125 = vector.broadcast %c15_i32_34 : i32 to vector<128x1xi32>
    %126 = arith.cmpi ne, %51, %125 : vector<128x1xi32>
    %cst_35 = arith.constant 0.000000e+00 : f32
    %127 = vector.shape_cast %126 : vector<128x1xi1> to vector<128x1xi1>
    %128 = vector.broadcast %127 : vector<128x1xi1> to vector<128x32xi1>
    %129 = vector.broadcast %cst_35 : f32 to vector<128x32xf32>
    %130 = arith.select %128, %124, %129 : vector<128x32xi1>, vector<128x32xf32>
    %131 = vector.extract_strided_slice %52 {offsets = [8, 0], sizes = [1, 32], strides = [1, 1]} : vector<9x32xf32> to vector<1x32xf32>
    %132 = vector.broadcast %131 : vector<1x32xf32> to vector<128x32xf32>
    %133 = arith.mulf %130, %132 : vector<128x32xf32>
    %134 = arith.addf %123, %133 : vector<128x32xf32>
    %c0_36 = arith.constant 0 : index
    %c0_37 = arith.constant 0 : index
    %135 = vector.load %arg9[%c0_36, %c0_37] : memref<1x32xf32, #tpu.memory_space<vmem>>, vector<1x32xf32>
    %c0_38 = arith.constant 0 : index
    %c0_39 = arith.constant 0 : index
    %136 = vector.load %arg10[%c0_38, %c0_39] : memref<1x32xf32, #tpu.memory_space<vmem>>, vector<1x32xf32>
    %137 = vector.broadcast %135 : vector<1x32xf32> to vector<128x32xf32>
    %138 = arith.mulf %134, %137 : vector<128x32xf32>
    %139 = vector.broadcast %136 : vector<1x32xf32> to vector<128x32xf32>
    %140 = arith.addf %138, %139 : vector<128x32xf32>
    %cst_40 = arith.constant 0.000000e+00 : f32
    %141 = vector.broadcast %cst_40 : f32 to vector<128x32xf32>
    %142 = arith.maximumf %140, %141 : vector<128x32xf32>
    %c0_41 = arith.constant 0 : index
    %c0_42 = arith.constant 0 : index
    %143 = vector.load %arg11[%c0_41, %c0_42] : memref<32x32xf32, #tpu.memory_space<vmem>>, vector<32x32xf32>
    %cst_43 = arith.constant dense<0.000000e+00> : vector<128x32xf32>
    %144 = tpu.matmul %142, %143, %cst_43 {dimension_numbers = #tpu.dot_dimension_numbers<[1], [0], [0], [1], [0, 0, 1, 1], [], []>} : vector<128x32xf32>, vector<32x32xf32>, vector<128x32xf32> -> vector<128x32xf32>
    %c0_44 = arith.constant 0 : index
    %c0_45 = arith.constant 0 : index
    %145 = vector.load %arg12[%c0_44, %c0_45] : memref<1x32xf32, #tpu.memory_space<vmem>>, vector<1x32xf32>
    %c0_46 = arith.constant 0 : index
    %c0_47 = arith.constant 0 : index
    %146 = vector.load %arg13[%c0_46, %c0_47] : memref<1x32xf32, #tpu.memory_space<vmem>>, vector<1x32xf32>
    %147 = vector.broadcast %145 : vector<1x32xf32> to vector<128x32xf32>
    %148 = arith.mulf %144, %147 : vector<128x32xf32>
    %149 = vector.broadcast %146 : vector<1x32xf32> to vector<128x32xf32>
    %150 = arith.addf %148, %149 : vector<128x32xf32>
    %cst_48 = arith.constant 0.000000e+00 : f32
    %151 = vector.broadcast %cst_48 : f32 to vector<128x32xf32>
    %152 = arith.maximumf %150, %151 : vector<128x32xf32>
    %c0_49 = arith.constant 0 : index
    %c0_50 = arith.constant 0 : index
    %153 = vector.load %arg14[%c0_49, %c0_50] : memref<32x8xf32, #tpu.memory_space<vmem>>, vector<32x8xf32>
    %cst_51 = arith.constant dense<0.000000e+00> : vector<128x8xf32>
    %154 = tpu.matmul %152, %153, %cst_51 {dimension_numbers = #tpu.dot_dimension_numbers<[1], [0], [0], [1], [0, 0, 1, 1], [], []>} : vector<128x32xf32>, vector<32x8xf32>, vector<128x8xf32> -> vector<128x8xf32>
    %c0_52 = arith.constant 0 : index
    %c0_53 = arith.constant 0 : index
    %155 = vector.load %arg15[%c0_52, %c0_53] : memref<1x8xf32, #tpu.memory_space<vmem>>, vector<1x8xf32>
    %156 = vector.broadcast %155 : vector<1x8xf32> to vector<128x8xf32>
    %157 = arith.mulf %154, %156 : vector<128x8xf32>
    %c0_54 = arith.constant 0 : index
    %c0_55 = arith.constant 0 : index
    %158 = vector.load %arg16[%c0_54, %c0_55] : memref<1x8xf32, #tpu.memory_space<vmem>>, vector<1x8xf32>
    %159 = vector.broadcast %158 : vector<1x8xf32> to vector<128x8xf32>
    %160 = arith.addf %157, %159 : vector<128x8xf32>
    %161 = arith.addf %160, %5 : vector<128x8xf32>
    %c0_56 = arith.constant 0 : index
    %c0_57 = arith.constant 0 : index
    %c0_58 = arith.constant 0 : index
    %162 = vector.load %arg17[%c0_56, %c0_57, %c0_58] : memref<1x128x4xf32, #tpu.memory_space<vmem>>, vector<1x128x4xf32>
    %163 = vector.shape_cast %162 : vector<1x128x4xf32> to vector<128x4xf32>
    %c0_59 = arith.constant 0 : index
    %c0_60 = arith.constant 0 : index
    %164 = vector.load %arg18[%c0_59, %c0_60] : memref<4x8xf32, #tpu.memory_space<vmem>>, vector<4x8xf32>
    %cst_61 = arith.constant dense<0.000000e+00> : vector<128x8xf32>
    %165 = tpu.matmul %163, %164, %cst_61 {dimension_numbers = #tpu.dot_dimension_numbers<[1], [0], [0], [1], [0, 0, 1, 1], [], []>} : vector<128x4xf32>, vector<4x8xf32>, vector<128x8xf32> -> vector<128x8xf32>
    %166 = arith.addf %161, %165 : vector<128x8xf32>
    %c0_62 = arith.constant 0 : index
    %c0_63 = arith.constant 0 : index
    %c0_64 = arith.constant 0 : index
    %167 = vector.load %arg19[%c0_62, %c0_63, %c0_64] : memref<1x128x8xf32, #tpu.memory_space<vmem>>, vector<1x128x8xf32>
    %168 = vector.shape_cast %167 : vector<1x128x8xf32> to vector<128x8xf32>
    %169 = vector.shape_cast %166 : vector<128x8xf32> to vector<1x128x8xf32>
    tpu.vector_store %arg19[%c0_62, %c0_63, %c0_64], %169 {strides = array<i32>} : memref<1x128x8xf32, #tpu.memory_space<vmem>>, vector<1x128x8xf32>,
    return
  }
  func.func @transform_0(%arg0: i32, %arg1: i32) -> (i32, i32, i32) {
    %c1_i32 = arith.constant 1 : i32
    %0 = arith.subi %arg1, %c1_i32 : i32
    %c0_i32 = arith.constant 0 : i32
    %1 = arith.maxsi %0, %c0_i32 : i32
    %c0_i32_0 = arith.constant 0 : i32
    %c0_i32_1 = arith.constant 0 : i32
    return %arg0, %1, %c0_i32_0 : i32, i32, i32
  }
  func.func @transform_1(%arg0: i32, %arg1: i32) -> (i32, i32, i32) {
    %c0_i32 = arith.constant 0 : i32
    %c0_i32_0 = arith.constant 0 : i32
    return %arg0, %arg1, %c0_i32 : i32, i32, i32
  }
  func.func @transform_2(%arg0: i32, %arg1: i32) -> (i32, i32, i32) {
    %c1_i32 = arith.constant 1 : i32
    %0 = arith.addi %arg1, %c1_i32 : i32
    %c1_i32_0 = arith.constant 1 : i32
    %1 = arith.minsi %0, %c1_i32_0 : i32
    %c0_i32 = arith.constant 0 : i32
    %c0_i32_1 = arith.constant 0 : i32
    return %arg0, %1, %c0_i32 : i32, i32, i32
  }
  func.func @transform_3(%arg0: i32, %arg1: i32) -> (i32, i32) {
    %c0_i32 = arith.constant 0 : i32
    %c0_i32_0 = arith.constant 0 : i32
    %c0_i32_1 = arith.constant 0 : i32
    return %c0_i32, %c0_i32_0 : i32, i32
  }
  func.func @transform_4(%arg0: i32, %arg1: i32) -> (i32, i32) {
    %c0_i32 = arith.constant 0 : i32
    %c0_i32_0 = arith.constant 0 : i32
    %c0_i32_1 = arith.constant 0 : i32
    return %c0_i32, %c0_i32_0 : i32, i32
  }
  func.func @transform_5(%arg0: i32, %arg1: i32) -> (i32, i32) {
    %c0_i32 = arith.constant 0 : i32
    %c0_i32_0 = arith.constant 0 : i32
    %c0_i32_1 = arith.constant 0 : i32
    return %c0_i32, %c0_i32_0 : i32, i32
  }
  func.func @transform_6(%arg0: i32, %arg1: i32) -> (i32, i32) {
    %c0_i32 = arith.constant 0 : i32
    %c0_i32_0 = arith.constant 0 : i32
    %c0_i32_1 = arith.constant 0 : i32
    return %c0_i32, %c0_i32_0 : i32, i32
  }
  func.func @transform_7(%arg0: i32, %arg1: i32) -> (i32, i32) {
    %c0_i32 = arith.constant 0 : i32
    %c0_i32_0 = arith.constant 0 : i32
    %c0_i32_1 = arith.constant 0 : i32
    return %c0_i32, %c0_i32_0 : i32, i32
  }
  func.func @transform_8(%arg0: i32, %arg1: i32) -> (i32, i32) {
    %c0_i32 = arith.constant 0 : i32
    %c0_i32_0 = arith.constant 0 : i32
    %c0_i32_1 = arith.constant 0 : i32
    return %c0_i32, %c0_i32_0 : i32, i32
  }
  func.func @transform_9(%arg0: i32, %arg1: i32) -> (i32, i32) {
    %c0_i32 = arith.constant 0 : i32
    %c0_i32_0 = arith.constant 0 : i32
    %c0_i32_1 = arith.constant 0 : i32
    return %c0_i32, %c0_i32_0 : i32, i32
  }
  func.func @transform_10(%arg0: i32, %arg1: i32) -> (i32, i32) {
    %c0_i32 = arith.constant 0 : i32
    %c0_i32_0 = arith.constant 0 : i32
    %c0_i32_1 = arith.constant 0 : i32
    return %c0_i32, %c0_i32_0 : i32, i32
  }
  func.func @transform_11(%arg0: i32, %arg1: i32) -> (i32, i32) {
    %c0_i32 = arith.constant 0 : i32
    %c0_i32_0 = arith.constant 0 : i32
    %c0_i32_1 = arith.constant 0 : i32
    return %c0_i32, %c0_i32_0 : i32, i32
  }
  func.func @transform_12(%arg0: i32, %arg1: i32) -> (i32, i32) {
    %c0_i32 = arith.constant 0 : i32
    %c0_i32_0 = arith.constant 0 : i32
    %c0_i32_1 = arith.constant 0 : i32
    return %c0_i32, %c0_i32_0 : i32, i32
  }
  func.func @transform_13(%arg0: i32, %arg1: i32) -> (i32, i32) {
    %c0_i32 = arith.constant 0 : i32
    %c0_i32_0 = arith.constant 0 : i32
    %c0_i32_1 = arith.constant 0 : i32
    return %c0_i32, %c0_i32_0 : i32, i32
  }
  func.func @transform_14(%arg0: i32, %arg1: i32) -> (i32, i32) {
    %c0_i32 = arith.constant 0 : i32
    %c0_i32_0 = arith.constant 0 : i32
    %c0_i32_1 = arith.constant 0 : i32
    return %c0_i32, %c0_i32_0 : i32, i32
  }
  func.func @transform_15(%arg0: i32, %arg1: i32) -> (i32, i32, i32) {
    %c0_i32 = arith.constant 0 : i32
    %c0_i32_0 = arith.constant 0 : i32
    return %arg0, %arg1, %c0_i32 : i32, i32, i32
  }
  func.func @transform_16(%arg0: i32, %arg1: i32) -> (i32, i32) {
    %c0_i32 = arith.constant 0 : i32
    %c0_i32_0 = arith.constant 0 : i32
    %c0_i32_1 = arith.constant 0 : i32
    return %c0_i32, %c0_i32_0 : i32, i32
  }
  func.func @transform_17(%arg0: i32, %arg1: i32) -> (i32, i32, i32) {
    %c0_i32 = arith.constant 0 : i32
    %c0_i32_0 = arith.constant 0 : i32
    return %arg0, %arg1, %c0_i32 : i32, i32, i32
  }
}

</mosaic_0001>

<llo_original>
// kernel: block_forward.5
$region0: #{block_forward.5}
  #allocation0 [shape = 'u32[]', space=smem, size = 0x4, offset = 0x4, fixed_abs, tag = 'smem constant byte address 0x4 - core index']
  #allocation1 [shape = 'u32[144,128]{1,0:T(1,128)}', space=vmem, size = 0x12000, scoped, tag = 'internal scratch']
  %s0 = inlined_call_operand.vmem [shape: f32[2,256,8], index: 0, kind: input, shape index: {}, may-alias: {0,1,2}]
  %s1 = inlined_call_operand.vmem [shape: f32[2,256,8], index: 1, kind: input, shape index: {}, may-alias: {0,1,2}]
  %s2 = inlined_call_operand.vmem [shape: f32[2,256,8], index: 2, kind: input, shape index: {}, may-alias: {0,1,2}]
  %s3 = inlined_call_operand.vmem [shape: f32[8,32], index: 3, kind: input, shape index: {}]
  %s4 = inlined_call_operand.vmem [shape: f32[1,32], index: 4, kind: input, shape index: {}]
  %s5 = inlined_call_operand.vmem [shape: f32[1,32], index: 5, kind: input, shape index: {}]
  %s6 = inlined_call_operand.vmem [shape: f32[9,32], index: 6, kind: input, shape index: {}]
  %s7 = inlined_call_operand.vmem [shape: f32[1,32], index: 7, kind: input, shape index: {}]
  %s8 = inlined_call_operand.vmem [shape: f32[1,32], index: 8, kind: input, shape index: {}]
  %s9 = inlined_call_operand.vmem [shape: f32[32,32], index: 9, kind: input, shape index: {}]
  %s10 = inlined_call_operand.vmem [shape: f32[1,32], index: 10, kind: input, shape index: {}]
  %s11 = inlined_call_operand.vmem [shape: f32[1,32], index: 11, kind: input, shape index: {}]
  %s12 = inlined_call_operand.vmem [shape: f32[32,8], index: 12, kind: input, shape index: {}]
  %s13 = inlined_call_operand.vmem [shape: f32[1,8], index: 13, kind: input, shape index: {}]
  %s14 = inlined_call_operand.vmem [shape: f32[1,8], index: 14, kind: input, shape index: {}]
  %s15 = inlined_call_operand.vmem [shape: f32[2,256,4], index: 15, kind: input, shape index: {}]
  %s16 = inlined_call_operand.vmem [shape: f32[4,8], index: 16, kind: input, shape index: {}]
  %s17 = inlined_call_operand.vmem [shape: f32[2,256,8], index: 17, kind: output, shape index: {}]
  %s18 = sld [smem:[#allocation0]]
  $region101: #{block_forward.5} parent=0
    _
  %s20 = ssub.s32 1, %s18
  %s21 = scalar_select 0, %s20, %s18
  loop: start=0, step=1, limit=6
  $region2: #{block_forward.5} parent=0 // loop_pre_header
    _
  $region3: #{block_forward.5} parent=0 // loop_header
    %s23 = sphi 0, %s27
    %p24 = scmp.ge.s32.totalorder %s23, 6
    %s30 = sphi 0, %s42
    %s31 = sphi 0, %s38
    %s32 = sphi 0, %s30
    %s33 = sphi 0, %s31
    %s34 = sphi 0, %s32
    %s35 = sphi 0, %s33
    %s53 = sphi 0, %s55
    %s56 = sphi 0, %s53
    %s57 = sphi 0, %s56
    %s73 = sphi 0, %s57
    %s81 = sphi 0, %s83
    %s84 = sphi 0, %s81
    %s85 = sphi 0, %s84
    %s101 = sphi 0, %s85
    %s115 = sphi 0, %s117
    %s118 = sphi 0, %s115
    %s119 = sphi 0, %s118
    %s135 = sphi 0, %s119
    %s139 = sphi 0, %s139
    %s141 = sphi 0, %s139
    %s142 = sphi 0, %s141
    %s156 = sphi 0, %s142
    %s160 = sphi 0, %s160
    %s162 = sphi 0, %s160
    %s163 = sphi 0, %s162
    %s177 = sphi 0, %s163
    %s181 = sphi 0, %s181
    %s183 = sphi 0, %s181
    %s184 = sphi 0, %s183
    %s198 = sphi 0, %s184
    %s202 = sphi 0, %s202
    %s204 = sphi 0, %s202
    %s205 = sphi 0, %s204
    %s219 = sphi 0, %s205
    %s223 = sphi 0, %s223
    %s225 = sphi 0, %s223
    %s226 = sphi 0, %s225
    %s240 = sphi 0, %s226
    %s244 = sphi 0, %s244
    %s246 = sphi 0, %s244
    %s247 = sphi 0, %s246
    %s261 = sphi 0, %s247
    %s265 = sphi 0, %s265
    %s267 = sphi 0, %s265
    %s268 = sphi 0, %s267
    %s282 = sphi 0, %s268
    %s286 = sphi 0, %s286
    %s288 = sphi 0, %s286
    %s289 = sphi 0, %s288
    %s303 = sphi 0, %s289
    %s307 = sphi 0, %s307
    %s309 = sphi 0, %s307
    %s310 = sphi 0, %s309
    %s324 = sphi 0, %s310
    %s328 = sphi 0, %s328
    %s330 = sphi 0, %s328
    %s331 = sphi 0, %s330
    %s345 = sphi 0, %s331
    %s349 = sphi 0, %s349
    %s351 = sphi 0, %s349
    %s352 = sphi 0, %s351
    %s366 = sphi 0, %s352
    %s370 = sphi 0, %s370
    %s372 = sphi 0, %s370
    %s373 = sphi 0, %s372
    %s387 = sphi 0, %s373
    %s395 = sphi 0, %s397
    %s398 = sphi 0, %s395
    %s399 = sphi 0, %s398
    %s415 = sphi 0, %s399
    %s419 = sphi 0, %s419
    %s421 = sphi 0, %s419
    %s422 = sphi 0, %s421
    %s436 = sphi 0, %s422
    %s444 = sphi 0, %s446
    %s447 = sphi 0, %s444
    %s448 = sphi 0, %s447
    %s464 = sphi 0, %s448
  $region4: #{block_forward.5} parent=0 // loop_header_branch
    %26 = sbr.rel (%p24) target = $region8
  $region5: #{block_forward.5} parent=0 // loop_body
    %s28 = ssub.s32 %s23, 1
    %s29 = ssub.s32 %s23, 2
    %s36 = sadd.s32 1, %s31
    %p37 = scmp.ge.s32.totalorder %s36, 2
    %s38 = scalar_select %p37, 0, %s36
    %s39 = sadd.s32 1, %s30
    %s40 = scalar_select %p37, %s39, %s30
    %p41 = scmp.ge.s32.totalorder %s40, 2
    %s42 = scalar_select %p41, 0, %s40
    %s43 = ssub.s32 %s31, 1
    %p44 = scmp.gt.s32.totalorder %s43, 0
    %s45 = scalar_select %p44, %s43, 0
    %s46 = ssub.s32 %s38, 1
    %p47 = scmp.gt.s32.totalorder %s46, 0
    %s48 = scalar_select %p47, %s46, 0
    %s49 = ssub.s32 %s30, %s42
    %s50 = ssub.s32 %s45, %s48
    %s51 = sor.u32 %s49, %s50
    %p52 = scmp.eq.s32.totalorder %s51, 0
    %s54 = sadd.s32 %s53, 1
    %s55 = scalar_select %p52, %s53, %s54
    %p58 = pneg %p52
    %p59 = scmp.eq.s32.totalorder %s23, 3
    %p60 = por %p58, %p59
    %p61 = scmp.ne.s32.totalorder %s53, %s56
    %p62 = scmp.eq.s32.totalorder %s23, 0
    %p63 = por %p61, %p62
    %p64 = scmp.ne.s32.totalorder %s53, %s56
    %p65 = scmp.eq.s32.totalorder %s28, 3
    %p66 = por %p64, %p65
    %p67 = scmp.ne.s32.totalorder %s56, %s57
    %p68 = scmp.eq.s32.totalorder %s28, 0
    %p69 = por %p67, %p68
    %p70 = scmp.ne.s32.totalorder %s56, %s57
    %p71 = scmp.eq.s32.totalorder %s29, 3
    %p72 = por %p70, %p71
    %p74 = scmp.ne.s32.totalorder %s57, %s73
    %p75 = scmp.eq.s32.totalorder %s29, 0
    %p76 = por %p74, %p75
    %s77 = ssub.s32 %s30, %s42
    %s78 = ssub.s32 %s31, %s38
    %s79 = sor.u32 %s77, %s78
    %p80 = scmp.eq.s32.totalorder %s79, 0
    %s82 = sadd.s32 %s81, 1
    %s83 = scalar_select %p80, %s81, %s82
    %p86 = pneg %p80
    %p87 = scmp.eq.s32.totalorder %s23, 3
    %p88 = por %p86, %p87
    %p89 = scmp.ne.s32.totalorder %s81, %s84
    %p90 = scmp.eq.s32.totalorder %s23, 0
    %p91 = por %p89, %p90
    %p92 = scmp.ne.s32.totalorder %s81, %s84
    %p93 = scmp.eq.s32.totalorder %s28, 3
    %p94 = por %p92, %p93
    %p95 = scmp.ne.s32.totalorder %s84, %s85
    %p96 = scmp.eq.s32.totalorder %s28, 0
    %p97 = por %p95, %p96
    %p98 = scmp.ne.s32.totalorder %s84, %s85
    %p99 = scmp.eq.s32.totalorder %s29, 3
    %p100 = por %p98, %p99
    %p102 = scmp.ne.s32.totalorder %s85, %s101
    %p103 = scmp.eq.s32.totalorder %s29, 0
    %p104 = por %p102, %p103
    %s105 = sadd.s32 %s31, 1
    %p106 = scmp.lt.s32.totalorder %s105, 1
    %s107 = scalar_select %p106, %s105, 1
    %s108 = sadd.s32 %s38, 1
    %p109 = scmp.lt.s32.totalorder %s108, 1
    %s110 = scalar_select %p109, %s108, 1
    %s111 = ssub.s32 %s30, %s42
    %s112 = ssub.s32 %s107, %s110
    %s113 = sor.u32 %s111, %s112
    %p114 = scmp.eq.s32.totalorder %s113, 0
    %s116 = sadd.s32 %s115, 1
    %s117 = scalar_select %p114, %s115, %s116
    %p120 = pneg %p114
    %p121 = scmp.eq.s32.totalorder %s23, 3
    %p122 = por %p120, %p121
    %p123 = scmp.ne.s32.totalorder %s115, %s118
    %p124 = scmp.eq.s32.totalorder %s23, 0
    %p125 = por %p123, %p124
    %p126 = scmp.ne.s32.totalorder %s115, %s118
    %p127 = scmp.eq.s32.totalorder %s28, 3
    %p128 = por %p126, %p127
    %p129 = scmp.ne.s32.totalorder %s118, %s119
    %p130 = scmp.eq.s32.totalorder %s28, 0
    %p131 = por %p129, %p130
    %p132 = scmp.ne.s32.totalorder %s118, %s119
    %p133 = scmp.eq.s32.totalorder %s29, 3
    %p134 = por %p132, %p133
    %p136 = scmp.ne.s32.totalorder %s119, %s135
    %p137 = scmp.eq.s32.totalorder %s29, 0
    %p138 = por %p136, %p137
    %s140 = sadd.s32 %s139, 1
    %p143 = scmp.eq.s32.totalorder %s23, 3
    %p144 = scmp.ne.s32.totalorder %s139, %s141
    %p145 = scmp.eq.s32.totalorder %s23, 0
    %p146 = por %p144, %p145
    %p147 = scmp.ne.s32.totalorder %s139, %s141
    %p148 = scmp.eq.s32.totalorder %s28, 3
    %p149 = por %p147, %p148
    %p150 = scmp.ne.s32.totalorder %s141, %s142
    %p151 = scmp.eq.s32.totalorder %s28, 0
    %p152 = por %p150, %p151
    %p153 = scmp.ne.s32.totalorder %s141, %s142
    %p154 = scmp.eq.s32.totalorder %s29, 3
    %p155 = por %p153, %p154
    %p157 = scmp.ne.s32.totalorder %s142, %s156
    %p158 = scmp.eq.s32.totalorder %s29, 0
    %p159 = por %p157, %p158
    %s161 = sadd.s32 %s160, 1
    %p164 = scmp.eq.s32.totalorder %s23, 3
    %p165 = scmp.ne.s32.totalorder %s160, %s162
    %p166 = scmp.eq.s32.totalorder %s23, 0
    %p167 = por %p165, %p166
    %p168 = scmp.ne.s32.totalorder %s160, %s162
    %p169 = scmp.eq.s32.totalorder %s28, 3
    %p170 = por %p168, %p169
    %p171 = scmp.ne.s32.totalorder %s162, %s163
    %p172 = scmp.eq.s32.totalorder %s28, 0
    %p173 = por %p171, %p172
    %p174 = scmp.ne.s32.totalorder %s162, %s163
    %p175 = scmp.eq.s32.totalorder %s29, 3
    %p176 = por %p174, %p175
    %p178 = scmp.ne.s32.totalorder %s163, %s177
    %p179 = scmp.eq.s32.totalorder %s29, 0
    %p180 = por %p178, %p179
    %s182 = sadd.s32 %s181, 1
    %p185 = scmp.eq.s32.totalorder %s23, 3
    %p186 = scmp.ne.s32.totalorder %s181, %s183
    %p187 = scmp.eq.s32.totalorder %s23, 0
    %p188 = por %p186, %p187
    %p189 = scmp.ne.s32.totalorder %s181, %s183
    %p190 = scmp.eq.s32.totalorder %s28, 3
    %p191 = por %p189, %p190
    %p192 = scmp.ne.s32.totalorder %s183, %s184
    %p193 = scmp.eq.s32.totalorder %s28, 0
    %p194 = por %p192, %p193
    %p195 = scmp.ne.s32.totalorder %s183, %s184
    %p196 = scmp.eq.s32.totalorder %s29, 3
    %p197 = por %p195, %p196
    %p199 = scmp.ne.s32.totalorder %s184, %s198
    %p200 = scmp.eq.s32.totalorder %s29, 0
    %p201 = por %p199, %p200
    %s203 = sadd.s32 %s202, 1
    %p206 = scmp.eq.s32.totalorder %s23, 3
    %p207 = scmp.ne.s32.totalorder %s202, %s204
    %p208 = scmp.eq.s32.totalorder %s23, 0
    %p209 = por %p207, %p208
    %p210 = scmp.ne.s32.totalorder %s202, %s204
    %p211 = scmp.eq.s32.totalorder %s28, 3
    %p212 = por %p210, %p211
    %p213 = scmp.ne.s32.totalorder %s204, %s205
    %p214 = scmp.eq.s32.totalorder %s28, 0
    %p215 = por %p213, %p214
    %p216 = scmp.ne.s32.totalorder %s204, %s205
    %p217 = scmp.eq.s32.totalorder %s29, 3
    %p218 = por %p216, %p217
    %p220 = scmp.ne.s32.totalorder %s205, %s219
    %p221 = scmp.eq.s32.totalorder %s29, 0
    %p222 = por %p220, %p221
    %s224 = sadd.s32 %s223, 1
    %p227 = scmp.eq.s32.totalorder %s23, 3
    %p228 = scmp.ne.s32.totalorder %s223, %s225
    %p229 = scmp.eq.s32.totalorder %s23, 0
    %p230 = por %p228, %p229
    %p231 = scmp.ne.s32.totalorder %s223, %s225
    %p232 = scmp.eq.s32.totalorder %s28, 3
    %p233 = por %p231, %p232
    %p234 = scmp.ne.s32.totalorder %s225, %s226
    %p235 = scmp.eq.s32.totalorder %s28, 0
    %p236 = por %p234, %p235
    %p237 = scmp.ne.s32.totalorder %s225, %s226
    %p238 = scmp.eq.s32.totalorder %s29, 3
    %p239 = por %p237, %p238
    %p241 = scmp.ne.s32.totalorder %s226, %s240
    %p242 = scmp.eq.s32.totalorder %s29, 0
    %p243 = por %p241, %p242
    %s245 = sadd.s32 %s244, 1
    %p248 = scmp.eq.s32.totalorder %s23, 3
    %p249 = scmp.ne.s32.totalorder %s244, %s246
    %p250 = scmp.eq.s32.totalorder %s23, 0
    %p251 = por %p249, %p250
    %p252 = scmp.ne.s32.totalorder %s244, %s246
    %p253 = scmp.eq.s32.totalorder %s28, 3
    %p254 = por %p252, %p253
    %p255 = scmp.ne.s32.totalorder %s246, %s247
    %p256 = scmp.eq.s32.totalorder %s28, 0
    %p257 = por %p255, %p256
    %p258 = scmp.ne.s32.totalorder %s246, %s247
    %p259 = scmp.eq.s32.totalorder %s29, 3
    %p260 = por %p258, %p259
    %p262 = scmp.ne.s32.totalorder %s247, %s261
    %p263 = scmp.eq.s32.totalorder %s29, 0
    %p264 = por %p262, %p263
    %s266 = sadd.s32 %s265, 1
    %p269 = scmp.eq.s32.totalorder %s23, 3
    %p270 = scmp.ne.s32.totalorder %s265, %s267
    %p271 = scmp.eq.s32.totalorder %s23, 0
    %p272 = por %p270, %p271
    %p273 = scmp.ne.s32.totalorder %s265, %s267
    %p274 = scmp.eq.s32.totalorder %s28, 3
    %p275 = por %p273, %p274
    %p276 = scmp.ne.s32.totalorder %s267, %s268
    %p277 = scmp.eq.s32.totalorder %s28, 0
    %p278 = por %p276, %p277
    %p279 = scmp.ne.s32.totalorder %s267, %s268
    %p280 = scmp.eq.s32.totalorder %s29, 3
    %p281 = por %p279, %p280
    %p283 = scmp.ne.s32.totalorder %s268, %s282
    %p284 = scmp.eq.s32.totalorder %s29, 0
    %p285 = por %p283, %p284
    %s287 = sadd.s32 %s286, 1
    %p290 = scmp.eq.s32.totalorder %s23, 3
    %p291 = scmp.ne.s32.totalorder %s286, %s288
    %p292 = scmp.eq.s32.totalorder %s23, 0
    %p293 = por %p291, %p292
    %p294 = scmp.ne.s32.totalorder %s286, %s288
    %p295 = scmp.eq.s32.totalorder %s28, 3
    %p296 = por %p294, %p295
    %p297 = scmp.ne.s32.totalorder %s288, %s289
    %p298 = scmp.eq.s32.totalorder %s28, 0
    %p299 = por %p297, %p298
    %p300 = scmp.ne.s32.totalorder %s288, %s289
    %p301 = scmp.eq.s32.totalorder %s29, 3
    %p302 = por %p300, %p301
    %p304 = scmp.ne.s32.totalorder %s289, %s303
    %p305 = scmp.eq.s32.totalorder %s29, 0
    %p306 = por %p304, %p305
    %s308 = sadd.s32 %s307, 1
    %p311 = scmp.eq.s32.totalorder %s23, 3
    %p312 = scmp.ne.s32.totalorder %s307, %s309
    %p313 = scmp.eq.s32.totalorder %s23, 0
    %p314 = por %p312, %p313
    %p315 = scmp.ne.s32.totalorder %s307, %s309
    %p316 = scmp.eq.s32.totalorder %s28, 3
    %p317 = por %p315, %p316
    %p318 = scmp.ne.s32.totalorder %s309, %s310
    %p319 = scmp.eq.s32.totalorder %s28, 0
    %p320 = por %p318, %p319
    %p321 = scmp.ne.s32.totalorder %s309, %s310
    %p322 = scmp.eq.s32.totalorder %s29, 3
    %p323 = por %p321, %p322
    %p325 = scmp.ne.s32.totalorder %s310, %s324
    %p326 = scmp.eq.s32.totalorder %s29, 0
    %p327 = por %p325, %p326
    %s329 = sadd.s32 %s328, 1
    %p332 = scmp.eq.s32.totalorder %s23, 3
    %p333 = scmp.ne.s32.totalorder %s328, %s330
    %p334 = scmp.eq.s32.totalorder %s23, 0
    %p335 = por %p333, %p334
    %p336 = scmp.ne.s32.totalorder %s328, %s330
    %p337 = scmp.eq.s32.totalorder %s28, 3
    %p338 = por %p336, %p337
    %p339 = scmp.ne.s32.totalorder %s330, %s331
    %p340 = scmp.eq.s32.totalorder %s28, 0
    %p341 = por %p339, %p340
    %p342 = scmp.ne.s32.totalorder %s330, %s331
    %p343 = scmp.eq.s32.totalorder %s29, 3
    %p344 = por %p342, %p343
    %p346 = scmp.ne.s32.totalorder %s331, %s345
    %p347 = scmp.eq.s32.totalorder %s29, 0
    %p348 = por %p346, %p347
    %s350 = sadd.s32 %s349, 1
    %p353 = scmp.eq.s32.totalorder %s23, 3
    %p354 = scmp.ne.s32.totalorder %s349, %s351
    %p355 = scmp.eq.s32.totalorder %s23, 0
    %p356 = por %p354, %p355
    %p357 = scmp.ne.s32.totalorder %s349, %s351
    %p358 = scmp.eq.s32.totalorder %s28, 3
    %p359 = por %p357, %p358
    %p360 = scmp.ne.s32.totalorder %s351, %s352
    %p361 = scmp.eq.s32.totalorder %s28, 0
    %p362 = por %p360, %p361
    %p363 = scmp.ne.s32.totalorder %s351, %s352
    %p364 = scmp.eq.s32.totalorder %s29, 3
    %p365 = por %p363, %p364
    %p367 = scmp.ne.s32.totalorder %s352, %s366
    %p368 = scmp.eq.s32.totalorder %s29, 0
    %p369 = por %p367, %p368
    %s371 = sadd.s32 %s370, 1
    %p374 = scmp.eq.s32.totalorder %s23, 3
    %p375 = scmp.ne.s32.totalorder %s370, %s372
    %p376 = scmp.eq.s32.totalorder %s23, 0
    %p377 = por %p375, %p376
    %p378 = scmp.ne.s32.totalorder %s370, %s372
    %p379 = scmp.eq.s32.totalorder %s28, 3
    %p380 = por %p378, %p379
    %p381 = scmp.ne.s32.totalorder %s372, %s373
    %p382 = scmp.eq.s32.totalorder %s28, 0
    %p383 = por %p381, %p382
    %p384 = scmp.ne.s32.totalorder %s372, %s373
    %p385 = scmp.eq.s32.totalorder %s29, 3
    %p386 = por %p384, %p385
    %p388 = scmp.ne.s32.totalorder %s373, %s387
    %p389 = scmp.eq.s32.totalorder %s29, 0
    %p390 = por %p388, %p389
    %s391 = ssub.s32 %s30, %s42
    %s392 = ssub.s32 %s31, %s38
    %s393 = sor.u32 %s391, %s392
    %p394 = scmp.eq.s32.totalorder %s393, 0
    %s396 = sadd.s32 %s395, 1
    %s397 = scalar_select %p394, %s395, %s396
    %p400 = pneg %p394
    %p401 = scmp.eq.s32.totalorder %s23, 3
    %p402 = por %p400, %p401
    %p403 = scmp.ne.s32.totalorder %s395, %s398
    %p404 = scmp.eq.s32.totalorder %s23, 0
    %p405 = por %p403, %p404
    %p406 = scmp.ne.s32.totalorder %s395, %s398
    %p407 = scmp.eq.s32.totalorder %s28, 3
    %p408 = por %p406, %p407
    %p409 = scmp.ne.s32.totalorder %s398, %s399
    %p410 = scmp.eq.s32.totalorder %s28, 0
    %p411 = por %p409, %p410
    %p412 = scmp.ne.s32.totalorder %s398, %s399
    %p413 = scmp.eq.s32.totalorder %s29, 3
    %p414 = por %p412, %p413
    %p416 = scmp.ne.s32.totalorder %s399, %s415
    %p417 = scmp.eq.s32.totalorder %s29, 0
    %p418 = por %p416, %p417
    %s420 = sadd.s32 %s419, 1
    %p423 = scmp.eq.s32.totalorder %s23, 3
    %p424 = scmp.ne.s32.totalorder %s419, %s421
    %p425 = scmp.eq.s32.totalorder %s23, 0
    %p426 = por %p424, %p425
    %p427 = scmp.ne.s32.totalorder %s419, %s421
    %p428 = scmp.eq.s32.totalorder %s28, 3
    %p429 = por %p427, %p428
    %p430 = scmp.ne.s32.totalorder %s421, %s422
    %p431 = scmp.eq.s32.totalorder %s28, 0
    %p432 = por %p430, %p431
    %p433 = scmp.ne.s32.totalorder %s421, %s422
    %p434 = scmp.eq.s32.totalorder %s29, 3
    %p435 = por %p433, %p434
    %p437 = scmp.ne.s32.totalorder %s422, %s436
    %p438 = scmp.eq.s32.totalorder %s29, 0
    %p439 = por %p437, %p438
    %s440 = ssub.s32 %s30, %s42
    %s441 = ssub.s32 %s31, %s38
    %s442 = sor.u32 %s440, %s441
    %p443 = scmp.eq.s32.totalorder %s442, 0
    %s445 = sadd.s32 %s444, 1
    %s446 = scalar_select %p443, %s444, %s445
    %p449 = pneg %p443
    %p450 = scmp.eq.s32.totalorder %s23, 3
    %p451 = por %p449, %p450
    %p452 = scmp.ne.s32.totalorder %s444, %s447
    %p453 = scmp.eq.s32.totalorder %s23, 0
    %p454 = por %p452, %p453
    %p455 = scmp.ne.s32.totalorder %s444, %s447
    %p456 = scmp.eq.s32.totalorder %s28, 3
    %p457 = por %p455, %p456
    %p458 = scmp.ne.s32.totalorder %s447, %s448
    %p459 = scmp.eq.s32.totalorder %s28, 0
    %p460 = por %p458, %p459
    %p461 = scmp.ne.s32.totalorder %s447, %s448
    %p462 = scmp.eq.s32.totalorder %s29, 3
    %p463 = por %p461, %p462
    %p465 = scmp.ne.s32.totalorder %s448, %s464
    %p466 = scmp.eq.s32.totalorder %s29, 0
    %p467 = por %p465, %p466
    %p468 = scmp.le.s32.totalorder 1, %s23
    %p469 = scmp.lt.s32.totalorder %s23, 5
    %p470 = pnand %p468, %p469
    %p471 = pneg %p470
    // Predicated region
    $region9: #{block_forward.5} parent=5 // pred_check
      _
    $region10: #{block_forward.5} parent=5 // pred_check_branch
      %473 = sbr.rel (%p470) target = $region12
    $region11: #{block_forward.5} parent=5 // pred_region
      %s474 = ssub.s32 %s23, 1
      // Predicated region
      $region13: #{block_forward.5} parent=11 // pred_check
        %p475 = pneg %p152
      $region14: #{block_forward.5} parent=11 // pred_check_branch
        %477 = sbr.rel (%p475) target = $region16
      $region15: #{block_forward.5} parent=11 // pred_region
        _
      $region16: #{block_forward.5} parent=11 // pred_fallthru
        _
      // Predicated region
      $region17: #{block_forward.5} parent=11 // pred_check
        %p478 = pneg %p173
      $region18: #{block_forward.5} parent=11 // pred_check_branch
        %480 = sbr.rel (%p478) target = $region20
      $region19: #{block_forward.5} parent=11 // pred_region
        _
      $region20: #{block_forward.5} parent=11 // pred_fallthru
        _
      // Predicated region
      $region21: #{block_forward.5} parent=11 // pred_check
        %p481 = pneg %p194
      $region22: #{block_forward.5} parent=11 // pred_check_branch
        %483 = sbr.rel (%p481) target = $region24
      $region23: #{block_forward.5} parent=11 // pred_region
        _
      $region24: #{block_forward.5} parent=11 // pred_fallthru
        _
      // Predicated region
      $region25: #{block_forward.5} parent=11 // pred_check
        %p484 = pneg %p215
      $region26: #{block_forward.5} parent=11 // pred_check_branch
        %486 = sbr.rel (%p484) target = $region28
      $region27: #{block_forward.5} parent=11 // pred_region
        _
      $region28: #{block_forward.5} parent=11 // pred_fallthru
        _
      // Predicated region
      $region29: #{block_forward.5} parent=11 // pred_check
        %p487 = pneg %p236
      $region30: #{block_forward.5} parent=11 // pred_check_branch
        %489 = sbr.rel (%p487) target = $region32
      $region31: #{block_forward.5} parent=11 // pred_region
        _
      $region32: #{block_forward.5} parent=11 // pred_fallthru
        _
      // Predicated region
      $region33: #{block_forward.5} parent=11 // pred_check
        %p490 = pneg %p257
      $region34: #{block_forward.5} parent=11 // pred_check_branch
        %492 = sbr.rel (%p490) target = $region36
      $region35: #{block_forward.5} parent=11 // pred_region
        _
      $region36: #{block_forward.5} parent=11 // pred_fallthru
        _
      // Predicated region
      $region37: #{block_forward.5} parent=11 // pred_check
        %p493 = pneg %p278
      $region38: #{block_forward.5} parent=11 // pred_check_branch
        %495 = sbr.rel (%p493) target = $region40
      $region39: #{block_forward.5} parent=11 // pred_region
        _
      $region40: #{block_forward.5} parent=11 // pred_fallthru
        _
      // Predicated region
      $region41: #{block_forward.5} parent=11 // pred_check
        %p496 = pneg %p299
      $region42: #{block_forward.5} parent=11 // pred_check_branch
        %498 = sbr.rel (%p496) target = $region44
      $region43: #{block_forward.5} parent=11 // pred_region
        _
      $region44: #{block_forward.5} parent=11 // pred_fallthru
        _
      // Predicated region
      $region45: #{block_forward.5} parent=11 // pred_check
        %p499 = pneg %p320
      $region46: #{block_forward.5} parent=11 // pred_check_branch
        %501 = sbr.rel (%p499) target = $region48
      $region47: #{block_forward.5} parent=11 // pred_region
        _
      $region48: #{block_forward.5} parent=11 // pred_fallthru
        _
      // Predicated region
      $region49: #{block_forward.5} parent=11 // pred_check
        %p502 = pneg %p341
      $region50: #{block_forward.5} parent=11 // pred_check_branch
        %504 = sbr.rel (%p502) target = $region52
      $region51: #{block_forward.5} parent=11 // pred_region
        _
      $region52: #{block_forward.5} parent=11 // pred_fallthru
        _
      // Predicated region
      $region53: #{block_forward.5} parent=11 // pred_check
        %p505 = pneg %p362
      $region54: #{block_forward.5} parent=11 // pred_check_branch
        %507 = sbr.rel (%p505) target = $region56
      $region55: #{block_forward.5} parent=11 // pred_region
        _
      $region56: #{block_forward.5} parent=11 // pred_fallthru
        _
      // Predicated region
      $region57: #{block_forward.5} parent=11 // pred_check
        %p508 = pneg %p383
      $region58: #{block_forward.5} parent=11 // pred_check_branch
        %510 = sbr.rel (%p508) target = $region60
      $region59: #{block_forward.5} parent=11 // pred_region
        _
      $region60: #{block_forward.5} parent=11 // pred_fallthru
        _
      // Predicated region
      $region61: #{block_forward.5} parent=11 // pred_check
        %p511 = pneg %p432
      $region62: #{block_forward.5} parent=11 // pred_check_branch
        %513 = sbr.rel (%p511) target = $region64
      $region63: #{block_forward.5} parent=11 // pred_region
        _
      $region64: #{block_forward.5} parent=11 // pred_fallthru
        _
    $region12: #{block_forward.5} parent=5 // pred_fallthru
      _
    %p514 = scmp.lt.s32.totalorder %s23, 4
    // Predicated region
    $region65: #{block_forward.5} parent=5 // pred_check
      %p515 = pneg %p514
    $region66: #{block_forward.5} parent=5 // pred_check_branch
      %517 = sbr.rel (%p515) target = $region68
    $region67: #{block_forward.5} parent=5 // pred_region
      // Predicated region
      $region69: #{block_forward.5} parent=67 // pred_check
        %p518 = pneg %p63
      $region70: #{block_forward.5} parent=67 // pred_check_branch
        %520 = sbr.rel (%p518) target = $region72
      $region71: #{block_forward.5} parent=67 // pred_region
        %s521 = ssub.s32 %s31, 1
        %p522 = scmp.gt.s32.totalorder %s521, 0
        %s523 = scalar_select %p522, %s521, 0
        %s524 = smul.u32 16, %s523
        %p525 = scmp.lt.s32.totalorder %s30, 1
        %s526 = scalar_select %p525, %s30, 1
        %p527 = scmp.lt.s32.totalorder %s524, 31
        %s528 = scalar_select %p527, %s524, 31
        %s529 = smul.addr %s526, 32
        %s530 = sadd.s32 %s528, %s529
        %s531 = smul.addr %s530, 8
        %s532 = scalar_lea.vmem %s0, %s531
        %s533 = ssub.s32 %s31, 1
        %p534 = scmp.gt.s32.totalorder %s533, 0
        %s535 = scalar_select %p534, %s533, 0
        %s536 = smul.u32 16, %s535
      $region72: #{block_forward.5} parent=67 // pred_fallthru
        _
      // Predicated region
      $region73: #{block_forward.5} parent=67 // pred_check
        %p537 = pneg %p91
      $region74: #{block_forward.5} parent=67 // pred_check_branch
        %539 = sbr.rel (%p537) target = $region76
      $region75: #{block_forward.5} parent=67 // pred_region
        %s540 = smul.u32 16, %s31
        %p541 = scmp.lt.s32.totalorder %s30, 1
        %s542 = scalar_select %p541, %s30, 1
        %p543 = scmp.lt.s32.totalorder %s540, 31
        %s544 = scalar_select %p543, %s540, 31
        %s545 = smul.addr %s542, 32
        %s546 = sadd.s32 %s544, %s545
        %s547 = smul.addr %s546, 8
        %s548 = scalar_lea.vmem %s1, %s547
        %s549 = smul.u32 16, %s31
      $region76: #{block_forward.5} parent=67 // pred_fallthru
        _
      // Predicated region
      $region77: #{block_forward.5} parent=67 // pred_check
        %p550 = pneg %p125
      $region78: #{block_forward.5} parent=67 // pred_check_branch
        %552 = sbr.rel (%p550) target = $region80
      $region79: #{block_forward.5} parent=67 // pred_region
        %s553 = sadd.s32 %s31, 1
        %p554 = scmp.lt.s32.totalorder %s553, 1
        %s555 = scalar_select %p554, %s553, 1
        %s556 = smul.u32 16, %s555
        %p557 = scmp.lt.s32.totalorder %s30, 1
        %s558 = scalar_select %p557, %s30, 1
        %p559 = scmp.lt.s32.totalorder %s556, 31
        %s560 = scalar_select %p559, %s556, 31
        %s561 = smul.addr %s558, 32
        %s562 = sadd.s32 %s560, %s561
        %s563 = smul.addr %s562, 8
        %s564 = scalar_lea.vmem %s2, %s563
        %s565 = sadd.s32 %s31, 1
        %p566 = scmp.lt.s32.totalorder %s565, 1
        %s567 = scalar_select %p566, %s565, 1
        %s568 = smul.u32 16, %s567
      $region80: #{block_forward.5} parent=67 // pred_fallthru
        _
      // Predicated region
      $region81: #{block_forward.5} parent=67 // pred_check
        %p569 = pneg %p405
      $region82: #{block_forward.5} parent=67 // pred_check_branch
        %571 = sbr.rel (%p569) target = $region84
      $region83: #{block_forward.5} parent=67 // pred_region
        %s572 = smul.u32 16, %s31
        %p573 = scmp.lt.s32.totalorder %s30, 1
        %s574 = scalar_select %p573, %s30, 1
        %p575 = scmp.lt.s32.totalorder %s572, 31
        %s576 = scalar_select %p575, %s572, 31
        %s577 = smul.addr %s574, 32
        %s578 = sadd.s32 %s576, %s577
        %s579 = smul.addr %s578, 8
        %s580 = scalar_lea.vmem %s15, %s579
        %s581 = smul.u32 16, %s31
      $region84: #{block_forward.5} parent=67 // pred_fallthru
        _
    $region68: #{block_forward.5} parent=5 // pred_fallthru
      _
    %p582 = scmp.le.s32.totalorder 1, %s23
    %p583 = scmp.lt.s32.totalorder %s23, 5
    %p584 = pnand %p582, %p583
    %p585 = pneg %p584
    // Predicated region
    $region85: #{block_forward.5} parent=5 // pred_check
      _
    $region86: #{block_forward.5} parent=5 // pred_check_branch
      %587 = sbr.rel (%p584) target = $region88
    $region87: #{block_forward.5} parent=5 // pred_region
      %s588 = ssub.s32 %s23, 1
      %s589 = ssub.s32 %s33, 1
      %p590 = scmp.gt.s32.totalorder %s589, 0
      %s591 = scalar_select %p590, %s589, 0
      %s592 = smul.u32 16, %s591
      %p593 = scmp.lt.s32.totalorder %s32, 1
      %s594 = scalar_select %p593, %s32, 1
      %p595 = scmp.lt.s32.totalorder %s592, 31
      %s596 = scalar_select %p595, %s592, 31
      %s597 = smul.addr %s594, 32
      %s598 = sadd.s32 %s596, %s597
      %s599 = smul.addr %s598, 8
      %s600 = scalar_lea.vmem %s0, %s599
      %p601 = pneg %p69
      %p602 = pneg %p66
      %s603 = smul.u32 16, %s33
      %p604 = scmp.lt.s32.totalorder %s32, 1
      %s605 = scalar_select %p604, %s32, 1
      %p606 = scmp.lt.s32.totalorder %s603, 31
      %s607 = scalar_select %p606, %s603, 31
      %s608 = smul.addr %s605, 32
      %s609 = sadd.s32 %s607, %s608
      %s610 = smul.addr %s609, 8
      %s611 = scalar_lea.vmem %s1, %s610
      %p612 = pneg %p97
      %p613 = pneg %p94
      %s614 = sadd.s32 %s33, 1
      %p615 = scmp.lt.s32.totalorder %s614, 1
      %s616 = scalar_select %p615, %s614, 1
      %s617 = smul.u32 16, %s616
      %p618 = scmp.lt.s32.totalorder %s32, 1
      %s619 = scalar_select %p618, %s32, 1
      %p620 = scmp.lt.s32.totalorder %s617, 31
      %s621 = scalar_select %p620, %s617, 31
      %s622 = smul.addr %s619, 32
      %s623 = sadd.s32 %s621, %s622
      %s624 = smul.addr %s623, 8
      %s625 = scalar_lea.vmem %s2, %s624
      %p626 = pneg %p131
      %p627 = pneg %p128
      %p628 = pneg %p152
      %p629 = pneg %p149
      %p630 = pneg %p173
      %p631 = pneg %p170
      %p632 = pneg %p194
      %p633 = pneg %p191
      %p634 = pneg %p215
      %p635 = pneg %p212
      %p636 = pneg %p236
      %p637 = pneg %p233
      %p638 = pneg %p257
      %p639 = pneg %p254
      %p640 = pneg %p278
      %p641 = pneg %p275
      %p642 = pneg %p299
      %p643 = pneg %p296
      %p644 = pneg %p320
      %p645 = pneg %p317
      %p646 = pneg %p341
      %p647 = pneg %p338
      %p648 = pneg %p362
      %p649 = pneg %p359
      %p650 = pneg %p383
      %p651 = pneg %p380
      %s652 = smul.u32 16, %s33
      %p653 = scmp.lt.s32.totalorder %s32, 1
      %s654 = scalar_select %p653, %s32, 1
      %p655 = scmp.lt.s32.totalorder %s652, 31
      %s656 = scalar_select %p655, %s652, 31
      %s657 = smul.addr %s654, 32
      %s658 = sadd.s32 %s656, %s657
      %s659 = smul.addr %s658, 8
      %s660 = scalar_lea.vmem %s15, %s659
      %p661 = pneg %p411
      %p662 = pneg %p408
      %p663 = pneg %p432
      %p664 = pneg %p429
      %p665 = pneg %p460
      %p666 = pneg %p457
      %s667 = smul.u32 16, %s33
      %p668 = scmp.lt.s32.totalorder %s32, 1
      %s669 = scalar_select %p668, %s32, 1
      %p670 = scmp.lt.s32.totalorder %s667, 31
      %s671 = scalar_select %p670, %s667, 31
      %s672 = smul.addr %s669, 32
      %s673 = sadd.s32 %s671, %s672
      %s674 = smul.addr %s673, 8
      %s675 = scalar_lea.vmem %s17, %s674
      %s676 = ssub.s32 %s33, 1
      %p677 = scmp.gt.s32.totalorder %s676, 0
      %s678 = scalar_select %p677, %s676, 0
      %s679 = smul.u32 16, %s678
      %p680 = scmp.lt.s32.totalorder %s32, 1
      %s681 = scalar_select %p680, %s32, 1
      %p682 = scmp.lt.s32.totalorder %s679, 31
      %s683 = scalar_select %p682, %s679, 31
      %s684 = smul.addr %s681, 32
      %s685 = sadd.s32 %s683, %s684
      %s686 = smul.addr %s685, 8
      %s687 = scalar_lea.vmem %s0, %s686
      %s688 = ssub.s32 %s33, 1
      %p689 = scmp.gt.s32.totalorder %s688, 0
      %s690 = scalar_select %p689, %s688, 0
      %s691 = smul.u32 16, %s690
      %s692 = smul.u32 16, %s33
      %p693 = scmp.lt.s32.totalorder %s32, 1
      %s694 = scalar_select %p693, %s32, 1
      %p695 = scmp.lt.s32.totalorder %s692, 31
      %s696 = scalar_select %p695, %s692, 31
      %s697 = smul.addr %s694, 32
      %s698 = sadd.s32 %s696, %s697
      %s699 = smul.addr %s698, 8
      %s700 = scalar_lea.vmem %s1, %s699
      %s701 = smul.u32 16, %s33
      %s702 = sadd.s32 %s33, 1
      %p703 = scmp.lt.s32.totalorder %s702, 1
      %s704 = scalar_select %p703, %s702, 1
      %s705 = smul.u32 16, %s704
      %p706 = scmp.lt.s32.totalorder %s32, 1
      %s707 = scalar_select %p706, %s32, 1
      %p708 = scmp.lt.s32.totalorder %s705, 31
      %s709 = scalar_select %p708, %s705, 31
      %s710 = smul.addr %s707, 32
      %s711 = sadd.s32 %s709, %s710
      %s712 = smul.addr %s711, 8
      %s713 = scalar_lea.vmem %s2, %s712
      %s714 = sadd.s32 %s33, 1
      %p715 = scmp.lt.s32.totalorder %s714, 1
      %s716 = scalar_select %p715, %s714, 1
      %s717 = smul.u32 16, %s716
      %s718 = smul.u32 16, %s33
      %p719 = scmp.lt.s32.totalorder %s32, 1
      %s720 = scalar_select %p719, %s32, 1
      %p721 = scmp.lt.s32.totalorder %s718, 31
      %s722 = scalar_select %p721, %s718, 31
      %s723 = smul.addr %s720, 32
      %s724 = sadd.s32 %s722, %s723
      %s725 = smul.addr %s724, 8
      %s726 = scalar_lea.vmem %s15, %s725
      %s727 = smul.u32 16, %s33
      %s728 = smul.u32 16, %s33
      %p729 = scmp.lt.s32.totalorder %s32, 1
      %s730 = scalar_select %p729, %s32, 1
      %p731 = scmp.lt.s32.totalorder %s728, 31
      %s732 = scalar_select %p731, %s728, 31
      %s733 = smul.addr %s730, 32
      %s734 = sadd.s32 %s732, %s733
      %s735 = smul.addr %s734, 8
      %s736 = scalar_lea.vmem %s17, %s735
      %s737 = smul.u32 16, %s33
      %v738 = vld [vmem:[%s687 + $0x70] sm:$0xff]
      %v739 = vld [vmem:[%s687 + $0x78] sm:$0xff]
      %v740 = vld [vmem:[%s713] sm:$0xff]
      %v741 = vld [vmem:[%s713 + $0x8] sm:$0xff]
      %v742 = vld [vmem:[%s700] sm:$0xff]
      %v743 = vld [vmem:[%s700 + $0x8] sm:$0xff]
      %v744 = vld [vmem:[%s700 + $0x10] sm:$0xff]
      %v745 = vld [vmem:[%s700 + $0x18] sm:$0xff]
      %v746 = vld [vmem:[%s700 + $0x20] sm:$0xff]
      %v747 = vld [vmem:[%s700 + $0x28] sm:$0xff]
      %v748 = vld [vmem:[%s700 + $0x30] sm:$0xff]
      %v749 = vld [vmem:[%s700 + $0x38] sm:$0xff]
      %v750 = vld [vmem:[%s700 + $0x40] sm:$0xff]
      %v751 = vld [vmem:[%s700 + $0x48] sm:$0xff]
      %v752 = vld [vmem:[%s700 + $0x50] sm:$0xff]
      %v753 = vld [vmem:[%s700 + $0x58] sm:$0xff]
      %v754 = vld [vmem:[%s700 + $0x60] sm:$0xff]
      %v755 = vld [vmem:[%s700 + $0x68] sm:$0xff]
      %v756 = vld [vmem:[%s700 + $0x70] sm:$0xff]
      %v757 = vld [vmem:[%s700 + $0x78] sm:$0xff]
      %v758 = vld [vmem:[%s3] sm:$0xff]
      %vm759 = vcmask 64512
      %v761 = vsel %vm759, %v738, 0
      %v764 = vsel %vm759, %v739, 0
      %v767 = vsel %vm759, %v742, 0
      %v770 = vsel %vm759, %v743, 0
      %v773 = vsel %vm759, %v744, 0
      %v776 = vsel %vm759, %v745, 0
      %v779 = vsel %vm759, %v746, 0
      %v782 = vsel %vm759, %v747, 0
      %v785 = vsel %vm759, %v748, 0
      %v788 = vsel %vm759, %v749, 0
      %v791 = vsel %vm759, %v750, 0
      %v794 = vsel %vm759, %v751, 0
      %v797 = vsel %vm759, %v752, 0
      %v800 = vsel %vm759, %v753, 0
      %v803 = vsel %vm759, %v754, 0
      %v806 = vsel %vm759, %v755, 0
      %v809 = vsel %vm759, %v756, 0
      %v812 = vsel %vm759, %v757, 0
      %v815 = vsel %vm759, %v740, 0
      %v818 = vsel %vm759, %v741, 0
      %820 = vmatprep.subr.mxu0 0.0
      %821 = vmatpush1.msra.mxu0 %v758
      %822 = vmatprep.subr.mxu0 0.0
      %823 = vmatpush1.msra.mxu0 0.0
      %824 = vmatprep.subr.mxu0 0.0
      %825 = vmatpush1.msra.mxu0 0.0
      %826 = vmatprep.subr.mxu0 0.0
      %827 = vmatpush1.msra.mxu0 0.0
      %828 = vmatprep.subr.mxu0 0.0
      %829 = vmatpush1.msra.mxu0 0.0
      %830 = vmatprep.subr.mxu0 0.0
      %831 = vmatpush1.msra.mxu0 0.0
      %832 = vmatprep.subr.mxu0 0.0
      %833 = vmatpush1.msra.mxu0 0.0
      %834 = vmatprep.subr.mxu0 0.0
      %835 = vmatpush1.msra.mxu0 0.0
      %836 = vmatprep.subr.mxu0 0.0
      %837 = vmatpush1.msra.mxu0 0.0
      %838 = vmatprep.subr.mxu0 0.0
      %839 = vmatpush1.msra.mxu0 0.0
      %840 = vmatprep.subr.mxu0 0.0
      %841 = vmatpush1.msra.mxu0 0.0
      %842 = vmatprep.subr.mxu0 0.0
      %843 = vmatpush1.msra.mxu0 0.0
      %844 = vmatprep.subr.mxu0 0.0
      %845 = vmatpush1.msra.mxu0 0.0
      %846 = vmatprep.subr.mxu0 0.0
      %847 = vmatpush1.msra.mxu0 0.0
      %848 = vmatprep.subr.mxu0 0.0
      %849 = vmatpush1.msra.mxu0 0.0
      %850 = vmatprep.subr.mxu0 0.0
      %851 = vmatpush1.msra.mxu0 0.0
      %852 = vmatprep.subr.mxu0 0.0
      %853 = vmatpush1.msra.mxu0 0.0
      %854 = vmatprep.subr.mxu0 0.0
      %855 = vmatpush1.msra.mxu0 0.0
      %856 = vmatprep.subr.mxu0 0.0
      %857 = vmatpush1.msra.mxu0 0.0
      %858 = vmatprep.subr.mxu0 0.0
      %859 = vmatpush1.msra.mxu0 0.0
      %860 = vmatprep.subr.mxu0 0.0
      %861 = vmatpush1.msra.mxu0 0.0
      %862 = vmatprep.subr.mxu0 0.0
      %863 = vmatpush1.msra.mxu0 0.0
      %864 = vmatprep.subr.mxu0 0.0
      %865 = vmatpush1.msra.mxu0 0.0
      %866 = vmatprep.subr.mxu0 0.0
      %867 = vmatpush1.msra.mxu0 0.0
      %868 = vmatprep.subr.mxu0 0.0
      %869 = vmatpush1.msra.mxu0 0.0
      %870 = vmatprep.subr.mxu0 0.0
      %871 = vmatpush1.msra.mxu0 0.0
      %872 = vmatprep.subr.mxu0 0.0
      %873 = vmatpush1.msra.mxu0 0.0
      %874 = vmatprep.subr.mxu0 0.0
      %875 = vmatpush1.msra.mxu0 0.0
      %876 = vmatprep.subr.mxu0 0.0
      %877 = vmatpush1.msra.mxu0 0.0
      %878 = vmatprep.subr.mxu0 0.0
      %879 = vmatpush1.msra.mxu0 0.0
      %880 = vmatprep.subr.mxu0 0.0
      %881 = vmatpush1.msra.mxu0 0.0
      %882 = vmatprep.subr.mxu0 0.0
      %883 = vmatpush1.msra.mxu0 0.0
      %884 = vmatprep.mubr.f32.mxu0 0.0
      %885 = vmatmul.mubr.f32.gmra.mrb[0].mxu0 %v761
      %v886 = vpop.f32.mrb[0].mxu0
      %v887 = vadd.f32 0.0, %v886
      %v888 = vpop.f32.mrb[0].mxu0
      %889 = vmatprep.mubr.f32.mxu0 0.0
      %890 = vmatmul.mubr.f32.gmra.mrb[0].mxu0 %v764
      %v891 = vpop.f32.mrb[0].mxu0
      %v892 = vadd.f32 0.0, %v891
      %v893 = vpop.f32.mrb[0].mxu0
      %894 = vmatprep.mubr.f32.mxu0 0.0
      %895 = vmatmul.mubr.f32.gmra.mrb[0].mxu0 %v767
      %v896 = vpop.f32.mrb[0].mxu0
      %v897 = vadd.f32 0.0, %v896
      %v898 = vpop.f32.mrb[0].mxu0
      %899 = vmatprep.mubr.f32.mxu0 0.0
      %900 = vmatmul.mubr.f32.gmra.mrb[0].mxu0 %v770
      %v901 = vpop.f32.mrb[0].mxu0
      %v902 = vadd.f32 0.0, %v901
      %v903 = vpop.f32.mrb[0].mxu0
      %904 = vmatprep.mubr.f32.mxu0 0.0
      %905 = vmatmul.mubr.f32.gmra.mrb[0].mxu0 %v773
      %v906 = vpop.f32.mrb[0].mxu0
      %v907 = vadd.f32 0.0, %v906
      %v908 = vpop.f32.mrb[0].mxu0
      %909 = vmatprep.mubr.f32.mxu0 0.0
      %910 = vmatmul.mubr.f32.gmra.mrb[0].mxu0 %v776
      %v911 = vpop.f32.mrb[0].mxu0
      %v912 = vadd.f32 0.0, %v911
      %v913 = vpop.f32.mrb[0].mxu0
      %914 = vmatprep.mubr.f32.mxu0 0.0
      %915 = vmatmul.mubr.f32.gmra.mrb[0].mxu0 %v779
      %v916 = vpop.f32.mrb[0].mxu0
      %v917 = vadd.f32 0.0, %v916
      %v918 = vpop.f32.mrb[0].mxu0
      %919 = vmatprep.mubr.f32.mxu0 0.0
      %920 = vmatmul.mubr.f32.gmra.mrb[0].mxu0 %v782
      %v921 = vpop.f32.mrb[0].mxu0
      %v922 = vadd.f32 0.0, %v921
      %v923 = vpop.f32.mrb[0].mxu0
      %924 = vmatprep.mubr.f32.mxu0 0.0
      %925 = vmatmul.mubr.f32.gmra.mrb[0].mxu0 %v785
      %v926 = vpop.f32.mrb[0].mxu0
      %v927 = vadd.f32 0.0, %v926
      %v928 = vpop.f32.mrb[0].mxu0
      %929 = vmatprep.mubr.f32.mxu0 0.0
      %930 = vmatmul.mubr.f32.gmra.mrb[0].mxu0 %v788
      %v931 = vpop.f32.mrb[0].mxu0
      %v932 = vadd.f32 0.0, %v931
      %v933 = vpop.f32.mrb[0].mxu0
      %934 = vmatprep.mubr.f32.mxu0 0.0
      %935 = vmatmul.mubr.f32.gmra.mrb[0].mxu0 %v791
      %v936 = vpop.f32.mrb[0].mxu0
      %v937 = vadd.f32 0.0, %v936
      %v938 = vpop.f32.mrb[0].mxu0
      %939 = vmatprep.mubr.f32.mxu0 0.0
      %940 = vmatmul.mubr.f32.gmra.mrb[0].mxu0 %v794
      %v941 = vpop.f32.mrb[0].mxu0
      %v942 = vadd.f32 0.0, %v941
      %v943 = vpop.f32.mrb[0].mxu0
      %944 = vmatprep.mubr.f32.mxu0 0.0
      %945 = vmatmul.mubr.f32.gmra.mrb[0].mxu0 %v797
      %v946 = vpop.f32.mrb[0].mxu0
      %v947 = vadd.f32 0.0, %v946
      %v948 = vpop.f32.mrb[0].mxu0
      %949 = vmatprep.mubr.f32.mxu0 0.0
      %950 = vmatmul.mubr.f32.gmra.mrb[0].mxu0 %v800
      %v951 = vpop.f32.mrb[0].mxu0
      %v952 = vadd.f32 0.0, %v951
      %v953 = vpop.f32.mrb[0].mxu0
      %954 = vmatprep.mubr.f32.mxu0 0.0
      %955 = vmatmul.mubr.f32.gmra.mrb[0].mxu0 %v803
      %v956 = vpop.f32.mrb[0].mxu0
      %v957 = vadd.f32 0.0, %v956
      %v958 = vpop.f32.mrb[0].mxu0
      %959 = vmatprep.mubr.f32.mxu0 0.0
      %960 = vmatmul.mubr.f32.gmra.mrb[0].mxu0 %v806
      %v961 = vpop.f32.mrb[0].mxu0
      %v962 = vadd.f32 0.0, %v961
      %v963 = vpop.f32.mrb[0].mxu0
      %964 = vmatprep.mubr.f32.mxu0 0.0
      %965 = vmatmul.mubr.f32.gmra.mrb[0].mxu0 %v809
      %v966 = vpop.f32.mrb[0].mxu0
      %v967 = vadd.f32 0.0, %v966
      %v968 = vpop.f32.mrb[0].mxu0
      %969 = vmatprep.mubr.f32.mxu0 0.0
      %970 = vmatmul.mubr.f32.gmra.mrb[0].mxu0 %v812
      %v971 = vpop.f32.mrb[0].mxu0
      %v972 = vadd.f32 0.0, %v971
      %v973 = vpop.f32.mrb[0].mxu0
      %974 = vmatprep.mubr.f32.mxu0 0.0
      %975 = vmatmul.mubr.f32.gmra.mrb[0].mxu0 %v815
      %v976 = vpop.f32.mrb[0].mxu0
      %v977 = vadd.f32 0.0, %v976
      %v978 = vpop.f32.mrb[0].mxu0
      %979 = vmatprep.mubr.f32.mxu0 0.0
      %980 = vmatmul.mubr.f32.gmra.mrb[0].mxu0 %v818
      %v981 = vpop.f32.mrb[0].mxu0
      %v982 = vadd.f32 0.0, %v981
      %v983 = vpop.f32.mrb[0].mxu0
      %984 = vdwg.mxu0
      %v985 = vld [vmem:[%s4] sm:$0x1]
      %v986 = vld [vmem:[%s5] sm:$0x1]
      %v988 = vlaneseq
      %v989 = vshrl.u32 %v988, 7
      %v990 = vsub.s32 0, %v989
      %v991 = vrot.slane %v985, %v990
      %v993 = vmul.f32 %v887, %v991
      %v994 = vmul.f32 %v892, %v991
      %v995 = vmul.f32 %v897, %v991
      %v996 = vmul.f32 %v902, %v991
      %v997 = vmul.f32 %v907, %v991
      %v998 = vmul.f32 %v912, %v991
      %v999 = vmul.f32 %v917, %v991
      %v1000 = vmul.f32 %v922, %v991
      %v1001 = vmul.f32 %v927, %v991
      %v1002 = vmul.f32 %v932, %v991
      %v1003 = vmul.f32 %v937, %v991
      %v1004 = vmul.f32 %v942, %v991
      %v1005 = vmul.f32 %v947, %v991
      %v1006 = vmul.f32 %v952, %v991
      %v1007 = vmul.f32 %v957, %v991
      %v1008 = vmul.f32 %v962, %v991
      %v1009 = vmul.f32 %v967, %v991
      %v1010 = vmul.f32 %v972, %v991
      %v1011 = vmul.f32 %v977, %v991
      %v1012 = vmul.f32 %v982, %v991
      %v1014 = vlaneseq
      %v1015 = vshrl.u32 %v1014, 7
      %v1016 = vsub.s32 0, %v1015
      %v1017 = vrot.slane %v986, %v1016
      %v1019 = vadd.f32 %v993, %v1017
      %v1020 = vadd.f32 %v994, %v1017
      %v1021 = vadd.f32 %v995, %v1017
      %v1022 = vadd.f32 %v996, %v1017
      %v1023 = vadd.f32 %v997, %v1017
      %v1024 = vadd.f32 %v998, %v1017
      %v1025 = vadd.f32 %v999, %v1017
      %v1026 = vadd.f32 %v1000, %v1017
      %v1027 = vadd.f32 %v1001, %v1017
      %v1028 = vadd.f32 %v1002, %v1017
      %v1029 = vadd.f32 %v1003, %v1017
      %v1030 = vadd.f32 %v1004, %v1017
      %v1031 = vadd.f32 %v1005, %v1017
      %v1032 = vadd.f32 %v1006, %v1017
      %v1033 = vadd.f32 %v1007, %v1017
      %v1034 = vadd.f32 %v1008, %v1017
      %v1035 = vadd.f32 %v1009, %v1017
      %v1036 = vadd.f32 %v1010, %v1017
      %v1037 = vadd.f32 %v1011, %v1017
      %v1038 = vadd.f32 %v1012, %v1017
      %v1039 = vmax.f32 %v1019, 0.0
      %v1040 = vmax.f32 %v1020, 0.0
      %v1041 = vmax.f32 %v1021, 0.0
      %v1042 = vmax.f32 %v1022, 0.0
      %v1043 = vmax.f32 %v1023, 0.0
      %v1044 = vmax.f32 %v1024, 0.0
      %v1045 = vmax.f32 %v1025, 0.0
      %v1046 = vmax.f32 %v1026, 0.0
      %v1047 = vmax.f32 %v1027, 0.0
      %v1048 = vmax.f32 %v1028, 0.0
      %v1049 = vmax.f32 %v1029, 0.0
      %v1050 = vmax.f32 %v1030, 0.0
      %v1051 = vmax.f32 %v1031, 0.0
      %v1052 = vmax.f32 %v1032, 0.0
      %v1053 = vmax.f32 %v1033, 0.0
      %v1054 = vmax.f32 %v1034, 0.0
      %v1055 = vmax.f32 %v1035, 0.0
      %v1056 = vmax.f32 %v1036, 0.0
      %v1057 = vmax.f32 %v1037, 0.0
      %v1058 = vmax.f32 %v1038, 0.0
      %v1059 = vlaneseq
      %v1060 = vshrl.u32 %v1059, 7
      %v1061 = vadd.s32 %v1060, 8
      %v1062 = vadd.s32 %v1060, 16
      %v1063 = vadd.s32 %v1060, 24
      %v1064 = vadd.s32 %v1060, 32
      %v1065 = vadd.s32 %v1060, 40
      %v1066 = vadd.s32 %v1060, 48
      %v1067 = vadd.s32 %v1060, 56
      %v1068 = vadd.s32 %v1060, 64
      %v1069 = vadd.s32 %v1060, 72
      %v1070 = vadd.s32 %v1060, 80
      %v1071 = vadd.s32 %v1060, 88
      %v1072 = vadd.s32 %v1060, 96
      %v1073 = vadd.s32 %v1060, 104
      %v1074 = vadd.s32 %v1060, 112
      %v1075 = vadd.s32 %v1060, 120
      %v1076 = vadd.s32 %v1060, 128
      %v1077 = vadd.s32 %v1060, 136
      %v1078 = vadd.s32 %v1060, 144
      %v1079 = vadd.s32 %v1060, 152
      %vm1080 = vcmp.ge.s32.totalorder %v1060, 16
      %vm1081 = vcmp.ge.s32.totalorder %v1061, 16
      %vm1082 = vcmp.ge.s32.totalorder %v1062, 16
      %vm1083 = vcmp.ge.s32.totalorder %v1063, 16
      %vm1084 = vcmp.ge.s32.totalorder %v1064, 16
      %vm1085 = vcmp.ge.s32.totalorder %v1065, 16
      %vm1086 = vcmp.ge.s32.totalorder %v1066, 16
      %vm1087 = vcmp.ge.s32.totalorder %v1067, 16
      %vm1088 = vcmp.ge.s32.totalorder %v1068, 16
      %vm1089 = vcmp.ge.s32.totalorder %v1069, 16
      %vm1090 = vcmp.ge.s32.totalorder %v1070, 16
      %vm1091 = vcmp.ge.s32.totalorder %v1071, 16
      %vm1092 = vcmp.ge.s32.totalorder %v1072, 16
      %vm1093 = vcmp.ge.s32.totalorder %v1073, 16
      %vm1094 = vcmp.ge.s32.totalorder %v1074, 16
      %vm1095 = vcmp.ge.s32.totalorder %v1075, 16
      %vm1096 = vcmp.ge.s32.totalorder %v1076, 16
      %vm1097 = vcmp.ge.s32.totalorder %v1077, 16
      %vm1098 = vcmp.ge.s32.totalorder %v1078, 16
      %vm1099 = vcmp.ge.s32.totalorder %v1079, 16
      %p1100 = scmp.gt.s32.totalorder %s33, 0
      %s1101 = scalar_select %p1100, 1, 0
      %v1102 = vstv %s1101
      %vm1103 = vcmp.eq.s32.totalorder %v1102, 1
      %vm1104 = vmor %vm1080, %vm1103
      %vm1105 = vmor %vm1081, %vm1103
      %vm1106 = vmor %vm1082, %vm1103
      %vm1107 = vmor %vm1083, %vm1103
      %vm1108 = vmor %vm1084, %vm1103
      %vm1109 = vmor %vm1085, %vm1103
      %vm1110 = vmor %vm1086, %vm1103
      %vm1111 = vmor %vm1087, %vm1103
      %vm1112 = vmor %vm1088, %vm1103
      %vm1113 = vmor %vm1089, %vm1103
      %vm1114 = vmor %vm1090, %vm1103
      %vm1115 = vmor %vm1091, %vm1103
      %vm1116 = vmor %vm1092, %vm1103
      %vm1117 = vmor %vm1093, %vm1103
      %vm1118 = vmor %vm1094, %vm1103
      %vm1119 = vmor %vm1095, %vm1103
      %vm1120 = vmor %vm1096, %vm1103
      %vm1121 = vmor %vm1097, %vm1103
      %vm1122 = vmor %vm1098, %vm1103
      %vm1123 = vmor %vm1099, %vm1103
      %vm1124 = vcmp.lt.s32.totalorder %v1060, 144
      %vm1125 = vcmp.lt.s32.totalorder %v1061, 144
      %vm1126 = vcmp.lt.s32.totalorder %v1062, 144
      %vm1127 = vcmp.lt.s32.totalorder %v1063, 144
      %vm1128 = vcmp.lt.s32.totalorder %v1064, 144
      %vm1129 = vcmp.lt.s32.totalorder %v1065, 144
      %vm1130 = vcmp.lt.s32.totalorder %v1066, 144
      %vm1131 = vcmp.lt.s32.totalorder %v1067, 144
      %vm1132 = vcmp.lt.s32.totalorder %v1068, 144
      %vm1133 = vcmp.lt.s32.totalorder %v1069, 144
      %vm1134 = vcmp.lt.s32.totalorder %v1070, 144
      %vm1135 = vcmp.lt.s32.totalorder %v1071, 144
      %vm1136 = vcmp.lt.s32.totalorder %v1072, 144
      %vm1137 = vcmp.lt.s32.totalorder %v1073, 144
      %vm1138 = vcmp.lt.s32.totalorder %v1074, 144
      %vm1139 = vcmp.lt.s32.totalorder %v1075, 144
      %vm1140 = vcmp.lt.s32.totalorder %v1076, 144
      %vm1141 = vcmp.lt.s32.totalorder %v1077, 144
      %vm1142 = vcmp.lt.s32.totalorder %v1078, 144
      %vm1143 = vcmp.lt.s32.totalorder %v1079, 144
      %p1144 = scmp.lt.s32.totalorder %s33, 1
      %s1145 = scalar_select %p1144, 1, 0
      %v1146 = vstv %s1145
      %vm1147 = vcmp.eq.s32.totalorder %v1146, 1
      %vm1148 = vmor %vm1124, %vm1147
      %vm1149 = vmor %vm1125, %vm1147
      %vm1150 = vmor %vm1126, %vm1147
      %vm1151 = vmor %vm1127, %vm1147
      %vm1152 = vmor %vm1128, %vm1147
      %vm1153 = vmor %vm1129, %vm1147
      %vm1154 = vmor %vm1130, %vm1147
      %vm1155 = vmor %vm1131, %vm1147
      %vm1156 = vmor %vm1132, %vm1147
      %vm1157 = vmor %vm1133, %vm1147
      %vm1158 = vmor %vm1134, %vm1147
      %vm1159 = vmor %vm1135, %vm1147
      %vm1160 = vmor %vm1136, %vm1147
      %vm1161 = vmor %vm1137, %vm1147
      %vm1162 = vmor %vm1138, %vm1147
      %vm1163 = vmor %vm1139, %vm1147
      %vm1164 = vmor %vm1140, %vm1147
      %vm1165 = vmor %vm1141, %vm1147
      %vm1166 = vmor %vm1142, %vm1147
      %vm1167 = vmor %vm1143, %vm1147
      %vm1168 = vmand %vm1104, %vm1148
      %vm1169 = vmand %vm1105, %vm1149
      %vm1170 = vmand %vm1106, %vm1150
      %vm1171 = vmand %vm1107, %vm1151
      %vm1172 = vmand %vm1108, %vm1152
      %vm1173 = vmand %vm1109, %vm1153
      %vm1174 = vmand %vm1110, %vm1154
      %vm1175 = vmand %vm1111, %vm1155
      %vm1176 = vmand %vm1112, %vm1156
      %vm1177 = vmand %vm1113, %vm1157
      %vm1178 = vmand %vm1114, %vm1158
      %vm1179 = vmand %vm1115, %vm1159
      %vm1180 = vmand %vm1116, %vm1160
      %vm1181 = vmand %vm1117, %vm1161
      %vm1182 = vmand %vm1118, %vm1162
      %vm1183 = vmand %vm1119, %vm1163
      %vm1184 = vmand %vm1120, %vm1164
      %vm1185 = vmand %vm1121, %vm1165
      %vm1186 = vmand %vm1122, %vm1166
      %vm1187 = vmand %vm1123, %vm1167
      %v1188 = vsel %vm1168, 1, 0
      %v1189 = vsel %vm1169, 1, 0
      %v1190 = vsel %vm1170, 1, 0
      %v1191 = vsel %vm1171, 1, 0
      %v1192 = vsel %vm1172, 1, 0
      %v1193 = vsel %vm1173, 1, 0
      %v1194 = vsel %vm1174, 1, 0
      %v1195 = vsel %vm1175, 1, 0
      %v1196 = vsel %vm1176, 1, 0
      %v1197 = vsel %vm1177, 1, 0
      %v1198 = vsel %vm1178, 1, 0
      %v1199 = vsel %vm1179, 1, 0
      %v1200 = vsel %vm1180, 1, 0
      %v1201 = vsel %vm1181, 1, 0
      %v1202 = vsel %vm1182, 1, 0
      %v1203 = vsel %vm1183, 1, 0
      %v1204 = vsel %vm1184, 1, 0
      %v1205 = vsel %vm1185, 1, 0
      %v1206 = vsel %vm1186, 1, 0
      %v1207 = vsel %vm1187, 1, 0
      %vm1208 = vcmp.eq.s32.totalorder %v1188, 1
      %vm1209 = vcmp.eq.s32.totalorder %v1189, 1
      %vm1210 = vcmp.eq.s32.totalorder %v1190, 1
      %vm1211 = vcmp.eq.s32.totalorder %v1191, 1
      %vm1212 = vcmp.eq.s32.totalorder %v1192, 1
      %vm1213 = vcmp.eq.s32.totalorder %v1193, 1
      %vm1214 = vcmp.eq.s32.totalorder %v1194, 1
      %vm1215 = vcmp.eq.s32.totalorder %v1195, 1
      %vm1216 = vcmp.eq.s32.totalorder %v1196, 1
      %vm1217 = vcmp.eq.s32.totalorder %v1197, 1
      %vm1218 = vcmp.eq.s32.totalorder %v1198, 1
      %vm1219 = vcmp.eq.s32.totalorder %v1199, 1
      %vm1220 = vcmp.eq.s32.totalorder %v1200, 1
      %vm1221 = vcmp.eq.s32.totalorder %v1201, 1
      %vm1222 = vcmp.eq.s32.totalorder %v1202, 1
      %vm1223 = vcmp.eq.s32.totalorder %v1203, 1
      %vm1224 = vcmp.eq.s32.totalorder %v1204, 1
      %vm1225 = vcmp.eq.s32.totalorder %v1205, 1
      %vm1226 = vcmp.eq.s32.totalorder %v1206, 1
      %vm1227 = vcmp.eq.s32.totalorder %v1207, 1
      %v1228 = vsel %vm1208, %v1039, 0.0
      %v1229 = vsel %vm1209, %v1040, 0.0
      %v1230 = vsel %vm1210, %v1041, 0.0
      %v1231 = vsel %vm1211, %v1042, 0.0
      %v1232 = vsel %vm1212, %v1043, 0.0
      %v1233 = vsel %vm1213, %v1044, 0.0
      %v1234 = vsel %vm1214, %v1045, 0.0
      %v1235 = vsel %vm1215, %v1046, 0.0
      %v1236 = vsel %vm1216, %v1047, 0.0
      %v1237 = vsel %vm1217, %v1048, 0.0
      %v1238 = vsel %vm1218, %v1049, 0.0
      %v1239 = vsel %vm1219, %v1050, 0.0
      %v1240 = vsel %vm1220, %v1051, 0.0
      %v1241 = vsel %vm1221, %v1052, 0.0
      %v1242 = vsel %vm1222, %v1053, 0.0
      %v1243 = vsel %vm1223, %v1054, 0.0
      %v1244 = vsel %vm1224, %v1055, 0.0
      %v1245 = vsel %vm1225, %v1056, 0.0
      %v1246 = vsel %vm1226, %v1057, 0.0
      %v1247 = vsel %vm1227, %v1058, 0.0
      %vm1268 = vcmask 1040384
      %v1269 = vrot.slane %v1228, 7
      %v1270 = vrot.slane %v1229, 7
      %v1271 = vsel %vm1268, %v1269, %v1270
      %v1272 = vrot.slane %v1230, 7
      %v1273 = vsel %vm1268, %v1270, %v1272
      %v1274 = vrot.slane %v1231, 7
      %v1275 = vsel %vm1268, %v1272, %v1274
      %v1276 = vrot.slane %v1232, 7
      %v1277 = vsel %vm1268, %v1274, %v1276
      %v1278 = vrot.slane %v1233, 7
      %v1279 = vsel %vm1268, %v1276, %v1278
      %v1280 = vrot.slane %v1234, 7
      %v1281 = vsel %vm1268, %v1278, %v1280
      %v1282 = vrot.slane %v1235, 7
      %v1283 = vsel %vm1268, %v1280, %v1282
      %v1284 = vrot.slane %v1236, 7
      %v1285 = vsel %vm1268, %v1282, %v1284
      %v1286 = vrot.slane %v1237, 7
      %v1287 = vsel %vm1268, %v1284, %v1286
      %v1288 = vrot.slane %v1238, 7
      %v1289 = vsel %vm1268, %v1286, %v1288
      %v1290 = vrot.slane %v1239, 7
      %v1291 = vsel %vm1268, %v1288, %v1290
      %v1292 = vrot.slane %v1240, 7
      %v1293 = vsel %vm1268, %v1290, %v1292
      %v1294 = vrot.slane %v1241, 7
      %v1295 = vsel %vm1268, %v1292, %v1294
      %v1296 = vrot.slane %v1242, 7
      %v1297 = vsel %vm1268, %v1294, %v1296
      %v1298 = vrot.slane %v1243, 7
      %v1299 = vsel %vm1268, %v1296, %v1298
      %v1300 = vrot.slane %v1244, 7
      %v1301 = vsel %vm1268, %v1298, %v1300
      %v1302 = vrot.slane %v1245, 7
      %v1303 = vsel %vm1268, %v1300, %v1302
      %v1304 = vrot.slane %v1246, 7
      %v1305 = vsel %vm1268, %v1302, %v1304
      %v1306 = vrot.slane %v1247, 7
      %v1307 = vsel %vm1268, %v1304, %v1306
      %v1329 = vsel %vm1268, 0.0, %v1269
      %v1330 = vsel %vm1268, %v1306, 0.0
      %vm1331 = vcmp.lt.s32.totalorder %v1060, 0
      %v1332 = vsub.s32 0, %v1060
      %v1333 = vsel %vm1331, %v1332, %v1060
      %v1334 = vshrl.u32 %v1333, 4
      %v1335 = vand.u32 %v1333, 15
      %v1336 = vsub.s32 0, %v1335
      %v1337 = vsel %vm1331, %v1336, %v1335
      %vm1338 = vcmp.lt.s32.totalorder %v1061, 0
      %v1339 = vsub.s32 0, %v1061
      %v1340 = vsel %vm1338, %v1339, %v1061
      %v1341 = vshrl.u32 %v1340, 4
      %v1342 = vand.u32 %v1340, 15
      %v1343 = vsub.s32 0, %v1342
      %v1344 = vsel %vm1338, %v1343, %v1342
      %vm1345 = vcmp.lt.s32.totalorder %v1062, 0
      %v1346 = vsub.s32 0, %v1062
      %v1347 = vsel %vm1345, %v1346, %v1062
      %v1348 = vshrl.u32 %v1347, 4
      %v1349 = vand.u32 %v1347, 15
      %v1350 = vsub.s32 0, %v1349
      %v1351 = vsel %vm1345, %v1350, %v1349
      %vm1352 = vcmp.lt.s32.totalorder %v1063, 0
      %v1353 = vsub.s32 0, %v1063
      %v1354 = vsel %vm1352, %v1353, %v1063
      %v1355 = vshrl.u32 %v1354, 4
      %v1356 = vand.u32 %v1354, 15
      %v1357 = vsub.s32 0, %v1356
      %v1358 = vsel %vm1352, %v1357, %v1356
      %vm1359 = vcmp.lt.s32.totalorder %v1064, 0
      %v1360 = vsub.s32 0, %v1064
      %v1361 = vsel %vm1359, %v1360, %v1064
      %v1362 = vshrl.u32 %v1361, 4
      %v1363 = vand.u32 %v1361, 15
      %v1364 = vsub.s32 0, %v1363
      %v1365 = vsel %vm1359, %v1364, %v1363
      %vm1366 = vcmp.lt.s32.totalorder %v1065, 0
      %v1367 = vsub.s32 0, %v1065
      %v1368 = vsel %vm1366, %v1367, %v1065
      %v1369 = vshrl.u32 %v1368, 4
      %v1370 = vand.u32 %v1368, 15
      %v1371 = vsub.s32 0, %v1370
      %v1372 = vsel %vm1366, %v1371, %v1370
      %vm1373 = vcmp.lt.s32.totalorder %v1066, 0
      %v1374 = vsub.s32 0, %v1066
      %v1375 = vsel %vm1373, %v1374, %v1066
      %v1376 = vshrl.u32 %v1375, 4
      %v1377 = vand.u32 %v1375, 15
      %v1378 = vsub.s32 0, %v1377
      %v1379 = vsel %vm1373, %v1378, %v1377
      %vm1380 = vcmp.lt.s32.totalorder %v1067, 0
      %v1381 = vsub.s32 0, %v1067
      %v1382 = vsel %vm1380, %v1381, %v1067
      %v1383 = vshrl.u32 %v1382, 4
      %v1384 = vand.u32 %v1382, 15
      %v1385 = vsub.s32 0, %v1384
      %v1386 = vsel %vm1380, %v1385, %v1384
      %vm1387 = vcmp.lt.s32.totalorder %v1068, 0
      %v1388 = vsub.s32 0, %v1068
      %v1389 = vsel %vm1387, %v1388, %v1068
      %v1390 = vshrl.u32 %v1389, 4
      %v1391 = vand.u32 %v1389, 15
      %v1392 = vsub.s32 0, %v1391
      %v1393 = vsel %vm1387, %v1392, %v1391
      %vm1394 = vcmp.lt.s32.totalorder %v1069, 0
      %v1395 = vsub.s32 0, %v1069
      %v1396 = vsel %vm1394, %v1395, %v1069
      %v1397 = vshrl.u32 %v1396, 4
      %v1398 = vand.u32 %v1396, 15
      %v1399 = vsub.s32 0, %v1398
      %v1400 = vsel %vm1394, %v1399, %v1398
      %vm1401 = vcmp.lt.s32.totalorder %v1070, 0
      %v1402 = vsub.s32 0, %v1070
      %v1403 = vsel %vm1401, %v1402, %v1070
      %v1404 = vshrl.u32 %v1403, 4
      %v1405 = vand.u32 %v1403, 15
      %v1406 = vsub.s32 0, %v1405
      %v1407 = vsel %vm1401, %v1406, %v1405
      %vm1408 = vcmp.lt.s32.totalorder %v1071, 0
      %v1409 = vsub.s32 0, %v1071
      %v1410 = vsel %vm1408, %v1409, %v1071
      %v1411 = vshrl.u32 %v1410, 4
      %v1412 = vand.u32 %v1410, 15
      %v1413 = vsub.s32 0, %v1412
      %v1414 = vsel %vm1408, %v1413, %v1412
      %vm1415 = vcmp.lt.s32.totalorder %v1072, 0
      %v1416 = vsub.s32 0, %v1072
      %v1417 = vsel %vm1415, %v1416, %v1072
      %v1418 = vshrl.u32 %v1417, 4
      %v1419 = vand.u32 %v1417, 15
      %v1420 = vsub.s32 0, %v1419
      %v1421 = vsel %vm1415, %v1420, %v1419
      %vm1422 = vcmp.lt.s32.totalorder %v1073, 0
      %v1423 = vsub.s32 0, %v1073
      %v1424 = vsel %vm1422, %v1423, %v1073
      %v1425 = vshrl.u32 %v1424, 4
      %v1426 = vand.u32 %v1424, 15
      %v1427 = vsub.s32 0, %v1426
      %v1428 = vsel %vm1422, %v1427, %v1426
      %vm1429 = vcmp.lt.s32.totalorder %v1074, 0
      %v1430 = vsub.s32 0, %v1074
      %v1431 = vsel %vm1429, %v1430, %v1074
      %v1432 = vshrl.u32 %v1431, 4
      %v1433 = vand.u32 %v1431, 15
      %v1434 = vsub.s32 0, %v1433
      %v1435 = vsel %vm1429, %v1434, %v1433
      %vm1436 = vcmp.lt.s32.totalorder %v1075, 0
      %v1437 = vsub.s32 0, %v1075
      %v1438 = vsel %vm1436, %v1437, %v1075
      %v1439 = vshrl.u32 %v1438, 4
      %v1440 = vand.u32 %v1438, 15
      %v1441 = vsub.s32 0, %v1440
      %v1442 = vsel %vm1436, %v1441, %v1440
      %vm1443 = vcmp.ne.s32.totalorder %v1337, 0
      %vm1444 = vcmp.ne.s32.totalorder %v1344, 0
      %vm1445 = vcmp.ne.s32.totalorder %v1351, 0
      %vm1446 = vcmp.ne.s32.totalorder %v1358, 0
      %vm1447 = vcmp.ne.s32.totalorder %v1365, 0
      %vm1448 = vcmp.ne.s32.totalorder %v1372, 0
      %vm1449 = vcmp.ne.s32.totalorder %v1379, 0
      %vm1450 = vcmp.ne.s32.totalorder %v1386, 0
      %vm1451 = vcmp.ne.s32.totalorder %v1393, 0
      %vm1452 = vcmp.ne.s32.totalorder %v1400, 0
      %vm1453 = vcmp.ne.s32.totalorder %v1407, 0
      %vm1454 = vcmp.ne.s32.totalorder %v1414, 0
      %vm1455 = vcmp.ne.s32.totalorder %v1421, 0
      %vm1456 = vcmp.ne.s32.totalorder %v1428, 0
      %vm1457 = vcmp.ne.s32.totalorder %v1435, 0
      %vm1458 = vcmp.ne.s32.totalorder %v1442, 0
      %vm1459 = vcmp.lt.s32.totalorder %v1337, 0
      %vm1460 = vcmp.lt.s32.totalorder %v1344, 0
      %vm1461 = vcmp.lt.s32.totalorder %v1351, 0
      %vm1462 = vcmp.lt.s32.totalorder %v1358, 0
      %vm1463 = vcmp.lt.s32.totalorder %v1365, 0
      %vm1464 = vcmp.lt.s32.totalorder %v1372, 0
      %vm1465 = vcmp.lt.s32.totalorder %v1379, 0
      %vm1466 = vcmp.lt.s32.totalorder %v1386, 0
      %vm1467 = vcmp.lt.s32.totalorder %v1393, 0
      %vm1468 = vcmp.lt.s32.totalorder %v1400, 0
      %vm1469 = vcmp.lt.s32.totalorder %v1407, 0
      %vm1470 = vcmp.lt.s32.totalorder %v1414, 0
      %vm1471 = vcmp.lt.s32.totalorder %v1421, 0
      %vm1472 = vcmp.lt.s32.totalorder %v1428, 0
      %vm1473 = vcmp.lt.s32.totalorder %v1435, 0
      %vm1474 = vcmp.lt.s32.totalorder %v1442, 0
      %vm1475 = vmand %vm1459, %vm1443
      %vm1476 = vmand %vm1460, %vm1444
      %vm1477 = vmand %vm1461, %vm1445
      %vm1478 = vmand %vm1462, %vm1446
      %vm1479 = vmand %vm1463, %vm1447
      %vm1480 = vmand %vm1464, %vm1448
      %vm1481 = vmand %vm1465, %vm1449
      %vm1482 = vmand %vm1466, %vm1450
      %vm1483 = vmand %vm1467, %vm1451
      %vm1484 = vmand %vm1468, %vm1452
      %vm1485 = vmand %vm1469, %vm1453
      %vm1486 = vmand %vm1470, %vm1454
      %vm1487 = vmand %vm1471, %vm1455
      %vm1488 = vmand %vm1472, %vm1456
      %vm1489 = vmand %vm1473, %vm1457
      %vm1490 = vmand %vm1474, %vm1458
      %v1491 = vadd.s32 %v1337, 16
      %v1492 = vadd.s32 %v1344, 16
      %v1493 = vadd.s32 %v1351, 16
      %v1494 = vadd.s32 %v1358, 16
      %v1495 = vadd.s32 %v1365, 16
      %v1496 = vadd.s32 %v1372, 16
      %v1497 = vadd.s32 %v1379, 16
      %v1498 = vadd.s32 %v1386, 16
      %v1499 = vadd.s32 %v1393, 16
      %v1500 = vadd.s32 %v1400, 16
      %v1501 = vadd.s32 %v1407, 16
      %v1502 = vadd.s32 %v1414, 16
      %v1503 = vadd.s32 %v1421, 16
      %v1504 = vadd.s32 %v1428, 16
      %v1505 = vadd.s32 %v1435, 16
      %v1506 = vadd.s32 %v1442, 16
      %v1507 = vsel %vm1475, %v1491, %v1337
      %v1508 = vsel %vm1476, %v1492, %v1344
      %v1509 = vsel %vm1477, %v1493, %v1351
      %v1510 = vsel %vm1478, %v1494, %v1358
      %v1511 = vsel %vm1479, %v1495, %v1365
      %v1512 = vsel %vm1480, %v1496, %v1372
      %v1513 = vsel %vm1481, %v1497, %v1379
      %v1514 = vsel %vm1482, %v1498, %v1386
      %v1515 = vsel %vm1483, %v1499, %v1393
      %v1516 = vsel %vm1484, %v1500, %v1400
      %v1517 = vsel %vm1485, %v1501, %v1407
      %v1518 = vsel %vm1486, %v1502, %v1414
      %v1519 = vsel %vm1487, %v1503, %v1421
      %v1520 = vsel %vm1488, %v1504, %v1428
      %v1521 = vsel %vm1489, %v1505, %v1435
      %v1522 = vsel %vm1490, %v1506, %v1442
      %v1523 = vld [vmem:[%s6] sm:$0xff]
      %v1524 = vld [vmem:[%s6 + $0x8] sm:$0x1]
      %vm1525 = vcmp.ne.s32.totalorder %v1507, 0
      %vm1526 = vcmp.ne.s32.totalorder %v1508, 0
      %vm1527 = vcmp.ne.s32.totalorder %v1509, 0
      %vm1528 = vcmp.ne.s32.totalorder %v1510, 0
      %vm1529 = vcmp.ne.s32.totalorder %v1511, 0
      %vm1530 = vcmp.ne.s32.totalorder %v1512, 0
      %vm1531 = vcmp.ne.s32.totalorder %v1513, 0
      %vm1532 = vcmp.ne.s32.totalorder %v1514, 0
      %vm1533 = vcmp.ne.s32.totalorder %v1515, 0
      %vm1534 = vcmp.ne.s32.totalorder %v1516, 0
      %vm1535 = vcmp.ne.s32.totalorder %v1517, 0
      %vm1536 = vcmp.ne.s32.totalorder %v1518, 0
      %vm1537 = vcmp.ne.s32.totalorder %v1519, 0
      %vm1538 = vcmp.ne.s32.totalorder %v1520, 0
      %vm1539 = vcmp.ne.s32.totalorder %v1521, 0
      %vm1540 = vcmp.ne.s32.totalorder %v1522, 0
      %v1541 = vsel %vm1525, 1, 0
      %v1542 = vsel %vm1526, 1, 0
      %v1543 = vsel %vm1527, 1, 0
      %v1544 = vsel %vm1528, 1, 0
      %v1545 = vsel %vm1529, 1, 0
      %v1546 = vsel %vm1530, 1, 0
      %v1547 = vsel %vm1531, 1, 0
      %v1548 = vsel %vm1532, 1, 0
      %v1549 = vsel %vm1533, 1, 0
      %v1550 = vsel %vm1534, 1, 0
      %v1551 = vsel %vm1535, 1, 0
      %v1552 = vsel %vm1536, 1, 0
      %v1553 = vsel %vm1537, 1, 0
      %v1554 = vsel %vm1538, 1, 0
      %v1555 = vsel %vm1539, 1, 0
      %v1556 = vsel %vm1540, 1, 0
      %vm1557 = vcmp.eq.s32.totalorder %v1541, 1
      %vm1558 = vcmp.eq.s32.totalorder %v1542, 1
      %vm1559 = vcmp.eq.s32.totalorder %v1543, 1
      %vm1560 = vcmp.eq.s32.totalorder %v1544, 1
      %vm1561 = vcmp.eq.s32.totalorder %v1545, 1
      %vm1562 = vcmp.eq.s32.totalorder %v1546, 1
      %vm1563 = vcmp.eq.s32.totalorder %v1547, 1
      %vm1564 = vcmp.eq.s32.totalorder %v1548, 1
      %vm1565 = vcmp.eq.s32.totalorder %v1549, 1
      %vm1566 = vcmp.eq.s32.totalorder %v1550, 1
      %vm1567 = vcmp.eq.s32.totalorder %v1551, 1
      %vm1568 = vcmp.eq.s32.totalorder %v1552, 1
      %vm1569 = vcmp.eq.s32.totalorder %v1553, 1
      %vm1570 = vcmp.eq.s32.totalorder %v1554, 1
      %vm1571 = vcmp.eq.s32.totalorder %v1555, 1
      %vm1572 = vcmp.eq.s32.totalorder %v1556, 1
      %v1573 = vsel %vm1557, %v1329, 0.0
      %v1574 = vsel %vm1558, %v1271, 0.0
      %v1575 = vsel %vm1559, %v1273, 0.0
      %v1576 = vsel %vm1560, %v1275, 0.0
      %v1577 = vsel %vm1561, %v1277, 0.0
      %v1578 = vsel %vm1562, %v1279, 0.0
      %v1579 = vsel %vm1563, %v1281, 0.0
      %v1580 = vsel %vm1564, %v1283, 0.0
      %v1581 = vsel %vm1565, %v1285, 0.0
      %v1582 = vsel %vm1566, %v1287, 0.0
      %v1583 = vsel %vm1567, %v1289, 0.0
      %v1584 = vsel %vm1568, %v1291, 0.0
      %v1585 = vsel %vm1569, %v1293, 0.0
      %v1586 = vsel %vm1570, %v1295, 0.0
      %v1587 = vsel %vm1571, %v1297, 0.0
      %v1588 = vsel %vm1572, %v1299, 0.0
      %v1589 = vlaneseq
      %v1590 = vshrl.u32 %v1589, 7
      %v1591 = vsub.s32 0, %v1590
      %v1592 = vrot.slane %v1523, %v1591
      %v1593 = vmul.f32 %v1573, %v1592
      %v1594 = vmul.f32 %v1574, %v1592
      %v1595 = vmul.f32 %v1575, %v1592
      %v1596 = vmul.f32 %v1576, %v1592
      %v1597 = vmul.f32 %v1577, %v1592
      %v1598 = vmul.f32 %v1578, %v1592
      %v1599 = vmul.f32 %v1579, %v1592
      %v1600 = vmul.f32 %v1580, %v1592
      %v1601 = vmul.f32 %v1581, %v1592
      %v1602 = vmul.f32 %v1582, %v1592
      %v1603 = vmul.f32 %v1583, %v1592
      %v1604 = vmul.f32 %v1584, %v1592
      %v1605 = vmul.f32 %v1585, %v1592
      %v1606 = vmul.f32 %v1586, %v1592
      %v1607 = vmul.f32 %v1587, %v1592
      %v1608 = vmul.f32 %v1588, %v1592
      %v1609 = vadd.f32 %v1593, 0.0
      %v1610 = vadd.f32 %v1594, 0.0
      %v1611 = vadd.f32 %v1595, 0.0
      %v1612 = vadd.f32 %v1596, 0.0
      %v1613 = vadd.f32 %v1597, 0.0
      %v1614 = vadd.f32 %v1598, 0.0
      %v1615 = vadd.f32 %v1599, 0.0
      %v1616 = vadd.f32 %v1600, 0.0
      %v1617 = vadd.f32 %v1601, 0.0
      %v1618 = vadd.f32 %v1602, 0.0
      %v1619 = vadd.f32 %v1603, 0.0
      %v1620 = vadd.f32 %v1604, 0.0
      %v1621 = vadd.f32 %v1605, 0.0
      %v1622 = vadd.f32 %v1606, 0.0
      %v1623 = vadd.f32 %v1607, 0.0
      %v1624 = vadd.f32 %v1608, 0.0
      %v1625 = vlaneseq
      %v1626 = vshrl.u32 %v1625, 7
      %v1627 = vsub.s32 1, %v1626
      %v1628 = vrot.slane %v1523, %v1627
      %v1629 = vmul.f32 %v1329, %v1628
      %v1630 = vmul.f32 %v1271, %v1628
      %v1631 = vmul.f32 %v1273, %v1628
      %v1632 = vmul.f32 %v1275, %v1628
      %v1633 = vmul.f32 %v1277, %v1628
      %v1634 = vmul.f32 %v1279, %v1628
      %v1635 = vmul.f32 %v1281, %v1628
      %v1636 = vmul.f32 %v1283, %v1628
      %v1637 = vmul.f32 %v1285, %v1628
      %v1638 = vmul.f32 %v1287, %v1628
      %v1639 = vmul.f32 %v1289, %v1628
      %v1640 = vmul.f32 %v1291, %v1628
      %v1641 = vmul.f32 %v1293, %v1628
      %v1642 = vmul.f32 %v1295, %v1628
      %v1643 = vmul.f32 %v1297, %v1628
      %v1644 = vmul.f32 %v1299, %v1628
      %v1645 = vmul.f32 %v1301, %v1628
      %vm1663 = vcmask 1046528
      %v1664 = vrot.slane %v1629, 1
      %v1665 = vrot.slane %v1630, 1
      %v1666 = vsel %vm1663, %v1664, %v1665
      %v1667 = vrot.slane %v1631, 1
      %v1668 = vsel %vm1663, %v1665, %v1667
      %v1669 = vrot.slane %v1632, 1
      %v1670 = vsel %vm1663, %v1667, %v1669
      %v1671 = vrot.slane %v1633, 1
      %v1672 = vsel %vm1663, %v1669, %v1671
      %v1673 = vrot.slane %v1634, 1
      %v1674 = vsel %vm1663, %v1671, %v1673
      %v1675 = vrot.slane %v1635, 1
      %v1676 = vsel %vm1663, %v1673, %v1675
      %v1677 = vrot.slane %v1636, 1
      %v1678 = vsel %vm1663, %v1675, %v1677
      %v1679 = vrot.slane %v1637, 1
      %v1680 = vsel %vm1663, %v1677, %v1679
      %v1681 = vrot.slane %v1638, 1
      %v1682 = vsel %vm1663, %v1679, %v1681
      %v1683 = vrot.slane %v1639, 1
      %v1684 = vsel %vm1663, %v1681, %v1683
      %v1685 = vrot.slane %v1640, 1
      %v1686 = vsel %vm1663, %v1683, %v1685
      %v1687 = vrot.slane %v1641, 1
      %v1688 = vsel %vm1663, %v1685, %v1687
      %v1689 = vrot.slane %v1642, 1
      %v1690 = vsel %vm1663, %v1687, %v1689
      %v1691 = vrot.slane %v1643, 1
      %v1692 = vsel %vm1663, %v1689, %v1691
      %v1693 = vrot.slane %v1644, 1
      %v1694 = vsel %vm1663, %v1691, %v1693
      %v1695 = vrot.slane %v1645, 1
      %v1696 = vsel %vm1663, %v1693, %v1695
      %v1713 = vadd.f32 %v1609, %v1666
      %v1714 = vadd.f32 %v1610, %v1668
      %v1715 = vadd.f32 %v1611, %v1670
      %v1716 = vadd.f32 %v1612, %v1672
      %v1717 = vadd.f32 %v1613, %v1674
      %v1718 = vadd.f32 %v1614, %v1676
      %v1719 = vadd.f32 %v1615, %v1678
      %v1720 = vadd.f32 %v1616, %v1680
      %v1721 = vadd.f32 %v1617, %v1682
      %v1722 = vadd.f32 %v1618, %v1684
      %v1723 = vadd.f32 %v1619, %v1686
      %v1724 = vadd.f32 %v1620, %v1688
      %v1725 = vadd.f32 %v1621, %v1690
      %v1726 = vadd.f32 %v1622, %v1692
      %v1727 = vadd.f32 %v1623, %v1694
      %v1728 = vadd.f32 %v1624, %v1696
      %vm1729 = vcmp.ne.s32.totalorder %v1507, 15
      %vm1730 = vcmp.ne.s32.totalorder %v1508, 15
      %vm1731 = vcmp.ne.s32.totalorder %v1509, 15
      %vm1732 = vcmp.ne.s32.totalorder %v1510, 15
      %vm1733 = vcmp.ne.s32.totalorder %v1511, 15
      %vm1734 = vcmp.ne.s32.totalorder %v1512, 15
      %vm1735 = vcmp.ne.s32.totalorder %v1513, 15
      %vm1736 = vcmp.ne.s32.totalorder %v1514, 15
      %vm1737 = vcmp.ne.s32.totalorder %v1515, 15
      %vm1738 = vcmp.ne.s32.totalorder %v1516, 15
      %vm1739 = vcmp.ne.s32.totalorder %v1517, 15
      %vm1740 = vcmp.ne.s32.totalorder %v1518, 15
      %vm1741 = vcmp.ne.s32.totalorder %v1519, 15
      %vm1742 = vcmp.ne.s32.totalorder %v1520, 15
      %vm1743 = vcmp.ne.s32.totalorder %v1521, 15
      %vm1744 = vcmp.ne.s32.totalorder %v1522, 15
      %v1745 = vsel %vm1729, 1, 0
      %v1746 = vsel %vm1730, 1, 0
      %v1747 = vsel %vm1731, 1, 0
      %v1748 = vsel %vm1732, 1, 0
      %v1749 = vsel %vm1733, 1, 0
      %v1750 = vsel %vm1734, 1, 0
      %v1751 = vsel %vm1735, 1, 0
      %v1752 = vsel %vm1736, 1, 0
      %v1753 = vsel %vm1737, 1, 0
      %v1754 = vsel %vm1738, 1, 0
      %v1755 = vsel %vm1739, 1, 0
      %v1756 = vsel %vm1740, 1, 0
      %v1757 = vsel %vm1741, 1, 0
      %v1758 = vsel %vm1742, 1, 0
      %v1759 = vsel %vm1743, 1, 0
      %v1760 = vsel %vm1744, 1, 0
      %vm1761 = vcmp.eq.s32.totalorder %v1745, 1
      %vm1762 = vcmp.eq.s32.totalorder %v1746, 1
      %vm1763 = vcmp.eq.s32.totalorder %v1747, 1
      %vm1764 = vcmp.eq.s32.totalorder %v1748, 1
      %vm1765 = vcmp.eq.s32.totalorder %v1749, 1
      %vm1766 = vcmp.eq.s32.totalorder %v1750, 1
      %vm1767 = vcmp.eq.s32.totalorder %v1751, 1
      %vm1768 = vcmp.eq.s32.totalorder %v1752, 1
      %vm1769 = vcmp.eq.s32.totalorder %v1753, 1
      %vm1770 = vcmp.eq.s32.totalorder %v1754, 1
      %vm1771 = vcmp.eq.s32.totalorder %v1755, 1
      %vm1772 = vcmp.eq.s32.totalorder %v1756, 1
      %vm1773 = vcmp.eq.s32.totalorder %v1757, 1
      %vm1774 = vcmp.eq.s32.totalorder %v1758, 1
      %vm1775 = vcmp.eq.s32.totalorder %v1759, 1
      %vm1776 = vcmp.eq.s32.totalorder %v1760, 1
      %vm1778 = vcmask 1045504
      %v1779 = vrot.slane %v1329, 2
      %v1780 = vrot.slane %v1271, 2
      %v1781 = vsel %vm1778, %v1779, %v1780
      %v1782 = vrot.slane %v1273, 2
      %v1783 = vsel %vm1778, %v1780, %v1782
      %v1784 = vrot.slane %v1275, 2
      %v1785 = vsel %vm1778, %v1782, %v1784
      %v1786 = vrot.slane %v1277, 2
      %v1787 = vsel %vm1778, %v1784, %v1786
      %v1788 = vrot.slane %v1279, 2
      %v1789 = vsel %vm1778, %v1786, %v1788
      %v1790 = vrot.slane %v1281, 2
      %v1791 = vsel %vm1778, %v1788, %v1790
      %v1792 = vrot.slane %v1283, 2
      %v1793 = vsel %vm1778, %v1790, %v1792
      %v1794 = vrot.slane %v1285, 2
      %v1795 = vsel %vm1778, %v1792, %v1794
      %v1796 = vrot.slane %v1287, 2
      %v1797 = vsel %vm1778, %v1794, %v1796
      %v1798 = vrot.slane %v1289, 2
      %v1799 = vsel %vm1778, %v1796, %v1798
      %v1800 = vrot.slane %v1291, 2
      %v1801 = vsel %vm1778, %v1798, %v1800
      %v1802 = vrot.slane %v1293, 2
      %v1803 = vsel %vm1778, %v1800, %v1802
      %v1804 = vrot.slane %v1295, 2
      %v1805 = vsel %vm1778, %v1802, %v1804
      %v1806 = vrot.slane %v1297, 2
      %v1807 = vsel %vm1778, %v1804, %v1806
      %v1808 = vrot.slane %v1299, 2
      %v1809 = vsel %vm1778, %v1806, %v1808
      %v1810 = vrot.slane %v1301, 2
      %v1811 = vsel %vm1778, %v1808, %v1810
      %v1828 = vsel %vm1761, %v1781, 0.0
      %v1829 = vsel %vm1762, %v1783, 0.0
      %v1830 = vsel %vm1763, %v1785, 0.0
      %v1831 = vsel %vm1764, %v1787, 0.0
      %v1832 = vsel %vm1765, %v1789, 0.0
      %v1833 = vsel %vm1766, %v1791, 0.0
      %v1834 = vsel %vm1767, %v1793, 0.0
      %v1835 = vsel %vm1768, %v1795, 0.0
      %v1836 = vsel %vm1769, %v1797, 0.0
      %v1837 = vsel %vm1770, %v1799, 0.0
      %v1838 = vsel %vm1771, %v1801, 0.0
      %v1839 = vsel %vm1772, %v1803, 0.0
      %v1840 = vsel %vm1773, %v1805, 0.0
      %v1841 = vsel %vm1774, %v1807, 0.0
      %v1842 = vsel %vm1775, %v1809, 0.0
      %v1843 = vsel %vm1776, %v1811, 0.0
      %v1844 = vlaneseq
      %v1845 = vshrl.u32 %v1844, 7
      %v1846 = vsub.s32 2, %v1845
      %v1847 = vrot.slane %v1523, %v1846
      %v1848 = vmul.f32 %v1828, %v1847
      %v1849 = vmul.f32 %v1829, %v1847
      %v1850 = vmul.f32 %v1830, %v1847
      %v1851 = vmul.f32 %v1831, %v1847
      %v1852 = vmul.f32 %v1832, %v1847
      %v1853 = vmul.f32 %v1833, %v1847
      %v1854 = vmul.f32 %v1834, %v1847
      %v1855 = vmul.f32 %v1835, %v1847
      %v1856 = vmul.f32 %v1836, %v1847
      %v1857 = vmul.f32 %v1837, %v1847
      %v1858 = vmul.f32 %v1838, %v1847
      %v1859 = vmul.f32 %v1839, %v1847
      %v1860 = vmul.f32 %v1840, %v1847
      %v1861 = vmul.f32 %v1841, %v1847
      %v1862 = vmul.f32 %v1842, %v1847
      %v1863 = vmul.f32 %v1843, %v1847
      %v1864 = vadd.f32 %v1713, %v1848
      %v1865 = vadd.f32 %v1714, %v1849
      %v1866 = vadd.f32 %v1715, %v1850
      %v1867 = vadd.f32 %v1716, %v1851
      %v1868 = vadd.f32 %v1717, %v1852
      %v1869 = vadd.f32 %v1718, %v1853
      %v1870 = vadd.f32 %v1719, %v1854
      %v1871 = vadd.f32 %v1720, %v1855
      %v1872 = vadd.f32 %v1721, %v1856
      %v1873 = vadd.f32 %v1722, %v1857
      %v1874 = vadd.f32 %v1723, %v1858
      %v1875 = vadd.f32 %v1724, %v1859
      %v1876 = vadd.f32 %v1725, %v1860
      %v1877 = vadd.f32 %v1726, %v1861
      %v1878 = vadd.f32 %v1727, %v1862
      %v1879 = vadd.f32 %v1728, %v1863
      %v1880 = vsel %vm1557, %v1273, 0.0
      %v1881 = vsel %vm1558, %v1275, 0.0
      %v1882 = vsel %vm1559, %v1277, 0.0
      %v1883 = vsel %vm1560, %v1279, 0.0
      %v1884 = vsel %vm1561, %v1281, 0.0
      %v1885 = vsel %vm1562, %v1283, 0.0
      %v1886 = vsel %vm1563, %v1285, 0.0
      %v1887 = vsel %vm1564, %v1287, 0.0
      %v1888 = vsel %vm1565, %v1289, 0.0
      %v1889 = vsel %vm1566, %v1291, 0.0
      %v1890 = vsel %vm1567, %v1293, 0.0
      %v1891 = vsel %vm1568, %v1295, 0.0
      %v1892 = vsel %vm1569, %v1297, 0.0
      %v1893 = vsel %vm1570, %v1299, 0.0
      %v1894 = vsel %vm1571, %v1301, 0.0
      %v1895 = vsel %vm1572, %v1303, 0.0
      %v1896 = vlaneseq
      %v1897 = vshrl.u32 %v1896, 7
      %v1898 = vsub.s32 3, %v1897
      %v1899 = vrot.slane %v1523, %v1898
      %v1900 = vmul.f32 %v1880, %v1899
      %v1901 = vmul.f32 %v1881, %v1899
      %v1902 = vmul.f32 %v1882, %v1899
      %v1903 = vmul.f32 %v1883, %v1899
      %v1904 = vmul.f32 %v1884, %v1899
      %v1905 = vmul.f32 %v1885, %v1899
      %v1906 = vmul.f32 %v1886, %v1899
      %v1907 = vmul.f32 %v1887, %v1899
      %v1908 = vmul.f32 %v1888, %v1899
      %v1909 = vmul.f32 %v1889, %v1899
      %v1910 = vmul.f32 %v1890, %v1899
      %v1911 = vmul.f32 %v1891, %v1899
      %v1912 = vmul.f32 %v1892, %v1899
      %v1913 = vmul.f32 %v1893, %v1899
      %v1914 = vmul.f32 %v1894, %v1899
      %v1915 = vmul.f32 %v1895, %v1899
      %v1916 = vadd.f32 %v1864, %v1900
      %v1917 = vadd.f32 %v1865, %v1901
      %v1918 = vadd.f32 %v1866, %v1902
      %v1919 = vadd.f32 %v1867, %v1903
      %v1920 = vadd.f32 %v1868, %v1904
      %v1921 = vadd.f32 %v1869, %v1905
      %v1922 = vadd.f32 %v1870, %v1906
      %v1923 = vadd.f32 %v1871, %v1907
      %v1924 = vadd.f32 %v1872, %v1908
      %v1925 = vadd.f32 %v1873, %v1909
      %v1926 = vadd.f32 %v1874, %v1910
      %v1927 = vadd.f32 %v1875, %v1911
      %v1928 = vadd.f32 %v1876, %v1912
      %v1929 = vadd.f32 %v1877, %v1913
      %v1930 = vadd.f32 %v1878, %v1914
      %v1931 = vadd.f32 %v1879, %v1915
      %v1932 = vlaneseq
      %v1933 = vshrl.u32 %v1932, 7
      %v1934 = vsub.s32 4, %v1933
      %v1935 = vrot.slane %v1523, %v1934
      %v1936 = vmul.f32 %v1273, %v1935
      %v1937 = vmul.f32 %v1275, %v1935
      %v1938 = vmul.f32 %v1277, %v1935
      %v1939 = vmul.f32 %v1279, %v1935
      %v1940 = vmul.f32 %v1281, %v1935
      %v1941 = vmul.f32 %v1283, %v1935
      %v1942 = vmul.f32 %v1285, %v1935
      %v1943 = vmul.f32 %v1287, %v1935
      %v1944 = vmul.f32 %v1289, %v1935
      %v1945 = vmul.f32 %v1291, %v1935
      %v1946 = vmul.f32 %v1293, %v1935
      %v1947 = vmul.f32 %v1295, %v1935
      %v1948 = vmul.f32 %v1297, %v1935
      %v1949 = vmul.f32 %v1299, %v1935
      %v1950 = vmul.f32 %v1301, %v1935
      %v1951 = vmul.f32 %v1303, %v1935
      %v1952 = vmul.f32 %v1305, %v1935
      %v1970 = vrot.slane %v1936, 1
      %v1971 = vrot.slane %v1937, 1
      %v1972 = vsel %vm1663, %v1970, %v1971
      %v1973 = vrot.slane %v1938, 1
      %v1974 = vsel %vm1663, %v1971, %v1973
      %v1975 = vrot.slane %v1939, 1
      %v1976 = vsel %vm1663, %v1973, %v1975
      %v1977 = vrot.slane %v1940, 1
      %v1978 = vsel %vm1663, %v1975, %v1977
      %v1979 = vrot.slane %v1941, 1
      %v1980 = vsel %vm1663, %v1977, %v1979
      %v1981 = vrot.slane %v1942, 1
      %v1982 = vsel %vm1663, %v1979, %v1981
      %v1983 = vrot.slane %v1943, 1
      %v1984 = vsel %vm1663, %v1981, %v1983
      %v1985 = vrot.slane %v1944, 1
      %v1986 = vsel %vm1663, %v1983, %v1985
      %v1987 = vrot.slane %v1945, 1
      %v1988 = vsel %vm1663, %v1985, %v1987
      %v1989 = vrot.slane %v1946, 1
      %v1990 = vsel %vm1663, %v1987, %v1989
      %v1991 = vrot.slane %v1947, 1
      %v1992 = vsel %vm1663, %v1989, %v1991
      %v1993 = vrot.slane %v1948, 1
      %v1994 = vsel %vm1663, %v1991, %v1993
      %v1995 = vrot.slane %v1949, 1
      %v1996 = vsel %vm1663, %v1993, %v1995
      %v1997 = vrot.slane %v1950, 1
      %v1998 = vsel %vm1663, %v1995, %v1997
      %v1999 = vrot.slane %v1951, 1
      %v2000 = vsel %vm1663, %v1997, %v1999
      %v2001 = vrot.slane %v1952, 1
      %v2002 = vsel %vm1663, %v1999, %v2001
      %v2019 = vadd.f32 %v1916, %v1972
      %v2020 = vadd.f32 %v1917, %v1974
      %v2021 = vadd.f32 %v1918, %v1976
      %v2022 = vadd.f32 %v1919, %v1978
      %v2023 = vadd.f32 %v1920, %v1980
      %v2024 = vadd.f32 %v1921, %v1982
      %v2025 = vadd.f32 %v1922, %v1984
      %v2026 = vadd.f32 %v1923, %v1986
      %v2027 = vadd.f32 %v1924, %v1988
      %v2028 = vadd.f32 %v1925, %v1990
      %v2029 = vadd.f32 %v1926, %v1992
      %v2030 = vadd.f32 %v1927, %v1994
      %v2031 = vadd.f32 %v1928, %v1996
      %v2032 = vadd.f32 %v1929, %v1998
      %v2033 = vadd.f32 %v1930, %v2000
      %v2034 = vadd.f32 %v1931, %v2002
      %v2035 = vrot.slane %v1303, 2
      %v2036 = vsel %vm1778, %v1810, %v2035
      %v2037 = vrot.slane %v1305, 2
      %v2038 = vsel %vm1778, %v2035, %v2037
      %v2041 = vsel %vm1761, %v1785, 0.0
      %v2042 = vsel %vm1762, %v1787, 0.0
      %v2043 = vsel %vm1763, %v1789, 0.0
      %v2044 = vsel %vm1764, %v1791, 0.0
      %v2045 = vsel %vm1765, %v1793, 0.0
      %v2046 = vsel %vm1766, %v1795, 0.0
      %v2047 = vsel %vm1767, %v1797, 0.0
      %v2048 = vsel %vm1768, %v1799, 0.0
      %v2049 = vsel %vm1769, %v1801, 0.0
      %v2050 = vsel %vm1770, %v1803, 0.0
      %v2051 = vsel %vm1771, %v1805, 0.0
      %v2052 = vsel %vm1772, %v1807, 0.0
      %v2053 = vsel %vm1773, %v1809, 0.0
      %v2054 = vsel %vm1774, %v1811, 0.0
      %v2055 = vsel %vm1775, %v2036, 0.0
      %v2056 = vsel %vm1776, %v2038, 0.0
      %v2057 = vlaneseq
      %v2058 = vshrl.u32 %v2057, 7
      %v2059 = vsub.s32 5, %v2058
      %v2060 = vrot.slane %v1523, %v2059
      %v2061 = vmul.f32 %v2041, %v2060
      %v2062 = vmul.f32 %v2042, %v2060
      %v2063 = vmul.f32 %v2043, %v2060
      %v2064 = vmul.f32 %v2044, %v2060
      %v2065 = vmul.f32 %v2045, %v2060
      %v2066 = vmul.f32 %v2046, %v2060
      %v2067 = vmul.f32 %v2047, %v2060
      %v2068 = vmul.f32 %v2048, %v2060
      %v2069 = vmul.f32 %v2049, %v2060
      %v2070 = vmul.f32 %v2050, %v2060
      %v2071 = vmul.f32 %v2051, %v2060
      %v2072 = vmul.f32 %v2052, %v2060
      %v2073 = vmul.f32 %v2053, %v2060
      %v2074 = vmul.f32 %v2054, %v2060
      %v2075 = vmul.f32 %v2055, %v2060
      %v2076 = vmul.f32 %v2056, %v2060
      %v2077 = vadd.f32 %v2019, %v2061
      %v2078 = vadd.f32 %v2020, %v2062
      %v2079 = vadd.f32 %v2021, %v2063
      %v2080 = vadd.f32 %v2022, %v2064
      %v2081 = vadd.f32 %v2023, %v2065
      %v2082 = vadd.f32 %v2024, %v2066
      %v2083 = vadd.f32 %v2025, %v2067
      %v2084 = vadd.f32 %v2026, %v2068
      %v2085 = vadd.f32 %v2027, %v2069
      %v2086 = vadd.f32 %v2028, %v2070
      %v2087 = vadd.f32 %v2029, %v2071
      %v2088 = vadd.f32 %v2030, %v2072
      %v2089 = vadd.f32 %v2031, %v2073
      %v2090 = vadd.f32 %v2032, %v2074
      %v2091 = vadd.f32 %v2033, %v2075
      %v2092 = vadd.f32 %v2034, %v2076
      %v2093 = vsel %vm1557, %v1277, 0.0
      %v2094 = vsel %vm1558, %v1279, 0.0
      %v2095 = vsel %vm1559, %v1281, 0.0
      %v2096 = vsel %vm1560, %v1283, 0.0
      %v2097 = vsel %vm1561, %v1285, 0.0
      %v2098 = vsel %vm1562, %v1287, 0.0
      %v2099 = vsel %vm1563, %v1289, 0.0
      %v2100 = vsel %vm1564, %v1291, 0.0
      %v2101 = vsel %vm1565, %v1293, 0.0
      %v2102 = vsel %vm1566, %v1295, 0.0
      %v2103 = vsel %vm1567, %v1297, 0.0
      %v2104 = vsel %vm1568, %v1299, 0.0
      %v2105 = vsel %vm1569, %v1301, 0.0
      %v2106 = vsel %vm1570, %v1303, 0.0
      %v2107 = vsel %vm1571, %v1305, 0.0
      %v2108 = vsel %vm1572, %v1307, 0.0
      %v2109 = vlaneseq
      %v2110 = vshrl.u32 %v2109, 7
      %v2111 = vsub.s32 6, %v2110
      %v2112 = vrot.slane %v1523, %v2111
      %v2113 = vmul.f32 %v2093, %v2112
      %v2114 = vmul.f32 %v2094, %v2112
      %v2115 = vmul.f32 %v2095, %v2112
      %v2116 = vmul.f32 %v2096, %v2112
      %v2117 = vmul.f32 %v2097, %v2112
      %v2118 = vmul.f32 %v2098, %v2112
      %v2119 = vmul.f32 %v2099, %v2112
      %v2120 = vmul.f32 %v2100, %v2112
      %v2121 = vmul.f32 %v2101, %v2112
      %v2122 = vmul.f32 %v2102, %v2112
      %v2123 = vmul.f32 %v2103, %v2112
      %v2124 = vmul.f32 %v2104, %v2112
      %v2125 = vmul.f32 %v2105, %v2112
      %v2126 = vmul.f32 %v2106, %v2112
      %v2127 = vmul.f32 %v2107, %v2112
      %v2128 = vmul.f32 %v2108, %v2112
      %v2129 = vadd.f32 %v2077, %v2113
      %v2130 = vadd.f32 %v2078, %v2114
      %v2131 = vadd.f32 %v2079, %v2115
      %v2132 = vadd.f32 %v2080, %v2116
      %v2133 = vadd.f32 %v2081, %v2117
      %v2134 = vadd.f32 %v2082, %v2118
      %v2135 = vadd.f32 %v2083, %v2119
      %v2136 = vadd.f32 %v2084, %v2120
      %v2137 = vadd.f32 %v2085, %v2121
      %v2138 = vadd.f32 %v2086, %v2122
      %v2139 = vadd.f32 %v2087, %v2123
      %v2140 = vadd.f32 %v2088, %v2124
      %v2141 = vadd.f32 %v2089, %v2125
      %v2142 = vadd.f32 %v2090, %v2126
      %v2143 = vadd.f32 %v2091, %v2127
      %v2144 = vadd.f32 %v2092, %v2128
      %v2145 = vlaneseq
      %v2146 = vshrl.u32 %v2145, 7
      %v2147 = vsub.s32 7, %v2146
      %v2148 = vrot.slane %v1523, %v2147
      %v2149 = vmul.f32 %v1277, %v2148
      %v2150 = vmul.f32 %v1279, %v2148
      %v2151 = vmul.f32 %v1281, %v2148
      %v2152 = vmul.f32 %v1283, %v2148
      %v2153 = vmul.f32 %v1285, %v2148
      %v2154 = vmul.f32 %v1287, %v2148
      %v2155 = vmul.f32 %v1289, %v2148
      %v2156 = vmul.f32 %v1291, %v2148
      %v2157 = vmul.f32 %v1293, %v2148
      %v2158 = vmul.f32 %v1295, %v2148
      %v2159 = vmul.f32 %v1297, %v2148
      %v2160 = vmul.f32 %v1299, %v2148
      %v2161 = vmul.f32 %v1301, %v2148
      %v2162 = vmul.f32 %v1303, %v2148
      %v2163 = vmul.f32 %v1305, %v2148
      %v2164 = vmul.f32 %v1307, %v2148
      %v2165 = vmul.f32 %v1330, %v2148
      %v2183 = vrot.slane %v2149, 1
      %v2184 = vrot.slane %v2150, 1
      %v2185 = vsel %vm1663, %v2183, %v2184
      %v2186 = vrot.slane %v2151, 1
      %v2187 = vsel %vm1663, %v2184, %v2186
      %v2188 = vrot.slane %v2152, 1
      %v2189 = vsel %vm1663, %v2186, %v2188
      %v2190 = vrot.slane %v2153, 1
      %v2191 = vsel %vm1663, %v2188, %v2190
      %v2192 = vrot.slane %v2154, 1
      %v2193 = vsel %vm1663, %v2190, %v2192
      %v2194 = vrot.slane %v2155, 1
      %v2195 = vsel %vm1663, %v2192, %v2194
      %v2196 = vrot.slane %v2156, 1
      %v2197 = vsel %vm1663, %v2194, %v2196
      %v2198 = vrot.slane %v2157, 1
      %v2199 = vsel %vm1663, %v2196, %v2198
      %v2200 = vrot.slane %v2158, 1
      %v2201 = vsel %vm1663, %v2198, %v2200
      %v2202 = vrot.slane %v2159, 1
      %v2203 = vsel %vm1663, %v2200, %v2202
      %v2204 = vrot.slane %v2160, 1
      %v2205 = vsel %vm1663, %v2202, %v2204
      %v2206 = vrot.slane %v2161, 1
      %v2207 = vsel %vm1663, %v2204, %v2206
      %v2208 = vrot.slane %v2162, 1
      %v2209 = vsel %vm1663, %v2206, %v2208
      %v2210 = vrot.slane %v2163, 1
      %v2211 = vsel %vm1663, %v2208, %v2210
      %v2212 = vrot.slane %v2164, 1
      %v2213 = vsel %vm1663, %v2210, %v2212
      %v2214 = vrot.slane %v2165, 1
      %v2215 = vsel %vm1663, %v2212, %v2214
      %v2232 = vadd.f32 %v2129, %v2185
      %v2233 = vadd.f32 %v2130, %v2187
      %v2234 = vadd.f32 %v2131, %v2189
      %v2235 = vadd.f32 %v2132, %v2191
      %v2236 = vadd.f32 %v2133, %v2193
      %v2237 = vadd.f32 %v2134, %v2195
      %v2238 = vadd.f32 %v2135, %v2197
      %v2239 = vadd.f32 %v2136, %v2199
      %v2240 = vadd.f32 %v2137, %v2201
      %v2241 = vadd.f32 %v2138, %v2203
      %v2242 = vadd.f32 %v2139, %v2205
      %v2243 = vadd.f32 %v2140, %v2207
      %v2244 = vadd.f32 %v2141, %v2209
      %v2245 = vadd.f32 %v2142, %v2211
      %v2246 = vadd.f32 %v2143, %v2213
      %v2247 = vadd.f32 %v2144, %v2215
      %v2249 = vrot.slane %v1307, 2
      %v2250 = vsel %vm1778, %v2037, %v2249
      %v2251 = vrot.slane %v1330, 2
      %v2252 = vsel %vm1778, %v2249, %v2251
      %v2255 = vsel %vm1761, %v1789, 0.0
      %v2256 = vsel %vm1762, %v1791, 0.0
      %v2257 = vsel %vm1763, %v1793, 0.0
      %v2258 = vsel %vm1764, %v1795, 0.0
      %v2259 = vsel %vm1765, %v1797, 0.0
      %v2260 = vsel %vm1766, %v1799, 0.0
      %v2261 = vsel %vm1767, %v1801, 0.0
      %v2262 = vsel %vm1768, %v1803, 0.0
      %v2263 = vsel %vm1769, %v1805, 0.0
      %v2264 = vsel %vm1770, %v1807, 0.0
      %v2265 = vsel %vm1771, %v1809, 0.0
      %v2266 = vsel %vm1772, %v1811, 0.0
      %v2267 = vsel %vm1773, %v2036, 0.0
      %v2268 = vsel %vm1774, %v2038, 0.0
      %v2269 = vsel %vm1775, %v2250, 0.0
      %v2270 = vsel %vm1776, %v2252, 0.0
      %v2271 = vlaneseq
      %v2272 = vshrl.u32 %v2271, 7
      %v2273 = vsub.s32 0, %v2272
      %v2274 = vrot.slane %v1524, %v2273
      %v2275 = vmul.f32 %v2255, %v2274
      %v2276 = vmul.f32 %v2256, %v2274
      %v2277 = vmul.f32 %v2257, %v2274
      %v2278 = vmul.f32 %v2258, %v2274
      %v2279 = vmul.f32 %v2259, %v2274
      %v2280 = vmul.f32 %v2260, %v2274
      %v2281 = vmul.f32 %v2261, %v2274
      %v2282 = vmul.f32 %v2262, %v2274
      %v2283 = vmul.f32 %v2263, %v2274
      %v2284 = vmul.f32 %v2264, %v2274
      %v2285 = vmul.f32 %v2265, %v2274
      %v2286 = vmul.f32 %v2266, %v2274
      %v2287 = vmul.f32 %v2267, %v2274
      %v2288 = vmul.f32 %v2268, %v2274
      %v2289 = vmul.f32 %v2269, %v2274
      %v2290 = vmul.f32 %v2270, %v2274
      %v2291 = vadd.f32 %v2232, %v2275
      %v2292 = vadd.f32 %v2233, %v2276
      %v2293 = vadd.f32 %v2234, %v2277
      %v2294 = vadd.f32 %v2235, %v2278
      %v2295 = vadd.f32 %v2236, %v2279
      %v2296 = vadd.f32 %v2237, %v2280
      %v2297 = vadd.f32 %v2238, %v2281
      %v2298 = vadd.f32 %v2239, %v2282
      %v2299 = vadd.f32 %v2240, %v2283
      %v2300 = vadd.f32 %v2241, %v2284
      %v2301 = vadd.f32 %v2242, %v2285
      %v2302 = vadd.f32 %v2243, %v2286
      %v2303 = vadd.f32 %v2244, %v2287
      %v2304 = vadd.f32 %v2245, %v2288
      %v2305 = vadd.f32 %v2246, %v2289
      %v2306 = vadd.f32 %v2247, %v2290
      %v2307 = vld [vmem:[%s7] sm:$0x1]
      %v2308 = vld [vmem:[%s8] sm:$0x1]
      %v2310 = vlaneseq
      %v2311 = vshrl.u32 %v2310, 7
      %v2312 = vsub.s32 0, %v2311
      %v2313 = vrot.slane %v2307, %v2312
      %v2315 = vmul.f32 %v2291, %v2313
      %v2316 = vmul.f32 %v2292, %v2313
      %v2317 = vmul.f32 %v2293, %v2313
      %v2318 = vmul.f32 %v2294, %v2313
      %v2319 = vmul.f32 %v2295, %v2313
      %v2320 = vmul.f32 %v2296, %v2313
      %v2321 = vmul.f32 %v2297, %v2313
      %v2322 = vmul.f32 %v2298, %v2313
      %v2323 = vmul.f32 %v2299, %v2313
      %v2324 = vmul.f32 %v2300, %v2313
      %v2325 = vmul.f32 %v2301, %v2313
      %v2326 = vmul.f32 %v2302, %v2313
      %v2327 = vmul.f32 %v2303, %v2313
      %v2328 = vmul.f32 %v2304, %v2313
      %v2329 = vmul.f32 %v2305, %v2313
      %v2330 = vmul.f32 %v2306, %v2313
      %v2332 = vlaneseq
      %v2333 = vshrl.u32 %v2332, 7
      %v2334 = vsub.s32 0, %v2333
      %v2335 = vrot.slane %v2308, %v2334
      %v2337 = vadd.f32 %v2315, %v2335
      %v2338 = vadd.f32 %v2316, %v2335
      %v2339 = vadd.f32 %v2317, %v2335
      %v2340 = vadd.f32 %v2318, %v2335
      %v2341 = vadd.f32 %v2319, %v2335
      %v2342 = vadd.f32 %v2320, %v2335
      %v2343 = vadd.f32 %v2321, %v2335
      %v2344 = vadd.f32 %v2322, %v2335
      %v2345 = vadd.f32 %v2323, %v2335
      %v2346 = vadd.f32 %v2324, %v2335
      %v2347 = vadd.f32 %v2325, %v2335
      %v2348 = vadd.f32 %v2326, %v2335
      %v2349 = vadd.f32 %v2327, %v2335
      %v2350 = vadd.f32 %v2328, %v2335
      %v2351 = vadd.f32 %v2329, %v2335
      %v2352 = vadd.f32 %v2330, %v2335
      %v2353 = vmax.f32 %v2337, 0.0
      %v2354 = vmax.f32 %v2338, 0.0
      %v2355 = vmax.f32 %v2339, 0.0
      %v2356 = vmax.f32 %v2340, 0.0
      %v2357 = vmax.f32 %v2341, 0.0
      %v2358 = vmax.f32 %v2342, 0.0
      %v2359 = vmax.f32 %v2343, 0.0
      %v2360 = vmax.f32 %v2344, 0.0
      %v2361 = vmax.f32 %v2345, 0.0
      %v2362 = vmax.f32 %v2346, 0.0
      %v2363 = vmax.f32 %v2347, 0.0
      %v2364 = vmax.f32 %v2348, 0.0
      %v2365 = vmax.f32 %v2349, 0.0
      %v2366 = vmax.f32 %v2350, 0.0
      %v2367 = vmax.f32 %v2351, 0.0
      %v2368 = vmax.f32 %v2352, 0.0
      %v2369 = vld [vmem:[%s9] sm:$0xff]
      %v2370 = vld [vmem:[%s9 + $0x8] sm:$0xff]
      %v2371 = vld [vmem:[%s9 + $0x10] sm:$0xff]
      %v2372 = vld [vmem:[%s9 + $0x18] sm:$0xff]
      %vm2373 = vcmask 261120
      %v2375 = vsel %vm2373, %v2353, 0
      %v2378 = vsel %vm2373, %v2354, 0
      %v2381 = vsel %vm2373, %v2355, 0
      %v2384 = vsel %vm2373, %v2356, 0
      %v2387 = vsel %vm2373, %v2357, 0
      %v2390 = vsel %vm2373, %v2358, 0
      %v2393 = vsel %vm2373, %v2359, 0
      %v2396 = vsel %vm2373, %v2360, 0
      %v2399 = vsel %vm2373, %v2361, 0
      %v2402 = vsel %vm2373, %v2362, 0
      %v2405 = vsel %vm2373, %v2363, 0
      %v2408 = vsel %vm2373, %v2364, 0
      %v2411 = vsel %vm2373, %v2365, 0
      %v2414 = vsel %vm2373, %v2366, 0
      %v2417 = vsel %vm2373, %v2367, 0
      %v2420 = vsel %vm2373, %v2368, 0
      %2422 = vmatprep.subr.mxu0 0.0
      %2423 = vmatpush1.msra.mxu0 %v2369
      %2424 = vmatprep.subr.mxu0 0.0
      %2425 = vmatpush1.msra.mxu0 %v2370
      %2426 = vmatprep.subr.mxu0 0.0
      %2427 = vmatpush1.msra.mxu0 %v2371
      %2428 = vmatprep.subr.mxu0 0.0
      %2429 = vmatpush1.msra.mxu0 %v2372
      %2430 = vmatprep.subr.mxu0 0.0
      %2431 = vmatpush1.msra.mxu0 0.0
      %2432 = vmatprep.subr.mxu0 0.0
      %2433 = vmatpush1.msra.mxu0 0.0
      %2434 = vmatprep.subr.mxu0 0.0
      %2435 = vmatpush1.msra.mxu0 0.0
      %2436 = vmatprep.subr.mxu0 0.0
      %2437 = vmatpush1.msra.mxu0 0.0
      %2438 = vmatprep.subr.mxu0 0.0
      %2439 = vmatpush1.msra.mxu0 0.0
      %2440 = vmatprep.subr.mxu0 0.0
      %2441 = vmatpush1.msra.mxu0 0.0
      %2442 = vmatprep.subr.mxu0 0.0
      %2443 = vmatpush1.msra.mxu0 0.0
      %2444 = vmatprep.subr.mxu0 0.0
      %2445 = vmatpush1.msra.mxu0 0.0
      %2446 = vmatprep.subr.mxu0 0.0
      %2447 = vmatpush1.msra.mxu0 0.0
      %2448 = vmatprep.subr.mxu0 0.0
      %2449 = vmatpush1.msra.mxu0 0.0
      %2450 = vmatprep.subr.mxu0 0.0
      %2451 = vmatpush1.msra.mxu0 0.0
      %2452 = vmatprep.subr.mxu0 0.0
      %2453 = vmatpush1.msra.mxu0 0.0
      %2454 = vmatprep.subr.mxu0 0.0
      %2455 = vmatpush1.msra.mxu0 0.0
      %2456 = vmatprep.subr.mxu0 0.0
      %2457 = vmatpush1.msra.mxu0 0.0
      %2458 = vmatprep.subr.mxu0 0.0
      %2459 = vmatpush1.msra.mxu0 0.0
      %2460 = vmatprep.subr.mxu0 0.0
      %2461 = vmatpush1.msra.mxu0 0.0
      %2462 = vmatprep.subr.mxu0 0.0
      %2463 = vmatpush1.msra.mxu0 0.0
      %2464 = vmatprep.subr.mxu0 0.0
      %2465 = vmatpush1.msra.mxu0 0.0
      %2466 = vmatprep.subr.mxu0 0.0
      %2467 = vmatpush1.msra.mxu0 0.0
      %2468 = vmatprep.subr.mxu0 0.0
      %2469 = vmatpush1.msra.mxu0 0.0
      %2470 = vmatprep.subr.mxu0 0.0
      %2471 = vmatpush1.msra.mxu0 0.0
      %2472 = vmatprep.subr.mxu0 0.0
      %2473 = vmatpush1.msra.mxu0 0.0
      %2474 = vmatprep.subr.mxu0 0.0
      %2475 = vmatpush1.msra.mxu0 0.0
      %2476 = vmatprep.subr.mxu0 0.0
      %2477 = vmatpush1.msra.mxu0 0.0
      %2478 = vmatprep.subr.mxu0 0.0
      %2479 = vmatpush1.msra.mxu0 0.0
      %2480 = vmatprep.subr.mxu0 0.0
      %2481 = vmatpush1.msra.mxu0 0.0
      %2482 = vmatprep.subr.mxu0 0.0
      %2483 = vmatpush1.msra.mxu0 0.0
      %2484 = vmatprep.subr.mxu0 0.0
      %2485 = vmatpush1.msra.mxu0 0.0
      %2486 = vmatprep.mubr.f32.mxu0 0.0
      %2487 = vmatmul.mubr.f32.gmra.mrb[0].mxu0 %v2375
      %v2488 = vpop.f32.mrb[0].mxu0
      %v2489 = vadd.f32 0.0, %v2488
      %v2490 = vpop.f32.mrb[0].mxu0
      %2491 = vmatprep.mubr.f32.mxu0 0.0
      %2492 = vmatmul.mubr.f32.gmra.mrb[0].mxu0 %v2378
      %v2493 = vpop.f32.mrb[0].mxu0
      %v2494 = vadd.f32 0.0, %v2493
      %v2495 = vpop.f32.mrb[0].mxu0
      %2496 = vmatprep.mubr.f32.mxu0 0.0
      %2497 = vmatmul.mubr.f32.gmra.mrb[0].mxu0 %v2381
      %v2498 = vpop.f32.mrb[0].mxu0
      %v2499 = vadd.f32 0.0, %v2498
      %v2500 = vpop.f32.mrb[0].mxu0
      %2501 = vmatprep.mubr.f32.mxu0 0.0
      %2502 = vmatmul.mubr.f32.gmra.mrb[0].mxu0 %v2384
      %v2503 = vpop.f32.mrb[0].mxu0
      %v2504 = vadd.f32 0.0, %v2503
      %v2505 = vpop.f32.mrb[0].mxu0
      %2506 = vmatprep.mubr.f32.mxu0 0.0
      %2507 = vmatmul.mubr.f32.gmra.mrb[0].mxu0 %v2387
      %v2508 = vpop.f32.mrb[0].mxu0
      %v2509 = vadd.f32 0.0, %v2508
      %v2510 = vpop.f32.mrb[0].mxu0
      %2511 = vmatprep.mubr.f32.mxu0 0.0
      %2512 = vmatmul.mubr.f32.gmra.mrb[0].mxu0 %v2390
      %v2513 = vpop.f32.mrb[0].mxu0
      %v2514 = vadd.f32 0.0, %v2513
      %v2515 = vpop.f32.mrb[0].mxu0
      %2516 = vmatprep.mubr.f32.mxu0 0.0
      %2517 = vmatmul.mubr.f32.gmra.mrb[0].mxu0 %v2393
      %v2518 = vpop.f32.mrb[0].mxu0
      %v2519 = vadd.f32 0.0, %v2518
      %v2520 = vpop.f32.mrb[0].mxu0
      %2521 = vmatprep.mubr.f32.mxu0 0.0
      %2522 = vmatmul.mubr.f32.gmra.mrb[0].mxu0 %v2396
      %v2523 = vpop.f32.mrb[0].mxu0
      %v2524 = vadd.f32 0.0, %v2523
      %v2525 = vpop.f32.mrb[0].mxu0
      %2526 = vmatprep.mubr.f32.mxu0 0.0
      %2527 = vmatmul.mubr.f32.gmra.mrb[0].mxu0 %v2399
      %v2528 = vpop.f32.mrb[0].mxu0
      %v2529 = vadd.f32 0.0, %v2528
      %v2530 = vpop.f32.mrb[0].mxu0
      %2531 = vmatprep.mubr.f32.mxu0 0.0
      %2532 = vmatmul.mubr.f32.gmra.mrb[0].mxu0 %v2402
      %v2533 = vpop.f32.mrb[0].mxu0
      %v2534 = vadd.f32 0.0, %v2533
      %v2535 = vpop.f32.mrb[0].mxu0
      %2536 = vmatprep.mubr.f32.mxu0 0.0
      %2537 = vmatmul.mubr.f32.gmra.mrb[0].mxu0 %v2405
      %v2538 = vpop.f32.mrb[0].mxu0
      %v2539 = vadd.f32 0.0, %v2538
      %v2540 = vpop.f32.mrb[0].mxu0
      %2541 = vmatprep.mubr.f32.mxu0 0.0
      %2542 = vmatmul.mubr.f32.gmra.mrb[0].mxu0 %v2408
      %v2543 = vpop.f32.mrb[0].mxu0
      %v2544 = vadd.f32 0.0, %v2543
      %v2545 = vpop.f32.mrb[0].mxu0
      %2546 = vmatprep.mubr.f32.mxu0 0.0
      %2547 = vmatmul.mubr.f32.gmra.mrb[0].mxu0 %v2411
      %v2548 = vpop.f32.mrb[0].mxu0
      %v2549 = vadd.f32 0.0, %v2548
      %v2550 = vpop.f32.mrb[0].mxu0
      %2551 = vmatprep.mubr.f32.mxu0 0.0
      %2552 = vmatmul.mubr.f32.gmra.mrb[0].mxu0 %v2414
      %v2553 = vpop.f32.mrb[0].mxu0
      %v2554 = vadd.f32 0.0, %v2553
      %v2555 = vpop.f32.mrb[0].mxu0
      %2556 = vmatprep.mubr.f32.mxu0 0.0
      %2557 = vmatmul.mubr.f32.gmra.mrb[0].mxu0 %v2417
      %v2558 = vpop.f32.mrb[0].mxu0
      %v2559 = vadd.f32 0.0, %v2558
      %v2560 = vpop.f32.mrb[0].mxu0
      %2561 = vmatprep.mubr.f32.mxu0 0.0
      %2562 = vmatmul.mubr.f32.gmra.mrb[0].mxu0 %v2420
      %v2563 = vpop.f32.mrb[0].mxu0
      %v2564 = vadd.f32 0.0, %v2563
      %v2565 = vpop.f32.mrb[0].mxu0
      %2566 = vdwg.mxu0
      %v2567 = vld [vmem:[%s10] sm:$0x1]
      %v2568 = vld [vmem:[%s11] sm:$0x1]
      %v2570 = vlaneseq
      %v2571 = vshrl.u32 %v2570, 7
      %v2572 = vsub.s32 0, %v2571
      %v2573 = vrot.slane %v2567, %v2572
      %v2575 = vmul.f32 %v2489, %v2573
      %v2576 = vmul.f32 %v2494, %v2573
      %v2577 = vmul.f32 %v2499, %v2573
      %v2578 = vmul.f32 %v2504, %v2573
      %v2579 = vmul.f32 %v2509, %v2573
      %v2580 = vmul.f32 %v2514, %v2573
      %v2581 = vmul.f32 %v2519, %v2573
      %v2582 = vmul.f32 %v2524, %v2573
      %v2583 = vmul.f32 %v2529, %v2573
      %v2584 = vmul.f32 %v2534, %v2573
      %v2585 = vmul.f32 %v2539, %v2573
      %v2586 = vmul.f32 %v2544, %v2573
      %v2587 = vmul.f32 %v2549, %v2573
      %v2588 = vmul.f32 %v2554, %v2573
      %v2589 = vmul.f32 %v2559, %v2573
      %v2590 = vmul.f32 %v2564, %v2573
      %v2592 = vlaneseq
      %v2593 = vshrl.u32 %v2592, 7
      %v2594 = vsub.s32 0, %v2593
      %v2595 = vrot.slane %v2568, %v2594
      %v2597 = vadd.f32 %v2575, %v2595
      %v2598 = vadd.f32 %v2576, %v2595
      %v2599 = vadd.f32 %v2577, %v2595
      %v2600 = vadd.f32 %v2578, %v2595
      %v2601 = vadd.f32 %v2579, %v2595
      %v2602 = vadd.f32 %v2580, %v2595
      %v2603 = vadd.f32 %v2581, %v2595
      %v2604 = vadd.f32 %v2582, %v2595
      %v2605 = vadd.f32 %v2583, %v2595
      %v2606 = vadd.f32 %v2584, %v2595
      %v2607 = vadd.f32 %v2585, %v2595
      %v2608 = vadd.f32 %v2586, %v2595
      %v2609 = vadd.f32 %v2587, %v2595
      %v2610 = vadd.f32 %v2588, %v2595
      %v2611 = vadd.f32 %v2589, %v2595
      %v2612 = vadd.f32 %v2590, %v2595
      %v2613 = vmax.f32 %v2597, 0.0
      %v2614 = vmax.f32 %v2598, 0.0
      %v2615 = vmax.f32 %v2599, 0.0
      %v2616 = vmax.f32 %v2600, 0.0
      %v2617 = vmax.f32 %v2601, 0.0
      %v2618 = vmax.f32 %v2602, 0.0
      %v2619 = vmax.f32 %v2603, 0.0
      %v2620 = vmax.f32 %v2604, 0.0
      %v2621 = vmax.f32 %v2605, 0.0
      %v2622 = vmax.f32 %v2606, 0.0
      %v2623 = vmax.f32 %v2607, 0.0
      %v2624 = vmax.f32 %v2608, 0.0
      %v2625 = vmax.f32 %v2609, 0.0
      %v2626 = vmax.f32 %v2610, 0.0
      %v2627 = vmax.f32 %v2611, 0.0
      %v2628 = vmax.f32 %v2612, 0.0
      %v2629 = vld [vmem:[%s12] sm:$0xff]
      %v2630 = vld [vmem:[%s12 + $0x8] sm:$0xff]
      %v2631 = vld [vmem:[%s12 + $0x10] sm:$0xff]
      %v2632 = vld [vmem:[%s12 + $0x18] sm:$0xff]
      %v2634 = vsel %vm2373, %v2613, 0
      %v2637 = vsel %vm2373, %v2614, 0
      %v2640 = vsel %vm2373, %v2615, 0
      %v2643 = vsel %vm2373, %v2616, 0
      %v2646 = vsel %vm2373, %v2617, 0
      %v2649 = vsel %vm2373, %v2618, 0
      %v2652 = vsel %vm2373, %v2619, 0
      %v2655 = vsel %vm2373, %v2620, 0
      %v2658 = vsel %vm2373, %v2621, 0
      %v2661 = vsel %vm2373, %v2622, 0
      %v2664 = vsel %vm2373, %v2623, 0
      %v2667 = vsel %vm2373, %v2624, 0
      %v2670 = vsel %vm2373, %v2625, 0
      %v2673 = vsel %vm2373, %v2626, 0
      %v2676 = vsel %vm2373, %v2627, 0
      %v2679 = vsel %vm2373, %v2628, 0
      %2681 = vmatprep.subr.mxu0 0.0
      %2682 = vmatpush1.msra.mxu0 %v2629
      %2683 = vmatprep.subr.mxu0 0.0
      %2684 = vmatpush1.msra.mxu0 %v2630
      %2685 = vmatprep.subr.mxu0 0.0
      %2686 = vmatpush1.msra.mxu0 %v2631
      %2687 = vmatprep.subr.mxu0 0.0
      %2688 = vmatpush1.msra.mxu0 %v2632
      %2689 = vmatprep.subr.mxu0 0.0
      %2690 = vmatpush1.msra.mxu0 0.0
      %2691 = vmatprep.subr.mxu0 0.0
      %2692 = vmatpush1.msra.mxu0 0.0
      %2693 = vmatprep.subr.mxu0 0.0
      %2694 = vmatpush1.msra.mxu0 0.0
      %2695 = vmatprep.subr.mxu0 0.0
      %2696 = vmatpush1.msra.mxu0 0.0
      %2697 = vmatprep.subr.mxu0 0.0
      %2698 = vmatpush1.msra.mxu0 0.0
      %2699 = vmatprep.subr.mxu0 0.0
      %2700 = vmatpush1.msra.mxu0 0.0
      %2701 = vmatprep.subr.mxu0 0.0
      %2702 = vmatpush1.msra.mxu0 0.0
      %2703 = vmatprep.subr.mxu0 0.0
      %2704 = vmatpush1.msra.mxu0 0.0
      %2705 = vmatprep.subr.mxu0 0.0
      %2706 = vmatpush1.msra.mxu0 0.0
      %2707 = vmatprep.subr.mxu0 0.0
      %2708 = vmatpush1.msra.mxu0 0.0
      %2709 = vmatprep.subr.mxu0 0.0
      %2710 = vmatpush1.msra.mxu0 0.0
      %2711 = vmatprep.subr.mxu0 0.0
      %2712 = vmatpush1.msra.mxu0 0.0
      %2713 = vmatprep.subr.mxu0 0.0
      %2714 = vmatpush1.msra.mxu0 0.0
      %2715 = vmatprep.subr.mxu0 0.0
      %2716 = vmatpush1.msra.mxu0 0.0
      %2717 = vmatprep.subr.mxu0 0.0
      %2718 = vmatpush1.msra.mxu0 0.0
      %2719 = vmatprep.subr.mxu0 0.0
      %2720 = vmatpush1.msra.mxu0 0.0
      %2721 = vmatprep.subr.mxu0 0.0
      %2722 = vmatpush1.msra.mxu0 0.0
      %2723 = vmatprep.subr.mxu0 0.0
      %2724 = vmatpush1.msra.mxu0 0.0
      %2725 = vmatprep.subr.mxu0 0.0
      %2726 = vmatpush1.msra.mxu0 0.0
      %2727 = vmatprep.subr.mxu0 0.0
      %2728 = vmatpush1.msra.mxu0 0.0
      %2729 = vmatprep.subr.mxu0 0.0
      %2730 = vmatpush1.msra.mxu0 0.0
      %2731 = vmatprep.subr.mxu0 0.0
      %2732 = vmatpush1.msra.mxu0 0.0
      %2733 = vmatprep.subr.mxu0 0.0
      %2734 = vmatpush1.msra.mxu0 0.0
      %2735 = vmatprep.subr.mxu0 0.0
      %2736 = vmatpush1.msra.mxu0 0.0
      %2737 = vmatprep.subr.mxu0 0.0
      %2738 = vmatpush1.msra.mxu0 0.0
      %2739 = vmatprep.subr.mxu0 0.0
      %2740 = vmatpush1.msra.mxu0 0.0
      %2741 = vmatprep.subr.mxu0 0.0
      %2742 = vmatpush1.msra.mxu0 0.0
      %2743 = vmatprep.subr.mxu0 0.0
      %2744 = vmatpush1.msra.mxu0 0.0
      %2745 = vmatprep.mubr.f32.mxu0 0.0
      %2746 = vmatmul.mubr.f32.gmra.mrb[0].mxu0 %v2634
      %v2747 = vpop.f32.mrb[0].mxu0
      %v2748 = vadd.f32 0.0, %v2747
      %v2749 = vpop.f32.mrb[0].mxu0
      %2750 = vmatprep.mubr.f32.mxu0 0.0
      %2751 = vmatmul.mubr.f32.gmra.mrb[0].mxu0 %v2637
      %v2752 = vpop.f32.mrb[0].mxu0
      %v2753 = vadd.f32 0.0, %v2752
      %v2754 = vpop.f32.mrb[0].mxu0
      %2755 = vmatprep.mubr.f32.mxu0 0.0
      %2756 = vmatmul.mubr.f32.gmra.mrb[0].mxu0 %v2640
      %v2757 = vpop.f32.mrb[0].mxu0
      %v2758 = vadd.f32 0.0, %v2757
      %v2759 = vpop.f32.mrb[0].mxu0
      %2760 = vmatprep.mubr.f32.mxu0 0.0
      %2761 = vmatmul.mubr.f32.gmra.mrb[0].mxu0 %v2643
      %v2762 = vpop.f32.mrb[0].mxu0
      %v2763 = vadd.f32 0.0, %v2762
      %v2764 = vpop.f32.mrb[0].mxu0
      %2765 = vmatprep.mubr.f32.mxu0 0.0
      %2766 = vmatmul.mubr.f32.gmra.mrb[0].mxu0 %v2646
      %v2767 = vpop.f32.mrb[0].mxu0
      %v2768 = vadd.f32 0.0, %v2767
      %v2769 = vpop.f32.mrb[0].mxu0
      %2770 = vmatprep.mubr.f32.mxu0 0.0
      %2771 = vmatmul.mubr.f32.gmra.mrb[0].mxu0 %v2649
      %v2772 = vpop.f32.mrb[0].mxu0
      %v2773 = vadd.f32 0.0, %v2772
      %v2774 = vpop.f32.mrb[0].mxu0
      %2775 = vmatprep.mubr.f32.mxu0 0.0
      %2776 = vmatmul.mubr.f32.gmra.mrb[0].mxu0 %v2652
      %v2777 = vpop.f32.mrb[0].mxu0
      %v2778 = vadd.f32 0.0, %v2777
      %v2779 = vpop.f32.mrb[0].mxu0
      %2780 = vmatprep.mubr.f32.mxu0 0.0
      %2781 = vmatmul.mubr.f32.gmra.mrb[0].mxu0 %v2655
      %v2782 = vpop.f32.mrb[0].mxu0
      %v2783 = vadd.f32 0.0, %v2782
      %v2784 = vpop.f32.mrb[0].mxu0
      %2785 = vmatprep.mubr.f32.mxu0 0.0
      %2786 = vmatmul.mubr.f32.gmra.mrb[0].mxu0 %v2658
      %v2787 = vpop.f32.mrb[0].mxu0
      %v2788 = vadd.f32 0.0, %v2787
      %v2789 = vpop.f32.mrb[0].mxu0
      %2790 = vmatprep.mubr.f32.mxu0 0.0
      %2791 = vmatmul.mubr.f32.gmra.mrb[0].mxu0 %v2661
      %v2792 = vpop.f32.mrb[0].mxu0
      %v2793 = vadd.f32 0.0, %v2792
      %v2794 = vpop.f32.mrb[0].mxu0
      %2795 = vmatprep.mubr.f32.mxu0 0.0
      %2796 = vmatmul.mubr.f32.gmra.mrb[0].mxu0 %v2664
      %v2797 = vpop.f32.mrb[0].mxu0
      %v2798 = vadd.f32 0.0, %v2797
      %v2799 = vpop.f32.mrb[0].mxu0
      %2800 = vmatprep.mubr.f32.mxu0 0.0
      %2801 = vmatmul.mubr.f32.gmra.mrb[0].mxu0 %v2667
      %v2802 = vpop.f32.mrb[0].mxu0
      %v2803 = vadd.f32 0.0, %v2802
      %v2804 = vpop.f32.mrb[0].mxu0
      %2805 = vmatprep.mubr.f32.mxu0 0.0
      %2806 = vmatmul.mubr.f32.gmra.mrb[0].mxu0 %v2670
      %v2807 = vpop.f32.mrb[0].mxu0
      %v2808 = vadd.f32 0.0, %v2807
      %v2809 = vpop.f32.mrb[0].mxu0
      %2810 = vmatprep.mubr.f32.mxu0 0.0
      %2811 = vmatmul.mubr.f32.gmra.mrb[0].mxu0 %v2673
      %v2812 = vpop.f32.mrb[0].mxu0
      %v2813 = vadd.f32 0.0, %v2812
      %v2814 = vpop.f32.mrb[0].mxu0
      %2815 = vmatprep.mubr.f32.mxu0 0.0
      %2816 = vmatmul.mubr.f32.gmra.mrb[0].mxu0 %v2676
      %v2817 = vpop.f32.mrb[0].mxu0
      %v2818 = vadd.f32 0.0, %v2817
      %v2819 = vpop.f32.mrb[0].mxu0
      %2820 = vmatprep.mubr.f32.mxu0 0.0
      %2821 = vmatmul.mubr.f32.gmra.mrb[0].mxu0 %v2679
      %v2822 = vpop.f32.mrb[0].mxu0
      %v2823 = vadd.f32 0.0, %v2822
      %v2824 = vpop.f32.mrb[0].mxu0
      %2825 = vdwg.mxu0
      %v2826 = vld [vmem:[%s13] sm:$0x1]
      %v2828 = vlaneseq
      %v2829 = vshrl.u32 %v2828, 7
      %v2830 = vsub.s32 0, %v2829
      %v2831 = vrot.slane %v2826, %v2830
      %v2833 = vmul.f32 %v2748, %v2831
      %v2834 = vmul.f32 %v2753, %v2831
      %v2835 = vmul.f32 %v2758, %v2831
      %v2836 = vmul.f32 %v2763, %v2831
      %v2837 = vmul.f32 %v2768, %v2831
      %v2838 = vmul.f32 %v2773, %v2831
      %v2839 = vmul.f32 %v2778, %v2831
      %v2840 = vmul.f32 %v2783, %v2831
      %v2841 = vmul.f32 %v2788, %v2831
      %v2842 = vmul.f32 %v2793, %v2831
      %v2843 = vmul.f32 %v2798, %v2831
      %v2844 = vmul.f32 %v2803, %v2831
      %v2845 = vmul.f32 %v2808, %v2831
      %v2846 = vmul.f32 %v2813, %v2831
      %v2847 = vmul.f32 %v2818, %v2831
      %v2848 = vmul.f32 %v2823, %v2831
      %v2849 = vld [vmem:[%s14] sm:$0x1]
      %v2851 = vlaneseq
      %v2852 = vshrl.u32 %v2851, 7
      %v2853 = vsub.s32 0, %v2852
      %v2854 = vrot.slane %v2849, %v2853
      %v2856 = vadd.f32 %v2833, %v2854
      %v2857 = vadd.f32 %v2834, %v2854
      %v2858 = vadd.f32 %v2835, %v2854
      %v2859 = vadd.f32 %v2836, %v2854
      %v2860 = vadd.f32 %v2837, %v2854
      %v2861 = vadd.f32 %v2838, %v2854
      %v2862 = vadd.f32 %v2839, %v2854
      %v2863 = vadd.f32 %v2840, %v2854
      %v2864 = vadd.f32 %v2841, %v2854
      %v2865 = vadd.f32 %v2842, %v2854
      %v2866 = vadd.f32 %v2843, %v2854
      %v2867 = vadd.f32 %v2844, %v2854
      %v2868 = vadd.f32 %v2845, %v2854
      %v2869 = vadd.f32 %v2846, %v2854
      %v2870 = vadd.f32 %v2847, %v2854
      %v2871 = vadd.f32 %v2848, %v2854
      %v2872 = vadd.f32 %v2856, %v742
      %v2873 = vadd.f32 %v2857, %v743
      %v2874 = vadd.f32 %v2858, %v744
      %v2875 = vadd.f32 %v2859, %v745
      %v2876 = vadd.f32 %v2860, %v746
      %v2877 = vadd.f32 %v2861, %v747
      %v2878 = vadd.f32 %v2862, %v748
      %v2879 = vadd.f32 %v2863, %v749
      %v2880 = vadd.f32 %v2864, %v750
      %v2881 = vadd.f32 %v2865, %v751
      %v2882 = vadd.f32 %v2866, %v752
      %v2883 = vadd.f32 %v2867, %v753
      %v2884 = vadd.f32 %v2868, %v754
      %v2885 = vadd.f32 %v2869, %v755
      %v2886 = vadd.f32 %v2870, %v756
      %v2887 = vadd.f32 %v2871, %v757
      %v2888 = vld [vmem:[%s726] sm:$0xff]
      %v2889 = vld [vmem:[%s726 + $0x8] sm:$0xff]
      %v2890 = vld [vmem:[%s726 + $0x10] sm:$0xff]
      %v2891 = vld [vmem:[%s726 + $0x18] sm:$0xff]
      %v2892 = vld [vmem:[%s726 + $0x20] sm:$0xff]
      %v2893 = vld [vmem:[%s726 + $0x28] sm:$0xff]
      %v2894 = vld [vmem:[%s726 + $0x30] sm:$0xff]
      %v2895 = vld [vmem:[%s726 + $0x38] sm:$0xff]
      %v2896 = vld [vmem:[%s726 + $0x40] sm:$0xff]
      %v2897 = vld [vmem:[%s726 + $0x48] sm:$0xff]
      %v2898 = vld [vmem:[%s726 + $0x50] sm:$0xff]
      %v2899 = vld [vmem:[%s726 + $0x58] sm:$0xff]
      %v2900 = vld [vmem:[%s726 + $0x60] sm:$0xff]
      %v2901 = vld [vmem:[%s726 + $0x68] sm:$0xff]
      %v2902 = vld [vmem:[%s726 + $0x70] sm:$0xff]
      %v2903 = vld [vmem:[%s726 + $0x78] sm:$0xff]
      %v2904 = vld [vmem:[%s16] sm:$0xf]
      %vm2905 = vcmask 31744
      %v2907 = vsel %vm2905, %v2888, 0
      %v2910 = vsel %vm2905, %v2889, 0
      %v2913 = vsel %vm2905, %v2890, 0
      %v2916 = vsel %vm2905, %v2891, 0
      %v2919 = vsel %vm2905, %v2892, 0
      %v2922 = vsel %vm2905, %v2893, 0
      %v2925 = vsel %vm2905, %v2894, 0
      %v2928 = vsel %vm2905, %v2895, 0
      %v2931 = vsel %vm2905, %v2896, 0
      %v2934 = vsel %vm2905, %v2897, 0
      %v2937 = vsel %vm2905, %v2898, 0
      %v2940 = vsel %vm2905, %v2899, 0
      %v2943 = vsel %vm2905, %v2900, 0
      %v2946 = vsel %vm2905, %v2901, 0
      %v2949 = vsel %vm2905, %v2902, 0
      %v2952 = vsel %vm2905, %v2903, 0
      %vm2954 = vcmask 1043456
      %v2956 = vsel %vm2954, %v2904, 0
      %2958 = vmatprep.subr.mxu0 0.0
      %2959 = vmatpush1.msra.mxu0 %v2956
      %2960 = vmatprep.subr.mxu0 0.0
      %2961 = vmatpush1.msra.mxu0 0.0
      %2962 = vmatprep.subr.mxu0 0.0
      %2963 = vmatpush1.msra.mxu0 0.0
      %2964 = vmatprep.subr.mxu0 0.0
      %2965 = vmatpush1.msra.mxu0 0.0
      %2966 = vmatprep.subr.mxu0 0.0
      %2967 = vmatpush1.msra.mxu0 0.0
      %2968 = vmatprep.subr.mxu0 0.0
      %2969 = vmatpush1.msra.mxu0 0.0
      %2970 = vmatprep.subr.mxu0 0.0
      %2971 = vmatpush1.msra.mxu0 0.0
      %2972 = vmatprep.subr.mxu0 0.0
      %2973 = vmatpush1.msra.mxu0 0.0
      %2974 = vmatprep.subr.mxu0 0.0
      %2975 = vmatpush1.msra.mxu0 0.0
      %2976 = vmatprep.subr.mxu0 0.0
      %2977 = vmatpush1.msra.mxu0 0.0
      %2978 = vmatprep.subr.mxu0 0.0
      %2979 = vmatpush1.msra.mxu0 0.0
      %2980 = vmatprep.subr.mxu0 0.0
      %2981 = vmatpush1.msra.mxu0 0.0
      %2982 = vmatprep.subr.mxu0 0.0
      %2983 = vmatpush1.msra.mxu0 0.0
      %2984 = vmatprep.subr.mxu0 0.0
      %2985 = vmatpush1.msra.mxu0 0.0
      %2986 = vmatprep.subr.mxu0 0.0
      %2987 = vmatpush1.msra.mxu0 0.0
      %2988 = vmatprep.subr.mxu0 0.0
      %2989 = vmatpush1.msra.mxu0 0.0
      %2990 = vmatprep.subr.mxu0 0.0
      %2991 = vmatpush1.msra.mxu0 0.0
      %2992 = vmatprep.subr.mxu0 0.0
      %2993 = vmatpush1.msra.mxu0 0.0
      %2994 = vmatprep.subr.mxu0 0.0
      %2995 = vmatpush1.msra.mxu0 0.0
      %2996 = vmatprep.subr.mxu0 0.0
      %2997 = vmatpush1.msra.mxu0 0.0
      %2998 = vmatprep.subr.mxu0 0.0
      %2999 = vmatpush1.msra.mxu0 0.0
      %3000 = vmatprep.subr.mxu0 0.0
      %3001 = vmatpush1.msra.mxu0 0.0
      %3002 = vmatprep.subr.mxu0 0.0
      %3003 = vmatpush1.msra.mxu0 0.0
      %3004 = vmatprep.subr.mxu0 0.0
      %3005 = vmatpush1.msra.mxu0 0.0
      %3006 = vmatprep.subr.mxu0 0.0
      %3007 = vmatpush1.msra.mxu0 0.0
      %3008 = vmatprep.subr.mxu0 0.0
      %3009 = vmatpush1.msra.mxu0 0.0
      %3010 = vmatprep.subr.mxu0 0.0
      %3011 = vmatpush1.msra.mxu0 0.0
      %3012 = vmatprep.subr.mxu0 0.0
      %3013 = vmatpush1.msra.mxu0 0.0
      %3014 = vmatprep.subr.mxu0 0.0
      %3015 = vmatpush1.msra.mxu0 0.0
      %3016 = vmatprep.subr.mxu0 0.0
      %3017 = vmatpush1.msra.mxu0 0.0
      %3018 = vmatprep.subr.mxu0 0.0
      %3019 = vmatpush1.msra.mxu0 0.0
      %3020 = vmatprep.subr.mxu0 0.0
      %3021 = vmatpush1.msra.mxu0 0.0
      %3022 = vmatprep.mubr.f32.mxu0 0.0
      %3023 = vmatmul.mubr.f32.gmra.mrb[0].mxu0 %v2907
      %v3024 = vpop.f32.mrb[0].mxu0
      %v3025 = vadd.f32 0.0, %v3024
      %v3026 = vpop.f32.mrb[0].mxu0
      %3027 = vmatprep.mubr.f32.mxu0 0.0
      %3028 = vmatmul.mubr.f32.gmra.mrb[0].mxu0 %v2910
      %v3029 = vpop.f32.mrb[0].mxu0
      %v3030 = vadd.f32 0.0, %v3029
      %v3031 = vpop.f32.mrb[0].mxu0
      %3032 = vmatprep.mubr.f32.mxu0 0.0
      %3033 = vmatmul.mubr.f32.gmra.mrb[0].mxu0 %v2913
      %v3034 = vpop.f32.mrb[0].mxu0
      %v3035 = vadd.f32 0.0, %v3034
      %v3036 = vpop.f32.mrb[0].mxu0
      %3037 = vmatprep.mubr.f32.mxu0 0.0
      %3038 = vmatmul.mubr.f32.gmra.mrb[0].mxu0 %v2916
      %v3039 = vpop.f32.mrb[0].mxu0
      %v3040 = vadd.f32 0.0, %v3039
      %v3041 = vpop.f32.mrb[0].mxu0
      %3042 = vmatprep.mubr.f32.mxu0 0.0
      %3043 = vmatmul.mubr.f32.gmra.mrb[0].mxu0 %v2919
      %v3044 = vpop.f32.mrb[0].mxu0
      %v3045 = vadd.f32 0.0, %v3044
      %v3046 = vpop.f32.mrb[0].mxu0
      %3047 = vmatprep.mubr.f32.mxu0 0.0
      %3048 = vmatmul.mubr.f32.gmra.mrb[0].mxu0 %v2922
      %v3049 = vpop.f32.mrb[0].mxu0
      %v3050 = vadd.f32 0.0, %v3049
      %v3051 = vpop.f32.mrb[0].mxu0
      %3052 = vmatprep.mubr.f32.mxu0 0.0
      %3053 = vmatmul.mubr.f32.gmra.mrb[0].mxu0 %v2925
      %v3054 = vpop.f32.mrb[0].mxu0
      %v3055 = vadd.f32 0.0, %v3054
      %v3056 = vpop.f32.mrb[0].mxu0
      %3057 = vmatprep.mubr.f32.mxu0 0.0
      %3058 = vmatmul.mubr.f32.gmra.mrb[0].mxu0 %v2928
      %v3059 = vpop.f32.mrb[0].mxu0
      %v3060 = vadd.f32 0.0, %v3059
      %v3061 = vpop.f32.mrb[0].mxu0
      %3062 = vmatprep.mubr.f32.mxu0 0.0
      %3063 = vmatmul.mubr.f32.gmra.mrb[0].mxu0 %v2931
      %v3064 = vpop.f32.mrb[0].mxu0
      %v3065 = vadd.f32 0.0, %v3064
      %v3066 = vpop.f32.mrb[0].mxu0
      %3067 = vmatprep.mubr.f32.mxu0 0.0
      %3068 = vmatmul.mubr.f32.gmra.mrb[0].mxu0 %v2934
      %v3069 = vpop.f32.mrb[0].mxu0
      %v3070 = vadd.f32 0.0, %v3069
      %v3071 = vpop.f32.mrb[0].mxu0
      %3072 = vmatprep.mubr.f32.mxu0 0.0
      %3073 = vmatmul.mubr.f32.gmra.mrb[0].mxu0 %v2937
      %v3074 = vpop.f32.mrb[0].mxu0
      %v3075 = vadd.f32 0.0, %v3074
      %v3076 = vpop.f32.mrb[0].mxu0
      %3077 = vmatprep.mubr.f32.mxu0 0.0
      %3078 = vmatmul.mubr.f32.gmra.mrb[0].mxu0 %v2940
      %v3079 = vpop.f32.mrb[0].mxu0
      %v3080 = vadd.f32 0.0, %v3079
      %v3081 = vpop.f32.mrb[0].mxu0
      %3082 = vmatprep.mubr.f32.mxu0 0.0
      %3083 = vmatmul.mubr.f32.gmra.mrb[0].mxu0 %v2943
      %v3084 = vpop.f32.mrb[0].mxu0
      %v3085 = vadd.f32 0.0, %v3084
      %v3086 = vpop.f32.mrb[0].mxu0
      %3087 = vmatprep.mubr.f32.mxu0 0.0
      %3088 = vmatmul.mubr.f32.gmra.mrb[0].mxu0 %v2946
      %v3089 = vpop.f32.mrb[0].mxu0
      %v3090 = vadd.f32 0.0, %v3089
      %v3091 = vpop.f32.mrb[0].mxu0
      %3092 = vmatprep.mubr.f32.mxu0 0.0
      %3093 = vmatmul.mubr.f32.gmra.mrb[0].mxu0 %v2949
      %v3094 = vpop.f32.mrb[0].mxu0
      %v3095 = vadd.f32 0.0, %v3094
      %v3096 = vpop.f32.mrb[0].mxu0
      %3097 = vmatprep.mubr.f32.mxu0 0.0
      %3098 = vmatmul.mubr.f32.gmra.mrb[0].mxu0 %v2952
      %v3099 = vpop.f32.mrb[0].mxu0
      %v3100 = vadd.f32 0.0, %v3099
      %v3101 = vpop.f32.mrb[0].mxu0
      %3102 = vdwg.mxu0
      %v3103 = vadd.f32 %v2872, %v3025
      %v3104 = vadd.f32 %v2873, %v3030
      %v3105 = vadd.f32 %v2874, %v3035
      %v3106 = vadd.f32 %v2875, %v3040
      %v3107 = vadd.f32 %v2876, %v3045
      %v3108 = vadd.f32 %v2877, %v3050
      %v3109 = vadd.f32 %v2878, %v3055
      %v3110 = vadd.f32 %v2879, %v3060
      %v3111 = vadd.f32 %v2880, %v3065
      %v3112 = vadd.f32 %v2881, %v3070
      %v3113 = vadd.f32 %v2882, %v3075
      %v3114 = vadd.f32 %v2883, %v3080
      %v3115 = vadd.f32 %v2884, %v3085
      %v3116 = vadd.f32 %v2885, %v3090
      %v3117 = vadd.f32 %v2886, %v3095
      %v3118 = vadd.f32 %v2887, %v3100
      %3119 = vst.msk [vmem:[%s736] sm:$0xff] %vm759, %v3103
      %3120 = vst.msk [vmem:[%s736 + $0x8] sm:$0xff] %vm759, %v3104
      %3121 = vst.msk [vmem:[%s736 + $0x10] sm:$0xff] %vm759, %v3105
      %3122 = vst.msk [vmem:[%s736 + $0x18] sm:$0xff] %vm759, %v3106
      %3123 = vst.msk [vmem:[%s736 + $0x20] sm:$0xff] %vm759, %v3107
      %3124 = vst.msk [vmem:[%s736 + $0x28] sm:$0xff] %vm759, %v3108
      %3125 = vst.msk [vmem:[%s736 + $0x30] sm:$0xff] %vm759, %v3109
      %3126 = vst.msk [vmem:[%s736 + $0x38] sm:$0xff] %vm759, %v3110
      %3127 = vst.msk [vmem:[%s736 + $0x40] sm:$0xff] %vm759, %v3111
      %3128 = vst.msk [vmem:[%s736 + $0x48] sm:$0xff] %vm759, %v3112
      %3129 = vst.msk [vmem:[%s736 + $0x50] sm:$0xff] %vm759, %v3113
      %3130 = vst.msk [vmem:[%s736 + $0x58] sm:$0xff] %vm759, %v3114
      %3131 = vst.msk [vmem:[%s736 + $0x60] sm:$0xff] %vm759, %v3115
      %3132 = vst.msk [vmem:[%s736 + $0x68] sm:$0xff] %vm759, %v3116
      %3133 = vst.msk [vmem:[%s736 + $0x70] sm:$0xff] %vm759, %v3117
      %3134 = vst.msk [vmem:[%s736 + $0x78] sm:$0xff] %vm759, %v3118
      %s3135 = smul.u32 16, %s33
      %p3136 = scmp.lt.s32.totalorder %s32, 1
      %s3137 = scalar_select %p3136, %s32, 1
      %p3138 = scmp.lt.s32.totalorder %s3135, 31
      %s3139 = scalar_select %p3138, %s3135, 31
      %s3140 = smul.addr %s3137, 32
      %s3141 = sadd.s32 %s3139, %s3140
      %s3142 = smul.addr %s3141, 8
      %s3143 = scalar_lea.vmem %s17, %s3142
      // Predicated region
      $region89: #{block_forward.5} parent=87 // pred_check
        %p3144 = pneg %p457
      $region90: #{block_forward.5} parent=87 // pred_check_branch
        %3146 = sbr.rel (%p3144) target = $region92
      $region91: #{block_forward.5} parent=87 // pred_region
        %s3147 = smul.u32 16, %s33
      $region92: #{block_forward.5} parent=87 // pred_fallthru
        _
    $region88: #{block_forward.5} parent=5 // pred_fallthru
      _
    %p3148 = scmp.le.s32.totalorder 2, %s23
    // Predicated region
    $region93: #{block_forward.5} parent=5 // pred_check
      %p3149 = pneg %p3148
    $region94: #{block_forward.5} parent=5 // pred_check_branch
      %3151 = sbr.rel (%p3149) target = $region96
    $region95: #{block_forward.5} parent=5 // pred_region
      %s3152 = ssub.s32 %s23, 2
      // Predicated region
      $region97: #{block_forward.5} parent=95 // pred_check
        %p3153 = pneg %p463
      $region98: #{block_forward.5} parent=95 // pred_check_branch
        %3155 = sbr.rel (%p3153) target = $region100
      $region99: #{block_forward.5} parent=95 // pred_region
        %s3156 = smul.u32 16, %s35
        %p3157 = scmp.lt.s32.totalorder %s34, 1
        %s3158 = scalar_select %p3157, %s34, 1
        %p3159 = scmp.lt.s32.totalorder %s3156, 31
        %s3160 = scalar_select %p3159, %s3156, 31
        %s3161 = smul.addr %s3158, 32
        %s3162 = sadd.s32 %s3160, %s3161
        %s3163 = smul.addr %s3162, 8
        %s3164 = scalar_lea.vmem %s17, %s3163
      $region100: #{block_forward.5} parent=95 // pred_fallthru
        _
    $region96: #{block_forward.5} parent=5 // pred_fallthru
      _
  $region6: #{block_forward.5} parent=0 // loop_footer
    %s27 = sadd.s32 1, %s23
  $region7: #{block_forward.5} parent=0 // loop_footer_branch
    %22 = sbr.rel target = $region3
  $region8: #{block_forward.5} parent=0 // loop_exit
    _

// kernel: block_forward.4
$region0: #{block_forward.4}
  #allocation0 [shape = 'u32[]', space=smem, size = 0x4, offset = 0x4, fixed_abs, tag = 'smem constant byte address 0x4 - core index']
  #allocation1 [shape = 'u32[144,128]{1,0:T(1,128)}', space=vmem, size = 0x12000, scoped, tag = 'internal scratch']
  %s0 = inlined_call_operand.vmem [shape: f32[2,256,4], index: 0, kind: input, shape index: {}, may-alias: {0,1,2}]
  %s1 = inlined_call_operand.vmem [shape: f32[2,256,4], index: 1, kind: input, shape index: {}, may-alias: {0,1,2}]
  %s2 = inlined_call_operand.vmem [shape: f32[2,256,4], index: 2, kind: input, shape index: {}, may-alias: {0,1,2}]
  %s3 = inlined_call_operand.vmem [shape: f32[9,4,8], index: 3, kind: input, shape index: {}]
  %s4 = inlined_call_operand.vmem [shape: f32[1,8], index: 4, kind: input, shape index: {}]
  %s5 = inlined_call_operand.vmem [shape: f32[1,8], index: 5, kind: input, shape index: {}]
  %s6 = inlined_call_operand.vmem [shape: f32[2,256,8], index: 6, kind: output, shape index: {}]
  %s7 = sld [smem:[#allocation0]]
  $region57: #{block_forward.4} parent=0
    _
  %s9 = ssub.s32 1, %s7
  %s10 = scalar_select 0, %s9, %s7
  loop: start=0, step=1, limit=6
  $region2: #{block_forward.4} parent=0 // loop_pre_header
    _
  $region3: #{block_forward.4} parent=0 // loop_header
    %s12 = sphi 0, %s16
    %p13 = scmp.ge.s32.totalorder %s12, 6
    %s19 = sphi 0, %s31
    %s20 = sphi 0, %s27
    %s21 = sphi 0, %s19
    %s22 = sphi 0, %s20
    %s23 = sphi 0, %s21
    %s24 = sphi 0, %s22
    %s42 = sphi 0, %s44
    %s45 = sphi 0, %s42
    %s46 = sphi 0, %s45
    %s62 = sphi 0, %s46
    %s70 = sphi 0, %s72
    %s73 = sphi 0, %s70
    %s74 = sphi 0, %s73
    %s90 = sphi 0, %s74
    %s104 = sphi 0, %s106
    %s107 = sphi 0, %s104
    %s108 = sphi 0, %s107
    %s124 = sphi 0, %s108
    %s128 = sphi 0, %s128
    %s130 = sphi 0, %s128
    %s131 = sphi 0, %s130
    %s145 = sphi 0, %s131
    %s149 = sphi 0, %s149
    %s151 = sphi 0, %s149
    %s152 = sphi 0, %s151
    %s166 = sphi 0, %s152
    %s170 = sphi 0, %s170
    %s172 = sphi 0, %s170
    %s173 = sphi 0, %s172
    %s187 = sphi 0, %s173
    %s195 = sphi 0, %s197
    %s198 = sphi 0, %s195
    %s199 = sphi 0, %s198
    %s215 = sphi 0, %s199
  $region4: #{block_forward.4} parent=0 // loop_header_branch
    %15 = sbr.rel (%p13) target = $region8
  $region5: #{block_forward.4} parent=0 // loop_body
    %s17 = ssub.s32 %s12, 1
    %s18 = ssub.s32 %s12, 2
    %s25 = sadd.s32 1, %s20
    %p26 = scmp.ge.s32.totalorder %s25, 2
    %s27 = scalar_select %p26, 0, %s25
    %s28 = sadd.s32 1, %s19
    %s29 = scalar_select %p26, %s28, %s19
    %p30 = scmp.ge.s32.totalorder %s29, 2
    %s31 = scalar_select %p30, 0, %s29
    %s32 = ssub.s32 %s20, 1
    %p33 = scmp.gt.s32.totalorder %s32, 0
    %s34 = scalar_select %p33, %s32, 0
    %s35 = ssub.s32 %s27, 1
    %p36 = scmp.gt.s32.totalorder %s35, 0
    %s37 = scalar_select %p36, %s35, 0
    %s38 = ssub.s32 %s19, %s31
    %s39 = ssub.s32 %s34, %s37
    %s40 = sor.u32 %s38, %s39
    %p41 = scmp.eq.s32.totalorder %s40, 0
    %s43 = sadd.s32 %s42, 1
    %s44 = scalar_select %p41, %s42, %s43
    %p47 = pneg %p41
    %p48 = scmp.eq.s32.totalorder %s12, 3
    %p49 = por %p47, %p48
    %p50 = scmp.ne.s32.totalorder %s42, %s45
    %p51 = scmp.eq.s32.totalorder %s12, 0
    %p52 = por %p50, %p51
    %p53 = scmp.ne.s32.totalorder %s42, %s45
    %p54 = scmp.eq.s32.totalorder %s17, 3
    %p55 = por %p53, %p54
    %p56 = scmp.ne.s32.totalorder %s45, %s46
    %p57 = scmp.eq.s32.totalorder %s17, 0
    %p58 = por %p56, %p57
    %p59 = scmp.ne.s32.totalorder %s45, %s46
    %p60 = scmp.eq.s32.totalorder %s18, 3
    %p61 = por %p59, %p60
    %p63 = scmp.ne.s32.totalorder %s46, %s62
    %p64 = scmp.eq.s32.totalorder %s18, 0
    %p65 = por %p63, %p64
    %s66 = ssub.s32 %s19, %s31
    %s67 = ssub.s32 %s20, %s27
    %s68 = sor.u32 %s66, %s67
    %p69 = scmp.eq.s32.totalorder %s68, 0
    %s71 = sadd.s32 %s70, 1
    %s72 = scalar_select %p69, %s70, %s71
    %p75 = pneg %p69
    %p76 = scmp.eq.s32.totalorder %s12, 3
    %p77 = por %p75, %p76
    %p78 = scmp.ne.s32.totalorder %s70, %s73
    %p79 = scmp.eq.s32.totalorder %s12, 0
    %p80 = por %p78, %p79
    %p81 = scmp.ne.s32.totalorder %s70, %s73
    %p82 = scmp.eq.s32.totalorder %s17, 3
    %p83 = por %p81, %p82
    %p84 = scmp.ne.s32.totalorder %s73, %s74
    %p85 = scmp.eq.s32.totalorder %s17, 0
    %p86 = por %p84, %p85
    %p87 = scmp.ne.s32.totalorder %s73, %s74
    %p88 = scmp.eq.s32.totalorder %s18, 3
    %p89 = por %p87, %p88
    %p91 = scmp.ne.s32.totalorder %s74, %s90
    %p92 = scmp.eq.s32.totalorder %s18, 0
    %p93 = por %p91, %p92
    %s94 = sadd.s32 %s20, 1
    %p95 = scmp.lt.s32.totalorder %s94, 1
    %s96 = scalar_select %p95, %s94, 1
    %s97 = sadd.s32 %s27, 1
    %p98 = scmp.lt.s32.totalorder %s97, 1
    %s99 = scalar_select %p98, %s97, 1
    %s100 = ssub.s32 %s19, %s31
    %s101 = ssub.s32 %s96, %s99
    %s102 = sor.u32 %s100, %s101
    %p103 = scmp.eq.s32.totalorder %s102, 0
    %s105 = sadd.s32 %s104, 1
    %s106 = scalar_select %p103, %s104, %s105
    %p109 = pneg %p103
    %p110 = scmp.eq.s32.totalorder %s12, 3
    %p111 = por %p109, %p110
    %p112 = scmp.ne.s32.totalorder %s104, %s107
    %p113 = scmp.eq.s32.totalorder %s12, 0
    %p114 = por %p112, %p113
    %p115 = scmp.ne.s32.totalorder %s104, %s107
    %p116 = scmp.eq.s32.totalorder %s17, 3
    %p117 = por %p115, %p116
    %p118 = scmp.ne.s32.totalorder %s107, %s108
    %p119 = scmp.eq.s32.totalorder %s17, 0
    %p120 = por %p118, %p119
    %p121 = scmp.ne.s32.totalorder %s107, %s108
    %p122 = scmp.eq.s32.totalorder %s18, 3
    %p123 = por %p121, %p122
    %p125 = scmp.ne.s32.totalorder %s108, %s124
    %p126 = scmp.eq.s32.totalorder %s18, 0
    %p127 = por %p125, %p126
    %s129 = sadd.s32 %s128, 1
    %p132 = scmp.eq.s32.totalorder %s12, 3
    %p133 = scmp.ne.s32.totalorder %s128, %s130
    %p134 = scmp.eq.s32.totalorder %s12, 0
    %p135 = por %p133, %p134
    %p136 = scmp.ne.s32.totalorder %s128, %s130
    %p137 = scmp.eq.s32.totalorder %s17, 3
    %p138 = por %p136, %p137
    %p139 = scmp.ne.s32.totalorder %s130, %s131
    %p140 = scmp.eq.s32.totalorder %s17, 0
    %p141 = por %p139, %p140
    %p142 = scmp.ne.s32.totalorder %s130, %s131
    %p143 = scmp.eq.s32.totalorder %s18, 3
    %p144 = por %p142, %p143
    %p146 = scmp.ne.s32.totalorder %s131, %s145
    %p147 = scmp.eq.s32.totalorder %s18, 0
    %p148 = por %p146, %p147
    %s150 = sadd.s32 %s149, 1
    %p153 = scmp.eq.s32.totalorder %s12, 3
    %p154 = scmp.ne.s32.totalorder %s149, %s151
    %p155 = scmp.eq.s32.totalorder %s12, 0
    %p156 = por %p154, %p155
    %p157 = scmp.ne.s32.totalorder %s149, %s151
    %p158 = scmp.eq.s32.totalorder %s17, 3
    %p159 = por %p157, %p158
    %p160 = scmp.ne.s32.totalorder %s151, %s152
    %p161 = scmp.eq.s32.totalorder %s17, 0
    %p162 = por %p160, %p161
    %p163 = scmp.ne.s32.totalorder %s151, %s152
    %p164 = scmp.eq.s32.totalorder %s18, 3
    %p165 = por %p163, %p164
    %p167 = scmp.ne.s32.totalorder %s152, %s166
    %p168 = scmp.eq.s32.totalorder %s18, 0
    %p169 = por %p167, %p168
    %s171 = sadd.s32 %s170, 1
    %p174 = scmp.eq.s32.totalorder %s12, 3
    %p175 = scmp.ne.s32.totalorder %s170, %s172
    %p176 = scmp.eq.s32.totalorder %s12, 0
    %p177 = por %p175, %p176
    %p178 = scmp.ne.s32.totalorder %s170, %s172
    %p179 = scmp.eq.s32.totalorder %s17, 3
    %p180 = por %p178, %p179
    %p181 = scmp.ne.s32.totalorder %s172, %s173
    %p182 = scmp.eq.s32.totalorder %s17, 0
    %p183 = por %p181, %p182
    %p184 = scmp.ne.s32.totalorder %s172, %s173
    %p185 = scmp.eq.s32.totalorder %s18, 3
    %p186 = por %p184, %p185
    %p188 = scmp.ne.s32.totalorder %s173, %s187
    %p189 = scmp.eq.s32.totalorder %s18, 0
    %p190 = por %p188, %p189
    %s191 = ssub.s32 %s19, %s31
    %s192 = ssub.s32 %s20, %s27
    %s193 = sor.u32 %s191, %s192
    %p194 = scmp.eq.s32.totalorder %s193, 0
    %s196 = sadd.s32 %s195, 1
    %s197 = scalar_select %p194, %s195, %s196
    %p200 = pneg %p194
    %p201 = scmp.eq.s32.totalorder %s12, 3
    %p202 = por %p200, %p201
    %p203 = scmp.ne.s32.totalorder %s195, %s198
    %p204 = scmp.eq.s32.totalorder %s12, 0
    %p205 = por %p203, %p204
    %p206 = scmp.ne.s32.totalorder %s195, %s198
    %p207 = scmp.eq.s32.totalorder %s17, 3
    %p208 = por %p206, %p207
    %p209 = scmp.ne.s32.totalorder %s198, %s199
    %p210 = scmp.eq.s32.totalorder %s17, 0
    %p211 = por %p209, %p210
    %p212 = scmp.ne.s32.totalorder %s198, %s199
    %p213 = scmp.eq.s32.totalorder %s18, 3
    %p214 = por %p212, %p213
    %p216 = scmp.ne.s32.totalorder %s199, %s215
    %p217 = scmp.eq.s32.totalorder %s18, 0
    %p218 = por %p216, %p217
    %p219 = scmp.le.s32.totalorder 1, %s12
    %p220 = scmp.lt.s32.totalorder %s12, 5
    %p221 = pnand %p219, %p220
    %p222 = pneg %p221
    // Predicated region
    $region9: #{block_forward.4} parent=5 // pred_check
      _
    $region10: #{block_forward.4} parent=5 // pred_check_branch
      %224 = sbr.rel (%p221) target = $region12
    $region11: #{block_forward.4} parent=5 // pred_region
      %s225 = ssub.s32 %s12, 1
      // Predicated region
      $region13: #{block_forward.4} parent=11 // pred_check
        %p226 = pneg %p141
      $region14: #{block_forward.4} parent=11 // pred_check_branch
        %228 = sbr.rel (%p226) target = $region16
      $region15: #{block_forward.4} parent=11 // pred_region
        _
      $region16: #{block_forward.4} parent=11 // pred_fallthru
        _
      // Predicated region
      $region17: #{block_forward.4} parent=11 // pred_check
        %p229 = pneg %p162
      $region18: #{block_forward.4} parent=11 // pred_check_branch
        %231 = sbr.rel (%p229) target = $region20
      $region19: #{block_forward.4} parent=11 // pred_region
        _
      $region20: #{block_forward.4} parent=11 // pred_fallthru
        _
      // Predicated region
      $region21: #{block_forward.4} parent=11 // pred_check
        %p232 = pneg %p183
      $region22: #{block_forward.4} parent=11 // pred_check_branch
        %234 = sbr.rel (%p232) target = $region24
      $region23: #{block_forward.4} parent=11 // pred_region
        _
      $region24: #{block_forward.4} parent=11 // pred_fallthru
        _
    $region12: #{block_forward.4} parent=5 // pred_fallthru
      _
    %p235 = scmp.lt.s32.totalorder %s12, 4
    // Predicated region
    $region25: #{block_forward.4} parent=5 // pred_check
      %p236 = pneg %p235
    $region26: #{block_forward.4} parent=5 // pred_check_branch
      %238 = sbr.rel (%p236) target = $region28
    $region27: #{block_forward.4} parent=5 // pred_region
      // Predicated region
      $region29: #{block_forward.4} parent=27 // pred_check
        %p239 = pneg %p52
      $region30: #{block_forward.4} parent=27 // pred_check_branch
        %241 = sbr.rel (%p239) target = $region32
      $region31: #{block_forward.4} parent=27 // pred_region
        %s242 = ssub.s32 %s20, 1
        %p243 = scmp.gt.s32.totalorder %s242, 0
        %s244 = scalar_select %p243, %s242, 0
        %s245 = smul.u32 16, %s244
        %p246 = scmp.lt.s32.totalorder %s19, 1
        %s247 = scalar_select %p246, %s19, 1
        %p248 = scmp.lt.s32.totalorder %s245, 31
        %s249 = scalar_select %p248, %s245, 31
        %s250 = smul.addr %s247, 32
        %s251 = sadd.s32 %s249, %s250
        %s252 = smul.addr %s251, 8
        %s253 = scalar_lea.vmem %s0, %s252
        %s254 = ssub.s32 %s20, 1
        %p255 = scmp.gt.s32.totalorder %s254, 0
        %s256 = scalar_select %p255, %s254, 0
        %s257 = smul.u32 16, %s256
      $region32: #{block_forward.4} parent=27 // pred_fallthru
        _
      // Predicated region
      $region33: #{block_forward.4} parent=27 // pred_check
        %p258 = pneg %p80
      $region34: #{block_forward.4} parent=27 // pred_check_branch
        %260 = sbr.rel (%p258) target = $region36
      $region35: #{block_forward.4} parent=27 // pred_region
        %s261 = smul.u32 16, %s20
        %p262 = scmp.lt.s32.totalorder %s19, 1
        %s263 = scalar_select %p262, %s19, 1
        %p264 = scmp.lt.s32.totalorder %s261, 31
        %s265 = scalar_select %p264, %s261, 31
        %s266 = smul.addr %s263, 32
        %s267 = sadd.s32 %s265, %s266
        %s268 = smul.addr %s267, 8
        %s269 = scalar_lea.vmem %s1, %s268
        %s270 = smul.u32 16, %s20
      $region36: #{block_forward.4} parent=27 // pred_fallthru
        _
      // Predicated region
      $region37: #{block_forward.4} parent=27 // pred_check
        %p271 = pneg %p114
      $region38: #{block_forward.4} parent=27 // pred_check_branch
        %273 = sbr.rel (%p271) target = $region40
      $region39: #{block_forward.4} parent=27 // pred_region
        %s274 = sadd.s32 %s20, 1
        %p275 = scmp.lt.s32.totalorder %s274, 1
        %s276 = scalar_select %p275, %s274, 1
        %s277 = smul.u32 16, %s276
        %p278 = scmp.lt.s32.totalorder %s19, 1
        %s279 = scalar_select %p278, %s19, 1
        %p280 = scmp.lt.s32.totalorder %s277, 31
        %s281 = scalar_select %p280, %s277, 31
        %s282 = smul.addr %s279, 32
        %s283 = sadd.s32 %s281, %s282
        %s284 = smul.addr %s283, 8
        %s285 = scalar_lea.vmem %s2, %s284
        %s286 = sadd.s32 %s20, 1
        %p287 = scmp.lt.s32.totalorder %s286, 1
        %s288 = scalar_select %p287, %s286, 1
        %s289 = smul.u32 16, %s288
      $region40: #{block_forward.4} parent=27 // pred_fallthru
        _
    $region28: #{block_forward.4} parent=5 // pred_fallthru
      _
    %p290 = scmp.le.s32.totalorder 1, %s12
    %p291 = scmp.lt.s32.totalorder %s12, 5
    %p292 = pnand %p290, %p291
    %p293 = pneg %p292
    // Predicated region
    $region41: #{block_forward.4} parent=5 // pred_check
      _
    $region42: #{block_forward.4} parent=5 // pred_check_branch
      %295 = sbr.rel (%p292) target = $region44
    $region43: #{block_forward.4} parent=5 // pred_region
      %s296 = ssub.s32 %s12, 1
      %s297 = ssub.s32 %s22, 1
      %p298 = scmp.gt.s32.totalorder %s297, 0
      %s299 = scalar_select %p298, %s297, 0
      %s300 = smul.u32 16, %s299
      %p301 = scmp.lt.s32.totalorder %s21, 1
      %s302 = scalar_select %p301, %s21, 1
      %p303 = scmp.lt.s32.totalorder %s300, 31
      %s304 = scalar_select %p303, %s300, 31
      %s305 = smul.addr %s302, 32
      %s306 = sadd.s32 %s304, %s305
      %s307 = smul.addr %s306, 8
      %s308 = scalar_lea.vmem %s0, %s307
      %p309 = pneg %p58
      %p310 = pneg %p55
      %s311 = smul.u32 16, %s22
      %p312 = scmp.lt.s32.totalorder %s21, 1
      %s313 = scalar_select %p312, %s21, 1
      %p314 = scmp.lt.s32.totalorder %s311, 31
      %s315 = scalar_select %p314, %s311, 31
      %s316 = smul.addr %s313, 32
      %s317 = sadd.s32 %s315, %s316
      %s318 = smul.addr %s317, 8
      %s319 = scalar_lea.vmem %s1, %s318
      %p320 = pneg %p86
      %p321 = pneg %p83
      %s322 = sadd.s32 %s22, 1
      %p323 = scmp.lt.s32.totalorder %s322, 1
      %s324 = scalar_select %p323, %s322, 1
      %s325 = smul.u32 16, %s324
      %p326 = scmp.lt.s32.totalorder %s21, 1
      %s327 = scalar_select %p326, %s21, 1
      %p328 = scmp.lt.s32.totalorder %s325, 31
      %s329 = scalar_select %p328, %s325, 31
      %s330 = smul.addr %s327, 32
      %s331 = sadd.s32 %s329, %s330
      %s332 = smul.addr %s331, 8
      %s333 = scalar_lea.vmem %s2, %s332
      %p334 = pneg %p120
      %p335 = pneg %p117
      %p336 = pneg %p141
      %p337 = pneg %p138
      %p338 = pneg %p162
      %p339 = pneg %p159
      %p340 = pneg %p183
      %p341 = pneg %p180
      %p342 = pneg %p211
      %p343 = pneg %p208
      %s344 = smul.u32 16, %s22
      %p345 = scmp.lt.s32.totalorder %s21, 1
      %s346 = scalar_select %p345, %s21, 1
      %p347 = scmp.lt.s32.totalorder %s344, 31
      %s348 = scalar_select %p347, %s344, 31
      %s349 = smul.addr %s346, 32
      %s350 = sadd.s32 %s348, %s349
      %s351 = smul.addr %s350, 8
      %s352 = scalar_lea.vmem %s6, %s351
      %s353 = ssub.s32 %s22, 1
      %p354 = scmp.gt.s32.totalorder %s353, 0
      %s355 = scalar_select %p354, %s353, 0
      %s356 = smul.u32 16, %s355
      %p357 = scmp.lt.s32.totalorder %s21, 1
      %s358 = scalar_select %p357, %s21, 1
      %p359 = scmp.lt.s32.totalorder %s356, 31
      %s360 = scalar_select %p359, %s356, 31
      %s361 = smul.addr %s358, 32
      %s362 = sadd.s32 %s360, %s361
      %s363 = smul.addr %s362, 8
      %s364 = scalar_lea.vmem %s0, %s363
      %s365 = ssub.s32 %s22, 1
      %p366 = scmp.gt.s32.totalorder %s365, 0
      %s367 = scalar_select %p366, %s365, 0
      %s368 = smul.u32 16, %s367
      %s369 = smul.u32 16, %s22
      %p370 = scmp.lt.s32.totalorder %s21, 1
      %s371 = scalar_select %p370, %s21, 1
      %p372 = scmp.lt.s32.totalorder %s369, 31
      %s373 = scalar_select %p372, %s369, 31
      %s374 = smul.addr %s371, 32
      %s375 = sadd.s32 %s373, %s374
      %s376 = smul.addr %s375, 8
      %s377 = scalar_lea.vmem %s1, %s376
      %s378 = smul.u32 16, %s22
      %s379 = sadd.s32 %s22, 1
      %p380 = scmp.lt.s32.totalorder %s379, 1
      %s381 = scalar_select %p380, %s379, 1
      %s382 = smul.u32 16, %s381
      %p383 = scmp.lt.s32.totalorder %s21, 1
      %s384 = scalar_select %p383, %s21, 1
      %p385 = scmp.lt.s32.totalorder %s382, 31
      %s386 = scalar_select %p385, %s382, 31
      %s387 = smul.addr %s384, 32
      %s388 = sadd.s32 %s386, %s387
      %s389 = smul.addr %s388, 8
      %s390 = scalar_lea.vmem %s2, %s389
      %s391 = sadd.s32 %s22, 1
      %p392 = scmp.lt.s32.totalorder %s391, 1
      %s393 = scalar_select %p392, %s391, 1
      %s394 = smul.u32 16, %s393
      %s395 = smul.u32 16, %s22
      %p396 = scmp.lt.s32.totalorder %s21, 1
      %s397 = scalar_select %p396, %s21, 1
      %p398 = scmp.lt.s32.totalorder %s395, 31
      %s399 = scalar_select %p398, %s395, 31
      %s400 = smul.addr %s397, 32
      %s401 = sadd.s32 %s399, %s400
      %s402 = smul.addr %s401, 8
      %s403 = scalar_lea.vmem %s6, %s402
      %s404 = smul.u32 16, %s22
      %v405 = vld [vmem:[%s364 + $0x70] sm:$0xff]
      %v406 = vld [vmem:[%s364 + $0x78] sm:$0xff]
      %p407 = scmp.gt.s32.totalorder %s22, 0
      %s408 = scalar_select %p407, 1, 0
      %v409 = vstv %s408
      %vm410 = vcmp.eq.s32.totalorder %v409, 1
      %v411 = vsel %vm410, %v405, 0.0
      %v412 = vsel %vm410, %v406, 0.0
      %v413 = vld [vmem:[%s390] sm:$0xff]
      %v414 = vld [vmem:[%s390 + $0x8] sm:$0xff]
      %p415 = scmp.lt.s32.totalorder %s22, 1
      %s416 = scalar_select %p415, 1, 0
      %v417 = vstv %s416
      %vm418 = vcmp.eq.s32.totalorder %v417, 1
      %v419 = vsel %vm418, %v413, 0.0
      %v420 = vsel %vm418, %v414, 0.0
      %v421 = vld [vmem:[%s377] sm:$0xff]
      %v422 = vld [vmem:[%s377 + $0x8] sm:$0xff]
      %v423 = vld [vmem:[%s377 + $0x10] sm:$0xff]
      %v424 = vld [vmem:[%s377 + $0x18] sm:$0xff]
      %v425 = vld [vmem:[%s377 + $0x20] sm:$0xff]
      %v426 = vld [vmem:[%s377 + $0x28] sm:$0xff]
      %v427 = vld [vmem:[%s377 + $0x30] sm:$0xff]
      %v428 = vld [vmem:[%s377 + $0x38] sm:$0xff]
      %v429 = vld [vmem:[%s377 + $0x40] sm:$0xff]
      %v430 = vld [vmem:[%s377 + $0x48] sm:$0xff]
      %v431 = vld [vmem:[%s377 + $0x50] sm:$0xff]
      %v432 = vld [vmem:[%s377 + $0x58] sm:$0xff]
      %v433 = vld [vmem:[%s377 + $0x60] sm:$0xff]
      %v434 = vld [vmem:[%s377 + $0x68] sm:$0xff]
      %v435 = vld [vmem:[%s377 + $0x70] sm:$0xff]
      %v436 = vld [vmem:[%s377 + $0x78] sm:$0xff]
      %vm457 = vcmask 1040384
      %v458 = vrot.slane %v411, 7
      %v459 = vrot.slane %v412, 7
      %v460 = vsel %vm457, %v458, %v459
      %v461 = vrot.slane %v421, 7
      %v462 = vsel %vm457, %v459, %v461
      %v463 = vrot.slane %v422, 7
      %v464 = vsel %vm457, %v461, %v463
      %v465 = vrot.slane %v423, 7
      %v466 = vsel %vm457, %v463, %v465
      %v467 = vrot.slane %v424, 7
      %v468 = vsel %vm457, %v465, %v467
      %v469 = vrot.slane %v425, 7
      %v470 = vsel %vm457, %v467, %v469
      %v471 = vrot.slane %v426, 7
      %v472 = vsel %vm457, %v469, %v471
      %v473 = vrot.slane %v427, 7
      %v474 = vsel %vm457, %v471, %v473
      %v475 = vrot.slane %v428, 7
      %v476 = vsel %vm457, %v473, %v475
      %v477 = vrot.slane %v429, 7
      %v478 = vsel %vm457, %v475, %v477
      %v479 = vrot.slane %v430, 7
      %v480 = vsel %vm457, %v477, %v479
      %v481 = vrot.slane %v431, 7
      %v482 = vsel %vm457, %v479, %v481
      %v483 = vrot.slane %v432, 7
      %v484 = vsel %vm457, %v481, %v483
      %v485 = vrot.slane %v433, 7
      %v486 = vsel %vm457, %v483, %v485
      %v487 = vrot.slane %v434, 7
      %v488 = vsel %vm457, %v485, %v487
      %v489 = vrot.slane %v435, 7
      %v490 = vsel %vm457, %v487, %v489
      %v491 = vrot.slane %v436, 7
      %v492 = vsel %vm457, %v489, %v491
      %v493 = vrot.slane %v419, 7
      %v494 = vsel %vm457, %v491, %v493
      %v495 = vrot.slane %v420, 7
      %v496 = vsel %vm457, %v493, %v495
      %v518 = vsel %vm457, 0.0, %v458
      %v519 = vsel %vm457, %v495, 0.0
      %v520 = vlaneseq
      %v521 = vshrl.u32 %v520, 7
      %v522 = vadd.s32 %v521, 8
      %v523 = vadd.s32 %v521, 16
      %v524 = vadd.s32 %v521, 24
      %v525 = vadd.s32 %v521, 32
      %v526 = vadd.s32 %v521, 40
      %v527 = vadd.s32 %v521, 48
      %v528 = vadd.s32 %v521, 56
      %v529 = vadd.s32 %v521, 64
      %v530 = vadd.s32 %v521, 72
      %v531 = vadd.s32 %v521, 80
      %v532 = vadd.s32 %v521, 88
      %v533 = vadd.s32 %v521, 96
      %v534 = vadd.s32 %v521, 104
      %v535 = vadd.s32 %v521, 112
      %v536 = vadd.s32 %v521, 120
      %vm537 = vcmp.lt.s32.totalorder %v521, 0
      %v538 = vsub.s32 0, %v521
      %v539 = vsel %vm537, %v538, %v521
      %v540 = vshrl.u32 %v539, 4
      %v541 = vand.u32 %v539, 15
      %v542 = vsub.s32 0, %v541
      %v543 = vsel %vm537, %v542, %v541
      %vm544 = vcmp.lt.s32.totalorder %v522, 0
      %v545 = vsub.s32 0, %v522
      %v546 = vsel %vm544, %v545, %v522
      %v547 = vshrl.u32 %v546, 4
      %v548 = vand.u32 %v546, 15
      %v549 = vsub.s32 0, %v548
      %v550 = vsel %vm544, %v549, %v548
      %vm551 = vcmp.lt.s32.totalorder %v523, 0
      %v552 = vsub.s32 0, %v523
      %v553 = vsel %vm551, %v552, %v523
      %v554 = vshrl.u32 %v553, 4
      %v555 = vand.u32 %v553, 15
      %v556 = vsub.s32 0, %v555
      %v557 = vsel %vm551, %v556, %v555
      %vm558 = vcmp.lt.s32.totalorder %v524, 0
      %v559 = vsub.s32 0, %v524
      %v560 = vsel %vm558, %v559, %v524
      %v561 = vshrl.u32 %v560, 4
      %v562 = vand.u32 %v560, 15
      %v563 = vsub.s32 0, %v562
      %v564 = vsel %vm558, %v563, %v562
      %vm565 = vcmp.lt.s32.totalorder %v525, 0
      %v566 = vsub.s32 0, %v525
      %v567 = vsel %vm565, %v566, %v525
      %v568 = vshrl.u32 %v567, 4
      %v569 = vand.u32 %v567, 15
      %v570 = vsub.s32 0, %v569
      %v571 = vsel %vm565, %v570, %v569
      %vm572 = vcmp.lt.s32.totalorder %v526, 0
      %v573 = vsub.s32 0, %v526
      %v574 = vsel %vm572, %v573, %v526
      %v575 = vshrl.u32 %v574, 4
      %v576 = vand.u32 %v574, 15
      %v577 = vsub.s32 0, %v576
      %v578 = vsel %vm572, %v577, %v576
      %vm579 = vcmp.lt.s32.totalorder %v527, 0
      %v580 = vsub.s32 0, %v527
      %v581 = vsel %vm579, %v580, %v527
      %v582 = vshrl.u32 %v581, 4
      %v583 = vand.u32 %v581, 15
      %v584 = vsub.s32 0, %v583
      %v585 = vsel %vm579, %v584, %v583
      %vm586 = vcmp.lt.s32.totalorder %v528, 0
      %v587 = vsub.s32 0, %v528
      %v588 = vsel %vm586, %v587, %v528
      %v589 = vshrl.u32 %v588, 4
      %v590 = vand.u32 %v588, 15
      %v591 = vsub.s32 0, %v590
      %v592 = vsel %vm586, %v591, %v590
      %vm593 = vcmp.lt.s32.totalorder %v529, 0
      %v594 = vsub.s32 0, %v529
      %v595 = vsel %vm593, %v594, %v529
      %v596 = vshrl.u32 %v595, 4
      %v597 = vand.u32 %v595, 15
      %v598 = vsub.s32 0, %v597
      %v599 = vsel %vm593, %v598, %v597
      %vm600 = vcmp.lt.s32.totalorder %v530, 0
      %v601 = vsub.s32 0, %v530
      %v602 = vsel %vm600, %v601, %v530
      %v603 = vshrl.u32 %v602, 4
      %v604 = vand.u32 %v602, 15
      %v605 = vsub.s32 0, %v604
      %v606 = vsel %vm600, %v605, %v604
      %vm607 = vcmp.lt.s32.totalorder %v531, 0
      %v608 = vsub.s32 0, %v531
      %v609 = vsel %vm607, %v608, %v531
      %v610 = vshrl.u32 %v609, 4
      %v611 = vand.u32 %v609, 15
      %v612 = vsub.s32 0, %v611
      %v613 = vsel %vm607, %v612, %v611
      %vm614 = vcmp.lt.s32.totalorder %v532, 0
      %v615 = vsub.s32 0, %v532
      %v616 = vsel %vm614, %v615, %v532
      %v617 = vshrl.u32 %v616, 4
      %v618 = vand.u32 %v616, 15
      %v619 = vsub.s32 0, %v618
      %v620 = vsel %vm614, %v619, %v618
      %vm621 = vcmp.lt.s32.totalorder %v533, 0
      %v622 = vsub.s32 0, %v533
      %v623 = vsel %vm621, %v622, %v533
      %v624 = vshrl.u32 %v623, 4
      %v625 = vand.u32 %v623, 15
      %v626 = vsub.s32 0, %v625
      %v627 = vsel %vm621, %v626, %v625
      %vm628 = vcmp.lt.s32.totalorder %v534, 0
      %v629 = vsub.s32 0, %v534
      %v630 = vsel %vm628, %v629, %v534
      %v631 = vshrl.u32 %v630, 4
      %v632 = vand.u32 %v630, 15
      %v633 = vsub.s32 0, %v632
      %v634 = vsel %vm628, %v633, %v632
      %vm635 = vcmp.lt.s32.totalorder %v535, 0
      %v636 = vsub.s32 0, %v535
      %v637 = vsel %vm635, %v636, %v535
      %v638 = vshrl.u32 %v637, 4
      %v639 = vand.u32 %v637, 15
      %v640 = vsub.s32 0, %v639
      %v641 = vsel %vm635, %v640, %v639
      %vm642 = vcmp.lt.s32.totalorder %v536, 0
      %v643 = vsub.s32 0, %v536
      %v644 = vsel %vm642, %v643, %v536
      %v645 = vshrl.u32 %v644, 4
      %v646 = vand.u32 %v644, 15
      %v647 = vsub.s32 0, %v646
      %v648 = vsel %vm642, %v647, %v646
      %vm649 = vcmp.ne.s32.totalorder %v543, 0
      %vm650 = vcmp.ne.s32.totalorder %v550, 0
      %vm651 = vcmp.ne.s32.totalorder %v557, 0
      %vm652 = vcmp.ne.s32.totalorder %v564, 0
      %vm653 = vcmp.ne.s32.totalorder %v571, 0
      %vm654 = vcmp.ne.s32.totalorder %v578, 0
      %vm655 = vcmp.ne.s32.totalorder %v585, 0
      %vm656 = vcmp.ne.s32.totalorder %v592, 0
      %vm657 = vcmp.ne.s32.totalorder %v599, 0
      %vm658 = vcmp.ne.s32.totalorder %v606, 0
      %vm659 = vcmp.ne.s32.totalorder %v613, 0
      %vm660 = vcmp.ne.s32.totalorder %v620, 0
      %vm661 = vcmp.ne.s32.totalorder %v627, 0
      %vm662 = vcmp.ne.s32.totalorder %v634, 0
      %vm663 = vcmp.ne.s32.totalorder %v641, 0
      %vm664 = vcmp.ne.s32.totalorder %v648, 0
      %vm665 = vcmp.lt.s32.totalorder %v543, 0
      %vm666 = vcmp.lt.s32.totalorder %v550, 0
      %vm667 = vcmp.lt.s32.totalorder %v557, 0
      %vm668 = vcmp.lt.s32.totalorder %v564, 0
      %vm669 = vcmp.lt.s32.totalorder %v571, 0
      %vm670 = vcmp.lt.s32.totalorder %v578, 0
      %vm671 = vcmp.lt.s32.totalorder %v585, 0
      %vm672 = vcmp.lt.s32.totalorder %v592, 0
      %vm673 = vcmp.lt.s32.totalorder %v599, 0
      %vm674 = vcmp.lt.s32.totalorder %v606, 0
      %vm675 = vcmp.lt.s32.totalorder %v613, 0
      %vm676 = vcmp.lt.s32.totalorder %v620, 0
      %vm677 = vcmp.lt.s32.totalorder %v627, 0
      %vm678 = vcmp.lt.s32.totalorder %v634, 0
      %vm679 = vcmp.lt.s32.totalorder %v641, 0
      %vm680 = vcmp.lt.s32.totalorder %v648, 0
      %vm681 = vmand %vm665, %vm649
      %vm682 = vmand %vm666, %vm650
      %vm683 = vmand %vm667, %vm651
      %vm684 = vmand %vm668, %vm652
      %vm685 = vmand %vm669, %vm653
      %vm686 = vmand %vm670, %vm654
      %vm687 = vmand %vm671, %vm655
      %vm688 = vmand %vm672, %vm656
      %vm689 = vmand %vm673, %vm657
      %vm690 = vmand %vm674, %vm658
      %vm691 = vmand %vm675, %vm659
      %vm692 = vmand %vm676, %vm660
      %vm693 = vmand %vm677, %vm661
      %vm694 = vmand %vm678, %vm662
      %vm695 = vmand %vm679, %vm663
      %vm696 = vmand %vm680, %vm664
      %v697 = vadd.s32 %v543, 16
      %v698 = vadd.s32 %v550, 16
      %v699 = vadd.s32 %v557, 16
      %v700 = vadd.s32 %v564, 16
      %v701 = vadd.s32 %v571, 16
      %v702 = vadd.s32 %v578, 16
      %v703 = vadd.s32 %v585, 16
      %v704 = vadd.s32 %v592, 16
      %v705 = vadd.s32 %v599, 16
      %v706 = vadd.s32 %v606, 16
      %v707 = vadd.s32 %v613, 16
      %v708 = vadd.s32 %v620, 16
      %v709 = vadd.s32 %v627, 16
      %v710 = vadd.s32 %v634, 16
      %v711 = vadd.s32 %v641, 16
      %v712 = vadd.s32 %v648, 16
      %v713 = vsel %vm681, %v697, %v543
      %v714 = vsel %vm682, %v698, %v550
      %v715 = vsel %vm683, %v699, %v557
      %v716 = vsel %vm684, %v700, %v564
      %v717 = vsel %vm685, %v701, %v571
      %v718 = vsel %vm686, %v702, %v578
      %v719 = vsel %vm687, %v703, %v585
      %v720 = vsel %vm688, %v704, %v592
      %v721 = vsel %vm689, %v705, %v599
      %v722 = vsel %vm690, %v706, %v606
      %v723 = vsel %vm691, %v707, %v613
      %v724 = vsel %vm692, %v708, %v620
      %v725 = vsel %vm693, %v709, %v627
      %v726 = vsel %vm694, %v710, %v634
      %v727 = vsel %vm695, %v711, %v641
      %v728 = vsel %vm696, %v712, %v648
      %v729 = vld [vmem:[%s3] sm:$0xf]
      %v730 = vld [vmem:[%s3 + $0x4] sm:$0xf]
      %v731 = vld [vmem:[%s3 + $0x8] sm:$0xf]
      %v732 = vld [vmem:[%s3 + $0xc] sm:$0xf]
      %v733 = vld [vmem:[%s3 + $0x10] sm:$0xf]
      %v734 = vld [vmem:[%s3 + $0x14] sm:$0xf]
      %v735 = vld [vmem:[%s3 + $0x18] sm:$0xf]
      %v736 = vld [vmem:[%s3 + $0x1c] sm:$0xf]
      %v737 = vld [vmem:[%s3 + $0x20] sm:$0xf]
      %vm738 = vcmp.ne.s32.totalorder %v713, 0
      %vm739 = vcmp.ne.s32.totalorder %v714, 0
      %vm740 = vcmp.ne.s32.totalorder %v715, 0
      %vm741 = vcmp.ne.s32.totalorder %v716, 0
      %vm742 = vcmp.ne.s32.totalorder %v717, 0
      %vm743 = vcmp.ne.s32.totalorder %v718, 0
      %vm744 = vcmp.ne.s32.totalorder %v719, 0
      %vm745 = vcmp.ne.s32.totalorder %v720, 0
      %vm746 = vcmp.ne.s32.totalorder %v721, 0
      %vm747 = vcmp.ne.s32.totalorder %v722, 0
      %vm748 = vcmp.ne.s32.totalorder %v723, 0
      %vm749 = vcmp.ne.s32.totalorder %v724, 0
      %vm750 = vcmp.ne.s32.totalorder %v725, 0
      %vm751 = vcmp.ne.s32.totalorder %v726, 0
      %vm752 = vcmp.ne.s32.totalorder %v727, 0
      %vm753 = vcmp.ne.s32.totalorder %v728, 0
      %v754 = vsel %vm738, 1, 0
      %v755 = vsel %vm739, 1, 0
      %v756 = vsel %vm740, 1, 0
      %v757 = vsel %vm741, 1, 0
      %v758 = vsel %vm742, 1, 0
      %v759 = vsel %vm743, 1, 0
      %v760 = vsel %vm744, 1, 0
      %v761 = vsel %vm745, 1, 0
      %v762 = vsel %vm746, 1, 0
      %v763 = vsel %vm747, 1, 0
      %v764 = vsel %vm748, 1, 0
      %v765 = vsel %vm749, 1, 0
      %v766 = vsel %vm750, 1, 0
      %v767 = vsel %vm751, 1, 0
      %v768 = vsel %vm752, 1, 0
      %v769 = vsel %vm753, 1, 0
      %vm770 = vcmp.eq.s32.totalorder %v754, 1
      %vm771 = vcmp.eq.s32.totalorder %v755, 1
      %vm772 = vcmp.eq.s32.totalorder %v756, 1
      %vm773 = vcmp.eq.s32.totalorder %v757, 1
      %vm774 = vcmp.eq.s32.totalorder %v758, 1
      %vm775 = vcmp.eq.s32.totalorder %v759, 1
      %vm776 = vcmp.eq.s32.totalorder %v760, 1
      %vm777 = vcmp.eq.s32.totalorder %v761, 1
      %vm778 = vcmp.eq.s32.totalorder %v762, 1
      %vm779 = vcmp.eq.s32.totalorder %v763, 1
      %vm780 = vcmp.eq.s32.totalorder %v764, 1
      %vm781 = vcmp.eq.s32.totalorder %v765, 1
      %vm782 = vcmp.eq.s32.totalorder %v766, 1
      %vm783 = vcmp.eq.s32.totalorder %v767, 1
      %vm784 = vcmp.eq.s32.totalorder %v768, 1
      %vm785 = vcmp.eq.s32.totalorder %v769, 1
      %v786 = vsel %vm770, %v518, 0.0
      %v787 = vsel %vm771, %v460, 0.0
      %v788 = vsel %vm772, %v462, 0.0
      %v789 = vsel %vm773, %v464, 0.0
      %v790 = vsel %vm774, %v466, 0.0
      %v791 = vsel %vm775, %v468, 0.0
      %v792 = vsel %vm776, %v470, 0.0
      %v793 = vsel %vm777, %v472, 0.0
      %v794 = vsel %vm778, %v474, 0.0
      %v795 = vsel %vm779, %v476, 0.0
      %v796 = vsel %vm780, %v478, 0.0
      %v797 = vsel %vm781, %v480, 0.0
      %v798 = vsel %vm782, %v482, 0.0
      %v799 = vsel %vm783, %v484, 0.0
      %v800 = vsel %vm784, %v486, 0.0
      %v801 = vsel %vm785, %v488, 0.0
      %vm803 = vcmask 1046528
      %v804 = vrot.slane %v518, 1
      %v805 = vrot.slane %v460, 1
      %v806 = vsel %vm803, %v804, %v805
      %v807 = vrot.slane %v462, 1
      %v808 = vsel %vm803, %v805, %v807
      %v809 = vrot.slane %v464, 1
      %v810 = vsel %vm803, %v807, %v809
      %v811 = vrot.slane %v466, 1
      %v812 = vsel %vm803, %v809, %v811
      %v813 = vrot.slane %v468, 1
      %v814 = vsel %vm803, %v811, %v813
      %v815 = vrot.slane %v470, 1
      %v816 = vsel %vm803, %v813, %v815
      %v817 = vrot.slane %v472, 1
      %v818 = vsel %vm803, %v815, %v817
      %v819 = vrot.slane %v474, 1
      %v820 = vsel %vm803, %v817, %v819
      %v821 = vrot.slane %v476, 1
      %v822 = vsel %vm803, %v819, %v821
      %v823 = vrot.slane %v478, 1
      %v824 = vsel %vm803, %v821, %v823
      %v825 = vrot.slane %v480, 1
      %v826 = vsel %vm803, %v823, %v825
      %v827 = vrot.slane %v482, 1
      %v828 = vsel %vm803, %v825, %v827
      %v829 = vrot.slane %v484, 1
      %v830 = vsel %vm803, %v827, %v829
      %v831 = vrot.slane %v486, 1
      %v832 = vsel %vm803, %v829, %v831
      %v833 = vrot.slane %v488, 1
      %v834 = vsel %vm803, %v831, %v833
      %v835 = vrot.slane %v490, 1
      %v836 = vsel %vm803, %v833, %v835
      %vm837 = vcmask 31744
      %v838 = vsel %vm837, %v806, 0
      %v840 = vsel %vm837, %v808, 0
      %v842 = vsel %vm837, %v810, 0
      %v844 = vsel %vm837, %v812, 0
      %v846 = vsel %vm837, %v814, 0
      %v848 = vsel %vm837, %v816, 0
      %v850 = vsel %vm837, %v818, 0
      %v852 = vsel %vm837, %v820, 0
      %v854 = vsel %vm837, %v822, 0
      %v856 = vsel %vm837, %v824, 0
      %v858 = vsel %vm837, %v826, 0
      %v860 = vsel %vm837, %v828, 0
      %v862 = vsel %vm837, %v830, 0
      %v864 = vsel %vm837, %v832, 0
      %v866 = vsel %vm837, %v834, 0
      %v868 = vsel %vm837, %v836, 0
      %vm870 = vcmask 1043456
      %v872 = vsel %vm870, %v730, 0
      %874 = vmatprep.subr.mxu0 0.0
      %875 = vmatpush1.msra.mxu0 %v872
      %876 = vmatprep.subr.mxu0 0.0
      %877 = vmatpush1.msra.mxu0 0.0
      %878 = vmatprep.subr.mxu0 0.0
      %879 = vmatpush1.msra.mxu0 0.0
      %880 = vmatprep.subr.mxu0 0.0
      %881 = vmatpush1.msra.mxu0 0.0
      %882 = vmatprep.subr.mxu0 0.0
      %883 = vmatpush1.msra.mxu0 0.0
      %884 = vmatprep.subr.mxu0 0.0
      %885 = vmatpush1.msra.mxu0 0.0
      %886 = vmatprep.subr.mxu0 0.0
      %887 = vmatpush1.msra.mxu0 0.0
      %888 = vmatprep.subr.mxu0 0.0
      %889 = vmatpush1.msra.mxu0 0.0
      %890 = vmatprep.subr.mxu0 0.0
      %891 = vmatpush1.msra.mxu0 0.0
      %892 = vmatprep.subr.mxu0 0.0
      %893 = vmatpush1.msra.mxu0 0.0
      %894 = vmatprep.subr.mxu0 0.0
      %895 = vmatpush1.msra.mxu0 0.0
      %896 = vmatprep.subr.mxu0 0.0
      %897 = vmatpush1.msra.mxu0 0.0
      %898 = vmatprep.subr.mxu0 0.0
      %899 = vmatpush1.msra.mxu0 0.0
      %900 = vmatprep.subr.mxu0 0.0
      %901 = vmatpush1.msra.mxu0 0.0
      %902 = vmatprep.subr.mxu0 0.0
      %903 = vmatpush1.msra.mxu0 0.0
      %904 = vmatprep.subr.mxu0 0.0
      %905 = vmatpush1.msra.mxu0 0.0
      %906 = vmatprep.subr.mxu0 0.0
      %907 = vmatpush1.msra.mxu0 0.0
      %908 = vmatprep.subr.mxu0 0.0
      %909 = vmatpush1.msra.mxu0 0.0
      %910 = vmatprep.subr.mxu0 0.0
      %911 = vmatpush1.msra.mxu0 0.0
      %912 = vmatprep.subr.mxu0 0.0
      %913 = vmatpush1.msra.mxu0 0.0
      %914 = vmatprep.subr.mxu0 0.0
      %915 = vmatpush1.msra.mxu0 0.0
      %916 = vmatprep.subr.mxu0 0.0
      %917 = vmatpush1.msra.mxu0 0.0
      %918 = vmatprep.subr.mxu0 0.0
      %919 = vmatpush1.msra.mxu0 0.0
      %920 = vmatprep.subr.mxu0 0.0
      %921 = vmatpush1.msra.mxu0 0.0
      %922 = vmatprep.subr.mxu0 0.0
      %923 = vmatpush1.msra.mxu0 0.0
      %924 = vmatprep.subr.mxu0 0.0
      %925 = vmatpush1.msra.mxu0 0.0
      %926 = vmatprep.subr.mxu0 0.0
      %927 = vmatpush1.msra.mxu0 0.0
      %928 = vmatprep.subr.mxu0 0.0
      %929 = vmatpush1.msra.mxu0 0.0
      %930 = vmatprep.subr.mxu0 0.0
      %931 = vmatpush1.msra.mxu0 0.0
      %932 = vmatprep.subr.mxu0 0.0
      %933 = vmatpush1.msra.mxu0 0.0
      %934 = vmatprep.subr.mxu0 0.0
      %935 = vmatpush1.msra.mxu0 0.0
      %936 = vmatprep.subr.mxu0 0.0
      %937 = vmatpush1.msra.mxu0 0.0
      %938 = vmatprep.mubr.f32.mxu0 0.0
      %939 = vmatmul.mubr.f32.gmra.mrb[0].mxu0 %v838
      %v940 = vpop.f32.mrb[0].mxu0
      %v941 = vadd.f32 0.0, %v940
      %v942 = vpop.f32.mrb[0].mxu0
      %943 = vmatprep.mubr.f32.mxu0 0.0
      %944 = vmatmul.mubr.f32.gmra.mrb[0].mxu0 %v840
      %v945 = vpop.f32.mrb[0].mxu0
      %v946 = vadd.f32 0.0, %v945
      %v947 = vpop.f32.mrb[0].mxu0
      %948 = vmatprep.mubr.f32.mxu0 0.0
      %949 = vmatmul.mubr.f32.gmra.mrb[0].mxu0 %v842
      %v950 = vpop.f32.mrb[0].mxu0
      %v951 = vadd.f32 0.0, %v950
      %v952 = vpop.f32.mrb[0].mxu0
      %953 = vmatprep.mubr.f32.mxu0 0.0
      %954 = vmatmul.mubr.f32.gmra.mrb[0].mxu0 %v844
      %v955 = vpop.f32.mrb[0].mxu0
      %v956 = vadd.f32 0.0, %v955
      %v957 = vpop.f32.mrb[0].mxu0
      %958 = vmatprep.mubr.f32.mxu0 0.0
      %959 = vmatmul.mubr.f32.gmra.mrb[0].mxu0 %v846
      %v960 = vpop.f32.mrb[0].mxu0
      %v961 = vadd.f32 0.0, %v960
      %v962 = vpop.f32.mrb[0].mxu0
      %963 = vmatprep.mubr.f32.mxu0 0.0
      %964 = vmatmul.mubr.f32.gmra.mrb[0].mxu0 %v848
      %v965 = vpop.f32.mrb[0].mxu0
      %v966 = vadd.f32 0.0, %v965
      %v967 = vpop.f32.mrb[0].mxu0
      %968 = vmatprep.mubr.f32.mxu0 0.0
      %969 = vmatmul.mubr.f32.gmra.mrb[0].mxu0 %v850
      %v970 = vpop.f32.mrb[0].mxu0
      %v971 = vadd.f32 0.0, %v970
      %v972 = vpop.f32.mrb[0].mxu0
      %973 = vmatprep.mubr.f32.mxu0 0.0
      %974 = vmatmul.mubr.f32.gmra.mrb[0].mxu0 %v852
      %v975 = vpop.f32.mrb[0].mxu0
      %v976 = vadd.f32 0.0, %v975
      %v977 = vpop.f32.mrb[0].mxu0
      %978 = vmatprep.mubr.f32.mxu0 0.0
      %979 = vmatmul.mubr.f32.gmra.mrb[0].mxu0 %v854
      %v980 = vpop.f32.mrb[0].mxu0
      %v981 = vadd.f32 0.0, %v980
      %v982 = vpop.f32.mrb[0].mxu0
      %983 = vmatprep.mubr.f32.mxu0 0.0
      %984 = vmatmul.mubr.f32.gmra.mrb[0].mxu0 %v856
      %v985 = vpop.f32.mrb[0].mxu0
      %v986 = vadd.f32 0.0, %v985
      %v987 = vpop.f32.mrb[0].mxu0
      %988 = vmatprep.mubr.f32.mxu0 0.0
      %989 = vmatmul.mubr.f32.gmra.mrb[0].mxu0 %v858
      %v990 = vpop.f32.mrb[0].mxu0
      %v991 = vadd.f32 0.0, %v990
      %v992 = vpop.f32.mrb[0].mxu0
      %993 = vmatprep.mubr.f32.mxu0 0.0
      %994 = vmatmul.mubr.f32.gmra.mrb[0].mxu0 %v860
      %v995 = vpop.f32.mrb[0].mxu0
      %v996 = vadd.f32 0.0, %v995
      %v997 = vpop.f32.mrb[0].mxu0
      %998 = vmatprep.mubr.f32.mxu0 0.0
      %999 = vmatmul.mubr.f32.gmra.mrb[0].mxu0 %v862
      %v1000 = vpop.f32.mrb[0].mxu0
      %v1001 = vadd.f32 0.0, %v1000
      %v1002 = vpop.f32.mrb[0].mxu0
      %1003 = vmatprep.mubr.f32.mxu0 0.0
      %1004 = vmatmul.mubr.f32.gmra.mrb[0].mxu0 %v864
      %v1005 = vpop.f32.mrb[0].mxu0
      %v1006 = vadd.f32 0.0, %v1005
      %v1007 = vpop.f32.mrb[0].mxu0
      %1008 = vmatprep.mubr.f32.mxu0 0.0
      %1009 = vmatmul.mubr.f32.gmra.mrb[0].mxu0 %v866
      %v1010 = vpop.f32.mrb[0].mxu0
      %v1011 = vadd.f32 0.0, %v1010
      %v1012 = vpop.f32.mrb[0].mxu0
      %1013 = vmatprep.mubr.f32.mxu0 0.0
      %1014 = vmatmul.mubr.f32.gmra.mrb[0].mxu0 %v868
      %v1015 = vpop.f32.mrb[0].mxu0
      %v1016 = vadd.f32 0.0, %v1015
      %v1017 = vpop.f32.mrb[0].mxu0
      %1018 = vdwg.mxu0
      %v1020 = vsel %vm837, %v786, 0
      %v1023 = vsel %vm837, %v787, 0
      %v1026 = vsel %vm837, %v788, 0
      %v1029 = vsel %vm837, %v789, 0
      %v1032 = vsel %vm837, %v790, 0
      %v1035 = vsel %vm837, %v791, 0
      %v1038 = vsel %vm837, %v792, 0
      %v1041 = vsel %vm837, %v793, 0
      %v1044 = vsel %vm837, %v794, 0
      %v1047 = vsel %vm837, %v795, 0
      %v1050 = vsel %vm837, %v796, 0
      %v1053 = vsel %vm837, %v797, 0
      %v1056 = vsel %vm837, %v798, 0
      %v1059 = vsel %vm837, %v799, 0
      %v1062 = vsel %vm837, %v800, 0
      %v1065 = vsel %vm837, %v801, 0
      %v1068 = vsel %vm870, %v729, 0
      %1070 = vmatprep.subr.mxu0 0.0
      %1071 = vmatpush1.msra.mxu0 %v1068
      %1072 = vmatprep.subr.mxu0 0.0
      %1073 = vmatpush1.msra.mxu0 0.0
      %1074 = vmatprep.subr.mxu0 0.0
      %1075 = vmatpush1.msra.mxu0 0.0
      %1076 = vmatprep.subr.mxu0 0.0
      %1077 = vmatpush1.msra.mxu0 0.0
      %1078 = vmatprep.subr.mxu0 0.0
      %1079 = vmatpush1.msra.mxu0 0.0
      %1080 = vmatprep.subr.mxu0 0.0
      %1081 = vmatpush1.msra.mxu0 0.0
      %1082 = vmatprep.subr.mxu0 0.0
      %1083 = vmatpush1.msra.mxu0 0.0
      %1084 = vmatprep.subr.mxu0 0.0
      %1085 = vmatpush1.msra.mxu0 0.0
      %1086 = vmatprep.subr.mxu0 0.0
      %1087 = vmatpush1.msra.mxu0 0.0
      %1088 = vmatprep.subr.mxu0 0.0
      %1089 = vmatpush1.msra.mxu0 0.0
      %1090 = vmatprep.subr.mxu0 0.0
      %1091 = vmatpush1.msra.mxu0 0.0
      %1092 = vmatprep.subr.mxu0 0.0
      %1093 = vmatpush1.msra.mxu0 0.0
      %1094 = vmatprep.subr.mxu0 0.0
      %1095 = vmatpush1.msra.mxu0 0.0
      %1096 = vmatprep.subr.mxu0 0.0
      %1097 = vmatpush1.msra.mxu0 0.0
      %1098 = vmatprep.subr.mxu0 0.0
      %1099 = vmatpush1.msra.mxu0 0.0
      %1100 = vmatprep.subr.mxu0 0.0
      %1101 = vmatpush1.msra.mxu0 0.0
      %1102 = vmatprep.subr.mxu0 0.0
      %1103 = vmatpush1.msra.mxu0 0.0
      %1104 = vmatprep.subr.mxu0 0.0
      %1105 = vmatpush1.msra.mxu0 0.0
      %1106 = vmatprep.subr.mxu0 0.0
      %1107 = vmatpush1.msra.mxu0 0.0
      %1108 = vmatprep.subr.mxu0 0.0
      %1109 = vmatpush1.msra.mxu0 0.0
      %1110 = vmatprep.subr.mxu0 0.0
      %1111 = vmatpush1.msra.mxu0 0.0
      %1112 = vmatprep.subr.mxu0 0.0
      %1113 = vmatpush1.msra.mxu0 0.0
      %1114 = vmatprep.subr.mxu0 0.0
      %1115 = vmatpush1.msra.mxu0 0.0
      %1116 = vmatprep.subr.mxu0 0.0
      %1117 = vmatpush1.msra.mxu0 0.0
      %1118 = vmatprep.subr.mxu0 0.0
      %1119 = vmatpush1.msra.mxu0 0.0
      %1120 = vmatprep.subr.mxu0 0.0
      %1121 = vmatpush1.msra.mxu0 0.0
      %1122 = vmatprep.subr.mxu0 0.0
      %1123 = vmatpush1.msra.mxu0 0.0
      %1124 = vmatprep.subr.mxu0 0.0
      %1125 = vmatpush1.msra.mxu0 0.0
      %1126 = vmatprep.subr.mxu0 0.0
      %1127 = vmatpush1.msra.mxu0 0.0
      %1128 = vmatprep.subr.mxu0 0.0
      %1129 = vmatpush1.msra.mxu0 0.0
      %1130 = vmatprep.subr.mxu0 0.0
      %1131 = vmatpush1.msra.mxu0 0.0
      %1132 = vmatprep.subr.mxu0 0.0
      %1133 = vmatpush1.msra.mxu0 0.0
      %1134 = vmatprep.mubr.f32.mxu0 0.0
      %1135 = vmatmul.mubr.f32.gmra.mrb[0].mxu0 %v1020
      %v1136 = vpop.f32.mrb[0].mxu0
      %v1137 = vadd.f32 %v941, %v1136
      %v1138 = vpop.f32.mrb[0].mxu0
      %1139 = vmatprep.mubr.f32.mxu0 0.0
      %1140 = vmatmul.mubr.f32.gmra.mrb[0].mxu0 %v1023
      %v1141 = vpop.f32.mrb[0].mxu0
      %v1142 = vadd.f32 %v946, %v1141
      %v1143 = vpop.f32.mrb[0].mxu0
      %1144 = vmatprep.mubr.f32.mxu0 0.0
      %1145 = vmatmul.mubr.f32.gmra.mrb[0].mxu0 %v1026
      %v1146 = vpop.f32.mrb[0].mxu0
      %v1147 = vadd.f32 %v951, %v1146
      %v1148 = vpop.f32.mrb[0].mxu0
      %1149 = vmatprep.mubr.f32.mxu0 0.0
      %1150 = vmatmul.mubr.f32.gmra.mrb[0].mxu0 %v1029
      %v1151 = vpop.f32.mrb[0].mxu0
      %v1152 = vadd.f32 %v956, %v1151
      %v1153 = vpop.f32.mrb[0].mxu0
      %1154 = vmatprep.mubr.f32.mxu0 0.0
      %1155 = vmatmul.mubr.f32.gmra.mrb[0].mxu0 %v1032
      %v1156 = vpop.f32.mrb[0].mxu0
      %v1157 = vadd.f32 %v961, %v1156
      %v1158 = vpop.f32.mrb[0].mxu0
      %1159 = vmatprep.mubr.f32.mxu0 0.0
      %1160 = vmatmul.mubr.f32.gmra.mrb[0].mxu0 %v1035
      %v1161 = vpop.f32.mrb[0].mxu0
      %v1162 = vadd.f32 %v966, %v1161
      %v1163 = vpop.f32.mrb[0].mxu0
      %1164 = vmatprep.mubr.f32.mxu0 0.0
      %1165 = vmatmul.mubr.f32.gmra.mrb[0].mxu0 %v1038
      %v1166 = vpop.f32.mrb[0].mxu0
      %v1167 = vadd.f32 %v971, %v1166
      %v1168 = vpop.f32.mrb[0].mxu0
      %1169 = vmatprep.mubr.f32.mxu0 0.0
      %1170 = vmatmul.mubr.f32.gmra.mrb[0].mxu0 %v1041
      %v1171 = vpop.f32.mrb[0].mxu0
      %v1172 = vadd.f32 %v976, %v1171
      %v1173 = vpop.f32.mrb[0].mxu0
      %1174 = vmatprep.mubr.f32.mxu0 0.0
      %1175 = vmatmul.mubr.f32.gmra.mrb[0].mxu0 %v1044
      %v1176 = vpop.f32.mrb[0].mxu0
      %v1177 = vadd.f32 %v981, %v1176
      %v1178 = vpop.f32.mrb[0].mxu0
      %1179 = vmatprep.mubr.f32.mxu0 0.0
      %1180 = vmatmul.mubr.f32.gmra.mrb[0].mxu0 %v1047
      %v1181 = vpop.f32.mrb[0].mxu0
      %v1182 = vadd.f32 %v986, %v1181
      %v1183 = vpop.f32.mrb[0].mxu0
      %1184 = vmatprep.mubr.f32.mxu0 0.0
      %1185 = vmatmul.mubr.f32.gmra.mrb[0].mxu0 %v1050
      %v1186 = vpop.f32.mrb[0].mxu0
      %v1187 = vadd.f32 %v991, %v1186
      %v1188 = vpop.f32.mrb[0].mxu0
      %1189 = vmatprep.mubr.f32.mxu0 0.0
      %1190 = vmatmul.mubr.f32.gmra.mrb[0].mxu0 %v1053
      %v1191 = vpop.f32.mrb[0].mxu0
      %v1192 = vadd.f32 %v996, %v1191
      %v1193 = vpop.f32.mrb[0].mxu0
      %1194 = vmatprep.mubr.f32.mxu0 0.0
      %1195 = vmatmul.mubr.f32.gmra.mrb[0].mxu0 %v1056
      %v1196 = vpop.f32.mrb[0].mxu0
      %v1197 = vadd.f32 %v1001, %v1196
      %v1198 = vpop.f32.mrb[0].mxu0
      %1199 = vmatprep.mubr.f32.mxu0 0.0
      %1200 = vmatmul.mubr.f32.gmra.mrb[0].mxu0 %v1059
      %v1201 = vpop.f32.mrb[0].mxu0
      %v1202 = vadd.f32 %v1006, %v1201
      %v1203 = vpop.f32.mrb[0].mxu0
      %1204 = vmatprep.mubr.f32.mxu0 0.0
      %1205 = vmatmul.mubr.f32.gmra.mrb[0].mxu0 %v1062
      %v1206 = vpop.f32.mrb[0].mxu0
      %v1207 = vadd.f32 %v1011, %v1206
      %v1208 = vpop.f32.mrb[0].mxu0
      %1209 = vmatprep.mubr.f32.mxu0 0.0
      %1210 = vmatmul.mubr.f32.gmra.mrb[0].mxu0 %v1065
      %v1211 = vpop.f32.mrb[0].mxu0
      %v1212 = vadd.f32 %v1016, %v1211
      %v1213 = vpop.f32.mrb[0].mxu0
      %1214 = vdwg.mxu0
      %vm1215 = vcmp.ne.s32.totalorder %v713, 15
      %vm1216 = vcmp.ne.s32.totalorder %v714, 15
      %vm1217 = vcmp.ne.s32.totalorder %v715, 15
      %vm1218 = vcmp.ne.s32.totalorder %v716, 15
      %vm1219 = vcmp.ne.s32.totalorder %v717, 15
      %vm1220 = vcmp.ne.s32.totalorder %v718, 15
      %vm1221 = vcmp.ne.s32.totalorder %v719, 15
      %vm1222 = vcmp.ne.s32.totalorder %v720, 15
      %vm1223 = vcmp.ne.s32.totalorder %v721, 15
      %vm1224 = vcmp.ne.s32.totalorder %v722, 15
      %vm1225 = vcmp.ne.s32.totalorder %v723, 15
      %vm1226 = vcmp.ne.s32.totalorder %v724, 15
      %vm1227 = vcmp.ne.s32.totalorder %v725, 15
      %vm1228 = vcmp.ne.s32.totalorder %v726, 15
      %vm1229 = vcmp.ne.s32.totalorder %v727, 15
      %vm1230 = vcmp.ne.s32.totalorder %v728, 15
      %v1231 = vsel %vm1215, 1, 0
      %v1232 = vsel %vm1216, 1, 0
      %v1233 = vsel %vm1217, 1, 0
      %v1234 = vsel %vm1218, 1, 0
      %v1235 = vsel %vm1219, 1, 0
      %v1236 = vsel %vm1220, 1, 0
      %v1237 = vsel %vm1221, 1, 0
      %v1238 = vsel %vm1222, 1, 0
      %v1239 = vsel %vm1223, 1, 0
      %v1240 = vsel %vm1224, 1, 0
      %v1241 = vsel %vm1225, 1, 0
      %v1242 = vsel %vm1226, 1, 0
      %v1243 = vsel %vm1227, 1, 0
      %v1244 = vsel %vm1228, 1, 0
      %v1245 = vsel %vm1229, 1, 0
      %v1246 = vsel %vm1230, 1, 0
      %vm1247 = vcmp.eq.s32.totalorder %v1231, 1
      %vm1248 = vcmp.eq.s32.totalorder %v1232, 1
      %vm1249 = vcmp.eq.s32.totalorder %v1233, 1
      %vm1250 = vcmp.eq.s32.totalorder %v1234, 1
      %vm1251 = vcmp.eq.s32.totalorder %v1235, 1
      %vm1252 = vcmp.eq.s32.totalorder %v1236, 1
      %vm1253 = vcmp.eq.s32.totalorder %v1237, 1
      %vm1254 = vcmp.eq.s32.totalorder %v1238, 1
      %vm1255 = vcmp.eq.s32.totalorder %v1239, 1
      %vm1256 = vcmp.eq.s32.totalorder %v1240, 1
      %vm1257 = vcmp.eq.s32.totalorder %v1241, 1
      %vm1258 = vcmp.eq.s32.totalorder %v1242, 1
      %vm1259 = vcmp.eq.s32.totalorder %v1243, 1
      %vm1260 = vcmp.eq.s32.totalorder %v1244, 1
      %vm1261 = vcmp.eq.s32.totalorder %v1245, 1
      %vm1262 = vcmp.eq.s32.totalorder %v1246, 1
      %vm1263 = vcmask 1045504
      %v1264 = vrot.slane %v518, 2
      %v1265 = vrot.slane %v460, 2
      %v1266 = vsel %vm1263, %v1264, %v1265
      %v1267 = vrot.slane %v462, 2
      %v1268 = vsel %vm1263, %v1265, %v1267
      %v1269 = vrot.slane %v464, 2
      %v1270 = vsel %vm1263, %v1267, %v1269
      %v1271 = vrot.slane %v466, 2
      %v1272 = vsel %vm1263, %v1269, %v1271
      %v1273 = vrot.slane %v468, 2
      %v1274 = vsel %vm1263, %v1271, %v1273
      %v1275 = vrot.slane %v470, 2
      %v1276 = vsel %vm1263, %v1273, %v1275
      %v1277 = vrot.slane %v472, 2
      %v1278 = vsel %vm1263, %v1275, %v1277
      %v1279 = vrot.slane %v474, 2
      %v1280 = vsel %vm1263, %v1277, %v1279
      %v1281 = vrot.slane %v476, 2
      %v1282 = vsel %vm1263, %v1279, %v1281
      %v1283 = vrot.slane %v478, 2
      %v1284 = vsel %vm1263, %v1281, %v1283
      %v1285 = vrot.slane %v480, 2
      %v1286 = vsel %vm1263, %v1283, %v1285
      %v1287 = vrot.slane %v482, 2
      %v1288 = vsel %vm1263, %v1285, %v1287
      %v1289 = vrot.slane %v484, 2
      %v1290 = vsel %vm1263, %v1287, %v1289
      %v1291 = vrot.slane %v486, 2
      %v1292 = vsel %vm1263, %v1289, %v1291
      %v1293 = vrot.slane %v488, 2
      %v1294 = vsel %vm1263, %v1291, %v1293
      %v1295 = vrot.slane %v490, 2
      %v1296 = vsel %vm1263, %v1293, %v1295
      %v1313 = vsel %vm1247, %v1266, 0.0
      %v1314 = vsel %vm1248, %v1268, 0.0
      %v1315 = vsel %vm1249, %v1270, 0.0
      %v1316 = vsel %vm1250, %v1272, 0.0
      %v1317 = vsel %vm1251, %v1274, 0.0
      %v1318 = vsel %vm1252, %v1276, 0.0
      %v1319 = vsel %vm1253, %v1278, 0.0
      %v1320 = vsel %vm1254, %v1280, 0.0
      %v1321 = vsel %vm1255, %v1282, 0.0
      %v1322 = vsel %vm1256, %v1284, 0.0
      %v1323 = vsel %vm1257, %v1286, 0.0
      %v1324 = vsel %vm1258, %v1288, 0.0
      %v1325 = vsel %vm1259, %v1290, 0.0
      %v1326 = vsel %vm1260, %v1292, 0.0
      %v1327 = vsel %vm1261, %v1294, 0.0
      %v1328 = vsel %vm1262, %v1296, 0.0
      %v1330 = vsel %vm837, %v1313, 0
      %v1333 = vsel %vm837, %v1314, 0
      %v1336 = vsel %vm837, %v1315, 0
      %v1339 = vsel %vm837, %v1316, 0
      %v1342 = vsel %vm837, %v1317, 0
      %v1345 = vsel %vm837, %v1318, 0
      %v1348 = vsel %vm837, %v1319, 0
      %v1351 = vsel %vm837, %v1320, 0
      %v1354 = vsel %vm837, %v1321, 0
      %v1357 = vsel %vm837, %v1322, 0
      %v1360 = vsel %vm837, %v1323, 0
      %v1363 = vsel %vm837, %v1324, 0
      %v1366 = vsel %vm837, %v1325, 0
      %v1369 = vsel %vm837, %v1326, 0
      %v1372 = vsel %vm837, %v1327, 0
      %v1375 = vsel %vm837, %v1328, 0
      %v1378 = vsel %vm870, %v731, 0
      %1380 = vmatprep.subr.mxu0 0.0
      %1381 = vmatpush1.msra.mxu0 %v1378
      %1382 = vmatprep.subr.mxu0 0.0
      %1383 = vmatpush1.msra.mxu0 0.0
      %1384 = vmatprep.subr.mxu0 0.0
      %1385 = vmatpush1.msra.mxu0 0.0
      %1386 = vmatprep.subr.mxu0 0.0
      %1387 = vmatpush1.msra.mxu0 0.0
      %1388 = vmatprep.subr.mxu0 0.0
      %1389 = vmatpush1.msra.mxu0 0.0
      %1390 = vmatprep.subr.mxu0 0.0
      %1391 = vmatpush1.msra.mxu0 0.0
      %1392 = vmatprep.subr.mxu0 0.0
      %1393 = vmatpush1.msra.mxu0 0.0
      %1394 = vmatprep.subr.mxu0 0.0
      %1395 = vmatpush1.msra.mxu0 0.0
      %1396 = vmatprep.subr.mxu0 0.0
      %1397 = vmatpush1.msra.mxu0 0.0
      %1398 = vmatprep.subr.mxu0 0.0
      %1399 = vmatpush1.msra.mxu0 0.0
      %1400 = vmatprep.subr.mxu0 0.0
      %1401 = vmatpush1.msra.mxu0 0.0
      %1402 = vmatprep.subr.mxu0 0.0
      %1403 = vmatpush1.msra.mxu0 0.0
      %1404 = vmatprep.subr.mxu0 0.0
      %1405 = vmatpush1.msra.mxu0 0.0
      %1406 = vmatprep.subr.mxu0 0.0
      %1407 = vmatpush1.msra.mxu0 0.0
      %1408 = vmatprep.subr.mxu0 0.0
      %1409 = vmatpush1.msra.mxu0 0.0
      %1410 = vmatprep.subr.mxu0 0.0
      %1411 = vmatpush1.msra.mxu0 0.0
      %1412 = vmatprep.subr.mxu0 0.0
      %1413 = vmatpush1.msra.mxu0 0.0
      %1414 = vmatprep.subr.mxu0 0.0
      %1415 = vmatpush1.msra.mxu0 0.0
      %1416 = vmatprep.subr.mxu0 0.0
      %1417 = vmatpush1.msra.mxu0 0.0
      %1418 = vmatprep.subr.mxu0 0.0
      %1419 = vmatpush1.msra.mxu0 0.0
      %1420 = vmatprep.subr.mxu0 0.0
      %1421 = vmatpush1.msra.mxu0 0.0
      %1422 = vmatprep.subr.mxu0 0.0
      %1423 = vmatpush1.msra.mxu0 0.0
      %1424 = vmatprep.subr.mxu0 0.0
      %1425 = vmatpush1.msra.mxu0 0.0
      %1426 = vmatprep.subr.mxu0 0.0
      %1427 = vmatpush1.msra.mxu0 0.0
      %1428 = vmatprep.subr.mxu0 0.0
      %1429 = vmatpush1.msra.mxu0 0.0
      %1430 = vmatprep.subr.mxu0 0.0
      %1431 = vmatpush1.msra.mxu0 0.0
      %1432 = vmatprep.subr.mxu0 0.0
      %1433 = vmatpush1.msra.mxu0 0.0
      %1434 = vmatprep.subr.mxu0 0.0
      %1435 = vmatpush1.msra.mxu0 0.0
      %1436 = vmatprep.subr.mxu0 0.0
      %1437 = vmatpush1.msra.mxu0 0.0
      %1438 = vmatprep.subr.mxu0 0.0
      %1439 = vmatpush1.msra.mxu0 0.0
      %1440 = vmatprep.subr.mxu0 0.0
      %1441 = vmatpush1.msra.mxu0 0.0
      %1442 = vmatprep.subr.mxu0 0.0
      %1443 = vmatpush1.msra.mxu0 0.0
      %1444 = vmatprep.mubr.f32.mxu0 0.0
      %1445 = vmatmul.mubr.f32.gmra.mrb[0].mxu0 %v1330
      %v1446 = vpop.f32.mrb[0].mxu0
      %v1447 = vadd.f32 0.0, %v1446
      %v1448 = vpop.f32.mrb[0].mxu0
      %1449 = vmatprep.mubr.f32.mxu0 0.0
      %1450 = vmatmul.mubr.f32.gmra.mrb[0].mxu0 %v1333
      %v1451 = vpop.f32.mrb[0].mxu0
      %v1452 = vadd.f32 0.0, %v1451
      %v1453 = vpop.f32.mrb[0].mxu0
      %1454 = vmatprep.mubr.f32.mxu0 0.0
      %1455 = vmatmul.mubr.f32.gmra.mrb[0].mxu0 %v1336
      %v1456 = vpop.f32.mrb[0].mxu0
      %v1457 = vadd.f32 0.0, %v1456
      %v1458 = vpop.f32.mrb[0].mxu0
      %1459 = vmatprep.mubr.f32.mxu0 0.0
      %1460 = vmatmul.mubr.f32.gmra.mrb[0].mxu0 %v1339
      %v1461 = vpop.f32.mrb[0].mxu0
      %v1462 = vadd.f32 0.0, %v1461
      %v1463 = vpop.f32.mrb[0].mxu0
      %1464 = vmatprep.mubr.f32.mxu0 0.0
      %1465 = vmatmul.mubr.f32.gmra.mrb[0].mxu0 %v1342
      %v1466 = vpop.f32.mrb[0].mxu0
      %v1467 = vadd.f32 0.0, %v1466
      %v1468 = vpop.f32.mrb[0].mxu0
      %1469 = vmatprep.mubr.f32.mxu0 0.0
      %1470 = vmatmul.mubr.f32.gmra.mrb[0].mxu0 %v1345
      %v1471 = vpop.f32.mrb[0].mxu0
      %v1472 = vadd.f32 0.0, %v1471
      %v1473 = vpop.f32.mrb[0].mxu0
      %1474 = vmatprep.mubr.f32.mxu0 0.0
      %1475 = vmatmul.mubr.f32.gmra.mrb[0].mxu0 %v1348
      %v1476 = vpop.f32.mrb[0].mxu0
      %v1477 = vadd.f32 0.0, %v1476
      %v1478 = vpop.f32.mrb[0].mxu0
      %1479 = vmatprep.mubr.f32.mxu0 0.0
      %1480 = vmatmul.mubr.f32.gmra.mrb[0].mxu0 %v1351
      %v1481 = vpop.f32.mrb[0].mxu0
      %v1482 = vadd.f32 0.0, %v1481
      %v1483 = vpop.f32.mrb[0].mxu0
      %1484 = vmatprep.mubr.f32.mxu0 0.0
      %1485 = vmatmul.mubr.f32.gmra.mrb[0].mxu0 %v1354
      %v1486 = vpop.f32.mrb[0].mxu0
      %v1487 = vadd.f32 0.0, %v1486
      %v1488 = vpop.f32.mrb[0].mxu0
      %1489 = vmatprep.mubr.f32.mxu0 0.0
      %1490 = vmatmul.mubr.f32.gmra.mrb[0].mxu0 %v1357
      %v1491 = vpop.f32.mrb[0].mxu0
      %v1492 = vadd.f32 0.0, %v1491
      %v1493 = vpop.f32.mrb[0].mxu0
      %1494 = vmatprep.mubr.f32.mxu0 0.0
      %1495 = vmatmul.mubr.f32.gmra.mrb[0].mxu0 %v1360
      %v1496 = vpop.f32.mrb[0].mxu0
      %v1497 = vadd.f32 0.0, %v1496
      %v1498 = vpop.f32.mrb[0].mxu0
      %1499 = vmatprep.mubr.f32.mxu0 0.0
      %1500 = vmatmul.mubr.f32.gmra.mrb[0].mxu0 %v1363
      %v1501 = vpop.f32.mrb[0].mxu0
      %v1502 = vadd.f32 0.0, %v1501
      %v1503 = vpop.f32.mrb[0].mxu0
      %1504 = vmatprep.mubr.f32.mxu0 0.0
      %1505 = vmatmul.mubr.f32.gmra.mrb[0].mxu0 %v1366
      %v1506 = vpop.f32.mrb[0].mxu0
      %v1507 = vadd.f32 0.0, %v1506
      %v1508 = vpop.f32.mrb[0].mxu0
      %1509 = vmatprep.mubr.f32.mxu0 0.0
      %1510 = vmatmul.mubr.f32.gmra.mrb[0].mxu0 %v1369
      %v1511 = vpop.f32.mrb[0].mxu0
      %v1512 = vadd.f32 0.0, %v1511
      %v1513 = vpop.f32.mrb[0].mxu0
      %1514 = vmatprep.mubr.f32.mxu0 0.0
      %1515 = vmatmul.mubr.f32.gmra.mrb[0].mxu0 %v1372
      %v1516 = vpop.f32.mrb[0].mxu0
      %v1517 = vadd.f32 0.0, %v1516
      %v1518 = vpop.f32.mrb[0].mxu0
      %1519 = vmatprep.mubr.f32.mxu0 0.0
      %1520 = vmatmul.mubr.f32.gmra.mrb[0].mxu0 %v1375
      %v1521 = vpop.f32.mrb[0].mxu0
      %v1522 = vadd.f32 0.0, %v1521
      %v1523 = vpop.f32.mrb[0].mxu0
      %1524 = vdwg.mxu0
      %v1525 = vadd.f32 %v1137, %v1447
      %v1526 = vadd.f32 %v1142, %v1452
      %v1527 = vadd.f32 %v1147, %v1457
      %v1528 = vadd.f32 %v1152, %v1462
      %v1529 = vadd.f32 %v1157, %v1467
      %v1530 = vadd.f32 %v1162, %v1472
      %v1531 = vadd.f32 %v1167, %v1477
      %v1532 = vadd.f32 %v1172, %v1482
      %v1533 = vadd.f32 %v1177, %v1487
      %v1534 = vadd.f32 %v1182, %v1492
      %v1535 = vadd.f32 %v1187, %v1497
      %v1536 = vadd.f32 %v1192, %v1502
      %v1537 = vadd.f32 %v1197, %v1507
      %v1538 = vadd.f32 %v1202, %v1512
      %v1539 = vadd.f32 %v1207, %v1517
      %v1540 = vadd.f32 %v1212, %v1522
      %v1541 = vsel %vm770, %v462, 0.0
      %v1542 = vsel %vm771, %v464, 0.0
      %v1543 = vsel %vm772, %v466, 0.0
      %v1544 = vsel %vm773, %v468, 0.0
      %v1545 = vsel %vm774, %v470, 0.0
      %v1546 = vsel %vm775, %v472, 0.0
      %v1547 = vsel %vm776, %v474, 0.0
      %v1548 = vsel %vm777, %v476, 0.0
      %v1549 = vsel %vm778, %v478, 0.0
      %v1550 = vsel %vm779, %v480, 0.0
      %v1551 = vsel %vm780, %v482, 0.0
      %v1552 = vsel %vm781, %v484, 0.0
      %v1553 = vsel %vm782, %v486, 0.0
      %v1554 = vsel %vm783, %v488, 0.0
      %v1555 = vsel %vm784, %v490, 0.0
      %v1556 = vsel %vm785, %v492, 0.0
      %v1558 = vsel %vm837, %v1541, 0
      %v1561 = vsel %vm837, %v1542, 0
      %v1564 = vsel %vm837, %v1543, 0
      %v1567 = vsel %vm837, %v1544, 0
      %v1570 = vsel %vm837, %v1545, 0
      %v1573 = vsel %vm837, %v1546, 0
      %v1576 = vsel %vm837, %v1547, 0
      %v1579 = vsel %vm837, %v1548, 0
      %v1582 = vsel %vm837, %v1549, 0
      %v1585 = vsel %vm837, %v1550, 0
      %v1588 = vsel %vm837, %v1551, 0
      %v1591 = vsel %vm837, %v1552, 0
      %v1594 = vsel %vm837, %v1553, 0
      %v1597 = vsel %vm837, %v1554, 0
      %v1600 = vsel %vm837, %v1555, 0
      %v1603 = vsel %vm837, %v1556, 0
      %v1606 = vsel %vm870, %v732, 0
      %1608 = vmatprep.subr.mxu0 0.0
      %1609 = vmatpush1.msra.mxu0 %v1606
      %1610 = vmatprep.subr.mxu0 0.0
      %1611 = vmatpush1.msra.mxu0 0.0
      %1612 = vmatprep.subr.mxu0 0.0
      %1613 = vmatpush1.msra.mxu0 0.0
      %1614 = vmatprep.subr.mxu0 0.0
      %1615 = vmatpush1.msra.mxu0 0.0
      %1616 = vmatprep.subr.mxu0 0.0
      %1617 = vmatpush1.msra.mxu0 0.0
      %1618 = vmatprep.subr.mxu0 0.0
      %1619 = vmatpush1.msra.mxu0 0.0
      %1620 = vmatprep.subr.mxu0 0.0
      %1621 = vmatpush1.msra.mxu0 0.0
      %1622 = vmatprep.subr.mxu0 0.0
      %1623 = vmatpush1.msra.mxu0 0.0
      %1624 = vmatprep.subr.mxu0 0.0
      %1625 = vmatpush1.msra.mxu0 0.0
      %1626 = vmatprep.subr.mxu0 0.0
      %1627 = vmatpush1.msra.mxu0 0.0
      %1628 = vmatprep.subr.mxu0 0.0
      %1629 = vmatpush1.msra.mxu0 0.0
      %1630 = vmatprep.subr.mxu0 0.0
      %1631 = vmatpush1.msra.mxu0 0.0
      %1632 = vmatprep.subr.mxu0 0.0
      %1633 = vmatpush1.msra.mxu0 0.0
      %1634 = vmatprep.subr.mxu0 0.0
      %1635 = vmatpush1.msra.mxu0 0.0
      %1636 = vmatprep.subr.mxu0 0.0
      %1637 = vmatpush1.msra.mxu0 0.0
      %1638 = vmatprep.subr.mxu0 0.0
      %1639 = vmatpush1.msra.mxu0 0.0
      %1640 = vmatprep.subr.mxu0 0.0
      %1641 = vmatpush1.msra.mxu0 0.0
      %1642 = vmatprep.subr.mxu0 0.0
      %1643 = vmatpush1.msra.mxu0 0.0
      %1644 = vmatprep.subr.mxu0 0.0
      %1645 = vmatpush1.msra.mxu0 0.0
      %1646 = vmatprep.subr.mxu0 0.0
      %1647 = vmatpush1.msra.mxu0 0.0
      %1648 = vmatprep.subr.mxu0 0.0
      %1649 = vmatpush1.msra.mxu0 0.0
      %1650 = vmatprep.subr.mxu0 0.0
      %1651 = vmatpush1.msra.mxu0 0.0
      %1652 = vmatprep.subr.mxu0 0.0
      %1653 = vmatpush1.msra.mxu0 0.0
      %1654 = vmatprep.subr.mxu0 0.0
      %1655 = vmatpush1.msra.mxu0 0.0
      %1656 = vmatprep.subr.mxu0 0.0
      %1657 = vmatpush1.msra.mxu0 0.0
      %1658 = vmatprep.subr.mxu0 0.0
      %1659 = vmatpush1.msra.mxu0 0.0
      %1660 = vmatprep.subr.mxu0 0.0
      %1661 = vmatpush1.msra.mxu0 0.0
      %1662 = vmatprep.subr.mxu0 0.0
      %1663 = vmatpush1.msra.mxu0 0.0
      %1664 = vmatprep.subr.mxu0 0.0
      %1665 = vmatpush1.msra.mxu0 0.0
      %1666 = vmatprep.subr.mxu0 0.0
      %1667 = vmatpush1.msra.mxu0 0.0
      %1668 = vmatprep.subr.mxu0 0.0
      %1669 = vmatpush1.msra.mxu0 0.0
      %1670 = vmatprep.subr.mxu0 0.0
      %1671 = vmatpush1.msra.mxu0 0.0
      %1672 = vmatprep.mubr.f32.mxu0 0.0
      %1673 = vmatmul.mubr.f32.gmra.mrb[0].mxu0 %v1558
      %v1674 = vpop.f32.mrb[0].mxu0
      %v1675 = vadd.f32 0.0, %v1674
      %v1676 = vpop.f32.mrb[0].mxu0
      %1677 = vmatprep.mubr.f32.mxu0 0.0
      %1678 = vmatmul.mubr.f32.gmra.mrb[0].mxu0 %v1561
      %v1679 = vpop.f32.mrb[0].mxu0
      %v1680 = vadd.f32 0.0, %v1679
      %v1681 = vpop.f32.mrb[0].mxu0
      %1682 = vmatprep.mubr.f32.mxu0 0.0
      %1683 = vmatmul.mubr.f32.gmra.mrb[0].mxu0 %v1564
      %v1684 = vpop.f32.mrb[0].mxu0
      %v1685 = vadd.f32 0.0, %v1684
      %v1686 = vpop.f32.mrb[0].mxu0
      %1687 = vmatprep.mubr.f32.mxu0 0.0
      %1688 = vmatmul.mubr.f32.gmra.mrb[0].mxu0 %v1567
      %v1689 = vpop.f32.mrb[0].mxu0
      %v1690 = vadd.f32 0.0, %v1689
      %v1691 = vpop.f32.mrb[0].mxu0
      %1692 = vmatprep.mubr.f32.mxu0 0.0
      %1693 = vmatmul.mubr.f32.gmra.mrb[0].mxu0 %v1570
      %v1694 = vpop.f32.mrb[0].mxu0
      %v1695 = vadd.f32 0.0, %v1694
      %v1696 = vpop.f32.mrb[0].mxu0
      %1697 = vmatprep.mubr.f32.mxu0 0.0
      %1698 = vmatmul.mubr.f32.gmra.mrb[0].mxu0 %v1573
      %v1699 = vpop.f32.mrb[0].mxu0
      %v1700 = vadd.f32 0.0, %v1699
      %v1701 = vpop.f32.mrb[0].mxu0
      %1702 = vmatprep.mubr.f32.mxu0 0.0
      %1703 = vmatmul.mubr.f32.gmra.mrb[0].mxu0 %v1576
      %v1704 = vpop.f32.mrb[0].mxu0
      %v1705 = vadd.f32 0.0, %v1704
      %v1706 = vpop.f32.mrb[0].mxu0
      %1707 = vmatprep.mubr.f32.mxu0 0.0
      %1708 = vmatmul.mubr.f32.gmra.mrb[0].mxu0 %v1579
      %v1709 = vpop.f32.mrb[0].mxu0
      %v1710 = vadd.f32 0.0, %v1709
      %v1711 = vpop.f32.mrb[0].mxu0
      %1712 = vmatprep.mubr.f32.mxu0 0.0
      %1713 = vmatmul.mubr.f32.gmra.mrb[0].mxu0 %v1582
      %v1714 = vpop.f32.mrb[0].mxu0
      %v1715 = vadd.f32 0.0, %v1714
      %v1716 = vpop.f32.mrb[0].mxu0
      %1717 = vmatprep.mubr.f32.mxu0 0.0
      %1718 = vmatmul.mubr.f32.gmra.mrb[0].mxu0 %v1585
      %v1719 = vpop.f32.mrb[0].mxu0
      %v1720 = vadd.f32 0.0, %v1719
      %v1721 = vpop.f32.mrb[0].mxu0
      %1722 = vmatprep.mubr.f32.mxu0 0.0
      %1723 = vmatmul.mubr.f32.gmra.mrb[0].mxu0 %v1588
      %v1724 = vpop.f32.mrb[0].mxu0
      %v1725 = vadd.f32 0.0, %v1724
      %v1726 = vpop.f32.mrb[0].mxu0
      %1727 = vmatprep.mubr.f32.mxu0 0.0
      %1728 = vmatmul.mubr.f32.gmra.mrb[0].mxu0 %v1591
      %v1729 = vpop.f32.mrb[0].mxu0
      %v1730 = vadd.f32 0.0, %v1729
      %v1731 = vpop.f32.mrb[0].mxu0
      %1732 = vmatprep.mubr.f32.mxu0 0.0
      %1733 = vmatmul.mubr.f32.gmra.mrb[0].mxu0 %v1594
      %v1734 = vpop.f32.mrb[0].mxu0
      %v1735 = vadd.f32 0.0, %v1734
      %v1736 = vpop.f32.mrb[0].mxu0
      %1737 = vmatprep.mubr.f32.mxu0 0.0
      %1738 = vmatmul.mubr.f32.gmra.mrb[0].mxu0 %v1597
      %v1739 = vpop.f32.mrb[0].mxu0
      %v1740 = vadd.f32 0.0, %v1739
      %v1741 = vpop.f32.mrb[0].mxu0
      %1742 = vmatprep.mubr.f32.mxu0 0.0
      %1743 = vmatmul.mubr.f32.gmra.mrb[0].mxu0 %v1600
      %v1744 = vpop.f32.mrb[0].mxu0
      %v1745 = vadd.f32 0.0, %v1744
      %v1746 = vpop.f32.mrb[0].mxu0
      %1747 = vmatprep.mubr.f32.mxu0 0.0
      %1748 = vmatmul.mubr.f32.gmra.mrb[0].mxu0 %v1603
      %v1749 = vpop.f32.mrb[0].mxu0
      %v1750 = vadd.f32 0.0, %v1749
      %v1751 = vpop.f32.mrb[0].mxu0
      %1752 = vdwg.mxu0
      %v1753 = vadd.f32 %v1525, %v1675
      %v1754 = vadd.f32 %v1526, %v1680
      %v1755 = vadd.f32 %v1527, %v1685
      %v1756 = vadd.f32 %v1528, %v1690
      %v1757 = vadd.f32 %v1529, %v1695
      %v1758 = vadd.f32 %v1530, %v1700
      %v1759 = vadd.f32 %v1531, %v1705
      %v1760 = vadd.f32 %v1532, %v1710
      %v1761 = vadd.f32 %v1533, %v1715
      %v1762 = vadd.f32 %v1534, %v1720
      %v1763 = vadd.f32 %v1535, %v1725
      %v1764 = vadd.f32 %v1536, %v1730
      %v1765 = vadd.f32 %v1537, %v1735
      %v1766 = vadd.f32 %v1538, %v1740
      %v1767 = vadd.f32 %v1539, %v1745
      %v1768 = vadd.f32 %v1540, %v1750
      %v1769 = vrot.slane %v492, 1
      %v1770 = vsel %vm803, %v835, %v1769
      %v1771 = vrot.slane %v494, 1
      %v1772 = vsel %vm803, %v1769, %v1771
      %v1773 = vsel %vm837, %v1770, 0
      %v1775 = vsel %vm837, %v1772, 0
      %v1778 = vsel %vm870, %v733, 0
      %1780 = vmatprep.subr.mxu0 0.0
      %1781 = vmatpush1.msra.mxu0 %v1778
      %1782 = vmatprep.subr.mxu0 0.0
      %1783 = vmatpush1.msra.mxu0 0.0
      %1784 = vmatprep.subr.mxu0 0.0
      %1785 = vmatpush1.msra.mxu0 0.0
      %1786 = vmatprep.subr.mxu0 0.0
      %1787 = vmatpush1.msra.mxu0 0.0
      %1788 = vmatprep.subr.mxu0 0.0
      %1789 = vmatpush1.msra.mxu0 0.0
      %1790 = vmatprep.subr.mxu0 0.0
      %1791 = vmatpush1.msra.mxu0 0.0
      %1792 = vmatprep.subr.mxu0 0.0
      %1793 = vmatpush1.msra.mxu0 0.0
      %1794 = vmatprep.subr.mxu0 0.0
      %1795 = vmatpush1.msra.mxu0 0.0
      %1796 = vmatprep.subr.mxu0 0.0
      %1797 = vmatpush1.msra.mxu0 0.0
      %1798 = vmatprep.subr.mxu0 0.0
      %1799 = vmatpush1.msra.mxu0 0.0
      %1800 = vmatprep.subr.mxu0 0.0
      %1801 = vmatpush1.msra.mxu0 0.0
      %1802 = vmatprep.subr.mxu0 0.0
      %1803 = vmatpush1.msra.mxu0 0.0
      %1804 = vmatprep.subr.mxu0 0.0
      %1805 = vmatpush1.msra.mxu0 0.0
      %1806 = vmatprep.subr.mxu0 0.0
      %1807 = vmatpush1.msra.mxu0 0.0
      %1808 = vmatprep.subr.mxu0 0.0
      %1809 = vmatpush1.msra.mxu0 0.0
      %1810 = vmatprep.subr.mxu0 0.0
      %1811 = vmatpush1.msra.mxu0 0.0
      %1812 = vmatprep.subr.mxu0 0.0
      %1813 = vmatpush1.msra.mxu0 0.0
      %1814 = vmatprep.subr.mxu0 0.0
      %1815 = vmatpush1.msra.mxu0 0.0
      %1816 = vmatprep.subr.mxu0 0.0
      %1817 = vmatpush1.msra.mxu0 0.0
      %1818 = vmatprep.subr.mxu0 0.0
      %1819 = vmatpush1.msra.mxu0 0.0
      %1820 = vmatprep.subr.mxu0 0.0
      %1821 = vmatpush1.msra.mxu0 0.0
      %1822 = vmatprep.subr.mxu0 0.0
      %1823 = vmatpush1.msra.mxu0 0.0
      %1824 = vmatprep.subr.mxu0 0.0
      %1825 = vmatpush1.msra.mxu0 0.0
      %1826 = vmatprep.subr.mxu0 0.0
      %1827 = vmatpush1.msra.mxu0 0.0
      %1828 = vmatprep.subr.mxu0 0.0
      %1829 = vmatpush1.msra.mxu0 0.0
      %1830 = vmatprep.subr.mxu0 0.0
      %1831 = vmatpush1.msra.mxu0 0.0
      %1832 = vmatprep.subr.mxu0 0.0
      %1833 = vmatpush1.msra.mxu0 0.0
      %1834 = vmatprep.subr.mxu0 0.0
      %1835 = vmatpush1.msra.mxu0 0.0
      %1836 = vmatprep.subr.mxu0 0.0
      %1837 = vmatpush1.msra.mxu0 0.0
      %1838 = vmatprep.subr.mxu0 0.0
      %1839 = vmatpush1.msra.mxu0 0.0
      %1840 = vmatprep.subr.mxu0 0.0
      %1841 = vmatpush1.msra.mxu0 0.0
      %1842 = vmatprep.subr.mxu0 0.0
      %1843 = vmatpush1.msra.mxu0 0.0
      %1844 = vmatprep.mubr.f32.mxu0 0.0
      %1845 = vmatmul.mubr.f32.gmra.mrb[0].mxu0 %v842
      %v1846 = vpop.f32.mrb[0].mxu0
      %v1847 = vadd.f32 0.0, %v1846
      %v1848 = vpop.f32.mrb[0].mxu0
      %1849 = vmatprep.mubr.f32.mxu0 0.0
      %1850 = vmatmul.mubr.f32.gmra.mrb[0].mxu0 %v844
      %v1851 = vpop.f32.mrb[0].mxu0
      %v1852 = vadd.f32 0.0, %v1851
      %v1853 = vpop.f32.mrb[0].mxu0
      %1854 = vmatprep.mubr.f32.mxu0 0.0
      %1855 = vmatmul.mubr.f32.gmra.mrb[0].mxu0 %v846
      %v1856 = vpop.f32.mrb[0].mxu0
      %v1857 = vadd.f32 0.0, %v1856
      %v1858 = vpop.f32.mrb[0].mxu0
      %1859 = vmatprep.mubr.f32.mxu0 0.0
      %1860 = vmatmul.mubr.f32.gmra.mrb[0].mxu0 %v848
      %v1861 = vpop.f32.mrb[0].mxu0
      %v1862 = vadd.f32 0.0, %v1861
      %v1863 = vpop.f32.mrb[0].mxu0
      %1864 = vmatprep.mubr.f32.mxu0 0.0
      %1865 = vmatmul.mubr.f32.gmra.mrb[0].mxu0 %v850
      %v1866 = vpop.f32.mrb[0].mxu0
      %v1867 = vadd.f32 0.0, %v1866
      %v1868 = vpop.f32.mrb[0].mxu0
      %1869 = vmatprep.mubr.f32.mxu0 0.0
      %1870 = vmatmul.mubr.f32.gmra.mrb[0].mxu0 %v852
      %v1871 = vpop.f32.mrb[0].mxu0
      %v1872 = vadd.f32 0.0, %v1871
      %v1873 = vpop.f32.mrb[0].mxu0
      %1874 = vmatprep.mubr.f32.mxu0 0.0
      %1875 = vmatmul.mubr.f32.gmra.mrb[0].mxu0 %v854
      %v1876 = vpop.f32.mrb[0].mxu0
      %v1877 = vadd.f32 0.0, %v1876
      %v1878 = vpop.f32.mrb[0].mxu0
      %1879 = vmatprep.mubr.f32.mxu0 0.0
      %1880 = vmatmul.mubr.f32.gmra.mrb[0].mxu0 %v856
      %v1881 = vpop.f32.mrb[0].mxu0
      %v1882 = vadd.f32 0.0, %v1881
      %v1883 = vpop.f32.mrb[0].mxu0
      %1884 = vmatprep.mubr.f32.mxu0 0.0
      %1885 = vmatmul.mubr.f32.gmra.mrb[0].mxu0 %v858
      %v1886 = vpop.f32.mrb[0].mxu0
      %v1887 = vadd.f32 0.0, %v1886
      %v1888 = vpop.f32.mrb[0].mxu0
      %1889 = vmatprep.mubr.f32.mxu0 0.0
      %1890 = vmatmul.mubr.f32.gmra.mrb[0].mxu0 %v860
      %v1891 = vpop.f32.mrb[0].mxu0
      %v1892 = vadd.f32 0.0, %v1891
      %v1893 = vpop.f32.mrb[0].mxu0
      %1894 = vmatprep.mubr.f32.mxu0 0.0
      %1895 = vmatmul.mubr.f32.gmra.mrb[0].mxu0 %v862
      %v1896 = vpop.f32.mrb[0].mxu0
      %v1897 = vadd.f32 0.0, %v1896
      %v1898 = vpop.f32.mrb[0].mxu0
      %1899 = vmatprep.mubr.f32.mxu0 0.0
      %1900 = vmatmul.mubr.f32.gmra.mrb[0].mxu0 %v864
      %v1901 = vpop.f32.mrb[0].mxu0
      %v1902 = vadd.f32 0.0, %v1901
      %v1903 = vpop.f32.mrb[0].mxu0
      %1904 = vmatprep.mubr.f32.mxu0 0.0
      %1905 = vmatmul.mubr.f32.gmra.mrb[0].mxu0 %v866
      %v1906 = vpop.f32.mrb[0].mxu0
      %v1907 = vadd.f32 0.0, %v1906
      %v1908 = vpop.f32.mrb[0].mxu0
      %1909 = vmatprep.mubr.f32.mxu0 0.0
      %1910 = vmatmul.mubr.f32.gmra.mrb[0].mxu0 %v868
      %v1911 = vpop.f32.mrb[0].mxu0
      %v1912 = vadd.f32 0.0, %v1911
      %v1913 = vpop.f32.mrb[0].mxu0
      %1914 = vmatprep.mubr.f32.mxu0 0.0
      %1915 = vmatmul.mubr.f32.gmra.mrb[0].mxu0 %v1773
      %v1916 = vpop.f32.mrb[0].mxu0
      %v1917 = vadd.f32 0.0, %v1916
      %v1918 = vpop.f32.mrb[0].mxu0
      %1919 = vmatprep.mubr.f32.mxu0 0.0
      %1920 = vmatmul.mubr.f32.gmra.mrb[0].mxu0 %v1775
      %v1921 = vpop.f32.mrb[0].mxu0
      %v1922 = vadd.f32 0.0, %v1921
      %v1923 = vpop.f32.mrb[0].mxu0
      %1924 = vdwg.mxu0
      %v1925 = vadd.f32 %v1753, %v1847
      %v1926 = vadd.f32 %v1754, %v1852
      %v1927 = vadd.f32 %v1755, %v1857
      %v1928 = vadd.f32 %v1756, %v1862
      %v1929 = vadd.f32 %v1757, %v1867
      %v1930 = vadd.f32 %v1758, %v1872
      %v1931 = vadd.f32 %v1759, %v1877
      %v1932 = vadd.f32 %v1760, %v1882
      %v1933 = vadd.f32 %v1761, %v1887
      %v1934 = vadd.f32 %v1762, %v1892
      %v1935 = vadd.f32 %v1763, %v1897
      %v1936 = vadd.f32 %v1764, %v1902
      %v1937 = vadd.f32 %v1765, %v1907
      %v1938 = vadd.f32 %v1766, %v1912
      %v1939 = vadd.f32 %v1767, %v1917
      %v1940 = vadd.f32 %v1768, %v1922
      %v1941 = vrot.slane %v492, 2
      %v1942 = vsel %vm1263, %v1295, %v1941
      %v1943 = vrot.slane %v494, 2
      %v1944 = vsel %vm1263, %v1941, %v1943
      %v1947 = vsel %vm1247, %v1270, 0.0
      %v1948 = vsel %vm1248, %v1272, 0.0
      %v1949 = vsel %vm1249, %v1274, 0.0
      %v1950 = vsel %vm1250, %v1276, 0.0
      %v1951 = vsel %vm1251, %v1278, 0.0
      %v1952 = vsel %vm1252, %v1280, 0.0
      %v1953 = vsel %vm1253, %v1282, 0.0
      %v1954 = vsel %vm1254, %v1284, 0.0
      %v1955 = vsel %vm1255, %v1286, 0.0
      %v1956 = vsel %vm1256, %v1288, 0.0
      %v1957 = vsel %vm1257, %v1290, 0.0
      %v1958 = vsel %vm1258, %v1292, 0.0
      %v1959 = vsel %vm1259, %v1294, 0.0
      %v1960 = vsel %vm1260, %v1296, 0.0
      %v1961 = vsel %vm1261, %v1942, 0.0
      %v1962 = vsel %vm1262, %v1944, 0.0
      %v1964 = vsel %vm837, %v1947, 0
      %v1967 = vsel %vm837, %v1948, 0
      %v1970 = vsel %vm837, %v1949, 0
      %v1973 = vsel %vm837, %v1950, 0
      %v1976 = vsel %vm837, %v1951, 0
      %v1979 = vsel %vm837, %v1952, 0
      %v1982 = vsel %vm837, %v1953, 0
      %v1985 = vsel %vm837, %v1954, 0
      %v1988 = vsel %vm837, %v1955, 0
      %v1991 = vsel %vm837, %v1956, 0
      %v1994 = vsel %vm837, %v1957, 0
      %v1997 = vsel %vm837, %v1958, 0
      %v2000 = vsel %vm837, %v1959, 0
      %v2003 = vsel %vm837, %v1960, 0
      %v2006 = vsel %vm837, %v1961, 0
      %v2009 = vsel %vm837, %v1962, 0
      %v2012 = vsel %vm870, %v734, 0
      %2014 = vmatprep.subr.mxu0 0.0
      %2015 = vmatpush1.msra.mxu0 %v2012
      %2016 = vmatprep.subr.mxu0 0.0
      %2017 = vmatpush1.msra.mxu0 0.0
      %2018 = vmatprep.subr.mxu0 0.0
      %2019 = vmatpush1.msra.mxu0 0.0
      %2020 = vmatprep.subr.mxu0 0.0
      %2021 = vmatpush1.msra.mxu0 0.0
      %2022 = vmatprep.subr.mxu0 0.0
      %2023 = vmatpush1.msra.mxu0 0.0
      %2024 = vmatprep.subr.mxu0 0.0
      %2025 = vmatpush1.msra.mxu0 0.0
      %2026 = vmatprep.subr.mxu0 0.0
      %2027 = vmatpush1.msra.mxu0 0.0
      %2028 = vmatprep.subr.mxu0 0.0
      %2029 = vmatpush1.msra.mxu0 0.0
      %2030 = vmatprep.subr.mxu0 0.0
      %2031 = vmatpush1.msra.mxu0 0.0
      %2032 = vmatprep.subr.mxu0 0.0
      %2033 = vmatpush1.msra.mxu0 0.0
      %2034 = vmatprep.subr.mxu0 0.0
      %2035 = vmatpush1.msra.mxu0 0.0
      %2036 = vmatprep.subr.mxu0 0.0
      %2037 = vmatpush1.msra.mxu0 0.0
      %2038 = vmatprep.subr.mxu0 0.0
      %2039 = vmatpush1.msra.mxu0 0.0
      %2040 = vmatprep.subr.mxu0 0.0
      %2041 = vmatpush1.msra.mxu0 0.0
      %2042 = vmatprep.subr.mxu0 0.0
      %2043 = vmatpush1.msra.mxu0 0.0
      %2044 = vmatprep.subr.mxu0 0.0
      %2045 = vmatpush1.msra.mxu0 0.0
      %2046 = vmatprep.subr.mxu0 0.0
      %2047 = vmatpush1.msra.mxu0 0.0
      %2048 = vmatprep.subr.mxu0 0.0
      %2049 = vmatpush1.msra.mxu0 0.0
      %2050 = vmatprep.subr.mxu0 0.0
      %2051 = vmatpush1.msra.mxu0 0.0
      %2052 = vmatprep.subr.mxu0 0.0
      %2053 = vmatpush1.msra.mxu0 0.0
      %2054 = vmatprep.subr.mxu0 0.0
      %2055 = vmatpush1.msra.mxu0 0.0
      %2056 = vmatprep.subr.mxu0 0.0
      %2057 = vmatpush1.msra.mxu0 0.0
      %2058 = vmatprep.subr.mxu0 0.0
      %2059 = vmatpush1.msra.mxu0 0.0
      %2060 = vmatprep.subr.mxu0 0.0
      %2061 = vmatpush1.msra.mxu0 0.0
      %2062 = vmatprep.subr.mxu0 0.0
      %2063 = vmatpush1.msra.mxu0 0.0
      %2064 = vmatprep.subr.mxu0 0.0
      %2065 = vmatpush1.msra.mxu0 0.0
      %2066 = vmatprep.subr.mxu0 0.0
      %2067 = vmatpush1.msra.mxu0 0.0
      %2068 = vmatprep.subr.mxu0 0.0
      %2069 = vmatpush1.msra.mxu0 0.0
      %2070 = vmatprep.subr.mxu0 0.0
      %2071 = vmatpush1.msra.mxu0 0.0
      %2072 = vmatprep.subr.mxu0 0.0
      %2073 = vmatpush1.msra.mxu0 0.0
      %2074 = vmatprep.subr.mxu0 0.0
      %2075 = vmatpush1.msra.mxu0 0.0
      %2076 = vmatprep.subr.mxu0 0.0
      %2077 = vmatpush1.msra.mxu0 0.0
      %2078 = vmatprep.mubr.f32.mxu0 0.0
      %2079 = vmatmul.mubr.f32.gmra.mrb[0].mxu0 %v1964
      %v2080 = vpop.f32.mrb[0].mxu0
      %v2081 = vadd.f32 0.0, %v2080
      %v2082 = vpop.f32.mrb[0].mxu0
      %2083 = vmatprep.mubr.f32.mxu0 0.0
      %2084 = vmatmul.mubr.f32.gmra.mrb[0].mxu0 %v1967
      %v2085 = vpop.f32.mrb[0].mxu0
      %v2086 = vadd.f32 0.0, %v2085
      %v2087 = vpop.f32.mrb[0].mxu0
      %2088 = vmatprep.mubr.f32.mxu0 0.0
      %2089 = vmatmul.mubr.f32.gmra.mrb[0].mxu0 %v1970
      %v2090 = vpop.f32.mrb[0].mxu0
      %v2091 = vadd.f32 0.0, %v2090
      %v2092 = vpop.f32.mrb[0].mxu0
      %2093 = vmatprep.mubr.f32.mxu0 0.0
      %2094 = vmatmul.mubr.f32.gmra.mrb[0].mxu0 %v1973
      %v2095 = vpop.f32.mrb[0].mxu0
      %v2096 = vadd.f32 0.0, %v2095
      %v2097 = vpop.f32.mrb[0].mxu0
      %2098 = vmatprep.mubr.f32.mxu0 0.0
      %2099 = vmatmul.mubr.f32.gmra.mrb[0].mxu0 %v1976
      %v2100 = vpop.f32.mrb[0].mxu0
      %v2101 = vadd.f32 0.0, %v2100
      %v2102 = vpop.f32.mrb[0].mxu0
      %2103 = vmatprep.mubr.f32.mxu0 0.0
      %2104 = vmatmul.mubr.f32.gmra.mrb[0].mxu0 %v1979
      %v2105 = vpop.f32.mrb[0].mxu0
      %v2106 = vadd.f32 0.0, %v2105
      %v2107 = vpop.f32.mrb[0].mxu0
      %2108 = vmatprep.mubr.f32.mxu0 0.0
      %2109 = vmatmul.mubr.f32.gmra.mrb[0].mxu0 %v1982
      %v2110 = vpop.f32.mrb[0].mxu0
      %v2111 = vadd.f32 0.0, %v2110
      %v2112 = vpop.f32.mrb[0].mxu0
      %2113 = vmatprep.mubr.f32.mxu0 0.0
      %2114 = vmatmul.mubr.f32.gmra.mrb[0].mxu0 %v1985
      %v2115 = vpop.f32.mrb[0].mxu0
      %v2116 = vadd.f32 0.0, %v2115
      %v2117 = vpop.f32.mrb[0].mxu0
      %2118 = vmatprep.mubr.f32.mxu0 0.0
      %2119 = vmatmul.mubr.f32.gmra.mrb[0].mxu0 %v1988
      %v2120 = vpop.f32.mrb[0].mxu0
      %v2121 = vadd.f32 0.0, %v2120
      %v2122 = vpop.f32.mrb[0].mxu0
      %2123 = vmatprep.mubr.f32.mxu0 0.0
      %2124 = vmatmul.mubr.f32.gmra.mrb[0].mxu0 %v1991
      %v2125 = vpop.f32.mrb[0].mxu0
      %v2126 = vadd.f32 0.0, %v2125
      %v2127 = vpop.f32.mrb[0].mxu0
      %2128 = vmatprep.mubr.f32.mxu0 0.0
      %2129 = vmatmul.mubr.f32.gmra.mrb[0].mxu0 %v1994
      %v2130 = vpop.f32.mrb[0].mxu0
      %v2131 = vadd.f32 0.0, %v2130
      %v2132 = vpop.f32.mrb[0].mxu0
      %2133 = vmatprep.mubr.f32.mxu0 0.0
      %2134 = vmatmul.mubr.f32.gmra.mrb[0].mxu0 %v1997
      %v2135 = vpop.f32.mrb[0].mxu0
      %v2136 = vadd.f32 0.0, %v2135
      %v2137 = vpop.f32.mrb[0].mxu0
      %2138 = vmatprep.mubr.f32.mxu0 0.0
      %2139 = vmatmul.mubr.f32.gmra.mrb[0].mxu0 %v2000
      %v2140 = vpop.f32.mrb[0].mxu0
      %v2141 = vadd.f32 0.0, %v2140
      %v2142 = vpop.f32.mrb[0].mxu0
      %2143 = vmatprep.mubr.f32.mxu0 0.0
      %2144 = vmatmul.mubr.f32.gmra.mrb[0].mxu0 %v2003
      %v2145 = vpop.f32.mrb[0].mxu0
      %v2146 = vadd.f32 0.0, %v2145
      %v2147 = vpop.f32.mrb[0].mxu0
      %2148 = vmatprep.mubr.f32.mxu0 0.0
      %2149 = vmatmul.mubr.f32.gmra.mrb[0].mxu0 %v2006
      %v2150 = vpop.f32.mrb[0].mxu0
      %v2151 = vadd.f32 0.0, %v2150
      %v2152 = vpop.f32.mrb[0].mxu0
      %2153 = vmatprep.mubr.f32.mxu0 0.0
      %2154 = vmatmul.mubr.f32.gmra.mrb[0].mxu0 %v2009
      %v2155 = vpop.f32.mrb[0].mxu0
      %v2156 = vadd.f32 0.0, %v2155
      %v2157 = vpop.f32.mrb[0].mxu0
      %2158 = vdwg.mxu0
      %v2159 = vadd.f32 %v1925, %v2081
      %v2160 = vadd.f32 %v1926, %v2086
      %v2161 = vadd.f32 %v1927, %v2091
      %v2162 = vadd.f32 %v1928, %v2096
      %v2163 = vadd.f32 %v1929, %v2101
      %v2164 = vadd.f32 %v1930, %v2106
      %v2165 = vadd.f32 %v1931, %v2111
      %v2166 = vadd.f32 %v1932, %v2116
      %v2167 = vadd.f32 %v1933, %v2121
      %v2168 = vadd.f32 %v1934, %v2126
      %v2169 = vadd.f32 %v1935, %v2131
      %v2170 = vadd.f32 %v1936, %v2136
      %v2171 = vadd.f32 %v1937, %v2141
      %v2172 = vadd.f32 %v1938, %v2146
      %v2173 = vadd.f32 %v1939, %v2151
      %v2174 = vadd.f32 %v1940, %v2156
      %v2175 = vsel %vm770, %v466, 0.0
      %v2176 = vsel %vm771, %v468, 0.0
      %v2177 = vsel %vm772, %v470, 0.0
      %v2178 = vsel %vm773, %v472, 0.0
      %v2179 = vsel %vm774, %v474, 0.0
      %v2180 = vsel %vm775, %v476, 0.0
      %v2181 = vsel %vm776, %v478, 0.0
      %v2182 = vsel %vm777, %v480, 0.0
      %v2183 = vsel %vm778, %v482, 0.0
      %v2184 = vsel %vm779, %v484, 0.0
      %v2185 = vsel %vm780, %v486, 0.0
      %v2186 = vsel %vm781, %v488, 0.0
      %v2187 = vsel %vm782, %v490, 0.0
      %v2188 = vsel %vm783, %v492, 0.0
      %v2189 = vsel %vm784, %v494, 0.0
      %v2190 = vsel %vm785, %v496, 0.0
      %v2192 = vsel %vm837, %v2175, 0
      %v2195 = vsel %vm837, %v2176, 0
      %v2198 = vsel %vm837, %v2177, 0
      %v2201 = vsel %vm837, %v2178, 0
      %v2204 = vsel %vm837, %v2179, 0
      %v2207 = vsel %vm837, %v2180, 0
      %v2210 = vsel %vm837, %v2181, 0
      %v2213 = vsel %vm837, %v2182, 0
      %v2216 = vsel %vm837, %v2183, 0
      %v2219 = vsel %vm837, %v2184, 0
      %v2222 = vsel %vm837, %v2185, 0
      %v2225 = vsel %vm837, %v2186, 0
      %v2228 = vsel %vm837, %v2187, 0
      %v2231 = vsel %vm837, %v2188, 0
      %v2234 = vsel %vm837, %v2189, 0
      %v2237 = vsel %vm837, %v2190, 0
      %v2240 = vsel %vm870, %v735, 0
      %2242 = vmatprep.subr.mxu0 0.0
      %2243 = vmatpush1.msra.mxu0 %v2240
      %2244 = vmatprep.subr.mxu0 0.0
      %2245 = vmatpush1.msra.mxu0 0.0
      %2246 = vmatprep.subr.mxu0 0.0
      %2247 = vmatpush1.msra.mxu0 0.0
      %2248 = vmatprep.subr.mxu0 0.0
      %2249 = vmatpush1.msra.mxu0 0.0
      %2250 = vmatprep.subr.mxu0 0.0
      %2251 = vmatpush1.msra.mxu0 0.0
      %2252 = vmatprep.subr.mxu0 0.0
      %2253 = vmatpush1.msra.mxu0 0.0
      %2254 = vmatprep.subr.mxu0 0.0
      %2255 = vmatpush1.msra.mxu0 0.0
      %2256 = vmatprep.subr.mxu0 0.0
      %2257 = vmatpush1.msra.mxu0 0.0
      %2258 = vmatprep.subr.mxu0 0.0
      %2259 = vmatpush1.msra.mxu0 0.0
      %2260 = vmatprep.subr.mxu0 0.0
      %2261 = vmatpush1.msra.mxu0 0.0
      %2262 = vmatprep.subr.mxu0 0.0
      %2263 = vmatpush1.msra.mxu0 0.0
      %2264 = vmatprep.subr.mxu0 0.0
      %2265 = vmatpush1.msra.mxu0 0.0
      %2266 = vmatprep.subr.mxu0 0.0
      %2267 = vmatpush1.msra.mxu0 0.0
      %2268 = vmatprep.subr.mxu0 0.0
      %2269 = vmatpush1.msra.mxu0 0.0
      %2270 = vmatprep.subr.mxu0 0.0
      %2271 = vmatpush1.msra.mxu0 0.0
      %2272 = vmatprep.subr.mxu0 0.0
      %2273 = vmatpush1.msra.mxu0 0.0
      %2274 = vmatprep.subr.mxu0 0.0
      %2275 = vmatpush1.msra.mxu0 0.0
      %2276 = vmatprep.subr.mxu0 0.0
      %2277 = vmatpush1.msra.mxu0 0.0
      %2278 = vmatprep.subr.mxu0 0.0
      %2279 = vmatpush1.msra.mxu0 0.0
      %2280 = vmatprep.subr.mxu0 0.0
      %2281 = vmatpush1.msra.mxu0 0.0
      %2282 = vmatprep.subr.mxu0 0.0
      %2283 = vmatpush1.msra.mxu0 0.0
      %2284 = vmatprep.subr.mxu0 0.0
      %2285 = vmatpush1.msra.mxu0 0.0
      %2286 = vmatprep.subr.mxu0 0.0
      %2287 = vmatpush1.msra.mxu0 0.0
      %2288 = vmatprep.subr.mxu0 0.0
      %2289 = vmatpush1.msra.mxu0 0.0
      %2290 = vmatprep.subr.mxu0 0.0
      %2291 = vmatpush1.msra.mxu0 0.0
      %2292 = vmatprep.subr.mxu0 0.0
      %2293 = vmatpush1.msra.mxu0 0.0
      %2294 = vmatprep.subr.mxu0 0.0
      %2295 = vmatpush1.msra.mxu0 0.0
      %2296 = vmatprep.subr.mxu0 0.0
      %2297 = vmatpush1.msra.mxu0 0.0
      %2298 = vmatprep.subr.mxu0 0.0
      %2299 = vmatpush1.msra.mxu0 0.0
      %2300 = vmatprep.subr.mxu0 0.0
      %2301 = vmatpush1.msra.mxu0 0.0
      %2302 = vmatprep.subr.mxu0 0.0
      %2303 = vmatpush1.msra.mxu0 0.0
      %2304 = vmatprep.subr.mxu0 0.0
      %2305 = vmatpush1.msra.mxu0 0.0
      %2306 = vmatprep.mubr.f32.mxu0 0.0
      %2307 = vmatmul.mubr.f32.gmra.mrb[0].mxu0 %v2192
      %v2308 = vpop.f32.mrb[0].mxu0
      %v2309 = vadd.f32 0.0, %v2308
      %v2310 = vpop.f32.mrb[0].mxu0
      %2311 = vmatprep.mubr.f32.mxu0 0.0
      %2312 = vmatmul.mubr.f32.gmra.mrb[0].mxu0 %v2195
      %v2313 = vpop.f32.mrb[0].mxu0
      %v2314 = vadd.f32 0.0, %v2313
      %v2315 = vpop.f32.mrb[0].mxu0
      %2316 = vmatprep.mubr.f32.mxu0 0.0
      %2317 = vmatmul.mubr.f32.gmra.mrb[0].mxu0 %v2198
      %v2318 = vpop.f32.mrb[0].mxu0
      %v2319 = vadd.f32 0.0, %v2318
      %v2320 = vpop.f32.mrb[0].mxu0
      %2321 = vmatprep.mubr.f32.mxu0 0.0
      %2322 = vmatmul.mubr.f32.gmra.mrb[0].mxu0 %v2201
      %v2323 = vpop.f32.mrb[0].mxu0
      %v2324 = vadd.f32 0.0, %v2323
      %v2325 = vpop.f32.mrb[0].mxu0
      %2326 = vmatprep.mubr.f32.mxu0 0.0
      %2327 = vmatmul.mubr.f32.gmra.mrb[0].mxu0 %v2204
      %v2328 = vpop.f32.mrb[0].mxu0
      %v2329 = vadd.f32 0.0, %v2328
      %v2330 = vpop.f32.mrb[0].mxu0
      %2331 = vmatprep.mubr.f32.mxu0 0.0
      %2332 = vmatmul.mubr.f32.gmra.mrb[0].mxu0 %v2207
      %v2333 = vpop.f32.mrb[0].mxu0
      %v2334 = vadd.f32 0.0, %v2333
      %v2335 = vpop.f32.mrb[0].mxu0
      %2336 = vmatprep.mubr.f32.mxu0 0.0
      %2337 = vmatmul.mubr.f32.gmra.mrb[0].mxu0 %v2210
      %v2338 = vpop.f32.mrb[0].mxu0
      %v2339 = vadd.f32 0.0, %v2338
      %v2340 = vpop.f32.mrb[0].mxu0
      %2341 = vmatprep.mubr.f32.mxu0 0.0
      %2342 = vmatmul.mubr.f32.gmra.mrb[0].mxu0 %v2213
      %v2343 = vpop.f32.mrb[0].mxu0
      %v2344 = vadd.f32 0.0, %v2343
      %v2345 = vpop.f32.mrb[0].mxu0
      %2346 = vmatprep.mubr.f32.mxu0 0.0
      %2347 = vmatmul.mubr.f32.gmra.mrb[0].mxu0 %v2216
      %v2348 = vpop.f32.mrb[0].mxu0
      %v2349 = vadd.f32 0.0, %v2348
      %v2350 = vpop.f32.mrb[0].mxu0
      %2351 = vmatprep.mubr.f32.mxu0 0.0
      %2352 = vmatmul.mubr.f32.gmra.mrb[0].mxu0 %v2219
      %v2353 = vpop.f32.mrb[0].mxu0
      %v2354 = vadd.f32 0.0, %v2353
      %v2355 = vpop.f32.mrb[0].mxu0
      %2356 = vmatprep.mubr.f32.mxu0 0.0
      %2357 = vmatmul.mubr.f32.gmra.mrb[0].mxu0 %v2222
      %v2358 = vpop.f32.mrb[0].mxu0
      %v2359 = vadd.f32 0.0, %v2358
      %v2360 = vpop.f32.mrb[0].mxu0
      %2361 = vmatprep.mubr.f32.mxu0 0.0
      %2362 = vmatmul.mubr.f32.gmra.mrb[0].mxu0 %v2225
      %v2363 = vpop.f32.mrb[0].mxu0
      %v2364 = vadd.f32 0.0, %v2363
      %v2365 = vpop.f32.mrb[0].mxu0
      %2366 = vmatprep.mubr.f32.mxu0 0.0
      %2367 = vmatmul.mubr.f32.gmra.mrb[0].mxu0 %v2228
      %v2368 = vpop.f32.mrb[0].mxu0
      %v2369 = vadd.f32 0.0, %v2368
      %v2370 = vpop.f32.mrb[0].mxu0
      %2371 = vmatprep.mubr.f32.mxu0 0.0
      %2372 = vmatmul.mubr.f32.gmra.mrb[0].mxu0 %v2231
      %v2373 = vpop.f32.mrb[0].mxu0
      %v2374 = vadd.f32 0.0, %v2373
      %v2375 = vpop.f32.mrb[0].mxu0
      %2376 = vmatprep.mubr.f32.mxu0 0.0
      %2377 = vmatmul.mubr.f32.gmra.mrb[0].mxu0 %v2234
      %v2378 = vpop.f32.mrb[0].mxu0
      %v2379 = vadd.f32 0.0, %v2378
      %v2380 = vpop.f32.mrb[0].mxu0
      %2381 = vmatprep.mubr.f32.mxu0 0.0
      %2382 = vmatmul.mubr.f32.gmra.mrb[0].mxu0 %v2237
      %v2383 = vpop.f32.mrb[0].mxu0
      %v2384 = vadd.f32 0.0, %v2383
      %v2385 = vpop.f32.mrb[0].mxu0
      %2386 = vdwg.mxu0
      %v2387 = vadd.f32 %v2159, %v2309
      %v2388 = vadd.f32 %v2160, %v2314
      %v2389 = vadd.f32 %v2161, %v2319
      %v2390 = vadd.f32 %v2162, %v2324
      %v2391 = vadd.f32 %v2163, %v2329
      %v2392 = vadd.f32 %v2164, %v2334
      %v2393 = vadd.f32 %v2165, %v2339
      %v2394 = vadd.f32 %v2166, %v2344
      %v2395 = vadd.f32 %v2167, %v2349
      %v2396 = vadd.f32 %v2168, %v2354
      %v2397 = vadd.f32 %v2169, %v2359
      %v2398 = vadd.f32 %v2170, %v2364
      %v2399 = vadd.f32 %v2171, %v2369
      %v2400 = vadd.f32 %v2172, %v2374
      %v2401 = vadd.f32 %v2173, %v2379
      %v2402 = vadd.f32 %v2174, %v2384
      %v2404 = vrot.slane %v496, 1
      %v2405 = vsel %vm803, %v1771, %v2404
      %v2406 = vrot.slane %v519, 1
      %v2407 = vsel %vm803, %v2404, %v2406
      %v2408 = vsel %vm837, %v2405, 0
      %v2410 = vsel %vm837, %v2407, 0
      %v2413 = vsel %vm870, %v736, 0
      %2415 = vmatprep.subr.mxu0 0.0
      %2416 = vmatpush1.msra.mxu0 %v2413
      %2417 = vmatprep.subr.mxu0 0.0
      %2418 = vmatpush1.msra.mxu0 0.0
      %2419 = vmatprep.subr.mxu0 0.0
      %2420 = vmatpush1.msra.mxu0 0.0
      %2421 = vmatprep.subr.mxu0 0.0
      %2422 = vmatpush1.msra.mxu0 0.0
      %2423 = vmatprep.subr.mxu0 0.0
      %2424 = vmatpush1.msra.mxu0 0.0
      %2425 = vmatprep.subr.mxu0 0.0
      %2426 = vmatpush1.msra.mxu0 0.0
      %2427 = vmatprep.subr.mxu0 0.0
      %2428 = vmatpush1.msra.mxu0 0.0
      %2429 = vmatprep.subr.mxu0 0.0
      %2430 = vmatpush1.msra.mxu0 0.0
      %2431 = vmatprep.subr.mxu0 0.0
      %2432 = vmatpush1.msra.mxu0 0.0
      %2433 = vmatprep.subr.mxu0 0.0
      %2434 = vmatpush1.msra.mxu0 0.0
      %2435 = vmatprep.subr.mxu0 0.0
      %2436 = vmatpush1.msra.mxu0 0.0
      %2437 = vmatprep.subr.mxu0 0.0
      %2438 = vmatpush1.msra.mxu0 0.0
      %2439 = vmatprep.subr.mxu0 0.0
      %2440 = vmatpush1.msra.mxu0 0.0
      %2441 = vmatprep.subr.mxu0 0.0
      %2442 = vmatpush1.msra.mxu0 0.0
      %2443 = vmatprep.subr.mxu0 0.0
      %2444 = vmatpush1.msra.mxu0 0.0
      %2445 = vmatprep.subr.mxu0 0.0
      %2446 = vmatpush1.msra.mxu0 0.0
      %2447 = vmatprep.subr.mxu0 0.0
      %2448 = vmatpush1.msra.mxu0 0.0
      %2449 = vmatprep.subr.mxu0 0.0
      %2450 = vmatpush1.msra.mxu0 0.0
      %2451 = vmatprep.subr.mxu0 0.0
      %2452 = vmatpush1.msra.mxu0 0.0
      %2453 = vmatprep.subr.mxu0 0.0
      %2454 = vmatpush1.msra.mxu0 0.0
      %2455 = vmatprep.subr.mxu0 0.0
      %2456 = vmatpush1.msra.mxu0 0.0
      %2457 = vmatprep.subr.mxu0 0.0
      %2458 = vmatpush1.msra.mxu0 0.0
      %2459 = vmatprep.subr.mxu0 0.0
      %2460 = vmatpush1.msra.mxu0 0.0
      %2461 = vmatprep.subr.mxu0 0.0
      %2462 = vmatpush1.msra.mxu0 0.0
      %2463 = vmatprep.subr.mxu0 0.0
      %2464 = vmatpush1.msra.mxu0 0.0
      %2465 = vmatprep.subr.mxu0 0.0
      %2466 = vmatpush1.msra.mxu0 0.0
      %2467 = vmatprep.subr.mxu0 0.0
      %2468 = vmatpush1.msra.mxu0 0.0
      %2469 = vmatprep.subr.mxu0 0.0
      %2470 = vmatpush1.msra.mxu0 0.0
      %2471 = vmatprep.subr.mxu0 0.0
      %2472 = vmatpush1.msra.mxu0 0.0
      %2473 = vmatprep.subr.mxu0 0.0
      %2474 = vmatpush1.msra.mxu0 0.0
      %2475 = vmatprep.subr.mxu0 0.0
      %2476 = vmatpush1.msra.mxu0 0.0
      %2477 = vmatprep.subr.mxu0 0.0
      %2478 = vmatpush1.msra.mxu0 0.0
      %2479 = vmatprep.mubr.f32.mxu0 0.0
      %2480 = vmatmul.mubr.f32.gmra.mrb[0].mxu0 %v846
      %v2481 = vpop.f32.mrb[0].mxu0
      %v2482 = vadd.f32 0.0, %v2481
      %v2483 = vpop.f32.mrb[0].mxu0
      %2484 = vmatprep.mubr.f32.mxu0 0.0
      %2485 = vmatmul.mubr.f32.gmra.mrb[0].mxu0 %v848
      %v2486 = vpop.f32.mrb[0].mxu0
      %v2487 = vadd.f32 0.0, %v2486
      %v2488 = vpop.f32.mrb[0].mxu0
      %2489 = vmatprep.mubr.f32.mxu0 0.0
      %2490 = vmatmul.mubr.f32.gmra.mrb[0].mxu0 %v850
      %v2491 = vpop.f32.mrb[0].mxu0
      %v2492 = vadd.f32 0.0, %v2491
      %v2493 = vpop.f32.mrb[0].mxu0
      %2494 = vmatprep.mubr.f32.mxu0 0.0
      %2495 = vmatmul.mubr.f32.gmra.mrb[0].mxu0 %v852
      %v2496 = vpop.f32.mrb[0].mxu0
      %v2497 = vadd.f32 0.0, %v2496
      %v2498 = vpop.f32.mrb[0].mxu0
      %2499 = vmatprep.mubr.f32.mxu0 0.0
      %2500 = vmatmul.mubr.f32.gmra.mrb[0].mxu0 %v854
      %v2501 = vpop.f32.mrb[0].mxu0
      %v2502 = vadd.f32 0.0, %v2501
      %v2503 = vpop.f32.mrb[0].mxu0
      %2504 = vmatprep.mubr.f32.mxu0 0.0
      %2505 = vmatmul.mubr.f32.gmra.mrb[0].mxu0 %v856
      %v2506 = vpop.f32.mrb[0].mxu0
      %v2507 = vadd.f32 0.0, %v2506
      %v2508 = vpop.f32.mrb[0].mxu0
      %2509 = vmatprep.mubr.f32.mxu0 0.0
      %2510 = vmatmul.mubr.f32.gmra.mrb[0].mxu0 %v858
      %v2511 = vpop.f32.mrb[0].mxu0
      %v2512 = vadd.f32 0.0, %v2511
      %v2513 = vpop.f32.mrb[0].mxu0
      %2514 = vmatprep.mubr.f32.mxu0 0.0
      %2515 = vmatmul.mubr.f32.gmra.mrb[0].mxu0 %v860
      %v2516 = vpop.f32.mrb[0].mxu0
      %v2517 = vadd.f32 0.0, %v2516
      %v2518 = vpop.f32.mrb[0].mxu0
      %2519 = vmatprep.mubr.f32.mxu0 0.0
      %2520 = vmatmul.mubr.f32.gmra.mrb[0].mxu0 %v862
      %v2521 = vpop.f32.mrb[0].mxu0
      %v2522 = vadd.f32 0.0, %v2521
      %v2523 = vpop.f32.mrb[0].mxu0
      %2524 = vmatprep.mubr.f32.mxu0 0.0
      %2525 = vmatmul.mubr.f32.gmra.mrb[0].mxu0 %v864
      %v2526 = vpop.f32.mrb[0].mxu0
      %v2527 = vadd.f32 0.0, %v2526
      %v2528 = vpop.f32.mrb[0].mxu0
      %2529 = vmatprep.mubr.f32.mxu0 0.0
      %2530 = vmatmul.mubr.f32.gmra.mrb[0].mxu0 %v866
      %v2531 = vpop.f32.mrb[0].mxu0
      %v2532 = vadd.f32 0.0, %v2531
      %v2533 = vpop.f32.mrb[0].mxu0
      %2534 = vmatprep.mubr.f32.mxu0 0.0
      %2535 = vmatmul.mubr.f32.gmra.mrb[0].mxu0 %v868
      %v2536 = vpop.f32.mrb[0].mxu0
      %v2537 = vadd.f32 0.0, %v2536
      %v2538 = vpop.f32.mrb[0].mxu0
      %2539 = vmatprep.mubr.f32.mxu0 0.0
      %2540 = vmatmul.mubr.f32.gmra.mrb[0].mxu0 %v1773
      %v2541 = vpop.f32.mrb[0].mxu0
      %v2542 = vadd.f32 0.0, %v2541
      %v2543 = vpop.f32.mrb[0].mxu0
      %2544 = vmatprep.mubr.f32.mxu0 0.0
      %2545 = vmatmul.mubr.f32.gmra.mrb[0].mxu0 %v1775
      %v2546 = vpop.f32.mrb[0].mxu0
      %v2547 = vadd.f32 0.0, %v2546
      %v2548 = vpop.f32.mrb[0].mxu0
      %2549 = vmatprep.mubr.f32.mxu0 0.0
      %2550 = vmatmul.mubr.f32.gmra.mrb[0].mxu0 %v2408
      %v2551 = vpop.f32.mrb[0].mxu0
      %v2552 = vadd.f32 0.0, %v2551
      %v2553 = vpop.f32.mrb[0].mxu0
      %2554 = vmatprep.mubr.f32.mxu0 0.0
      %2555 = vmatmul.mubr.f32.gmra.mrb[0].mxu0 %v2410
      %v2556 = vpop.f32.mrb[0].mxu0
      %v2557 = vadd.f32 0.0, %v2556
      %v2558 = vpop.f32.mrb[0].mxu0
      %2559 = vdwg.mxu0
      %v2560 = vadd.f32 %v2387, %v2482
      %v2561 = vadd.f32 %v2388, %v2487
      %v2562 = vadd.f32 %v2389, %v2492
      %v2563 = vadd.f32 %v2390, %v2497
      %v2564 = vadd.f32 %v2391, %v2502
      %v2565 = vadd.f32 %v2392, %v2507
      %v2566 = vadd.f32 %v2393, %v2512
      %v2567 = vadd.f32 %v2394, %v2517
      %v2568 = vadd.f32 %v2395, %v2522
      %v2569 = vadd.f32 %v2396, %v2527
      %v2570 = vadd.f32 %v2397, %v2532
      %v2571 = vadd.f32 %v2398, %v2537
      %v2572 = vadd.f32 %v2399, %v2542
      %v2573 = vadd.f32 %v2400, %v2547
      %v2574 = vadd.f32 %v2401, %v2552
      %v2575 = vadd.f32 %v2402, %v2557
      %v2576 = vrot.slane %v496, 2
      %v2577 = vsel %vm1263, %v1943, %v2576
      %v2578 = vrot.slane %v519, 2
      %v2579 = vsel %vm1263, %v2576, %v2578
      %v2582 = vsel %vm1247, %v1274, 0.0
      %v2583 = vsel %vm1248, %v1276, 0.0
      %v2584 = vsel %vm1249, %v1278, 0.0
      %v2585 = vsel %vm1250, %v1280, 0.0
      %v2586 = vsel %vm1251, %v1282, 0.0
      %v2587 = vsel %vm1252, %v1284, 0.0
      %v2588 = vsel %vm1253, %v1286, 0.0
      %v2589 = vsel %vm1254, %v1288, 0.0
      %v2590 = vsel %vm1255, %v1290, 0.0
      %v2591 = vsel %vm1256, %v1292, 0.0
      %v2592 = vsel %vm1257, %v1294, 0.0
      %v2593 = vsel %vm1258, %v1296, 0.0
      %v2594 = vsel %vm1259, %v1942, 0.0
      %v2595 = vsel %vm1260, %v1944, 0.0
      %v2596 = vsel %vm1261, %v2577, 0.0
      %v2597 = vsel %vm1262, %v2579, 0.0
      %v2599 = vsel %vm837, %v2582, 0
      %v2602 = vsel %vm837, %v2583, 0
      %v2605 = vsel %vm837, %v2584, 0
      %v2608 = vsel %vm837, %v2585, 0
      %v2611 = vsel %vm837, %v2586, 0
      %v2614 = vsel %vm837, %v2587, 0
      %v2617 = vsel %vm837, %v2588, 0
      %v2620 = vsel %vm837, %v2589, 0
      %v2623 = vsel %vm837, %v2590, 0
      %v2626 = vsel %vm837, %v2591, 0
      %v2629 = vsel %vm837, %v2592, 0
      %v2632 = vsel %vm837, %v2593, 0
      %v2635 = vsel %vm837, %v2594, 0
      %v2638 = vsel %vm837, %v2595, 0
      %v2641 = vsel %vm837, %v2596, 0
      %v2644 = vsel %vm837, %v2597, 0
      %v2647 = vsel %vm870, %v737, 0
      %2649 = vmatprep.subr.mxu0 0.0
      %2650 = vmatpush1.msra.mxu0 %v2647
      %2651 = vmatprep.subr.mxu0 0.0
      %2652 = vmatpush1.msra.mxu0 0.0
      %2653 = vmatprep.subr.mxu0 0.0
      %2654 = vmatpush1.msra.mxu0 0.0
      %2655 = vmatprep.subr.mxu0 0.0
      %2656 = vmatpush1.msra.mxu0 0.0
      %2657 = vmatprep.subr.mxu0 0.0
      %2658 = vmatpush1.msra.mxu0 0.0
      %2659 = vmatprep.subr.mxu0 0.0
      %2660 = vmatpush1.msra.mxu0 0.0
      %2661 = vmatprep.subr.mxu0 0.0
      %2662 = vmatpush1.msra.mxu0 0.0
      %2663 = vmatprep.subr.mxu0 0.0
      %2664 = vmatpush1.msra.mxu0 0.0
      %2665 = vmatprep.subr.mxu0 0.0
      %2666 = vmatpush1.msra.mxu0 0.0
      %2667 = vmatprep.subr.mxu0 0.0
      %2668 = vmatpush1.msra.mxu0 0.0
      %2669 = vmatprep.subr.mxu0 0.0
      %2670 = vmatpush1.msra.mxu0 0.0
      %2671 = vmatprep.subr.mxu0 0.0
      %2672 = vmatpush1.msra.mxu0 0.0
      %2673 = vmatprep.subr.mxu0 0.0
      %2674 = vmatpush1.msra.mxu0 0.0
      %2675 = vmatprep.subr.mxu0 0.0
      %2676 = vmatpush1.msra.mxu0 0.0
      %2677 = vmatprep.subr.mxu0 0.0
      %2678 = vmatpush1.msra.mxu0 0.0
      %2679 = vmatprep.subr.mxu0 0.0
      %2680 = vmatpush1.msra.mxu0 0.0
      %2681 = vmatprep.subr.mxu0 0.0
      %2682 = vmatpush1.msra.mxu0 0.0
      %2683 = vmatprep.subr.mxu0 0.0
      %2684 = vmatpush1.msra.mxu0 0.0
      %2685 = vmatprep.subr.mxu0 0.0
      %2686 = vmatpush1.msra.mxu0 0.0
      %2687 = vmatprep.subr.mxu0 0.0
      %2688 = vmatpush1.msra.mxu0 0.0
      %2689 = vmatprep.subr.mxu0 0.0
      %2690 = vmatpush1.msra.mxu0 0.0
      %2691 = vmatprep.subr.mxu0 0.0
      %2692 = vmatpush1.msra.mxu0 0.0
      %2693 = vmatprep.subr.mxu0 0.0
      %2694 = vmatpush1.msra.mxu0 0.0
      %2695 = vmatprep.subr.mxu0 0.0
      %2696 = vmatpush1.msra.mxu0 0.0
      %2697 = vmatprep.subr.mxu0 0.0
      %2698 = vmatpush1.msra.mxu0 0.0
      %2699 = vmatprep.subr.mxu0 0.0
      %2700 = vmatpush1.msra.mxu0 0.0
      %2701 = vmatprep.subr.mxu0 0.0
      %2702 = vmatpush1.msra.mxu0 0.0
      %2703 = vmatprep.subr.mxu0 0.0
      %2704 = vmatpush1.msra.mxu0 0.0
      %2705 = vmatprep.subr.mxu0 0.0
      %2706 = vmatpush1.msra.mxu0 0.0
      %2707 = vmatprep.subr.mxu0 0.0
      %2708 = vmatpush1.msra.mxu0 0.0
      %2709 = vmatprep.subr.mxu0 0.0
      %2710 = vmatpush1.msra.mxu0 0.0
      %2711 = vmatprep.subr.mxu0 0.0
      %2712 = vmatpush1.msra.mxu0 0.0
      %2713 = vmatprep.mubr.f32.mxu0 0.0
      %2714 = vmatmul.mubr.f32.gmra.mrb[0].mxu0 %v2599
      %v2715 = vpop.f32.mrb[0].mxu0
      %v2716 = vadd.f32 0.0, %v2715
      %v2717 = vpop.f32.mrb[0].mxu0
      %2718 = vmatprep.mubr.f32.mxu0 0.0
      %2719 = vmatmul.mubr.f32.gmra.mrb[0].mxu0 %v2602
      %v2720 = vpop.f32.mrb[0].mxu0
      %v2721 = vadd.f32 0.0, %v2720
      %v2722 = vpop.f32.mrb[0].mxu0
      %2723 = vmatprep.mubr.f32.mxu0 0.0
      %2724 = vmatmul.mubr.f32.gmra.mrb[0].mxu0 %v2605
      %v2725 = vpop.f32.mrb[0].mxu0
      %v2726 = vadd.f32 0.0, %v2725
      %v2727 = vpop.f32.mrb[0].mxu0
      %2728 = vmatprep.mubr.f32.mxu0 0.0
      %2729 = vmatmul.mubr.f32.gmra.mrb[0].mxu0 %v2608
      %v2730 = vpop.f32.mrb[0].mxu0
      %v2731 = vadd.f32 0.0, %v2730
      %v2732 = vpop.f32.mrb[0].mxu0
      %2733 = vmatprep.mubr.f32.mxu0 0.0
      %2734 = vmatmul.mubr.f32.gmra.mrb[0].mxu0 %v2611
      %v2735 = vpop.f32.mrb[0].mxu0
      %v2736 = vadd.f32 0.0, %v2735
      %v2737 = vpop.f32.mrb[0].mxu0
      %2738 = vmatprep.mubr.f32.mxu0 0.0
      %2739 = vmatmul.mubr.f32.gmra.mrb[0].mxu0 %v2614
      %v2740 = vpop.f32.mrb[0].mxu0
      %v2741 = vadd.f32 0.0, %v2740
      %v2742 = vpop.f32.mrb[0].mxu0
      %2743 = vmatprep.mubr.f32.mxu0 0.0
      %2744 = vmatmul.mubr.f32.gmra.mrb[0].mxu0 %v2617
      %v2745 = vpop.f32.mrb[0].mxu0
      %v2746 = vadd.f32 0.0, %v2745
      %v2747 = vpop.f32.mrb[0].mxu0
      %2748 = vmatprep.mubr.f32.mxu0 0.0
      %2749 = vmatmul.mubr.f32.gmra.mrb[0].mxu0 %v2620
      %v2750 = vpop.f32.mrb[0].mxu0
      %v2751 = vadd.f32 0.0, %v2750
      %v2752 = vpop.f32.mrb[0].mxu0
      %2753 = vmatprep.mubr.f32.mxu0 0.0
      %2754 = vmatmul.mubr.f32.gmra.mrb[0].mxu0 %v2623
      %v2755 = vpop.f32.mrb[0].mxu0
      %v2756 = vadd.f32 0.0, %v2755
      %v2757 = vpop.f32.mrb[0].mxu0
      %2758 = vmatprep.mubr.f32.mxu0 0.0
      %2759 = vmatmul.mubr.f32.gmra.mrb[0].mxu0 %v2626
      %v2760 = vpop.f32.mrb[0].mxu0
      %v2761 = vadd.f32 0.0, %v2760
      %v2762 = vpop.f32.mrb[0].mxu0
      %2763 = vmatprep.mubr.f32.mxu0 0.0
      %2764 = vmatmul.mubr.f32.gmra.mrb[0].mxu0 %v2629
      %v2765 = vpop.f32.mrb[0].mxu0
      %v2766 = vadd.f32 0.0, %v2765
      %v2767 = vpop.f32.mrb[0].mxu0
      %2768 = vmatprep.mubr.f32.mxu0 0.0
      %2769 = vmatmul.mubr.f32.gmra.mrb[0].mxu0 %v2632
      %v2770 = vpop.f32.mrb[0].mxu0
      %v2771 = vadd.f32 0.0, %v2770
      %v2772 = vpop.f32.mrb[0].mxu0
      %2773 = vmatprep.mubr.f32.mxu0 0.0
      %2774 = vmatmul.mubr.f32.gmra.mrb[0].mxu0 %v2635
      %v2775 = vpop.f32.mrb[0].mxu0
      %v2776 = vadd.f32 0.0, %v2775
      %v2777 = vpop.f32.mrb[0].mxu0
      %2778 = vmatprep.mubr.f32.mxu0 0.0
      %2779 = vmatmul.mubr.f32.gmra.mrb[0].mxu0 %v2638
      %v2780 = vpop.f32.mrb[0].mxu0
      %v2781 = vadd.f32 0.0, %v2780
      %v2782 = vpop.f32.mrb[0].mxu0
      %2783 = vmatprep.mubr.f32.mxu0 0.0
      %2784 = vmatmul.mubr.f32.gmra.mrb[0].mxu0 %v2641
      %v2785 = vpop.f32.mrb[0].mxu0
      %v2786 = vadd.f32 0.0, %v2785
      %v2787 = vpop.f32.mrb[0].mxu0
      %2788 = vmatprep.mubr.f32.mxu0 0.0
      %2789 = vmatmul.mubr.f32.gmra.mrb[0].mxu0 %v2644
      %v2790 = vpop.f32.mrb[0].mxu0
      %v2791 = vadd.f32 0.0, %v2790
      %v2792 = vpop.f32.mrb[0].mxu0
      %2793 = vdwg.mxu0
      %v2794 = vadd.f32 %v2560, %v2716
      %v2795 = vadd.f32 %v2561, %v2721
      %v2796 = vadd.f32 %v2562, %v2726
      %v2797 = vadd.f32 %v2563, %v2731
      %v2798 = vadd.f32 %v2564, %v2736
      %v2799 = vadd.f32 %v2565, %v2741
      %v2800 = vadd.f32 %v2566, %v2746
      %v2801 = vadd.f32 %v2567, %v2751
      %v2802 = vadd.f32 %v2568, %v2756
      %v2803 = vadd.f32 %v2569, %v2761
      %v2804 = vadd.f32 %v2570, %v2766
      %v2805 = vadd.f32 %v2571, %v2771
      %v2806 = vadd.f32 %v2572, %v2776
      %v2807 = vadd.f32 %v2573, %v2781
      %v2808 = vadd.f32 %v2574, %v2786
      %v2809 = vadd.f32 %v2575, %v2791
      %v2810 = vld [vmem:[%s4] sm:$0x1]
      %v2811 = vld [vmem:[%s5] sm:$0x1]
      %v2813 = vlaneseq
      %v2814 = vshrl.u32 %v2813, 7
      %v2815 = vsub.s32 0, %v2814
      %v2816 = vrot.slane %v2810, %v2815
      %v2818 = vmul.f32 %v2794, %v2816
      %v2819 = vmul.f32 %v2795, %v2816
      %v2820 = vmul.f32 %v2796, %v2816
      %v2821 = vmul.f32 %v2797, %v2816
      %v2822 = vmul.f32 %v2798, %v2816
      %v2823 = vmul.f32 %v2799, %v2816
      %v2824 = vmul.f32 %v2800, %v2816
      %v2825 = vmul.f32 %v2801, %v2816
      %v2826 = vmul.f32 %v2802, %v2816
      %v2827 = vmul.f32 %v2803, %v2816
      %v2828 = vmul.f32 %v2804, %v2816
      %v2829 = vmul.f32 %v2805, %v2816
      %v2830 = vmul.f32 %v2806, %v2816
      %v2831 = vmul.f32 %v2807, %v2816
      %v2832 = vmul.f32 %v2808, %v2816
      %v2833 = vmul.f32 %v2809, %v2816
      %v2835 = vlaneseq
      %v2836 = vshrl.u32 %v2835, 7
      %v2837 = vsub.s32 0, %v2836
      %v2838 = vrot.slane %v2811, %v2837
      %v2840 = vadd.f32 %v2818, %v2838
      %v2841 = vadd.f32 %v2819, %v2838
      %v2842 = vadd.f32 %v2820, %v2838
      %v2843 = vadd.f32 %v2821, %v2838
      %v2844 = vadd.f32 %v2822, %v2838
      %v2845 = vadd.f32 %v2823, %v2838
      %v2846 = vadd.f32 %v2824, %v2838
      %v2847 = vadd.f32 %v2825, %v2838
      %v2848 = vadd.f32 %v2826, %v2838
      %v2849 = vadd.f32 %v2827, %v2838
      %v2850 = vadd.f32 %v2828, %v2838
      %v2851 = vadd.f32 %v2829, %v2838
      %v2852 = vadd.f32 %v2830, %v2838
      %v2853 = vadd.f32 %v2831, %v2838
      %v2854 = vadd.f32 %v2832, %v2838
      %v2855 = vadd.f32 %v2833, %v2838
      %v2856 = vmax.f32 %v2840, 0.0
      %v2857 = vmax.f32 %v2841, 0.0
      %v2858 = vmax.f32 %v2842, 0.0
      %v2859 = vmax.f32 %v2843, 0.0
      %v2860 = vmax.f32 %v2844, 0.0
      %v2861 = vmax.f32 %v2845, 0.0
      %v2862 = vmax.f32 %v2846, 0.0
      %v2863 = vmax.f32 %v2847, 0.0
      %v2864 = vmax.f32 %v2848, 0.0
      %v2865 = vmax.f32 %v2849, 0.0
      %v2866 = vmax.f32 %v2850, 0.0
      %v2867 = vmax.f32 %v2851, 0.0
      %v2868 = vmax.f32 %v2852, 0.0
      %v2869 = vmax.f32 %v2853, 0.0
      %v2870 = vmax.f32 %v2854, 0.0
      %v2871 = vmax.f32 %v2855, 0.0
      %vm2872 = vcmask 64512
      %2873 = vst.msk [vmem:[%s403] sm:$0xff] %vm2872, %v2856
      %2874 = vst.msk [vmem:[%s403 + $0x8] sm:$0xff] %vm2872, %v2857
      %2875 = vst.msk [vmem:[%s403 + $0x10] sm:$0xff] %vm2872, %v2858
      %2876 = vst.msk [vmem:[%s403 + $0x18] sm:$0xff] %vm2872, %v2859
      %2877 = vst.msk [vmem:[%s403 + $0x20] sm:$0xff] %vm2872, %v2860
      %2878 = vst.msk [vmem:[%s403 + $0x28] sm:$0xff] %vm2872, %v2861
      %2879 = vst.msk [vmem:[%s403 + $0x30] sm:$0xff] %vm2872, %v2862
      %2880 = vst.msk [vmem:[%s403 + $0x38] sm:$0xff] %vm2872, %v2863
      %2881 = vst.msk [vmem:[%s403 + $0x40] sm:$0xff] %vm2872, %v2864
      %2882 = vst.msk [vmem:[%s403 + $0x48] sm:$0xff] %vm2872, %v2865
      %2883 = vst.msk [vmem:[%s403 + $0x50] sm:$0xff] %vm2872, %v2866
      %2884 = vst.msk [vmem:[%s403 + $0x58] sm:$0xff] %vm2872, %v2867
      %2885 = vst.msk [vmem:[%s403 + $0x60] sm:$0xff] %vm2872, %v2868
      %2886 = vst.msk [vmem:[%s403 + $0x68] sm:$0xff] %vm2872, %v2869
      %2887 = vst.msk [vmem:[%s403 + $0x70] sm:$0xff] %vm2872, %v2870
      %2888 = vst.msk [vmem:[%s403 + $0x78] sm:$0xff] %vm2872, %v2871
      %s2889 = smul.u32 16, %s22
      %p2890 = scmp.lt.s32.totalorder %s21, 1
      %s2891 = scalar_select %p2890, %s21, 1
      %p2892 = scmp.lt.s32.totalorder %s2889, 31
      %s2893 = scalar_select %p2892, %s2889, 31
      %s2894 = smul.addr %s2891, 32
      %s2895 = sadd.s32 %s2893, %s2894
      %s2896 = smul.addr %s2895, 8
      %s2897 = scalar_lea.vmem %s6, %s2896
      // Predicated region
      $region45: #{block_forward.4} parent=43 // pred_check
        %p2898 = pneg %p208
      $region46: #{block_forward.4} parent=43 // pred_check_branch
        %2900 = sbr.rel (%p2898) target = $region48
      $region47: #{block_forward.4} parent=43 // pred_region
        %s2901 = smul.u32 16, %s22
      $region48: #{block_forward.4} parent=43 // pred_fallthru
        _
    $region44: #{block_forward.4} parent=5 // pred_fallthru
      _
    %p2902 = scmp.le.s32.totalorder 2, %s12
    // Predicated region
    $region49: #{block_forward.4} parent=5 // pred_check
      %p2903 = pneg %p2902
    $region50: #{block_forward.4} parent=5 // pred_check_branch
      %2905 = sbr.rel (%p2903) target = $region52
    $region51: #{block_forward.4} parent=5 // pred_region
      %s2906 = ssub.s32 %s12, 2
      // Predicated region
      $region53: #{block_forward.4} parent=51 // pred_check
        %p2907 = pneg %p214
      $region54: #{block_forward.4} parent=51 // pred_check_branch
        %2909 = sbr.rel (%p2907) target = $region56
      $region55: #{block_forward.4} parent=51 // pred_region
        %s2910 = smul.u32 16, %s24
        %p2911 = scmp.lt.s32.totalorder %s23, 1
        %s2912 = scalar_select %p2911, %s23, 1
        %p2913 = scmp.lt.s32.totalorder %s2910, 31
        %s2914 = scalar_select %p2913, %s2910, 31
        %s2915 = smul.addr %s2912, 32
        %s2916 = sadd.s32 %s2914, %s2915
        %s2917 = smul.addr %s2916, 8
        %s2918 = scalar_lea.vmem %s6, %s2917
      $region56: #{block_forward.4} parent=51 // pred_fallthru
        _
    $region52: #{block_forward.4} parent=5 // pred_fallthru
      _
  $region6: #{block_forward.4} parent=0 // loop_footer
    %s16 = sadd.s32 1, %s12
  $region7: #{block_forward.4} parent=0 // loop_footer_branch
    %11 = sbr.rel target = $region3
  $region8: #{block_forward.4} parent=0 // loop_exit
    _

// kernel: block_forward.3
$region0: #{block_forward.3}
  #allocation0 [shape = 'u32[]', space=smem, size = 0x4, offset = 0x4, fixed_abs, tag = 'smem constant byte address 0x4 - core index']
  #allocation1 [shape = 'u32[144,128]{1,0:T(1,128)}', space=vmem, size = 0x12000, scoped, tag = 'internal scratch']
  %s0 = inlined_call_operand.vmem [shape: f32[2,256,4], index: 0, kind: input, shape index: {}, may-alias: {0,1,2}]
  %s1 = inlined_call_operand.vmem [shape: f32[2,256,4], index: 1, kind: input, shape index: {}, may-alias: {0,1,2}]
  %s2 = inlined_call_operand.vmem [shape: f32[2,256,4], index: 2, kind: input, shape index: {}, may-alias: {0,1,2}]
  %s3 = inlined_call_operand.vmem [shape: f32[4,16], index: 3, kind: input, shape index: {}]
  %s4 = inlined_call_operand.vmem [shape: f32[1,16], index: 4, kind: input, shape index: {}]
  %s5 = inlined_call_operand.vmem [shape: f32[1,16], index: 5, kind: input, shape index: {}]
  %s6 = inlined_call_operand.vmem [shape: f32[9,16], index: 6, kind: input, shape index: {}]
  %s7 = inlined_call_operand.vmem [shape: f32[1,16], index: 7, kind: input, shape index: {}]
  %s8 = inlined_call_operand.vmem [shape: f32[1,16], index: 8, kind: input, shape index: {}]
  %s9 = inlined_call_operand.vmem [shape: f32[16,16], index: 9, kind: input, shape index: {}]
  %s10 = inlined_call_operand.vmem [shape: f32[1,16], index: 10, kind: input, shape index: {}]
  %s11 = inlined_call_operand.vmem [shape: f32[1,16], index: 11, kind: input, shape index: {}]
  %s12 = inlined_call_operand.vmem [shape: f32[16,4], index: 12, kind: input, shape index: {}]
  %s13 = inlined_call_operand.vmem [shape: f32[1,4], index: 13, kind: input, shape index: {}]
  %s14 = inlined_call_operand.vmem [shape: f32[1,4], index: 14, kind: input, shape index: {}]
  %s15 = inlined_call_operand.vmem [shape: f32[2,256,4], index: 15, kind: output, shape index: {}]
  %s16 = sld [smem:[#allocation0]]
  $region93: #{block_forward.3} parent=0
    _
  %s18 = ssub.s32 1, %s16
  %s19 = scalar_select 0, %s18, %s16
  loop: start=0, step=1, limit=6
  $region2: #{block_forward.3} parent=0 // loop_pre_header
    _
  $region3: #{block_forward.3} parent=0 // loop_header
    %s21 = sphi 0, %s25
    %p22 = scmp.ge.s32.totalorder %s21, 6
    %s28 = sphi 0, %s40
    %s29 = sphi 0, %s36
    %s30 = sphi 0, %s28
    %s31 = sphi 0, %s29
    %s32 = sphi 0, %s30
    %s33 = sphi 0, %s31
    %s51 = sphi 0, %s53
    %s54 = sphi 0, %s51
    %s55 = sphi 0, %s54
    %s71 = sphi 0, %s55
    %s79 = sphi 0, %s81
    %s82 = sphi 0, %s79
    %s83 = sphi 0, %s82
    %s99 = sphi 0, %s83
    %s113 = sphi 0, %s115
    %s116 = sphi 0, %s113
    %s117 = sphi 0, %s116
    %s133 = sphi 0, %s117
    %s137 = sphi 0, %s137
    %s139 = sphi 0, %s137
    %s140 = sphi 0, %s139
    %s154 = sphi 0, %s140
    %s158 = sphi 0, %s158
    %s160 = sphi 0, %s158
    %s161 = sphi 0, %s160
    %s175 = sphi 0, %s161
    %s179 = sphi 0, %s179
    %s181 = sphi 0, %s179
    %s182 = sphi 0, %s181
    %s196 = sphi 0, %s182
    %s200 = sphi 0, %s200
    %s202 = sphi 0, %s200
    %s203 = sphi 0, %s202
    %s217 = sphi 0, %s203
    %s221 = sphi 0, %s221
    %s223 = sphi 0, %s221
    %s224 = sphi 0, %s223
    %s238 = sphi 0, %s224
    %s242 = sphi 0, %s242
    %s244 = sphi 0, %s242
    %s245 = sphi 0, %s244
    %s259 = sphi 0, %s245
    %s263 = sphi 0, %s263
    %s265 = sphi 0, %s263
    %s266 = sphi 0, %s265
    %s280 = sphi 0, %s266
    %s284 = sphi 0, %s284
    %s286 = sphi 0, %s284
    %s287 = sphi 0, %s286
    %s301 = sphi 0, %s287
    %s305 = sphi 0, %s305
    %s307 = sphi 0, %s305
    %s308 = sphi 0, %s307
    %s322 = sphi 0, %s308
    %s326 = sphi 0, %s326
    %s328 = sphi 0, %s326
    %s329 = sphi 0, %s328
    %s343 = sphi 0, %s329
    %s347 = sphi 0, %s347
    %s349 = sphi 0, %s347
    %s350 = sphi 0, %s349
    %s364 = sphi 0, %s350
    %s368 = sphi 0, %s368
    %s370 = sphi 0, %s368
    %s371 = sphi 0, %s370
    %s385 = sphi 0, %s371
    %s393 = sphi 0, %s395
    %s396 = sphi 0, %s393
    %s397 = sphi 0, %s396
    %s413 = sphi 0, %s397
  $region4: #{block_forward.3} parent=0 // loop_header_branch
    %24 = sbr.rel (%p22) target = $region8
  $region5: #{block_forward.3} parent=0 // loop_body
    %s26 = ssub.s32 %s21, 1
    %s27 = ssub.s32 %s21, 2
    %s34 = sadd.s32 1, %s29
    %p35 = scmp.ge.s32.totalorder %s34, 2
    %s36 = scalar_select %p35, 0, %s34
    %s37 = sadd.s32 1, %s28
    %s38 = scalar_select %p35, %s37, %s28
    %p39 = scmp.ge.s32.totalorder %s38, 2
    %s40 = scalar_select %p39, 0, %s38
    %s41 = ssub.s32 %s29, 1
    %p42 = scmp.gt.s32.totalorder %s41, 0
    %s43 = scalar_select %p42, %s41, 0
    %s44 = ssub.s32 %s36, 1
    %p45 = scmp.gt.s32.totalorder %s44, 0
    %s46 = scalar_select %p45, %s44, 0
    %s47 = ssub.s32 %s28, %s40
    %s48 = ssub.s32 %s43, %s46
    %s49 = sor.u32 %s47, %s48
    %p50 = scmp.eq.s32.totalorder %s49, 0
    %s52 = sadd.s32 %s51, 1
    %s53 = scalar_select %p50, %s51, %s52
    %p56 = pneg %p50
    %p57 = scmp.eq.s32.totalorder %s21, 3
    %p58 = por %p56, %p57
    %p59 = scmp.ne.s32.totalorder %s51, %s54
    %p60 = scmp.eq.s32.totalorder %s21, 0
    %p61 = por %p59, %p60
    %p62 = scmp.ne.s32.totalorder %s51, %s54
    %p63 = scmp.eq.s32.totalorder %s26, 3
    %p64 = por %p62, %p63
    %p65 = scmp.ne.s32.totalorder %s54, %s55
    %p66 = scmp.eq.s32.totalorder %s26, 0
    %p67 = por %p65, %p66
    %p68 = scmp.ne.s32.totalorder %s54, %s55
    %p69 = scmp.eq.s32.totalorder %s27, 3
    %p70 = por %p68, %p69
    %p72 = scmp.ne.s32.totalorder %s55, %s71
    %p73 = scmp.eq.s32.totalorder %s27, 0
    %p74 = por %p72, %p73
    %s75 = ssub.s32 %s28, %s40
    %s76 = ssub.s32 %s29, %s36
    %s77 = sor.u32 %s75, %s76
    %p78 = scmp.eq.s32.totalorder %s77, 0
    %s80 = sadd.s32 %s79, 1
    %s81 = scalar_select %p78, %s79, %s80
    %p84 = pneg %p78
    %p85 = scmp.eq.s32.totalorder %s21, 3
    %p86 = por %p84, %p85
    %p87 = scmp.ne.s32.totalorder %s79, %s82
    %p88 = scmp.eq.s32.totalorder %s21, 0
    %p89 = por %p87, %p88
    %p90 = scmp.ne.s32.totalorder %s79, %s82
    %p91 = scmp.eq.s32.totalorder %s26, 3
    %p92 = por %p90, %p91
    %p93 = scmp.ne.s32.totalorder %s82, %s83
    %p94 = scmp.eq.s32.totalorder %s26, 0
    %p95 = por %p93, %p94
    %p96 = scmp.ne.s32.totalorder %s82, %s83
    %p97 = scmp.eq.s32.totalorder %s27, 3
    %p98 = por %p96, %p97
    %p100 = scmp.ne.s32.totalorder %s83, %s99
    %p101 = scmp.eq.s32.totalorder %s27, 0
    %p102 = por %p100, %p101
    %s103 = sadd.s32 %s29, 1
    %p104 = scmp.lt.s32.totalorder %s103, 1
    %s105 = scalar_select %p104, %s103, 1
    %s106 = sadd.s32 %s36, 1
    %p107 = scmp.lt.s32.totalorder %s106, 1
    %s108 = scalar_select %p107, %s106, 1
    %s109 = ssub.s32 %s28, %s40
    %s110 = ssub.s32 %s105, %s108
    %s111 = sor.u32 %s109, %s110
    %p112 = scmp.eq.s32.totalorder %s111, 0
    %s114 = sadd.s32 %s113, 1
    %s115 = scalar_select %p112, %s113, %s114
    %p118 = pneg %p112
    %p119 = scmp.eq.s32.totalorder %s21, 3
    %p120 = por %p118, %p119
    %p121 = scmp.ne.s32.totalorder %s113, %s116
    %p122 = scmp.eq.s32.totalorder %s21, 0
    %p123 = por %p121, %p122
    %p124 = scmp.ne.s32.totalorder %s113, %s116
    %p125 = scmp.eq.s32.totalorder %s26, 3
    %p126 = por %p124, %p125
    %p127 = scmp.ne.s32.totalorder %s116, %s117
    %p128 = scmp.eq.s32.totalorder %s26, 0
    %p129 = por %p127, %p128
    %p130 = scmp.ne.s32.totalorder %s116, %s117
    %p131 = scmp.eq.s32.totalorder %s27, 3
    %p132 = por %p130, %p131
    %p134 = scmp.ne.s32.totalorder %s117, %s133
    %p135 = scmp.eq.s32.totalorder %s27, 0
    %p136 = por %p134, %p135
    %s138 = sadd.s32 %s137, 1
    %p141 = scmp.eq.s32.totalorder %s21, 3
    %p142 = scmp.ne.s32.totalorder %s137, %s139
    %p143 = scmp.eq.s32.totalorder %s21, 0
    %p144 = por %p142, %p143
    %p145 = scmp.ne.s32.totalorder %s137, %s139
    %p146 = scmp.eq.s32.totalorder %s26, 3
    %p147 = por %p145, %p146
    %p148 = scmp.ne.s32.totalorder %s139, %s140
    %p149 = scmp.eq.s32.totalorder %s26, 0
    %p150 = por %p148, %p149
    %p151 = scmp.ne.s32.totalorder %s139, %s140
    %p152 = scmp.eq.s32.totalorder %s27, 3
    %p153 = por %p151, %p152
    %p155 = scmp.ne.s32.totalorder %s140, %s154
    %p156 = scmp.eq.s32.totalorder %s27, 0
    %p157 = por %p155, %p156
    %s159 = sadd.s32 %s158, 1
    %p162 = scmp.eq.s32.totalorder %s21, 3
    %p163 = scmp.ne.s32.totalorder %s158, %s160
    %p164 = scmp.eq.s32.totalorder %s21, 0
    %p165 = por %p163, %p164
    %p166 = scmp.ne.s32.totalorder %s158, %s160
    %p167 = scmp.eq.s32.totalorder %s26, 3
    %p168 = por %p166, %p167
    %p169 = scmp.ne.s32.totalorder %s160, %s161
    %p170 = scmp.eq.s32.totalorder %s26, 0
    %p171 = por %p169, %p170
    %p172 = scmp.ne.s32.totalorder %s160, %s161
    %p173 = scmp.eq.s32.totalorder %s27, 3
    %p174 = por %p172, %p173
    %p176 = scmp.ne.s32.totalorder %s161, %s175
    %p177 = scmp.eq.s32.totalorder %s27, 0
    %p178 = por %p176, %p177
    %s180 = sadd.s32 %s179, 1
    %p183 = scmp.eq.s32.totalorder %s21, 3
    %p184 = scmp.ne.s32.totalorder %s179, %s181
    %p185 = scmp.eq.s32.totalorder %s21, 0
    %p186 = por %p184, %p185
    %p187 = scmp.ne.s32.totalorder %s179, %s181
    %p188 = scmp.eq.s32.totalorder %s26, 3
    %p189 = por %p187, %p188
    %p190 = scmp.ne.s32.totalorder %s181, %s182
    %p191 = scmp.eq.s32.totalorder %s26, 0
    %p192 = por %p190, %p191
    %p193 = scmp.ne.s32.totalorder %s181, %s182
    %p194 = scmp.eq.s32.totalorder %s27, 3
    %p195 = por %p193, %p194
    %p197 = scmp.ne.s32.totalorder %s182, %s196
    %p198 = scmp.eq.s32.totalorder %s27, 0
    %p199 = por %p197, %p198
    %s201 = sadd.s32 %s200, 1
    %p204 = scmp.eq.s32.totalorder %s21, 3
    %p205 = scmp.ne.s32.totalorder %s200, %s202
    %p206 = scmp.eq.s32.totalorder %s21, 0
    %p207 = por %p205, %p206
    %p208 = scmp.ne.s32.totalorder %s200, %s202
    %p209 = scmp.eq.s32.totalorder %s26, 3
    %p210 = por %p208, %p209
    %p211 = scmp.ne.s32.totalorder %s202, %s203
    %p212 = scmp.eq.s32.totalorder %s26, 0
    %p213 = por %p211, %p212
    %p214 = scmp.ne.s32.totalorder %s202, %s203
    %p215 = scmp.eq.s32.totalorder %s27, 3
    %p216 = por %p214, %p215
    %p218 = scmp.ne.s32.totalorder %s203, %s217
    %p219 = scmp.eq.s32.totalorder %s27, 0
    %p220 = por %p218, %p219
    %s222 = sadd.s32 %s221, 1
    %p225 = scmp.eq.s32.totalorder %s21, 3
    %p226 = scmp.ne.s32.totalorder %s221, %s223
    %p227 = scmp.eq.s32.totalorder %s21, 0
    %p228 = por %p226, %p227
    %p229 = scmp.ne.s32.totalorder %s221, %s223
    %p230 = scmp.eq.s32.totalorder %s26, 3
    %p231 = por %p229, %p230
    %p232 = scmp.ne.s32.totalorder %s223, %s224
    %p233 = scmp.eq.s32.totalorder %s26, 0
    %p234 = por %p232, %p233
    %p235 = scmp.ne.s32.totalorder %s223, %s224
    %p236 = scmp.eq.s32.totalorder %s27, 3
    %p237 = por %p235, %p236
    %p239 = scmp.ne.s32.totalorder %s224, %s238
    %p240 = scmp.eq.s32.totalorder %s27, 0
    %p241 = por %p239, %p240
    %s243 = sadd.s32 %s242, 1
    %p246 = scmp.eq.s32.totalorder %s21, 3
    %p247 = scmp.ne.s32.totalorder %s242, %s244
    %p248 = scmp.eq.s32.totalorder %s21, 0
    %p249 = por %p247, %p248
    %p250 = scmp.ne.s32.totalorder %s242, %s244
    %p251 = scmp.eq.s32.totalorder %s26, 3
    %p252 = por %p250, %p251
    %p253 = scmp.ne.s32.totalorder %s244, %s245
    %p254 = scmp.eq.s32.totalorder %s26, 0
    %p255 = por %p253, %p254
    %p256 = scmp.ne.s32.totalorder %s244, %s245
    %p257 = scmp.eq.s32.totalorder %s27, 3
    %p258 = por %p256, %p257
    %p260 = scmp.ne.s32.totalorder %s245, %s259
    %p261 = scmp.eq.s32.totalorder %s27, 0
    %p262 = por %p260, %p261
    %s264 = sadd.s32 %s263, 1
    %p267 = scmp.eq.s32.totalorder %s21, 3
    %p268 = scmp.ne.s32.totalorder %s263, %s265
    %p269 = scmp.eq.s32.totalorder %s21, 0
    %p270 = por %p268, %p269
    %p271 = scmp.ne.s32.totalorder %s263, %s265
    %p272 = scmp.eq.s32.totalorder %s26, 3
    %p273 = por %p271, %p272
    %p274 = scmp.ne.s32.totalorder %s265, %s266
    %p275 = scmp.eq.s32.totalorder %s26, 0
    %p276 = por %p274, %p275
    %p277 = scmp.ne.s32.totalorder %s265, %s266
    %p278 = scmp.eq.s32.totalorder %s27, 3
    %p279 = por %p277, %p278
    %p281 = scmp.ne.s32.totalorder %s266, %s280
    %p282 = scmp.eq.s32.totalorder %s27, 0
    %p283 = por %p281, %p282
    %s285 = sadd.s32 %s284, 1
    %p288 = scmp.eq.s32.totalorder %s21, 3
    %p289 = scmp.ne.s32.totalorder %s284, %s286
    %p290 = scmp.eq.s32.totalorder %s21, 0
    %p291 = por %p289, %p290
    %p292 = scmp.ne.s32.totalorder %s284, %s286
    %p293 = scmp.eq.s32.totalorder %s26, 3
    %p294 = por %p292, %p293
    %p295 = scmp.ne.s32.totalorder %s286, %s287
    %p296 = scmp.eq.s32.totalorder %s26, 0
    %p297 = por %p295, %p296
    %p298 = scmp.ne.s32.totalorder %s286, %s287
    %p299 = scmp.eq.s32.totalorder %s27, 3
    %p300 = por %p298, %p299
    %p302 = scmp.ne.s32.totalorder %s287, %s301
    %p303 = scmp.eq.s32.totalorder %s27, 0
    %p304 = por %p302, %p303
    %s306 = sadd.s32 %s305, 1
    %p309 = scmp.eq.s32.totalorder %s21, 3
    %p310 = scmp.ne.s32.totalorder %s305, %s307
    %p311 = scmp.eq.s32.totalorder %s21, 0
    %p312 = por %p310, %p311
    %p313 = scmp.ne.s32.totalorder %s305, %s307
    %p314 = scmp.eq.s32.totalorder %s26, 3
    %p315 = por %p313, %p314
    %p316 = scmp.ne.s32.totalorder %s307, %s308
    %p317 = scmp.eq.s32.totalorder %s26, 0
    %p318 = por %p316, %p317
    %p319 = scmp.ne.s32.totalorder %s307, %s308
    %p320 = scmp.eq.s32.totalorder %s27, 3
    %p321 = por %p319, %p320
    %p323 = scmp.ne.s32.totalorder %s308, %s322
    %p324 = scmp.eq.s32.totalorder %s27, 0
    %p325 = por %p323, %p324
    %s327 = sadd.s32 %s326, 1
    %p330 = scmp.eq.s32.totalorder %s21, 3
    %p331 = scmp.ne.s32.totalorder %s326, %s328
    %p332 = scmp.eq.s32.totalorder %s21, 0
    %p333 = por %p331, %p332
    %p334 = scmp.ne.s32.totalorder %s326, %s328
    %p335 = scmp.eq.s32.totalorder %s26, 3
    %p336 = por %p334, %p335
    %p337 = scmp.ne.s32.totalorder %s328, %s329
    %p338 = scmp.eq.s32.totalorder %s26, 0
    %p339 = por %p337, %p338
    %p340 = scmp.ne.s32.totalorder %s328, %s329
    %p341 = scmp.eq.s32.totalorder %s27, 3
    %p342 = por %p340, %p341
    %p344 = scmp.ne.s32.totalorder %s329, %s343
    %p345 = scmp.eq.s32.totalorder %s27, 0
    %p346 = por %p344, %p345
    %s348 = sadd.s32 %s347, 1
    %p351 = scmp.eq.s32.totalorder %s21, 3
    %p352 = scmp.ne.s32.totalorder %s347, %s349
    %p353 = scmp.eq.s32.totalorder %s21, 0
    %p354 = por %p352, %p353
    %p355 = scmp.ne.s32.totalorder %s347, %s349
    %p356 = scmp.eq.s32.totalorder %s26, 3
    %p357 = por %p355, %p356
    %p358 = scmp.ne.s32.totalorder %s349, %s350
    %p359 = scmp.eq.s32.totalorder %s26, 0
    %p360 = por %p358, %p359
    %p361 = scmp.ne.s32.totalorder %s349, %s350
    %p362 = scmp.eq.s32.totalorder %s27, 3
    %p363 = por %p361, %p362
    %p365 = scmp.ne.s32.totalorder %s350, %s364
    %p366 = scmp.eq.s32.totalorder %s27, 0
    %p367 = por %p365, %p366
    %s369 = sadd.s32 %s368, 1
    %p372 = scmp.eq.s32.totalorder %s21, 3
    %p373 = scmp.ne.s32.totalorder %s368, %s370
    %p374 = scmp.eq.s32.totalorder %s21, 0
    %p375 = por %p373, %p374
    %p376 = scmp.ne.s32.totalorder %s368, %s370
    %p377 = scmp.eq.s32.totalorder %s26, 3
    %p378 = por %p376, %p377
    %p379 = scmp.ne.s32.totalorder %s370, %s371
    %p380 = scmp.eq.s32.totalorder %s26, 0
    %p381 = por %p379, %p380
    %p382 = scmp.ne.s32.totalorder %s370, %s371
    %p383 = scmp.eq.s32.totalorder %s27, 3
    %p384 = por %p382, %p383
    %p386 = scmp.ne.s32.totalorder %s371, %s385
    %p387 = scmp.eq.s32.totalorder %s27, 0
    %p388 = por %p386, %p387
    %s389 = ssub.s32 %s28, %s40
    %s390 = ssub.s32 %s29, %s36
    %s391 = sor.u32 %s389, %s390
    %p392 = scmp.eq.s32.totalorder %s391, 0
    %s394 = sadd.s32 %s393, 1
    %s395 = scalar_select %p392, %s393, %s394
    %p398 = pneg %p392
    %p399 = scmp.eq.s32.totalorder %s21, 3
    %p400 = por %p398, %p399
    %p401 = scmp.ne.s32.totalorder %s393, %s396
    %p402 = scmp.eq.s32.totalorder %s21, 0
    %p403 = por %p401, %p402
    %p404 = scmp.ne.s32.totalorder %s393, %s396
    %p405 = scmp.eq.s32.totalorder %s26, 3
    %p406 = por %p404, %p405
    %p407 = scmp.ne.s32.totalorder %s396, %s397
    %p408 = scmp.eq.s32.totalorder %s26, 0
    %p409 = por %p407, %p408
    %p410 = scmp.ne.s32.totalorder %s396, %s397
    %p411 = scmp.eq.s32.totalorder %s27, 3
    %p412 = por %p410, %p411
    %p414 = scmp.ne.s32.totalorder %s397, %s413
    %p415 = scmp.eq.s32.totalorder %s27, 0
    %p416 = por %p414, %p415
    %p417 = scmp.le.s32.totalorder 1, %s21
    %p418 = scmp.lt.s32.totalorder %s21, 5
    %p419 = pnand %p417, %p418
    %p420 = pneg %p419
    // Predicated region
    $region9: #{block_forward.3} parent=5 // pred_check
      _
    $region10: #{block_forward.3} parent=5 // pred_check_branch
      %422 = sbr.rel (%p419) target = $region12
    $region11: #{block_forward.3} parent=5 // pred_region
      %s423 = ssub.s32 %s21, 1
      // Predicated region
      $region13: #{block_forward.3} parent=11 // pred_check
        %p424 = pneg %p150
      $region14: #{block_forward.3} parent=11 // pred_check_branch
        %426 = sbr.rel (%p424) target = $region16
      $region15: #{block_forward.3} parent=11 // pred_region
        _
      $region16: #{block_forward.3} parent=11 // pred_fallthru
        _
      // Predicated region
      $region17: #{block_forward.3} parent=11 // pred_check
        %p427 = pneg %p171
      $region18: #{block_forward.3} parent=11 // pred_check_branch
        %429 = sbr.rel (%p427) target = $region20
      $region19: #{block_forward.3} parent=11 // pred_region
        _
      $region20: #{block_forward.3} parent=11 // pred_fallthru
        _
      // Predicated region
      $region21: #{block_forward.3} parent=11 // pred_check
        %p430 = pneg %p192
      $region22: #{block_forward.3} parent=11 // pred_check_branch
        %432 = sbr.rel (%p430) target = $region24
      $region23: #{block_forward.3} parent=11 // pred_region
        _
      $region24: #{block_forward.3} parent=11 // pred_fallthru
        _
      // Predicated region
      $region25: #{block_forward.3} parent=11 // pred_check
        %p433 = pneg %p213
      $region26: #{block_forward.3} parent=11 // pred_check_branch
        %435 = sbr.rel (%p433) target = $region28
      $region27: #{block_forward.3} parent=11 // pred_region
        _
      $region28: #{block_forward.3} parent=11 // pred_fallthru
        _
      // Predicated region
      $region29: #{block_forward.3} parent=11 // pred_check
        %p436 = pneg %p234
      $region30: #{block_forward.3} parent=11 // pred_check_branch
        %438 = sbr.rel (%p436) target = $region32
      $region31: #{block_forward.3} parent=11 // pred_region
        _
      $region32: #{block_forward.3} parent=11 // pred_fallthru
        _
      // Predicated region
      $region33: #{block_forward.3} parent=11 // pred_check
        %p439 = pneg %p255
      $region34: #{block_forward.3} parent=11 // pred_check_branch
        %441 = sbr.rel (%p439) target = $region36
      $region35: #{block_forward.3} parent=11 // pred_region
        _
      $region36: #{block_forward.3} parent=11 // pred_fallthru
        _
      // Predicated region
      $region37: #{block_forward.3} parent=11 // pred_check
        %p442 = pneg %p276
      $region38: #{block_forward.3} parent=11 // pred_check_branch
        %444 = sbr.rel (%p442) target = $region40
      $region39: #{block_forward.3} parent=11 // pred_region
        _
      $region40: #{block_forward.3} parent=11 // pred_fallthru
        _
      // Predicated region
      $region41: #{block_forward.3} parent=11 // pred_check
        %p445 = pneg %p297
      $region42: #{block_forward.3} parent=11 // pred_check_branch
        %447 = sbr.rel (%p445) target = $region44
      $region43: #{block_forward.3} parent=11 // pred_region
        _
      $region44: #{block_forward.3} parent=11 // pred_fallthru
        _
      // Predicated region
      $region45: #{block_forward.3} parent=11 // pred_check
        %p448 = pneg %p318
      $region46: #{block_forward.3} parent=11 // pred_check_branch
        %450 = sbr.rel (%p448) target = $region48
      $region47: #{block_forward.3} parent=11 // pred_region
        _
      $region48: #{block_forward.3} parent=11 // pred_fallthru
        _
      // Predicated region
      $region49: #{block_forward.3} parent=11 // pred_check
        %p451 = pneg %p339
      $region50: #{block_forward.3} parent=11 // pred_check_branch
        %453 = sbr.rel (%p451) target = $region52
      $region51: #{block_forward.3} parent=11 // pred_region
        _
      $region52: #{block_forward.3} parent=11 // pred_fallthru
        _
      // Predicated region
      $region53: #{block_forward.3} parent=11 // pred_check
        %p454 = pneg %p360
      $region54: #{block_forward.3} parent=11 // pred_check_branch
        %456 = sbr.rel (%p454) target = $region56
      $region55: #{block_forward.3} parent=11 // pred_region
        _
      $region56: #{block_forward.3} parent=11 // pred_fallthru
        _
      // Predicated region
      $region57: #{block_forward.3} parent=11 // pred_check
        %p457 = pneg %p381
      $region58: #{block_forward.3} parent=11 // pred_check_branch
        %459 = sbr.rel (%p457) target = $region60
      $region59: #{block_forward.3} parent=11 // pred_region
        _
      $region60: #{block_forward.3} parent=11 // pred_fallthru
        _
    $region12: #{block_forward.3} parent=5 // pred_fallthru
      _
    %p460 = scmp.lt.s32.totalorder %s21, 4
    // Predicated region
    $region61: #{block_forward.3} parent=5 // pred_check
      %p461 = pneg %p460
    $region62: #{block_forward.3} parent=5 // pred_check_branch
      %463 = sbr.rel (%p461) target = $region64
    $region63: #{block_forward.3} parent=5 // pred_region
      // Predicated region
      $region65: #{block_forward.3} parent=63 // pred_check
        %p464 = pneg %p61
      $region66: #{block_forward.3} parent=63 // pred_check_branch
        %466 = sbr.rel (%p464) target = $region68
      $region67: #{block_forward.3} parent=63 // pred_region
        %s467 = ssub.s32 %s29, 1
        %p468 = scmp.gt.s32.totalorder %s467, 0
        %s469 = scalar_select %p468, %s467, 0
        %s470 = smul.u32 16, %s469
        %p471 = scmp.lt.s32.totalorder %s28, 1
        %s472 = scalar_select %p471, %s28, 1
        %p473 = scmp.lt.s32.totalorder %s470, 31
        %s474 = scalar_select %p473, %s470, 31
        %s475 = smul.addr %s472, 32
        %s476 = sadd.s32 %s474, %s475
        %s477 = smul.addr %s476, 8
        %s478 = scalar_lea.vmem %s0, %s477
        %s479 = ssub.s32 %s29, 1
        %p480 = scmp.gt.s32.totalorder %s479, 0
        %s481 = scalar_select %p480, %s479, 0
        %s482 = smul.u32 16, %s481
      $region68: #{block_forward.3} parent=63 // pred_fallthru
        _
      // Predicated region
      $region69: #{block_forward.3} parent=63 // pred_check
        %p483 = pneg %p89
      $region70: #{block_forward.3} parent=63 // pred_check_branch
        %485 = sbr.rel (%p483) target = $region72
      $region71: #{block_forward.3} parent=63 // pred_region
        %s486 = smul.u32 16, %s29
        %p487 = scmp.lt.s32.totalorder %s28, 1
        %s488 = scalar_select %p487, %s28, 1
        %p489 = scmp.lt.s32.totalorder %s486, 31
        %s490 = scalar_select %p489, %s486, 31
        %s491 = smul.addr %s488, 32
        %s492 = sadd.s32 %s490, %s491
        %s493 = smul.addr %s492, 8
        %s494 = scalar_lea.vmem %s1, %s493
        %s495 = smul.u32 16, %s29
      $region72: #{block_forward.3} parent=63 // pred_fallthru
        _
      // Predicated region
      $region73: #{block_forward.3} parent=63 // pred_check
        %p496 = pneg %p123
      $region74: #{block_forward.3} parent=63 // pred_check_branch
        %498 = sbr.rel (%p496) target = $region76
      $region75: #{block_forward.3} parent=63 // pred_region
        %s499 = sadd.s32 %s29, 1
        %p500 = scmp.lt.s32.totalorder %s499, 1
        %s501 = scalar_select %p500, %s499, 1
        %s502 = smul.u32 16, %s501
        %p503 = scmp.lt.s32.totalorder %s28, 1
        %s504 = scalar_select %p503, %s28, 1
        %p505 = scmp.lt.s32.totalorder %s502, 31
        %s506 = scalar_select %p505, %s502, 31
        %s507 = smul.addr %s504, 32
        %s508 = sadd.s32 %s506, %s507
        %s509 = smul.addr %s508, 8
        %s510 = scalar_lea.vmem %s2, %s509
        %s511 = sadd.s32 %s29, 1
        %p512 = scmp.lt.s32.totalorder %s511, 1
        %s513 = scalar_select %p512, %s511, 1
        %s514 = smul.u32 16, %s513
      $region76: #{block_forward.3} parent=63 // pred_fallthru
        _
    $region64: #{block_forward.3} parent=5 // pred_fallthru
      _
    %p515 = scmp.le.s32.totalorder 1, %s21
    %p516 = scmp.lt.s32.totalorder %s21, 5
    %p517 = pnand %p515, %p516
    %p518 = pneg %p517
    // Predicated region
    $region77: #{block_forward.3} parent=5 // pred_check
      _
    $region78: #{block_forward.3} parent=5 // pred_check_branch
      %520 = sbr.rel (%p517) target = $region80
    $region79: #{block_forward.3} parent=5 // pred_region
      %s521 = ssub.s32 %s21, 1
      %s522 = ssub.s32 %s31, 1
      %p523 = scmp.gt.s32.totalorder %s522, 0
      %s524 = scalar_select %p523, %s522, 0
      %s525 = smul.u32 16, %s524
      %p526 = scmp.lt.s32.totalorder %s30, 1
      %s527 = scalar_select %p526, %s30, 1
      %p528 = scmp.lt.s32.totalorder %s525, 31
      %s529 = scalar_select %p528, %s525, 31
      %s530 = smul.addr %s527, 32
      %s531 = sadd.s32 %s529, %s530
      %s532 = smul.addr %s531, 8
      %s533 = scalar_lea.vmem %s0, %s532
      %p534 = pneg %p67
      %p535 = pneg %p64
      %s536 = smul.u32 16, %s31
      %p537 = scmp.lt.s32.totalorder %s30, 1
      %s538 = scalar_select %p537, %s30, 1
      %p539 = scmp.lt.s32.totalorder %s536, 31
      %s540 = scalar_select %p539, %s536, 31
      %s541 = smul.addr %s538, 32
      %s542 = sadd.s32 %s540, %s541
      %s543 = smul.addr %s542, 8
      %s544 = scalar_lea.vmem %s1, %s543
      %p545 = pneg %p95
      %p546 = pneg %p92
      %s547 = sadd.s32 %s31, 1
      %p548 = scmp.lt.s32.totalorder %s547, 1
      %s549 = scalar_select %p548, %s547, 1
      %s550 = smul.u32 16, %s549
      %p551 = scmp.lt.s32.totalorder %s30, 1
      %s552 = scalar_select %p551, %s30, 1
      %p553 = scmp.lt.s32.totalorder %s550, 31
      %s554 = scalar_select %p553, %s550, 31
      %s555 = smul.addr %s552, 32
      %s556 = sadd.s32 %s554, %s555
      %s557 = smul.addr %s556, 8
      %s558 = scalar_lea.vmem %s2, %s557
      %p559 = pneg %p129
      %p560 = pneg %p126
      %p561 = pneg %p150
      %p562 = pneg %p147
      %p563 = pneg %p171
      %p564 = pneg %p168
      %p565 = pneg %p192
      %p566 = pneg %p189
      %p567 = pneg %p213
      %p568 = pneg %p210
      %p569 = pneg %p234
      %p570 = pneg %p231
      %p571 = pneg %p255
      %p572 = pneg %p252
      %p573 = pneg %p276
      %p574 = pneg %p273
      %p575 = pneg %p297
      %p576 = pneg %p294
      %p577 = pneg %p318
      %p578 = pneg %p315
      %p579 = pneg %p339
      %p580 = pneg %p336
      %p581 = pneg %p360
      %p582 = pneg %p357
      %p583 = pneg %p381
      %p584 = pneg %p378
      %p585 = pneg %p409
      %p586 = pneg %p406
      %s587 = smul.u32 16, %s31
      %p588 = scmp.lt.s32.totalorder %s30, 1
      %s589 = scalar_select %p588, %s30, 1
      %p590 = scmp.lt.s32.totalorder %s587, 31
      %s591 = scalar_select %p590, %s587, 31
      %s592 = smul.addr %s589, 32
      %s593 = sadd.s32 %s591, %s592
      %s594 = smul.addr %s593, 8
      %s595 = scalar_lea.vmem %s15, %s594
      %s596 = ssub.s32 %s31, 1
      %p597 = scmp.gt.s32.totalorder %s596, 0
      %s598 = scalar_select %p597, %s596, 0
      %s599 = smul.u32 16, %s598
      %p600 = scmp.lt.s32.totalorder %s30, 1
      %s601 = scalar_select %p600, %s30, 1
      %p602 = scmp.lt.s32.totalorder %s599, 31
      %s603 = scalar_select %p602, %s599, 31
      %s604 = smul.addr %s601, 32
      %s605 = sadd.s32 %s603, %s604
      %s606 = smul.addr %s605, 8
      %s607 = scalar_lea.vmem %s0, %s606
      %s608 = ssub.s32 %s31, 1
      %p609 = scmp.gt.s32.totalorder %s608, 0
      %s610 = scalar_select %p609, %s608, 0
      %s611 = smul.u32 16, %s610
      %s612 = smul.u32 16, %s31
      %p613 = scmp.lt.s32.totalorder %s30, 1
      %s614 = scalar_select %p613, %s30, 1
      %p615 = scmp.lt.s32.totalorder %s612, 31
      %s616 = scalar_select %p615, %s612, 31
      %s617 = smul.addr %s614, 32
      %s618 = sadd.s32 %s616, %s617
      %s619 = smul.addr %s618, 8
      %s620 = scalar_lea.vmem %s1, %s619
      %s621 = smul.u32 16, %s31
      %s622 = sadd.s32 %s31, 1
      %p623 = scmp.lt.s32.totalorder %s622, 1
      %s624 = scalar_select %p623, %s622, 1
      %s625 = smul.u32 16, %s624
      %p626 = scmp.lt.s32.totalorder %s30, 1
      %s627 = scalar_select %p626, %s30, 1
      %p628 = scmp.lt.s32.totalorder %s625, 31
      %s629 = scalar_select %p628, %s625, 31
      %s630 = smul.addr %s627, 32
      %s631 = sadd.s32 %s629, %s630
      %s632 = smul.addr %s631, 8
      %s633 = scalar_lea.vmem %s2, %s632
      %s634 = sadd.s32 %s31, 1
      %p635 = scmp.lt.s32.totalorder %s634, 1
      %s636 = scalar_select %p635, %s634, 1
      %s637 = smul.u32 16, %s636
      %s638 = smul.u32 16, %s31
      %p639 = scmp.lt.s32.totalorder %s30, 1
      %s640 = scalar_select %p639, %s30, 1
      %p641 = scmp.lt.s32.totalorder %s638, 31
      %s642 = scalar_select %p641, %s638, 31
      %s643 = smul.addr %s640, 32
      %s644 = sadd.s32 %s642, %s643
      %s645 = smul.addr %s644, 8
      %s646 = scalar_lea.vmem %s15, %s645
      %s647 = smul.u32 16, %s31
      %v648 = vld [vmem:[%s607 + $0x70] sm:$0xff]
      %v649 = vld [vmem:[%s607 + $0x78] sm:$0xff]
      %v650 = vld [vmem:[%s633] sm:$0xff]
      %v651 = vld [vmem:[%s633 + $0x8] sm:$0xff]
      %v652 = vld [vmem:[%s620] sm:$0xff]
      %v653 = vld [vmem:[%s620 + $0x8] sm:$0xff]
      %v654 = vld [vmem:[%s620 + $0x10] sm:$0xff]
      %v655 = vld [vmem:[%s620 + $0x18] sm:$0xff]
      %v656 = vld [vmem:[%s620 + $0x20] sm:$0xff]
      %v657 = vld [vmem:[%s620 + $0x28] sm:$0xff]
      %v658 = vld [vmem:[%s620 + $0x30] sm:$0xff]
      %v659 = vld [vmem:[%s620 + $0x38] sm:$0xff]
      %v660 = vld [vmem:[%s620 + $0x40] sm:$0xff]
      %v661 = vld [vmem:[%s620 + $0x48] sm:$0xff]
      %v662 = vld [vmem:[%s620 + $0x50] sm:$0xff]
      %v663 = vld [vmem:[%s620 + $0x58] sm:$0xff]
      %v664 = vld [vmem:[%s620 + $0x60] sm:$0xff]
      %v665 = vld [vmem:[%s620 + $0x68] sm:$0xff]
      %v666 = vld [vmem:[%s620 + $0x70] sm:$0xff]
      %v667 = vld [vmem:[%s620 + $0x78] sm:$0xff]
      %v668 = vld [vmem:[%s3] sm:$0xf]
      %vm669 = vcmask 31744
      %v671 = vsel %vm669, %v648, 0
      %v674 = vsel %vm669, %v649, 0
      %v677 = vsel %vm669, %v652, 0
      %v680 = vsel %vm669, %v653, 0
      %v683 = vsel %vm669, %v654, 0
      %v686 = vsel %vm669, %v655, 0
      %v689 = vsel %vm669, %v656, 0
      %v692 = vsel %vm669, %v657, 0
      %v695 = vsel %vm669, %v658, 0
      %v698 = vsel %vm669, %v659, 0
      %v701 = vsel %vm669, %v660, 0
      %v704 = vsel %vm669, %v661, 0
      %v707 = vsel %vm669, %v662, 0
      %v710 = vsel %vm669, %v663, 0
      %v713 = vsel %vm669, %v664, 0
      %v716 = vsel %vm669, %v665, 0
      %v719 = vsel %vm669, %v666, 0
      %v722 = vsel %vm669, %v667, 0
      %v725 = vsel %vm669, %v650, 0
      %v728 = vsel %vm669, %v651, 0
      %vm730 = vcmask 1043456
      %v732 = vsel %vm730, %v668, 0
      %734 = vmatprep.subr.mxu0 0.0
      %735 = vmatpush1.msra.mxu0 %v732
      %736 = vmatprep.subr.mxu0 0.0
      %737 = vmatpush1.msra.mxu0 0.0
      %738 = vmatprep.subr.mxu0 0.0
      %739 = vmatpush1.msra.mxu0 0.0
      %740 = vmatprep.subr.mxu0 0.0
      %741 = vmatpush1.msra.mxu0 0.0
      %742 = vmatprep.subr.mxu0 0.0
      %743 = vmatpush1.msra.mxu0 0.0
      %744 = vmatprep.subr.mxu0 0.0
      %745 = vmatpush1.msra.mxu0 0.0
      %746 = vmatprep.subr.mxu0 0.0
      %747 = vmatpush1.msra.mxu0 0.0
      %748 = vmatprep.subr.mxu0 0.0
      %749 = vmatpush1.msra.mxu0 0.0
      %750 = vmatprep.subr.mxu0 0.0
      %751 = vmatpush1.msra.mxu0 0.0
      %752 = vmatprep.subr.mxu0 0.0
      %753 = vmatpush1.msra.mxu0 0.0
      %754 = vmatprep.subr.mxu0 0.0
      %755 = vmatpush1.msra.mxu0 0.0
      %756 = vmatprep.subr.mxu0 0.0
      %757 = vmatpush1.msra.mxu0 0.0
      %758 = vmatprep.subr.mxu0 0.0
      %759 = vmatpush1.msra.mxu0 0.0
      %760 = vmatprep.subr.mxu0 0.0
      %761 = vmatpush1.msra.mxu0 0.0
      %762 = vmatprep.subr.mxu0 0.0
      %763 = vmatpush1.msra.mxu0 0.0
      %764 = vmatprep.subr.mxu0 0.0
      %765 = vmatpush1.msra.mxu0 0.0
      %766 = vmatprep.subr.mxu0 0.0
      %767 = vmatpush1.msra.mxu0 0.0
      %768 = vmatprep.subr.mxu0 0.0
      %769 = vmatpush1.msra.mxu0 0.0
      %770 = vmatprep.subr.mxu0 0.0
      %771 = vmatpush1.msra.mxu0 0.0
      %772 = vmatprep.subr.mxu0 0.0
      %773 = vmatpush1.msra.mxu0 0.0
      %774 = vmatprep.subr.mxu0 0.0
      %775 = vmatpush1.msra.mxu0 0.0
      %776 = vmatprep.subr.mxu0 0.0
      %777 = vmatpush1.msra.mxu0 0.0
      %778 = vmatprep.subr.mxu0 0.0
      %779 = vmatpush1.msra.mxu0 0.0
      %780 = vmatprep.subr.mxu0 0.0
      %781 = vmatpush1.msra.mxu0 0.0
      %782 = vmatprep.subr.mxu0 0.0
      %783 = vmatpush1.msra.mxu0 0.0
      %784 = vmatprep.subr.mxu0 0.0
      %785 = vmatpush1.msra.mxu0 0.0
      %786 = vmatprep.subr.mxu0 0.0
      %787 = vmatpush1.msra.mxu0 0.0
      %788 = vmatprep.subr.mxu0 0.0
      %789 = vmatpush1.msra.mxu0 0.0
      %790 = vmatprep.subr.mxu0 0.0
      %791 = vmatpush1.msra.mxu0 0.0
      %792 = vmatprep.subr.mxu0 0.0
      %793 = vmatpush1.msra.mxu0 0.0
      %794 = vmatprep.subr.mxu0 0.0
      %795 = vmatpush1.msra.mxu0 0.0
      %796 = vmatprep.subr.mxu0 0.0
      %797 = vmatpush1.msra.mxu0 0.0
      %798 = vmatprep.mubr.f32.mxu0 0.0
      %799 = vmatmul.mubr.f32.gmra.mrb[0].mxu0 %v671
      %v800 = vpop.f32.mrb[0].mxu0
      %v801 = vadd.f32 0.0, %v800
      %v802 = vpop.f32.mrb[0].mxu0
      %803 = vmatprep.mubr.f32.mxu0 0.0
      %804 = vmatmul.mubr.f32.gmra.mrb[0].mxu0 %v674
      %v805 = vpop.f32.mrb[0].mxu0
      %v806 = vadd.f32 0.0, %v805
      %v807 = vpop.f32.mrb[0].mxu0
      %808 = vmatprep.mubr.f32.mxu0 0.0
      %809 = vmatmul.mubr.f32.gmra.mrb[0].mxu0 %v677
      %v810 = vpop.f32.mrb[0].mxu0
      %v811 = vadd.f32 0.0, %v810
      %v812 = vpop.f32.mrb[0].mxu0
      %813 = vmatprep.mubr.f32.mxu0 0.0
      %814 = vmatmul.mubr.f32.gmra.mrb[0].mxu0 %v680
      %v815 = vpop.f32.mrb[0].mxu0
      %v816 = vadd.f32 0.0, %v815
      %v817 = vpop.f32.mrb[0].mxu0
      %818 = vmatprep.mubr.f32.mxu0 0.0
      %819 = vmatmul.mubr.f32.gmra.mrb[0].mxu0 %v683
      %v820 = vpop.f32.mrb[0].mxu0
      %v821 = vadd.f32 0.0, %v820
      %v822 = vpop.f32.mrb[0].mxu0
      %823 = vmatprep.mubr.f32.mxu0 0.0
      %824 = vmatmul.mubr.f32.gmra.mrb[0].mxu0 %v686
      %v825 = vpop.f32.mrb[0].mxu0
      %v826 = vadd.f32 0.0, %v825
      %v827 = vpop.f32.mrb[0].mxu0
      %828 = vmatprep.mubr.f32.mxu0 0.0
      %829 = vmatmul.mubr.f32.gmra.mrb[0].mxu0 %v689
      %v830 = vpop.f32.mrb[0].mxu0
      %v831 = vadd.f32 0.0, %v830
      %v832 = vpop.f32.mrb[0].mxu0
      %833 = vmatprep.mubr.f32.mxu0 0.0
      %834 = vmatmul.mubr.f32.gmra.mrb[0].mxu0 %v692
      %v835 = vpop.f32.mrb[0].mxu0
      %v836 = vadd.f32 0.0, %v835
      %v837 = vpop.f32.mrb[0].mxu0
      %838 = vmatprep.mubr.f32.mxu0 0.0
      %839 = vmatmul.mubr.f32.gmra.mrb[0].mxu0 %v695
      %v840 = vpop.f32.mrb[0].mxu0
      %v841 = vadd.f32 0.0, %v840
      %v842 = vpop.f32.mrb[0].mxu0
      %843 = vmatprep.mubr.f32.mxu0 0.0
      %844 = vmatmul.mubr.f32.gmra.mrb[0].mxu0 %v698
      %v845 = vpop.f32.mrb[0].mxu0
      %v846 = vadd.f32 0.0, %v845
      %v847 = vpop.f32.mrb[0].mxu0
      %848 = vmatprep.mubr.f32.mxu0 0.0
      %849 = vmatmul.mubr.f32.gmra.mrb[0].mxu0 %v701
      %v850 = vpop.f32.mrb[0].mxu0
      %v851 = vadd.f32 0.0, %v850
      %v852 = vpop.f32.mrb[0].mxu0
      %853 = vmatprep.mubr.f32.mxu0 0.0
      %854 = vmatmul.mubr.f32.gmra.mrb[0].mxu0 %v704
      %v855 = vpop.f32.mrb[0].mxu0
      %v856 = vadd.f32 0.0, %v855
      %v857 = vpop.f32.mrb[0].mxu0
      %858 = vmatprep.mubr.f32.mxu0 0.0
      %859 = vmatmul.mubr.f32.gmra.mrb[0].mxu0 %v707
      %v860 = vpop.f32.mrb[0].mxu0
      %v861 = vadd.f32 0.0, %v860
      %v862 = vpop.f32.mrb[0].mxu0
      %863 = vmatprep.mubr.f32.mxu0 0.0
      %864 = vmatmul.mubr.f32.gmra.mrb[0].mxu0 %v710
      %v865 = vpop.f32.mrb[0].mxu0
      %v866 = vadd.f32 0.0, %v865
      %v867 = vpop.f32.mrb[0].mxu0
      %868 = vmatprep.mubr.f32.mxu0 0.0
      %869 = vmatmul.mubr.f32.gmra.mrb[0].mxu0 %v713
      %v870 = vpop.f32.mrb[0].mxu0
      %v871 = vadd.f32 0.0, %v870
      %v872 = vpop.f32.mrb[0].mxu0
      %873 = vmatprep.mubr.f32.mxu0 0.0
      %874 = vmatmul.mubr.f32.gmra.mrb[0].mxu0 %v716
      %v875 = vpop.f32.mrb[0].mxu0
      %v876 = vadd.f32 0.0, %v875
      %v877 = vpop.f32.mrb[0].mxu0
      %878 = vmatprep.mubr.f32.mxu0 0.0
      %879 = vmatmul.mubr.f32.gmra.mrb[0].mxu0 %v719
      %v880 = vpop.f32.mrb[0].mxu0
      %v881 = vadd.f32 0.0, %v880
      %v882 = vpop.f32.mrb[0].mxu0
      %883 = vmatprep.mubr.f32.mxu0 0.0
      %884 = vmatmul.mubr.f32.gmra.mrb[0].mxu0 %v722
      %v885 = vpop.f32.mrb[0].mxu0
      %v886 = vadd.f32 0.0, %v885
      %v887 = vpop.f32.mrb[0].mxu0
      %888 = vmatprep.mubr.f32.mxu0 0.0
      %889 = vmatmul.mubr.f32.gmra.mrb[0].mxu0 %v725
      %v890 = vpop.f32.mrb[0].mxu0
      %v891 = vadd.f32 0.0, %v890
      %v892 = vpop.f32.mrb[0].mxu0
      %893 = vmatprep.mubr.f32.mxu0 0.0
      %894 = vmatmul.mubr.f32.gmra.mrb[0].mxu0 %v728
      %v895 = vpop.f32.mrb[0].mxu0
      %v896 = vadd.f32 0.0, %v895
      %v897 = vpop.f32.mrb[0].mxu0
      %898 = vdwg.mxu0
      %v899 = vld [vmem:[%s4] sm:$0x1]
      %v900 = vld [vmem:[%s5] sm:$0x1]
      %v902 = vlaneseq
      %v903 = vshrl.u32 %v902, 7
      %v904 = vsub.s32 0, %v903
      %v905 = vrot.slane %v899, %v904
      %v907 = vmul.f32 %v801, %v905
      %v908 = vmul.f32 %v806, %v905
      %v909 = vmul.f32 %v811, %v905
      %v910 = vmul.f32 %v816, %v905
      %v911 = vmul.f32 %v821, %v905
      %v912 = vmul.f32 %v826, %v905
      %v913 = vmul.f32 %v831, %v905
      %v914 = vmul.f32 %v836, %v905
      %v915 = vmul.f32 %v841, %v905
      %v916 = vmul.f32 %v846, %v905
      %v917 = vmul.f32 %v851, %v905
      %v918 = vmul.f32 %v856, %v905
      %v919 = vmul.f32 %v861, %v905
      %v920 = vmul.f32 %v866, %v905
      %v921 = vmul.f32 %v871, %v905
      %v922 = vmul.f32 %v876, %v905
      %v923 = vmul.f32 %v881, %v905
      %v924 = vmul.f32 %v886, %v905
      %v925 = vmul.f32 %v891, %v905
      %v926 = vmul.f32 %v896, %v905
      %v928 = vlaneseq
      %v929 = vshrl.u32 %v928, 7
      %v930 = vsub.s32 0, %v929
      %v931 = vrot.slane %v900, %v930
      %v933 = vadd.f32 %v907, %v931
      %v934 = vadd.f32 %v908, %v931
      %v935 = vadd.f32 %v909, %v931
      %v936 = vadd.f32 %v910, %v931
      %v937 = vadd.f32 %v911, %v931
      %v938 = vadd.f32 %v912, %v931
      %v939 = vadd.f32 %v913, %v931
      %v940 = vadd.f32 %v914, %v931
      %v941 = vadd.f32 %v915, %v931
      %v942 = vadd.f32 %v916, %v931
      %v943 = vadd.f32 %v917, %v931
      %v944 = vadd.f32 %v918, %v931
      %v945 = vadd.f32 %v919, %v931
      %v946 = vadd.f32 %v920, %v931
      %v947 = vadd.f32 %v921, %v931
      %v948 = vadd.f32 %v922, %v931
      %v949 = vadd.f32 %v923, %v931
      %v950 = vadd.f32 %v924, %v931
      %v951 = vadd.f32 %v925, %v931
      %v952 = vadd.f32 %v926, %v931
      %v953 = vmax.f32 %v933, 0.0
      %v954 = vmax.f32 %v934, 0.0
      %v955 = vmax.f32 %v935, 0.0
      %v956 = vmax.f32 %v936, 0.0
      %v957 = vmax.f32 %v937, 0.0
      %v958 = vmax.f32 %v938, 0.0
      %v959 = vmax.f32 %v939, 0.0
      %v960 = vmax.f32 %v940, 0.0
      %v961 = vmax.f32 %v941, 0.0
      %v962 = vmax.f32 %v942, 0.0
      %v963 = vmax.f32 %v943, 0.0
      %v964 = vmax.f32 %v944, 0.0
      %v965 = vmax.f32 %v945, 0.0
      %v966 = vmax.f32 %v946, 0.0
      %v967 = vmax.f32 %v947, 0.0
      %v968 = vmax.f32 %v948, 0.0
      %v969 = vmax.f32 %v949, 0.0
      %v970 = vmax.f32 %v950, 0.0
      %v971 = vmax.f32 %v951, 0.0
      %v972 = vmax.f32 %v952, 0.0
      %v973 = vlaneseq
      %v974 = vshrl.u32 %v973, 7
      %v975 = vadd.s32 %v974, 8
      %v976 = vadd.s32 %v974, 16
      %v977 = vadd.s32 %v974, 24
      %v978 = vadd.s32 %v974, 32
      %v979 = vadd.s32 %v974, 40
      %v980 = vadd.s32 %v974, 48
      %v981 = vadd.s32 %v974, 56
      %v982 = vadd.s32 %v974, 64
      %v983 = vadd.s32 %v974, 72
      %v984 = vadd.s32 %v974, 80
      %v985 = vadd.s32 %v974, 88
      %v986 = vadd.s32 %v974, 96
      %v987 = vadd.s32 %v974, 104
      %v988 = vadd.s32 %v974, 112
      %v989 = vadd.s32 %v974, 120
      %v990 = vadd.s32 %v974, 128
      %v991 = vadd.s32 %v974, 136
      %v992 = vadd.s32 %v974, 144
      %v993 = vadd.s32 %v974, 152
      %vm994 = vcmp.ge.s32.totalorder %v974, 16
      %vm995 = vcmp.ge.s32.totalorder %v975, 16
      %vm996 = vcmp.ge.s32.totalorder %v976, 16
      %vm997 = vcmp.ge.s32.totalorder %v977, 16
      %vm998 = vcmp.ge.s32.totalorder %v978, 16
      %vm999 = vcmp.ge.s32.totalorder %v979, 16
      %vm1000 = vcmp.ge.s32.totalorder %v980, 16
      %vm1001 = vcmp.ge.s32.totalorder %v981, 16
      %vm1002 = vcmp.ge.s32.totalorder %v982, 16
      %vm1003 = vcmp.ge.s32.totalorder %v983, 16
      %vm1004 = vcmp.ge.s32.totalorder %v984, 16
      %vm1005 = vcmp.ge.s32.totalorder %v985, 16
      %vm1006 = vcmp.ge.s32.totalorder %v986, 16
      %vm1007 = vcmp.ge.s32.totalorder %v987, 16
      %vm1008 = vcmp.ge.s32.totalorder %v988, 16
      %vm1009 = vcmp.ge.s32.totalorder %v989, 16
      %vm1010 = vcmp.ge.s32.totalorder %v990, 16
      %vm1011 = vcmp.ge.s32.totalorder %v991, 16
      %vm1012 = vcmp.ge.s32.totalorder %v992, 16
      %vm1013 = vcmp.ge.s32.totalorder %v993, 16
      %p1014 = scmp.gt.s32.totalorder %s31, 0
      %s1015 = scalar_select %p1014, 1, 0
      %v1016 = vstv %s1015
      %vm1017 = vcmp.eq.s32.totalorder %v1016, 1
      %vm1018 = vmor %vm994, %vm1017
      %vm1019 = vmor %vm995, %vm1017
      %vm1020 = vmor %vm996, %vm1017
      %vm1021 = vmor %vm997, %vm1017
      %vm1022 = vmor %vm998, %vm1017
      %vm1023 = vmor %vm999, %vm1017
      %vm1024 = vmor %vm1000, %vm1017
      %vm1025 = vmor %vm1001, %vm1017
      %vm1026 = vmor %vm1002, %vm1017
      %vm1027 = vmor %vm1003, %vm1017
      %vm1028 = vmor %vm1004, %vm1017
      %vm1029 = vmor %vm1005, %vm1017
      %vm1030 = vmor %vm1006, %vm1017
      %vm1031 = vmor %vm1007, %vm1017
      %vm1032 = vmor %vm1008, %vm1017
      %vm1033 = vmor %vm1009, %vm1017
      %vm1034 = vmor %vm1010, %vm1017
      %vm1035 = vmor %vm1011, %vm1017
      %vm1036 = vmor %vm1012, %vm1017
      %vm1037 = vmor %vm1013, %vm1017
      %vm1038 = vcmp.lt.s32.totalorder %v974, 144
      %vm1039 = vcmp.lt.s32.totalorder %v975, 144
      %vm1040 = vcmp.lt.s32.totalorder %v976, 144
      %vm1041 = vcmp.lt.s32.totalorder %v977, 144
      %vm1042 = vcmp.lt.s32.totalorder %v978, 144
      %vm1043 = vcmp.lt.s32.totalorder %v979, 144
      %vm1044 = vcmp.lt.s32.totalorder %v980, 144
      %vm1045 = vcmp.lt.s32.totalorder %v981, 144
      %vm1046 = vcmp.lt.s32.totalorder %v982, 144
      %vm1047 = vcmp.lt.s32.totalorder %v983, 144
      %vm1048 = vcmp.lt.s32.totalorder %v984, 144
      %vm1049 = vcmp.lt.s32.totalorder %v985, 144
      %vm1050 = vcmp.lt.s32.totalorder %v986, 144
      %vm1051 = vcmp.lt.s32.totalorder %v987, 144
      %vm1052 = vcmp.lt.s32.totalorder %v988, 144
      %vm1053 = vcmp.lt.s32.totalorder %v989, 144
      %vm1054 = vcmp.lt.s32.totalorder %v990, 144
      %vm1055 = vcmp.lt.s32.totalorder %v991, 144
      %vm1056 = vcmp.lt.s32.totalorder %v992, 144
      %vm1057 = vcmp.lt.s32.totalorder %v993, 144
      %p1058 = scmp.lt.s32.totalorder %s31, 1
      %s1059 = scalar_select %p1058, 1, 0
      %v1060 = vstv %s1059
      %vm1061 = vcmp.eq.s32.totalorder %v1060, 1
      %vm1062 = vmor %vm1038, %vm1061
      %vm1063 = vmor %vm1039, %vm1061
      %vm1064 = vmor %vm1040, %vm1061
      %vm1065 = vmor %vm1041, %vm1061
      %vm1066 = vmor %vm1042, %vm1061
      %vm1067 = vmor %vm1043, %vm1061
      %vm1068 = vmor %vm1044, %vm1061
      %vm1069 = vmor %vm1045, %vm1061
      %vm1070 = vmor %vm1046, %vm1061
      %vm1071 = vmor %vm1047, %vm1061
      %vm1072 = vmor %vm1048, %vm1061
      %vm1073 = vmor %vm1049, %vm1061
      %vm1074 = vmor %vm1050, %vm1061
      %vm1075 = vmor %vm1051, %vm1061
      %vm1076 = vmor %vm1052, %vm1061
      %vm1077 = vmor %vm1053, %vm1061
      %vm1078 = vmor %vm1054, %vm1061
      %vm1079 = vmor %vm1055, %vm1061
      %vm1080 = vmor %vm1056, %vm1061
      %vm1081 = vmor %vm1057, %vm1061
      %vm1082 = vmand %vm1018, %vm1062
      %vm1083 = vmand %vm1019, %vm1063
      %vm1084 = vmand %vm1020, %vm1064
      %vm1085 = vmand %vm1021, %vm1065
      %vm1086 = vmand %vm1022, %vm1066
      %vm1087 = vmand %vm1023, %vm1067
      %vm1088 = vmand %vm1024, %vm1068
      %vm1089 = vmand %vm1025, %vm1069
      %vm1090 = vmand %vm1026, %vm1070
      %vm1091 = vmand %vm1027, %vm1071
      %vm1092 = vmand %vm1028, %vm1072
      %vm1093 = vmand %vm1029, %vm1073
      %vm1094 = vmand %vm1030, %vm1074
      %vm1095 = vmand %vm1031, %vm1075
      %vm1096 = vmand %vm1032, %vm1076
      %vm1097 = vmand %vm1033, %vm1077
      %vm1098 = vmand %vm1034, %vm1078
      %vm1099 = vmand %vm1035, %vm1079
      %vm1100 = vmand %vm1036, %vm1080
      %vm1101 = vmand %vm1037, %vm1081
      %v1102 = vsel %vm1082, 1, 0
      %v1103 = vsel %vm1083, 1, 0
      %v1104 = vsel %vm1084, 1, 0
      %v1105 = vsel %vm1085, 1, 0
      %v1106 = vsel %vm1086, 1, 0
      %v1107 = vsel %vm1087, 1, 0
      %v1108 = vsel %vm1088, 1, 0
      %v1109 = vsel %vm1089, 1, 0
      %v1110 = vsel %vm1090, 1, 0
      %v1111 = vsel %vm1091, 1, 0
      %v1112 = vsel %vm1092, 1, 0
      %v1113 = vsel %vm1093, 1, 0
      %v1114 = vsel %vm1094, 1, 0
      %v1115 = vsel %vm1095, 1, 0
      %v1116 = vsel %vm1096, 1, 0
      %v1117 = vsel %vm1097, 1, 0
      %v1118 = vsel %vm1098, 1, 0
      %v1119 = vsel %vm1099, 1, 0
      %v1120 = vsel %vm1100, 1, 0
      %v1121 = vsel %vm1101, 1, 0
      %vm1122 = vcmp.eq.s32.totalorder %v1102, 1
      %vm1123 = vcmp.eq.s32.totalorder %v1103, 1
      %vm1124 = vcmp.eq.s32.totalorder %v1104, 1
      %vm1125 = vcmp.eq.s32.totalorder %v1105, 1
      %vm1126 = vcmp.eq.s32.totalorder %v1106, 1
      %vm1127 = vcmp.eq.s32.totalorder %v1107, 1
      %vm1128 = vcmp.eq.s32.totalorder %v1108, 1
      %vm1129 = vcmp.eq.s32.totalorder %v1109, 1
      %vm1130 = vcmp.eq.s32.totalorder %v1110, 1
      %vm1131 = vcmp.eq.s32.totalorder %v1111, 1
      %vm1132 = vcmp.eq.s32.totalorder %v1112, 1
      %vm1133 = vcmp.eq.s32.totalorder %v1113, 1
      %vm1134 = vcmp.eq.s32.totalorder %v1114, 1
      %vm1135 = vcmp.eq.s32.totalorder %v1115, 1
      %vm1136 = vcmp.eq.s32.totalorder %v1116, 1
      %vm1137 = vcmp.eq.s32.totalorder %v1117, 1
      %vm1138 = vcmp.eq.s32.totalorder %v1118, 1
      %vm1139 = vcmp.eq.s32.totalorder %v1119, 1
      %vm1140 = vcmp.eq.s32.totalorder %v1120, 1
      %vm1141 = vcmp.eq.s32.totalorder %v1121, 1
      %v1142 = vsel %vm1122, %v953, 0.0
      %v1143 = vsel %vm1123, %v954, 0.0
      %v1144 = vsel %vm1124, %v955, 0.0
      %v1145 = vsel %vm1125, %v956, 0.0
      %v1146 = vsel %vm1126, %v957, 0.0
      %v1147 = vsel %vm1127, %v958, 0.0
      %v1148 = vsel %vm1128, %v959, 0.0
      %v1149 = vsel %vm1129, %v960, 0.0
      %v1150 = vsel %vm1130, %v961, 0.0
      %v1151 = vsel %vm1131, %v962, 0.0
      %v1152 = vsel %vm1132, %v963, 0.0
      %v1153 = vsel %vm1133, %v964, 0.0
      %v1154 = vsel %vm1134, %v965, 0.0
      %v1155 = vsel %vm1135, %v966, 0.0
      %v1156 = vsel %vm1136, %v967, 0.0
      %v1157 = vsel %vm1137, %v968, 0.0
      %v1158 = vsel %vm1138, %v969, 0.0
      %v1159 = vsel %vm1139, %v970, 0.0
      %v1160 = vsel %vm1140, %v971, 0.0
      %v1161 = vsel %vm1141, %v972, 0.0
      %vm1182 = vcmask 1040384
      %v1183 = vrot.slane %v1142, 7
      %v1184 = vrot.slane %v1143, 7
      %v1185 = vsel %vm1182, %v1183, %v1184
      %v1186 = vrot.slane %v1144, 7
      %v1187 = vsel %vm1182, %v1184, %v1186
      %v1188 = vrot.slane %v1145, 7
      %v1189 = vsel %vm1182, %v1186, %v1188
      %v1190 = vrot.slane %v1146, 7
      %v1191 = vsel %vm1182, %v1188, %v1190
      %v1192 = vrot.slane %v1147, 7
      %v1193 = vsel %vm1182, %v1190, %v1192
      %v1194 = vrot.slane %v1148, 7
      %v1195 = vsel %vm1182, %v1192, %v1194
      %v1196 = vrot.slane %v1149, 7
      %v1197 = vsel %vm1182, %v1194, %v1196
      %v1198 = vrot.slane %v1150, 7
      %v1199 = vsel %vm1182, %v1196, %v1198
      %v1200 = vrot.slane %v1151, 7
      %v1201 = vsel %vm1182, %v1198, %v1200
      %v1202 = vrot.slane %v1152, 7
      %v1203 = vsel %vm1182, %v1200, %v1202
      %v1204 = vrot.slane %v1153, 7
      %v1205 = vsel %vm1182, %v1202, %v1204
      %v1206 = vrot.slane %v1154, 7
      %v1207 = vsel %vm1182, %v1204, %v1206
      %v1208 = vrot.slane %v1155, 7
      %v1209 = vsel %vm1182, %v1206, %v1208
      %v1210 = vrot.slane %v1156, 7
      %v1211 = vsel %vm1182, %v1208, %v1210
      %v1212 = vrot.slane %v1157, 7
      %v1213 = vsel %vm1182, %v1210, %v1212
      %v1214 = vrot.slane %v1158, 7
      %v1215 = vsel %vm1182, %v1212, %v1214
      %v1216 = vrot.slane %v1159, 7
      %v1217 = vsel %vm1182, %v1214, %v1216
      %v1218 = vrot.slane %v1160, 7
      %v1219 = vsel %vm1182, %v1216, %v1218
      %v1220 = vrot.slane %v1161, 7
      %v1221 = vsel %vm1182, %v1218, %v1220
      %v1243 = vsel %vm1182, 0.0, %v1183
      %v1244 = vsel %vm1182, %v1220, 0.0
      %vm1245 = vcmp.lt.s32.totalorder %v974, 0
      %v1246 = vsub.s32 0, %v974
      %v1247 = vsel %vm1245, %v1246, %v974
      %v1248 = vshrl.u32 %v1247, 4
      %v1249 = vand.u32 %v1247, 15
      %v1250 = vsub.s32 0, %v1249
      %v1251 = vsel %vm1245, %v1250, %v1249
      %vm1252 = vcmp.lt.s32.totalorder %v975, 0
      %v1253 = vsub.s32 0, %v975
      %v1254 = vsel %vm1252, %v1253, %v975
      %v1255 = vshrl.u32 %v1254, 4
      %v1256 = vand.u32 %v1254, 15
      %v1257 = vsub.s32 0, %v1256
      %v1258 = vsel %vm1252, %v1257, %v1256
      %vm1259 = vcmp.lt.s32.totalorder %v976, 0
      %v1260 = vsub.s32 0, %v976
      %v1261 = vsel %vm1259, %v1260, %v976
      %v1262 = vshrl.u32 %v1261, 4
      %v1263 = vand.u32 %v1261, 15
      %v1264 = vsub.s32 0, %v1263
      %v1265 = vsel %vm1259, %v1264, %v1263
      %vm1266 = vcmp.lt.s32.totalorder %v977, 0
      %v1267 = vsub.s32 0, %v977
      %v1268 = vsel %vm1266, %v1267, %v977
      %v1269 = vshrl.u32 %v1268, 4
      %v1270 = vand.u32 %v1268, 15
      %v1271 = vsub.s32 0, %v1270
      %v1272 = vsel %vm1266, %v1271, %v1270
      %vm1273 = vcmp.lt.s32.totalorder %v978, 0
      %v1274 = vsub.s32 0, %v978
      %v1275 = vsel %vm1273, %v1274, %v978
      %v1276 = vshrl.u32 %v1275, 4
      %v1277 = vand.u32 %v1275, 15
      %v1278 = vsub.s32 0, %v1277
      %v1279 = vsel %vm1273, %v1278, %v1277
      %vm1280 = vcmp.lt.s32.totalorder %v979, 0
      %v1281 = vsub.s32 0, %v979
      %v1282 = vsel %vm1280, %v1281, %v979
      %v1283 = vshrl.u32 %v1282, 4
      %v1284 = vand.u32 %v1282, 15
      %v1285 = vsub.s32 0, %v1284
      %v1286 = vsel %vm1280, %v1285, %v1284
      %vm1287 = vcmp.lt.s32.totalorder %v980, 0
      %v1288 = vsub.s32 0, %v980
      %v1289 = vsel %vm1287, %v1288, %v980
      %v1290 = vshrl.u32 %v1289, 4
      %v1291 = vand.u32 %v1289, 15
      %v1292 = vsub.s32 0, %v1291
      %v1293 = vsel %vm1287, %v1292, %v1291
      %vm1294 = vcmp.lt.s32.totalorder %v981, 0
      %v1295 = vsub.s32 0, %v981
      %v1296 = vsel %vm1294, %v1295, %v981
      %v1297 = vshrl.u32 %v1296, 4
      %v1298 = vand.u32 %v1296, 15
      %v1299 = vsub.s32 0, %v1298
      %v1300 = vsel %vm1294, %v1299, %v1298
      %vm1301 = vcmp.lt.s32.totalorder %v982, 0
      %v1302 = vsub.s32 0, %v982
      %v1303 = vsel %vm1301, %v1302, %v982
      %v1304 = vshrl.u32 %v1303, 4
      %v1305 = vand.u32 %v1303, 15
      %v1306 = vsub.s32 0, %v1305
      %v1307 = vsel %vm1301, %v1306, %v1305
      %vm1308 = vcmp.lt.s32.totalorder %v983, 0
      %v1309 = vsub.s32 0, %v983
      %v1310 = vsel %vm1308, %v1309, %v983
      %v1311 = vshrl.u32 %v1310, 4
      %v1312 = vand.u32 %v1310, 15
      %v1313 = vsub.s32 0, %v1312
      %v1314 = vsel %vm1308, %v1313, %v1312
      %vm1315 = vcmp.lt.s32.totalorder %v984, 0
      %v1316 = vsub.s32 0, %v984
      %v1317 = vsel %vm1315, %v1316, %v984
      %v1318 = vshrl.u32 %v1317, 4
      %v1319 = vand.u32 %v1317, 15
      %v1320 = vsub.s32 0, %v1319
      %v1321 = vsel %vm1315, %v1320, %v1319
      %vm1322 = vcmp.lt.s32.totalorder %v985, 0
      %v1323 = vsub.s32 0, %v985
      %v1324 = vsel %vm1322, %v1323, %v985
      %v1325 = vshrl.u32 %v1324, 4
      %v1326 = vand.u32 %v1324, 15
      %v1327 = vsub.s32 0, %v1326
      %v1328 = vsel %vm1322, %v1327, %v1326
      %vm1329 = vcmp.lt.s32.totalorder %v986, 0
      %v1330 = vsub.s32 0, %v986
      %v1331 = vsel %vm1329, %v1330, %v986
      %v1332 = vshrl.u32 %v1331, 4
      %v1333 = vand.u32 %v1331, 15
      %v1334 = vsub.s32 0, %v1333
      %v1335 = vsel %vm1329, %v1334, %v1333
      %vm1336 = vcmp.lt.s32.totalorder %v987, 0
      %v1337 = vsub.s32 0, %v987
      %v1338 = vsel %vm1336, %v1337, %v987
      %v1339 = vshrl.u32 %v1338, 4
      %v1340 = vand.u32 %v1338, 15
      %v1341 = vsub.s32 0, %v1340
      %v1342 = vsel %vm1336, %v1341, %v1340
      %vm1343 = vcmp.lt.s32.totalorder %v988, 0
      %v1344 = vsub.s32 0, %v988
      %v1345 = vsel %vm1343, %v1344, %v988
      %v1346 = vshrl.u32 %v1345, 4
      %v1347 = vand.u32 %v1345, 15
      %v1348 = vsub.s32 0, %v1347
      %v1349 = vsel %vm1343, %v1348, %v1347
      %vm1350 = vcmp.lt.s32.totalorder %v989, 0
      %v1351 = vsub.s32 0, %v989
      %v1352 = vsel %vm1350, %v1351, %v989
      %v1353 = vshrl.u32 %v1352, 4
      %v1354 = vand.u32 %v1352, 15
      %v1355 = vsub.s32 0, %v1354
      %v1356 = vsel %vm1350, %v1355, %v1354
      %vm1357 = vcmp.ne.s32.totalorder %v1251, 0
      %vm1358 = vcmp.ne.s32.totalorder %v1258, 0
      %vm1359 = vcmp.ne.s32.totalorder %v1265, 0
      %vm1360 = vcmp.ne.s32.totalorder %v1272, 0
      %vm1361 = vcmp.ne.s32.totalorder %v1279, 0
      %vm1362 = vcmp.ne.s32.totalorder %v1286, 0
      %vm1363 = vcmp.ne.s32.totalorder %v1293, 0
      %vm1364 = vcmp.ne.s32.totalorder %v1300, 0
      %vm1365 = vcmp.ne.s32.totalorder %v1307, 0
      %vm1366 = vcmp.ne.s32.totalorder %v1314, 0
      %vm1367 = vcmp.ne.s32.totalorder %v1321, 0
      %vm1368 = vcmp.ne.s32.totalorder %v1328, 0
      %vm1369 = vcmp.ne.s32.totalorder %v1335, 0
      %vm1370 = vcmp.ne.s32.totalorder %v1342, 0
      %vm1371 = vcmp.ne.s32.totalorder %v1349, 0
      %vm1372 = vcmp.ne.s32.totalorder %v1356, 0
      %vm1373 = vcmp.lt.s32.totalorder %v1251, 0
      %vm1374 = vcmp.lt.s32.totalorder %v1258, 0
      %vm1375 = vcmp.lt.s32.totalorder %v1265, 0
      %vm1376 = vcmp.lt.s32.totalorder %v1272, 0
      %vm1377 = vcmp.lt.s32.totalorder %v1279, 0
      %vm1378 = vcmp.lt.s32.totalorder %v1286, 0
      %vm1379 = vcmp.lt.s32.totalorder %v1293, 0
      %vm1380 = vcmp.lt.s32.totalorder %v1300, 0
      %vm1381 = vcmp.lt.s32.totalorder %v1307, 0
      %vm1382 = vcmp.lt.s32.totalorder %v1314, 0
      %vm1383 = vcmp.lt.s32.totalorder %v1321, 0
      %vm1384 = vcmp.lt.s32.totalorder %v1328, 0
      %vm1385 = vcmp.lt.s32.totalorder %v1335, 0
      %vm1386 = vcmp.lt.s32.totalorder %v1342, 0
      %vm1387 = vcmp.lt.s32.totalorder %v1349, 0
      %vm1388 = vcmp.lt.s32.totalorder %v1356, 0
      %vm1389 = vmand %vm1373, %vm1357
      %vm1390 = vmand %vm1374, %vm1358
      %vm1391 = vmand %vm1375, %vm1359
      %vm1392 = vmand %vm1376, %vm1360
      %vm1393 = vmand %vm1377, %vm1361
      %vm1394 = vmand %vm1378, %vm1362
      %vm1395 = vmand %vm1379, %vm1363
      %vm1396 = vmand %vm1380, %vm1364
      %vm1397 = vmand %vm1381, %vm1365
      %vm1398 = vmand %vm1382, %vm1366
      %vm1399 = vmand %vm1383, %vm1367
      %vm1400 = vmand %vm1384, %vm1368
      %vm1401 = vmand %vm1385, %vm1369
      %vm1402 = vmand %vm1386, %vm1370
      %vm1403 = vmand %vm1387, %vm1371
      %vm1404 = vmand %vm1388, %vm1372
      %v1405 = vadd.s32 %v1251, 16
      %v1406 = vadd.s32 %v1258, 16
      %v1407 = vadd.s32 %v1265, 16
      %v1408 = vadd.s32 %v1272, 16
      %v1409 = vadd.s32 %v1279, 16
      %v1410 = vadd.s32 %v1286, 16
      %v1411 = vadd.s32 %v1293, 16
      %v1412 = vadd.s32 %v1300, 16
      %v1413 = vadd.s32 %v1307, 16
      %v1414 = vadd.s32 %v1314, 16
      %v1415 = vadd.s32 %v1321, 16
      %v1416 = vadd.s32 %v1328, 16
      %v1417 = vadd.s32 %v1335, 16
      %v1418 = vadd.s32 %v1342, 16
      %v1419 = vadd.s32 %v1349, 16
      %v1420 = vadd.s32 %v1356, 16
      %v1421 = vsel %vm1389, %v1405, %v1251
      %v1422 = vsel %vm1390, %v1406, %v1258
      %v1423 = vsel %vm1391, %v1407, %v1265
      %v1424 = vsel %vm1392, %v1408, %v1272
      %v1425 = vsel %vm1393, %v1409, %v1279
      %v1426 = vsel %vm1394, %v1410, %v1286
      %v1427 = vsel %vm1395, %v1411, %v1293
      %v1428 = vsel %vm1396, %v1412, %v1300
      %v1429 = vsel %vm1397, %v1413, %v1307
      %v1430 = vsel %vm1398, %v1414, %v1314
      %v1431 = vsel %vm1399, %v1415, %v1321
      %v1432 = vsel %vm1400, %v1416, %v1328
      %v1433 = vsel %vm1401, %v1417, %v1335
      %v1434 = vsel %vm1402, %v1418, %v1342
      %v1435 = vsel %vm1403, %v1419, %v1349
      %v1436 = vsel %vm1404, %v1420, %v1356
      %v1437 = vld [vmem:[%s6] sm:$0xff]
      %v1438 = vld [vmem:[%s6 + $0x8] sm:$0x1]
      %vm1439 = vcmp.ne.s32.totalorder %v1421, 0
      %vm1440 = vcmp.ne.s32.totalorder %v1422, 0
      %vm1441 = vcmp.ne.s32.totalorder %v1423, 0
      %vm1442 = vcmp.ne.s32.totalorder %v1424, 0
      %vm1443 = vcmp.ne.s32.totalorder %v1425, 0
      %vm1444 = vcmp.ne.s32.totalorder %v1426, 0
      %vm1445 = vcmp.ne.s32.totalorder %v1427, 0
      %vm1446 = vcmp.ne.s32.totalorder %v1428, 0
      %vm1447 = vcmp.ne.s32.totalorder %v1429, 0
      %vm1448 = vcmp.ne.s32.totalorder %v1430, 0
      %vm1449 = vcmp.ne.s32.totalorder %v1431, 0
      %vm1450 = vcmp.ne.s32.totalorder %v1432, 0
      %vm1451 = vcmp.ne.s32.totalorder %v1433, 0
      %vm1452 = vcmp.ne.s32.totalorder %v1434, 0
      %vm1453 = vcmp.ne.s32.totalorder %v1435, 0
      %vm1454 = vcmp.ne.s32.totalorder %v1436, 0
      %v1455 = vsel %vm1439, 1, 0
      %v1456 = vsel %vm1440, 1, 0
      %v1457 = vsel %vm1441, 1, 0
      %v1458 = vsel %vm1442, 1, 0
      %v1459 = vsel %vm1443, 1, 0
      %v1460 = vsel %vm1444, 1, 0
      %v1461 = vsel %vm1445, 1, 0
      %v1462 = vsel %vm1446, 1, 0
      %v1463 = vsel %vm1447, 1, 0
      %v1464 = vsel %vm1448, 1, 0
      %v1465 = vsel %vm1449, 1, 0
      %v1466 = vsel %vm1450, 1, 0
      %v1467 = vsel %vm1451, 1, 0
      %v1468 = vsel %vm1452, 1, 0
      %v1469 = vsel %vm1453, 1, 0
      %v1470 = vsel %vm1454, 1, 0
      %vm1471 = vcmp.eq.s32.totalorder %v1455, 1
      %vm1472 = vcmp.eq.s32.totalorder %v1456, 1
      %vm1473 = vcmp.eq.s32.totalorder %v1457, 1
      %vm1474 = vcmp.eq.s32.totalorder %v1458, 1
      %vm1475 = vcmp.eq.s32.totalorder %v1459, 1
      %vm1476 = vcmp.eq.s32.totalorder %v1460, 1
      %vm1477 = vcmp.eq.s32.totalorder %v1461, 1
      %vm1478 = vcmp.eq.s32.totalorder %v1462, 1
      %vm1479 = vcmp.eq.s32.totalorder %v1463, 1
      %vm1480 = vcmp.eq.s32.totalorder %v1464, 1
      %vm1481 = vcmp.eq.s32.totalorder %v1465, 1
      %vm1482 = vcmp.eq.s32.totalorder %v1466, 1
      %vm1483 = vcmp.eq.s32.totalorder %v1467, 1
      %vm1484 = vcmp.eq.s32.totalorder %v1468, 1
      %vm1485 = vcmp.eq.s32.totalorder %v1469, 1
      %vm1486 = vcmp.eq.s32.totalorder %v1470, 1
      %v1487 = vsel %vm1471, %v1243, 0.0
      %v1488 = vsel %vm1472, %v1185, 0.0
      %v1489 = vsel %vm1473, %v1187, 0.0
      %v1490 = vsel %vm1474, %v1189, 0.0
      %v1491 = vsel %vm1475, %v1191, 0.0
      %v1492 = vsel %vm1476, %v1193, 0.0
      %v1493 = vsel %vm1477, %v1195, 0.0
      %v1494 = vsel %vm1478, %v1197, 0.0
      %v1495 = vsel %vm1479, %v1199, 0.0
      %v1496 = vsel %vm1480, %v1201, 0.0
      %v1497 = vsel %vm1481, %v1203, 0.0
      %v1498 = vsel %vm1482, %v1205, 0.0
      %v1499 = vsel %vm1483, %v1207, 0.0
      %v1500 = vsel %vm1484, %v1209, 0.0
      %v1501 = vsel %vm1485, %v1211, 0.0
      %v1502 = vsel %vm1486, %v1213, 0.0
      %v1503 = vlaneseq
      %v1504 = vshrl.u32 %v1503, 7
      %v1505 = vsub.s32 0, %v1504
      %v1506 = vrot.slane %v1437, %v1505
      %v1507 = vmul.f32 %v1487, %v1506
      %v1508 = vmul.f32 %v1488, %v1506
      %v1509 = vmul.f32 %v1489, %v1506
      %v1510 = vmul.f32 %v1490, %v1506
      %v1511 = vmul.f32 %v1491, %v1506
      %v1512 = vmul.f32 %v1492, %v1506
      %v1513 = vmul.f32 %v1493, %v1506
      %v1514 = vmul.f32 %v1494, %v1506
      %v1515 = vmul.f32 %v1495, %v1506
      %v1516 = vmul.f32 %v1496, %v1506
      %v1517 = vmul.f32 %v1497, %v1506
      %v1518 = vmul.f32 %v1498, %v1506
      %v1519 = vmul.f32 %v1499, %v1506
      %v1520 = vmul.f32 %v1500, %v1506
      %v1521 = vmul.f32 %v1501, %v1506
      %v1522 = vmul.f32 %v1502, %v1506
      %v1523 = vadd.f32 %v1507, 0.0
      %v1524 = vadd.f32 %v1508, 0.0
      %v1525 = vadd.f32 %v1509, 0.0
      %v1526 = vadd.f32 %v1510, 0.0
      %v1527 = vadd.f32 %v1511, 0.0
      %v1528 = vadd.f32 %v1512, 0.0
      %v1529 = vadd.f32 %v1513, 0.0
      %v1530 = vadd.f32 %v1514, 0.0
      %v1531 = vadd.f32 %v1515, 0.0
      %v1532 = vadd.f32 %v1516, 0.0
      %v1533 = vadd.f32 %v1517, 0.0
      %v1534 = vadd.f32 %v1518, 0.0
      %v1535 = vadd.f32 %v1519, 0.0
      %v1536 = vadd.f32 %v1520, 0.0
      %v1537 = vadd.f32 %v1521, 0.0
      %v1538 = vadd.f32 %v1522, 0.0
      %v1539 = vlaneseq
      %v1540 = vshrl.u32 %v1539, 7
      %v1541 = vsub.s32 1, %v1540
      %v1542 = vrot.slane %v1437, %v1541
      %v1543 = vmul.f32 %v1243, %v1542
      %v1544 = vmul.f32 %v1185, %v1542
      %v1545 = vmul.f32 %v1187, %v1542
      %v1546 = vmul.f32 %v1189, %v1542
      %v1547 = vmul.f32 %v1191, %v1542
      %v1548 = vmul.f32 %v1193, %v1542
      %v1549 = vmul.f32 %v1195, %v1542
      %v1550 = vmul.f32 %v1197, %v1542
      %v1551 = vmul.f32 %v1199, %v1542
      %v1552 = vmul.f32 %v1201, %v1542
      %v1553 = vmul.f32 %v1203, %v1542
      %v1554 = vmul.f32 %v1205, %v1542
      %v1555 = vmul.f32 %v1207, %v1542
      %v1556 = vmul.f32 %v1209, %v1542
      %v1557 = vmul.f32 %v1211, %v1542
      %v1558 = vmul.f32 %v1213, %v1542
      %v1559 = vmul.f32 %v1215, %v1542
      %vm1577 = vcmask 1046528
      %v1578 = vrot.slane %v1543, 1
      %v1579 = vrot.slane %v1544, 1
      %v1580 = vsel %vm1577, %v1578, %v1579
      %v1581 = vrot.slane %v1545, 1
      %v1582 = vsel %vm1577, %v1579, %v1581
      %v1583 = vrot.slane %v1546, 1
      %v1584 = vsel %vm1577, %v1581, %v1583
      %v1585 = vrot.slane %v1547, 1
      %v1586 = vsel %vm1577, %v1583, %v1585
      %v1587 = vrot.slane %v1548, 1
      %v1588 = vsel %vm1577, %v1585, %v1587
      %v1589 = vrot.slane %v1549, 1
      %v1590 = vsel %vm1577, %v1587, %v1589
      %v1591 = vrot.slane %v1550, 1
      %v1592 = vsel %vm1577, %v1589, %v1591
      %v1593 = vrot.slane %v1551, 1
      %v1594 = vsel %vm1577, %v1591, %v1593
      %v1595 = vrot.slane %v1552, 1
      %v1596 = vsel %vm1577, %v1593, %v1595
      %v1597 = vrot.slane %v1553, 1
      %v1598 = vsel %vm1577, %v1595, %v1597
      %v1599 = vrot.slane %v1554, 1
      %v1600 = vsel %vm1577, %v1597, %v1599
      %v1601 = vrot.slane %v1555, 1
      %v1602 = vsel %vm1577, %v1599, %v1601
      %v1603 = vrot.slane %v1556, 1
      %v1604 = vsel %vm1577, %v1601, %v1603
      %v1605 = vrot.slane %v1557, 1
      %v1606 = vsel %vm1577, %v1603, %v1605
      %v1607 = vrot.slane %v1558, 1
      %v1608 = vsel %vm1577, %v1605, %v1607
      %v1609 = vrot.slane %v1559, 1
      %v1610 = vsel %vm1577, %v1607, %v1609
      %v1627 = vadd.f32 %v1523, %v1580
      %v1628 = vadd.f32 %v1524, %v1582
      %v1629 = vadd.f32 %v1525, %v1584
      %v1630 = vadd.f32 %v1526, %v1586
      %v1631 = vadd.f32 %v1527, %v1588
      %v1632 = vadd.f32 %v1528, %v1590
      %v1633 = vadd.f32 %v1529, %v1592
      %v1634 = vadd.f32 %v1530, %v1594
      %v1635 = vadd.f32 %v1531, %v1596
      %v1636 = vadd.f32 %v1532, %v1598
      %v1637 = vadd.f32 %v1533, %v1600
      %v1638 = vadd.f32 %v1534, %v1602
      %v1639 = vadd.f32 %v1535, %v1604
      %v1640 = vadd.f32 %v1536, %v1606
      %v1641 = vadd.f32 %v1537, %v1608
      %v1642 = vadd.f32 %v1538, %v1610
      %vm1643 = vcmp.ne.s32.totalorder %v1421, 15
      %vm1644 = vcmp.ne.s32.totalorder %v1422, 15
      %vm1645 = vcmp.ne.s32.totalorder %v1423, 15
      %vm1646 = vcmp.ne.s32.totalorder %v1424, 15
      %vm1647 = vcmp.ne.s32.totalorder %v1425, 15
      %vm1648 = vcmp.ne.s32.totalorder %v1426, 15
      %vm1649 = vcmp.ne.s32.totalorder %v1427, 15
      %vm1650 = vcmp.ne.s32.totalorder %v1428, 15
      %vm1651 = vcmp.ne.s32.totalorder %v1429, 15
      %vm1652 = vcmp.ne.s32.totalorder %v1430, 15
      %vm1653 = vcmp.ne.s32.totalorder %v1431, 15
      %vm1654 = vcmp.ne.s32.totalorder %v1432, 15
      %vm1655 = vcmp.ne.s32.totalorder %v1433, 15
      %vm1656 = vcmp.ne.s32.totalorder %v1434, 15
      %vm1657 = vcmp.ne.s32.totalorder %v1435, 15
      %vm1658 = vcmp.ne.s32.totalorder %v1436, 15
      %v1659 = vsel %vm1643, 1, 0
      %v1660 = vsel %vm1644, 1, 0
      %v1661 = vsel %vm1645, 1, 0
      %v1662 = vsel %vm1646, 1, 0
      %v1663 = vsel %vm1647, 1, 0
      %v1664 = vsel %vm1648, 1, 0
      %v1665 = vsel %vm1649, 1, 0
      %v1666 = vsel %vm1650, 1, 0
      %v1667 = vsel %vm1651, 1, 0
      %v1668 = vsel %vm1652, 1, 0
      %v1669 = vsel %vm1653, 1, 0
      %v1670 = vsel %vm1654, 1, 0
      %v1671 = vsel %vm1655, 1, 0
      %v1672 = vsel %vm1656, 1, 0
      %v1673 = vsel %vm1657, 1, 0
      %v1674 = vsel %vm1658, 1, 0
      %vm1675 = vcmp.eq.s32.totalorder %v1659, 1
      %vm1676 = vcmp.eq.s32.totalorder %v1660, 1
      %vm1677 = vcmp.eq.s32.totalorder %v1661, 1
      %vm1678 = vcmp.eq.s32.totalorder %v1662, 1
      %vm1679 = vcmp.eq.s32.totalorder %v1663, 1
      %vm1680 = vcmp.eq.s32.totalorder %v1664, 1
      %vm1681 = vcmp.eq.s32.totalorder %v1665, 1
      %vm1682 = vcmp.eq.s32.totalorder %v1666, 1
      %vm1683 = vcmp.eq.s32.totalorder %v1667, 1
      %vm1684 = vcmp.eq.s32.totalorder %v1668, 1
      %vm1685 = vcmp.eq.s32.totalorder %v1669, 1
      %vm1686 = vcmp.eq.s32.totalorder %v1670, 1
      %vm1687 = vcmp.eq.s32.totalorder %v1671, 1
      %vm1688 = vcmp.eq.s32.totalorder %v1672, 1
      %vm1689 = vcmp.eq.s32.totalorder %v1673, 1
      %vm1690 = vcmp.eq.s32.totalorder %v1674, 1
      %vm1692 = vcmask 1045504
      %v1693 = vrot.slane %v1243, 2
      %v1694 = vrot.slane %v1185, 2
      %v1695 = vsel %vm1692, %v1693, %v1694
      %v1696 = vrot.slane %v1187, 2
      %v1697 = vsel %vm1692, %v1694, %v1696
      %v1698 = vrot.slane %v1189, 2
      %v1699 = vsel %vm1692, %v1696, %v1698
      %v1700 = vrot.slane %v1191, 2
      %v1701 = vsel %vm1692, %v1698, %v1700
      %v1702 = vrot.slane %v1193, 2
      %v1703 = vsel %vm1692, %v1700, %v1702
      %v1704 = vrot.slane %v1195, 2
      %v1705 = vsel %vm1692, %v1702, %v1704
      %v1706 = vrot.slane %v1197, 2
      %v1707 = vsel %vm1692, %v1704, %v1706
      %v1708 = vrot.slane %v1199, 2
      %v1709 = vsel %vm1692, %v1706, %v1708
      %v1710 = vrot.slane %v1201, 2
      %v1711 = vsel %vm1692, %v1708, %v1710
      %v1712 = vrot.slane %v1203, 2
      %v1713 = vsel %vm1692, %v1710, %v1712
      %v1714 = vrot.slane %v1205, 2
      %v1715 = vsel %vm1692, %v1712, %v1714
      %v1716 = vrot.slane %v1207, 2
      %v1717 = vsel %vm1692, %v1714, %v1716
      %v1718 = vrot.slane %v1209, 2
      %v1719 = vsel %vm1692, %v1716, %v1718
      %v1720 = vrot.slane %v1211, 2
      %v1721 = vsel %vm1692, %v1718, %v1720
      %v1722 = vrot.slane %v1213, 2
      %v1723 = vsel %vm1692, %v1720, %v1722
      %v1724 = vrot.slane %v1215, 2
      %v1725 = vsel %vm1692, %v1722, %v1724
      %v1742 = vsel %vm1675, %v1695, 0.0
      %v1743 = vsel %vm1676, %v1697, 0.0
      %v1744 = vsel %vm1677, %v1699, 0.0
      %v1745 = vsel %vm1678, %v1701, 0.0
      %v1746 = vsel %vm1679, %v1703, 0.0
      %v1747 = vsel %vm1680, %v1705, 0.0
      %v1748 = vsel %vm1681, %v1707, 0.0
      %v1749 = vsel %vm1682, %v1709, 0.0
      %v1750 = vsel %vm1683, %v1711, 0.0
      %v1751 = vsel %vm1684, %v1713, 0.0
      %v1752 = vsel %vm1685, %v1715, 0.0
      %v1753 = vsel %vm1686, %v1717, 0.0
      %v1754 = vsel %vm1687, %v1719, 0.0
      %v1755 = vsel %vm1688, %v1721, 0.0
      %v1756 = vsel %vm1689, %v1723, 0.0
      %v1757 = vsel %vm1690, %v1725, 0.0
      %v1758 = vlaneseq
      %v1759 = vshrl.u32 %v1758, 7
      %v1760 = vsub.s32 2, %v1759
      %v1761 = vrot.slane %v1437, %v1760
      %v1762 = vmul.f32 %v1742, %v1761
      %v1763 = vmul.f32 %v1743, %v1761
      %v1764 = vmul.f32 %v1744, %v1761
      %v1765 = vmul.f32 %v1745, %v1761
      %v1766 = vmul.f32 %v1746, %v1761
      %v1767 = vmul.f32 %v1747, %v1761
      %v1768 = vmul.f32 %v1748, %v1761
      %v1769 = vmul.f32 %v1749, %v1761
      %v1770 = vmul.f32 %v1750, %v1761
      %v1771 = vmul.f32 %v1751, %v1761
      %v1772 = vmul.f32 %v1752, %v1761
      %v1773 = vmul.f32 %v1753, %v1761
      %v1774 = vmul.f32 %v1754, %v1761
      %v1775 = vmul.f32 %v1755, %v1761
      %v1776 = vmul.f32 %v1756, %v1761
      %v1777 = vmul.f32 %v1757, %v1761
      %v1778 = vadd.f32 %v1627, %v1762
      %v1779 = vadd.f32 %v1628, %v1763
      %v1780 = vadd.f32 %v1629, %v1764
      %v1781 = vadd.f32 %v1630, %v1765
      %v1782 = vadd.f32 %v1631, %v1766
      %v1783 = vadd.f32 %v1632, %v1767
      %v1784 = vadd.f32 %v1633, %v1768
      %v1785 = vadd.f32 %v1634, %v1769
      %v1786 = vadd.f32 %v1635, %v1770
      %v1787 = vadd.f32 %v1636, %v1771
      %v1788 = vadd.f32 %v1637, %v1772
      %v1789 = vadd.f32 %v1638, %v1773
      %v1790 = vadd.f32 %v1639, %v1774
      %v1791 = vadd.f32 %v1640, %v1775
      %v1792 = vadd.f32 %v1641, %v1776
      %v1793 = vadd.f32 %v1642, %v1777
      %v1794 = vsel %vm1471, %v1187, 0.0
      %v1795 = vsel %vm1472, %v1189, 0.0
      %v1796 = vsel %vm1473, %v1191, 0.0
      %v1797 = vsel %vm1474, %v1193, 0.0
      %v1798 = vsel %vm1475, %v1195, 0.0
      %v1799 = vsel %vm1476, %v1197, 0.0
      %v1800 = vsel %vm1477, %v1199, 0.0
      %v1801 = vsel %vm1478, %v1201, 0.0
      %v1802 = vsel %vm1479, %v1203, 0.0
      %v1803 = vsel %vm1480, %v1205, 0.0
      %v1804 = vsel %vm1481, %v1207, 0.0
      %v1805 = vsel %vm1482, %v1209, 0.0
      %v1806 = vsel %vm1483, %v1211, 0.0
      %v1807 = vsel %vm1484, %v1213, 0.0
      %v1808 = vsel %vm1485, %v1215, 0.0
      %v1809 = vsel %vm1486, %v1217, 0.0
      %v1810 = vlaneseq
      %v1811 = vshrl.u32 %v1810, 7
      %v1812 = vsub.s32 3, %v1811
      %v1813 = vrot.slane %v1437, %v1812
      %v1814 = vmul.f32 %v1794, %v1813
      %v1815 = vmul.f32 %v1795, %v1813
      %v1816 = vmul.f32 %v1796, %v1813
      %v1817 = vmul.f32 %v1797, %v1813
      %v1818 = vmul.f32 %v1798, %v1813
      %v1819 = vmul.f32 %v1799, %v1813
      %v1820 = vmul.f32 %v1800, %v1813
      %v1821 = vmul.f32 %v1801, %v1813
      %v1822 = vmul.f32 %v1802, %v1813
      %v1823 = vmul.f32 %v1803, %v1813
      %v1824 = vmul.f32 %v1804, %v1813
      %v1825 = vmul.f32 %v1805, %v1813
      %v1826 = vmul.f32 %v1806, %v1813
      %v1827 = vmul.f32 %v1807, %v1813
      %v1828 = vmul.f32 %v1808, %v1813
      %v1829 = vmul.f32 %v1809, %v1813
      %v1830 = vadd.f32 %v1778, %v1814
      %v1831 = vadd.f32 %v1779, %v1815
      %v1832 = vadd.f32 %v1780, %v1816
      %v1833 = vadd.f32 %v1781, %v1817
      %v1834 = vadd.f32 %v1782, %v1818
      %v1835 = vadd.f32 %v1783, %v1819
      %v1836 = vadd.f32 %v1784, %v1820
      %v1837 = vadd.f32 %v1785, %v1821
      %v1838 = vadd.f32 %v1786, %v1822
      %v1839 = vadd.f32 %v1787, %v1823
      %v1840 = vadd.f32 %v1788, %v1824
      %v1841 = vadd.f32 %v1789, %v1825
      %v1842 = vadd.f32 %v1790, %v1826
      %v1843 = vadd.f32 %v1791, %v1827
      %v1844 = vadd.f32 %v1792, %v1828
      %v1845 = vadd.f32 %v1793, %v1829
      %v1846 = vlaneseq
      %v1847 = vshrl.u32 %v1846, 7
      %v1848 = vsub.s32 4, %v1847
      %v1849 = vrot.slane %v1437, %v1848
      %v1850 = vmul.f32 %v1187, %v1849
      %v1851 = vmul.f32 %v1189, %v1849
      %v1852 = vmul.f32 %v1191, %v1849
      %v1853 = vmul.f32 %v1193, %v1849
      %v1854 = vmul.f32 %v1195, %v1849
      %v1855 = vmul.f32 %v1197, %v1849
      %v1856 = vmul.f32 %v1199, %v1849
      %v1857 = vmul.f32 %v1201, %v1849
      %v1858 = vmul.f32 %v1203, %v1849
      %v1859 = vmul.f32 %v1205, %v1849
      %v1860 = vmul.f32 %v1207, %v1849
      %v1861 = vmul.f32 %v1209, %v1849
      %v1862 = vmul.f32 %v1211, %v1849
      %v1863 = vmul.f32 %v1213, %v1849
      %v1864 = vmul.f32 %v1215, %v1849
      %v1865 = vmul.f32 %v1217, %v1849
      %v1866 = vmul.f32 %v1219, %v1849
      %v1884 = vrot.slane %v1850, 1
      %v1885 = vrot.slane %v1851, 1
      %v1886 = vsel %vm1577, %v1884, %v1885
      %v1887 = vrot.slane %v1852, 1
      %v1888 = vsel %vm1577, %v1885, %v1887
      %v1889 = vrot.slane %v1853, 1
      %v1890 = vsel %vm1577, %v1887, %v1889
      %v1891 = vrot.slane %v1854, 1
      %v1892 = vsel %vm1577, %v1889, %v1891
      %v1893 = vrot.slane %v1855, 1
      %v1894 = vsel %vm1577, %v1891, %v1893
      %v1895 = vrot.slane %v1856, 1
      %v1896 = vsel %vm1577, %v1893, %v1895
      %v1897 = vrot.slane %v1857, 1
      %v1898 = vsel %vm1577, %v1895, %v1897
      %v1899 = vrot.slane %v1858, 1
      %v1900 = vsel %vm1577, %v1897, %v1899
      %v1901 = vrot.slane %v1859, 1
      %v1902 = vsel %vm1577, %v1899, %v1901
      %v1903 = vrot.slane %v1860, 1
      %v1904 = vsel %vm1577, %v1901, %v1903
      %v1905 = vrot.slane %v1861, 1
      %v1906 = vsel %vm1577, %v1903, %v1905
      %v1907 = vrot.slane %v1862, 1
      %v1908 = vsel %vm1577, %v1905, %v1907
      %v1909 = vrot.slane %v1863, 1
      %v1910 = vsel %vm1577, %v1907, %v1909
      %v1911 = vrot.slane %v1864, 1
      %v1912 = vsel %vm1577, %v1909, %v1911
      %v1913 = vrot.slane %v1865, 1
      %v1914 = vsel %vm1577, %v1911, %v1913
      %v1915 = vrot.slane %v1866, 1
      %v1916 = vsel %vm1577, %v1913, %v1915
      %v1933 = vadd.f32 %v1830, %v1886
      %v1934 = vadd.f32 %v1831, %v1888
      %v1935 = vadd.f32 %v1832, %v1890
      %v1936 = vadd.f32 %v1833, %v1892
      %v1937 = vadd.f32 %v1834, %v1894
      %v1938 = vadd.f32 %v1835, %v1896
      %v1939 = vadd.f32 %v1836, %v1898
      %v1940 = vadd.f32 %v1837, %v1900
      %v1941 = vadd.f32 %v1838, %v1902
      %v1942 = vadd.f32 %v1839, %v1904
      %v1943 = vadd.f32 %v1840, %v1906
      %v1944 = vadd.f32 %v1841, %v1908
      %v1945 = vadd.f32 %v1842, %v1910
      %v1946 = vadd.f32 %v1843, %v1912
      %v1947 = vadd.f32 %v1844, %v1914
      %v1948 = vadd.f32 %v1845, %v1916
      %v1949 = vrot.slane %v1217, 2
      %v1950 = vsel %vm1692, %v1724, %v1949
      %v1951 = vrot.slane %v1219, 2
      %v1952 = vsel %vm1692, %v1949, %v1951
      %v1955 = vsel %vm1675, %v1699, 0.0
      %v1956 = vsel %vm1676, %v1701, 0.0
      %v1957 = vsel %vm1677, %v1703, 0.0
      %v1958 = vsel %vm1678, %v1705, 0.0
      %v1959 = vsel %vm1679, %v1707, 0.0
      %v1960 = vsel %vm1680, %v1709, 0.0
      %v1961 = vsel %vm1681, %v1711, 0.0
      %v1962 = vsel %vm1682, %v1713, 0.0
      %v1963 = vsel %vm1683, %v1715, 0.0
      %v1964 = vsel %vm1684, %v1717, 0.0
      %v1965 = vsel %vm1685, %v1719, 0.0
      %v1966 = vsel %vm1686, %v1721, 0.0
      %v1967 = vsel %vm1687, %v1723, 0.0
      %v1968 = vsel %vm1688, %v1725, 0.0
      %v1969 = vsel %vm1689, %v1950, 0.0
      %v1970 = vsel %vm1690, %v1952, 0.0
      %v1971 = vlaneseq
      %v1972 = vshrl.u32 %v1971, 7
      %v1973 = vsub.s32 5, %v1972
      %v1974 = vrot.slane %v1437, %v1973
      %v1975 = vmul.f32 %v1955, %v1974
      %v1976 = vmul.f32 %v1956, %v1974
      %v1977 = vmul.f32 %v1957, %v1974
      %v1978 = vmul.f32 %v1958, %v1974
      %v1979 = vmul.f32 %v1959, %v1974
      %v1980 = vmul.f32 %v1960, %v1974
      %v1981 = vmul.f32 %v1961, %v1974
      %v1982 = vmul.f32 %v1962, %v1974
      %v1983 = vmul.f32 %v1963, %v1974
      %v1984 = vmul.f32 %v1964, %v1974
      %v1985 = vmul.f32 %v1965, %v1974
      %v1986 = vmul.f32 %v1966, %v1974
      %v1987 = vmul.f32 %v1967, %v1974
      %v1988 = vmul.f32 %v1968, %v1974
      %v1989 = vmul.f32 %v1969, %v1974
      %v1990 = vmul.f32 %v1970, %v1974
      %v1991 = vadd.f32 %v1933, %v1975
      %v1992 = vadd.f32 %v1934, %v1976
      %v1993 = vadd.f32 %v1935, %v1977
      %v1994 = vadd.f32 %v1936, %v1978
      %v1995 = vadd.f32 %v1937, %v1979
      %v1996 = vadd.f32 %v1938, %v1980
      %v1997 = vadd.f32 %v1939, %v1981
      %v1998 = vadd.f32 %v1940, %v1982
      %v1999 = vadd.f32 %v1941, %v1983
      %v2000 = vadd.f32 %v1942, %v1984
      %v2001 = vadd.f32 %v1943, %v1985
      %v2002 = vadd.f32 %v1944, %v1986
      %v2003 = vadd.f32 %v1945, %v1987
      %v2004 = vadd.f32 %v1946, %v1988
      %v2005 = vadd.f32 %v1947, %v1989
      %v2006 = vadd.f32 %v1948, %v1990
      %v2007 = vsel %vm1471, %v1191, 0.0
      %v2008 = vsel %vm1472, %v1193, 0.0
      %v2009 = vsel %vm1473, %v1195, 0.0
      %v2010 = vsel %vm1474, %v1197, 0.0
      %v2011 = vsel %vm1475, %v1199, 0.0
      %v2012 = vsel %vm1476, %v1201, 0.0
      %v2013 = vsel %vm1477, %v1203, 0.0
      %v2014 = vsel %vm1478, %v1205, 0.0
      %v2015 = vsel %vm1479, %v1207, 0.0
      %v2016 = vsel %vm1480, %v1209, 0.0
      %v2017 = vsel %vm1481, %v1211, 0.0
      %v2018 = vsel %vm1482, %v1213, 0.0
      %v2019 = vsel %vm1483, %v1215, 0.0
      %v2020 = vsel %vm1484, %v1217, 0.0
      %v2021 = vsel %vm1485, %v1219, 0.0
      %v2022 = vsel %vm1486, %v1221, 0.0
      %v2023 = vlaneseq
      %v2024 = vshrl.u32 %v2023, 7
      %v2025 = vsub.s32 6, %v2024
      %v2026 = vrot.slane %v1437, %v2025
      %v2027 = vmul.f32 %v2007, %v2026
      %v2028 = vmul.f32 %v2008, %v2026
      %v2029 = vmul.f32 %v2009, %v2026
      %v2030 = vmul.f32 %v2010, %v2026
      %v2031 = vmul.f32 %v2011, %v2026
      %v2032 = vmul.f32 %v2012, %v2026
      %v2033 = vmul.f32 %v2013, %v2026
      %v2034 = vmul.f32 %v2014, %v2026
      %v2035 = vmul.f32 %v2015, %v2026
      %v2036 = vmul.f32 %v2016, %v2026
      %v2037 = vmul.f32 %v2017, %v2026
      %v2038 = vmul.f32 %v2018, %v2026
      %v2039 = vmul.f32 %v2019, %v2026
      %v2040 = vmul.f32 %v2020, %v2026
      %v2041 = vmul.f32 %v2021, %v2026
      %v2042 = vmul.f32 %v2022, %v2026
      %v2043 = vadd.f32 %v1991, %v2027
      %v2044 = vadd.f32 %v1992, %v2028
      %v2045 = vadd.f32 %v1993, %v2029
      %v2046 = vadd.f32 %v1994, %v2030
      %v2047 = vadd.f32 %v1995, %v2031
      %v2048 = vadd.f32 %v1996, %v2032
      %v2049 = vadd.f32 %v1997, %v2033
      %v2050 = vadd.f32 %v1998, %v2034
      %v2051 = vadd.f32 %v1999, %v2035
      %v2052 = vadd.f32 %v2000, %v2036
      %v2053 = vadd.f32 %v2001, %v2037
      %v2054 = vadd.f32 %v2002, %v2038
      %v2055 = vadd.f32 %v2003, %v2039
      %v2056 = vadd.f32 %v2004, %v2040
      %v2057 = vadd.f32 %v2005, %v2041
      %v2058 = vadd.f32 %v2006, %v2042
      %v2059 = vlaneseq
      %v2060 = vshrl.u32 %v2059, 7
      %v2061 = vsub.s32 7, %v2060
      %v2062 = vrot.slane %v1437, %v2061
      %v2063 = vmul.f32 %v1191, %v2062
      %v2064 = vmul.f32 %v1193, %v2062
      %v2065 = vmul.f32 %v1195, %v2062
      %v2066 = vmul.f32 %v1197, %v2062
      %v2067 = vmul.f32 %v1199, %v2062
      %v2068 = vmul.f32 %v1201, %v2062
      %v2069 = vmul.f32 %v1203, %v2062
      %v2070 = vmul.f32 %v1205, %v2062
      %v2071 = vmul.f32 %v1207, %v2062
      %v2072 = vmul.f32 %v1209, %v2062
      %v2073 = vmul.f32 %v1211, %v2062
      %v2074 = vmul.f32 %v1213, %v2062
      %v2075 = vmul.f32 %v1215, %v2062
      %v2076 = vmul.f32 %v1217, %v2062
      %v2077 = vmul.f32 %v1219, %v2062
      %v2078 = vmul.f32 %v1221, %v2062
      %v2079 = vmul.f32 %v1244, %v2062
      %v2097 = vrot.slane %v2063, 1
      %v2098 = vrot.slane %v2064, 1
      %v2099 = vsel %vm1577, %v2097, %v2098
      %v2100 = vrot.slane %v2065, 1
      %v2101 = vsel %vm1577, %v2098, %v2100
      %v2102 = vrot.slane %v2066, 1
      %v2103 = vsel %vm1577, %v2100, %v2102
      %v2104 = vrot.slane %v2067, 1
      %v2105 = vsel %vm1577, %v2102, %v2104
      %v2106 = vrot.slane %v2068, 1
      %v2107 = vsel %vm1577, %v2104, %v2106
      %v2108 = vrot.slane %v2069, 1
      %v2109 = vsel %vm1577, %v2106, %v2108
      %v2110 = vrot.slane %v2070, 1
      %v2111 = vsel %vm1577, %v2108, %v2110
      %v2112 = vrot.slane %v2071, 1
      %v2113 = vsel %vm1577, %v2110, %v2112
      %v2114 = vrot.slane %v2072, 1
      %v2115 = vsel %vm1577, %v2112, %v2114
      %v2116 = vrot.slane %v2073, 1
      %v2117 = vsel %vm1577, %v2114, %v2116
      %v2118 = vrot.slane %v2074, 1
      %v2119 = vsel %vm1577, %v2116, %v2118
      %v2120 = vrot.slane %v2075, 1
      %v2121 = vsel %vm1577, %v2118, %v2120
      %v2122 = vrot.slane %v2076, 1
      %v2123 = vsel %vm1577, %v2120, %v2122
      %v2124 = vrot.slane %v2077, 1
      %v2125 = vsel %vm1577, %v2122, %v2124
      %v2126 = vrot.slane %v2078, 1
      %v2127 = vsel %vm1577, %v2124, %v2126
      %v2128 = vrot.slane %v2079, 1
      %v2129 = vsel %vm1577, %v2126, %v2128
      %v2146 = vadd.f32 %v2043, %v2099
      %v2147 = vadd.f32 %v2044, %v2101
      %v2148 = vadd.f32 %v2045, %v2103
      %v2149 = vadd.f32 %v2046, %v2105
      %v2150 = vadd.f32 %v2047, %v2107
      %v2151 = vadd.f32 %v2048, %v2109
      %v2152 = vadd.f32 %v2049, %v2111
      %v2153 = vadd.f32 %v2050, %v2113
      %v2154 = vadd.f32 %v2051, %v2115
      %v2155 = vadd.f32 %v2052, %v2117
      %v2156 = vadd.f32 %v2053, %v2119
      %v2157 = vadd.f32 %v2054, %v2121
      %v2158 = vadd.f32 %v2055, %v2123
      %v2159 = vadd.f32 %v2056, %v2125
      %v2160 = vadd.f32 %v2057, %v2127
      %v2161 = vadd.f32 %v2058, %v2129
      %v2163 = vrot.slane %v1221, 2
      %v2164 = vsel %vm1692, %v1951, %v2163
      %v2165 = vrot.slane %v1244, 2
      %v2166 = vsel %vm1692, %v2163, %v2165
      %v2169 = vsel %vm1675, %v1703, 0.0
      %v2170 = vsel %vm1676, %v1705, 0.0
      %v2171 = vsel %vm1677, %v1707, 0.0
      %v2172 = vsel %vm1678, %v1709, 0.0
      %v2173 = vsel %vm1679, %v1711, 0.0
      %v2174 = vsel %vm1680, %v1713, 0.0
      %v2175 = vsel %vm1681, %v1715, 0.0
      %v2176 = vsel %vm1682, %v1717, 0.0
      %v2177 = vsel %vm1683, %v1719, 0.0
      %v2178 = vsel %vm1684, %v1721, 0.0
      %v2179 = vsel %vm1685, %v1723, 0.0
      %v2180 = vsel %vm1686, %v1725, 0.0
      %v2181 = vsel %vm1687, %v1950, 0.0
      %v2182 = vsel %vm1688, %v1952, 0.0
      %v2183 = vsel %vm1689, %v2164, 0.0
      %v2184 = vsel %vm1690, %v2166, 0.0
      %v2185 = vlaneseq
      %v2186 = vshrl.u32 %v2185, 7
      %v2187 = vsub.s32 0, %v2186
      %v2188 = vrot.slane %v1438, %v2187
      %v2189 = vmul.f32 %v2169, %v2188
      %v2190 = vmul.f32 %v2170, %v2188
      %v2191 = vmul.f32 %v2171, %v2188
      %v2192 = vmul.f32 %v2172, %v2188
      %v2193 = vmul.f32 %v2173, %v2188
      %v2194 = vmul.f32 %v2174, %v2188
      %v2195 = vmul.f32 %v2175, %v2188
      %v2196 = vmul.f32 %v2176, %v2188
      %v2197 = vmul.f32 %v2177, %v2188
      %v2198 = vmul.f32 %v2178, %v2188
      %v2199 = vmul.f32 %v2179, %v2188
      %v2200 = vmul.f32 %v2180, %v2188
      %v2201 = vmul.f32 %v2181, %v2188
      %v2202 = vmul.f32 %v2182, %v2188
      %v2203 = vmul.f32 %v2183, %v2188
      %v2204 = vmul.f32 %v2184, %v2188
      %v2205 = vadd.f32 %v2146, %v2189
      %v2206 = vadd.f32 %v2147, %v2190
      %v2207 = vadd.f32 %v2148, %v2191
      %v2208 = vadd.f32 %v2149, %v2192
      %v2209 = vadd.f32 %v2150, %v2193
      %v2210 = vadd.f32 %v2151, %v2194
      %v2211 = vadd.f32 %v2152, %v2195
      %v2212 = vadd.f32 %v2153, %v2196
      %v2213 = vadd.f32 %v2154, %v2197
      %v2214 = vadd.f32 %v2155, %v2198
      %v2215 = vadd.f32 %v2156, %v2199
      %v2216 = vadd.f32 %v2157, %v2200
      %v2217 = vadd.f32 %v2158, %v2201
      %v2218 = vadd.f32 %v2159, %v2202
      %v2219 = vadd.f32 %v2160, %v2203
      %v2220 = vadd.f32 %v2161, %v2204
      %v2221 = vld [vmem:[%s7] sm:$0x1]
      %v2222 = vld [vmem:[%s8] sm:$0x1]
      %v2224 = vlaneseq
      %v2225 = vshrl.u32 %v2224, 7
      %v2226 = vsub.s32 0, %v2225
      %v2227 = vrot.slane %v2221, %v2226
      %v2229 = vmul.f32 %v2205, %v2227
      %v2230 = vmul.f32 %v2206, %v2227
      %v2231 = vmul.f32 %v2207, %v2227
      %v2232 = vmul.f32 %v2208, %v2227
      %v2233 = vmul.f32 %v2209, %v2227
      %v2234 = vmul.f32 %v2210, %v2227
      %v2235 = vmul.f32 %v2211, %v2227
      %v2236 = vmul.f32 %v2212, %v2227
      %v2237 = vmul.f32 %v2213, %v2227
      %v2238 = vmul.f32 %v2214, %v2227
      %v2239 = vmul.f32 %v2215, %v2227
      %v2240 = vmul.f32 %v2216, %v2227
      %v2241 = vmul.f32 %v2217, %v2227
      %v2242 = vmul.f32 %v2218, %v2227
      %v2243 = vmul.f32 %v2219, %v2227
      %v2244 = vmul.f32 %v2220, %v2227
      %v2246 = vlaneseq
      %v2247 = vshrl.u32 %v2246, 7
      %v2248 = vsub.s32 0, %v2247
      %v2249 = vrot.slane %v2222, %v2248
      %v2251 = vadd.f32 %v2229, %v2249
      %v2252 = vadd.f32 %v2230, %v2249
      %v2253 = vadd.f32 %v2231, %v2249
      %v2254 = vadd.f32 %v2232, %v2249
      %v2255 = vadd.f32 %v2233, %v2249
      %v2256 = vadd.f32 %v2234, %v2249
      %v2257 = vadd.f32 %v2235, %v2249
      %v2258 = vadd.f32 %v2236, %v2249
      %v2259 = vadd.f32 %v2237, %v2249
      %v2260 = vadd.f32 %v2238, %v2249
      %v2261 = vadd.f32 %v2239, %v2249
      %v2262 = vadd.f32 %v2240, %v2249
      %v2263 = vadd.f32 %v2241, %v2249
      %v2264 = vadd.f32 %v2242, %v2249
      %v2265 = vadd.f32 %v2243, %v2249
      %v2266 = vadd.f32 %v2244, %v2249
      %v2267 = vmax.f32 %v2251, 0.0
      %v2268 = vmax.f32 %v2252, 0.0
      %v2269 = vmax.f32 %v2253, 0.0
      %v2270 = vmax.f32 %v2254, 0.0
      %v2271 = vmax.f32 %v2255, 0.0
      %v2272 = vmax.f32 %v2256, 0.0
      %v2273 = vmax.f32 %v2257, 0.0
      %v2274 = vmax.f32 %v2258, 0.0
      %v2275 = vmax.f32 %v2259, 0.0
      %v2276 = vmax.f32 %v2260, 0.0
      %v2277 = vmax.f32 %v2261, 0.0
      %v2278 = vmax.f32 %v2262, 0.0
      %v2279 = vmax.f32 %v2263, 0.0
      %v2280 = vmax.f32 %v2264, 0.0
      %v2281 = vmax.f32 %v2265, 0.0
      %v2282 = vmax.f32 %v2266, 0.0
      %v2283 = vld [vmem:[%s9] sm:$0xff]
      %v2284 = vld [vmem:[%s9 + $0x8] sm:$0xff]
      %vm2285 = vcmask 130048
      %v2287 = vsel %vm2285, %v2267, 0
      %v2290 = vsel %vm2285, %v2268, 0
      %v2293 = vsel %vm2285, %v2269, 0
      %v2296 = vsel %vm2285, %v2270, 0
      %v2299 = vsel %vm2285, %v2271, 0
      %v2302 = vsel %vm2285, %v2272, 0
      %v2305 = vsel %vm2285, %v2273, 0
      %v2308 = vsel %vm2285, %v2274, 0
      %v2311 = vsel %vm2285, %v2275, 0
      %v2314 = vsel %vm2285, %v2276, 0
      %v2317 = vsel %vm2285, %v2277, 0
      %v2320 = vsel %vm2285, %v2278, 0
      %v2323 = vsel %vm2285, %v2279, 0
      %v2326 = vsel %vm2285, %v2280, 0
      %v2329 = vsel %vm2285, %v2281, 0
      %v2332 = vsel %vm2285, %v2282, 0
      %2334 = vmatprep.subr.mxu0 0.0
      %2335 = vmatpush1.msra.mxu0 %v2283
      %2336 = vmatprep.subr.mxu0 0.0
      %2337 = vmatpush1.msra.mxu0 %v2284
      %2338 = vmatprep.subr.mxu0 0.0
      %2339 = vmatpush1.msra.mxu0 0.0
      %2340 = vmatprep.subr.mxu0 0.0
      %2341 = vmatpush1.msra.mxu0 0.0
      %2342 = vmatprep.subr.mxu0 0.0
      %2343 = vmatpush1.msra.mxu0 0.0
      %2344 = vmatprep.subr.mxu0 0.0
      %2345 = vmatpush1.msra.mxu0 0.0
      %2346 = vmatprep.subr.mxu0 0.0
      %2347 = vmatpush1.msra.mxu0 0.0
      %2348 = vmatprep.subr.mxu0 0.0
      %2349 = vmatpush1.msra.mxu0 0.0
      %2350 = vmatprep.subr.mxu0 0.0
      %2351 = vmatpush1.msra.mxu0 0.0
      %2352 = vmatprep.subr.mxu0 0.0
      %2353 = vmatpush1.msra.mxu0 0.0
      %2354 = vmatprep.subr.mxu0 0.0
      %2355 = vmatpush1.msra.mxu0 0.0
      %2356 = vmatprep.subr.mxu0 0.0
      %2357 = vmatpush1.msra.mxu0 0.0
      %2358 = vmatprep.subr.mxu0 0.0
      %2359 = vmatpush1.msra.mxu0 0.0
      %2360 = vmatprep.subr.mxu0 0.0
      %2361 = vmatpush1.msra.mxu0 0.0
      %2362 = vmatprep.subr.mxu0 0.0
      %2363 = vmatpush1.msra.mxu0 0.0
      %2364 = vmatprep.subr.mxu0 0.0
      %2365 = vmatpush1.msra.mxu0 0.0
      %2366 = vmatprep.subr.mxu0 0.0
      %2367 = vmatpush1.msra.mxu0 0.0
      %2368 = vmatprep.subr.mxu0 0.0
      %2369 = vmatpush1.msra.mxu0 0.0
      %2370 = vmatprep.subr.mxu0 0.0
      %2371 = vmatpush1.msra.mxu0 0.0
      %2372 = vmatprep.subr.mxu0 0.0
      %2373 = vmatpush1.msra.mxu0 0.0
      %2374 = vmatprep.subr.mxu0 0.0
      %2375 = vmatpush1.msra.mxu0 0.0
      %2376 = vmatprep.subr.mxu0 0.0
      %2377 = vmatpush1.msra.mxu0 0.0
      %2378 = vmatprep.subr.mxu0 0.0
      %2379 = vmatpush1.msra.mxu0 0.0
      %2380 = vmatprep.subr.mxu0 0.0
      %2381 = vmatpush1.msra.mxu0 0.0
      %2382 = vmatprep.subr.mxu0 0.0
      %2383 = vmatpush1.msra.mxu0 0.0
      %2384 = vmatprep.subr.mxu0 0.0
      %2385 = vmatpush1.msra.mxu0 0.0
      %2386 = vmatprep.subr.mxu0 0.0
      %2387 = vmatpush1.msra.mxu0 0.0
      %2388 = vmatprep.subr.mxu0 0.0
      %2389 = vmatpush1.msra.mxu0 0.0
      %2390 = vmatprep.subr.mxu0 0.0
      %2391 = vmatpush1.msra.mxu0 0.0
      %2392 = vmatprep.subr.mxu0 0.0
      %2393 = vmatpush1.msra.mxu0 0.0
      %2394 = vmatprep.subr.mxu0 0.0
      %2395 = vmatpush1.msra.mxu0 0.0
      %2396 = vmatprep.subr.mxu0 0.0
      %2397 = vmatpush1.msra.mxu0 0.0
      %2398 = vmatprep.mubr.f32.mxu0 0.0
      %2399 = vmatmul.mubr.f32.gmra.mrb[0].mxu0 %v2287
      %v2400 = vpop.f32.mrb[0].mxu0
      %v2401 = vadd.f32 0.0, %v2400
      %v2402 = vpop.f32.mrb[0].mxu0
      %2403 = vmatprep.mubr.f32.mxu0 0.0
      %2404 = vmatmul.mubr.f32.gmra.mrb[0].mxu0 %v2290
      %v2405 = vpop.f32.mrb[0].mxu0
      %v2406 = vadd.f32 0.0, %v2405
      %v2407 = vpop.f32.mrb[0].mxu0
      %2408 = vmatprep.mubr.f32.mxu0 0.0
      %2409 = vmatmul.mubr.f32.gmra.mrb[0].mxu0 %v2293
      %v2410 = vpop.f32.mrb[0].mxu0
      %v2411 = vadd.f32 0.0, %v2410
      %v2412 = vpop.f32.mrb[0].mxu0
      %2413 = vmatprep.mubr.f32.mxu0 0.0
      %2414 = vmatmul.mubr.f32.gmra.mrb[0].mxu0 %v2296
      %v2415 = vpop.f32.mrb[0].mxu0
      %v2416 = vadd.f32 0.0, %v2415
      %v2417 = vpop.f32.mrb[0].mxu0
      %2418 = vmatprep.mubr.f32.mxu0 0.0
      %2419 = vmatmul.mubr.f32.gmra.mrb[0].mxu0 %v2299
      %v2420 = vpop.f32.mrb[0].mxu0
      %v2421 = vadd.f32 0.0, %v2420
      %v2422 = vpop.f32.mrb[0].mxu0
      %2423 = vmatprep.mubr.f32.mxu0 0.0
      %2424 = vmatmul.mubr.f32.gmra.mrb[0].mxu0 %v2302
      %v2425 = vpop.f32.mrb[0].mxu0
      %v2426 = vadd.f32 0.0, %v2425
      %v2427 = vpop.f32.mrb[0].mxu0
      %2428 = vmatprep.mubr.f32.mxu0 0.0
      %2429 = vmatmul.mubr.f32.gmra.mrb[0].mxu0 %v2305
      %v2430 = vpop.f32.mrb[0].mxu0
      %v2431 = vadd.f32 0.0, %v2430
      %v2432 = vpop.f32.mrb[0].mxu0
      %2433 = vmatprep.mubr.f32.mxu0 0.0
      %2434 = vmatmul.mubr.f32.gmra.mrb[0].mxu0 %v2308
      %v2435 = vpop.f32.mrb[0].mxu0
      %v2436 = vadd.f32 0.0, %v2435
      %v2437 = vpop.f32.mrb[0].mxu0
      %2438 = vmatprep.mubr.f32.mxu0 0.0
      %2439 = vmatmul.mubr.f32.gmra.mrb[0].mxu0 %v2311
      %v2440 = vpop.f32.mrb[0].mxu0
      %v2441 = vadd.f32 0.0, %v2440
      %v2442 = vpop.f32.mrb[0].mxu0
      %2443 = vmatprep.mubr.f32.mxu0 0.0
      %2444 = vmatmul.mubr.f32.gmra.mrb[0].mxu0 %v2314
      %v2445 = vpop.f32.mrb[0].mxu0
      %v2446 = vadd.f32 0.0, %v2445
      %v2447 = vpop.f32.mrb[0].mxu0
      %2448 = vmatprep.mubr.f32.mxu0 0.0
      %2449 = vmatmul.mubr.f32.gmra.mrb[0].mxu0 %v2317
      %v2450 = vpop.f32.mrb[0].mxu0
      %v2451 = vadd.f32 0.0, %v2450
      %v2452 = vpop.f32.mrb[0].mxu0
      %2453 = vmatprep.mubr.f32.mxu0 0.0
      %2454 = vmatmul.mubr.f32.gmra.mrb[0].mxu0 %v2320
      %v2455 = vpop.f32.mrb[0].mxu0
      %v2456 = vadd.f32 0.0, %v2455
      %v2457 = vpop.f32.mrb[0].mxu0
      %2458 = vmatprep.mubr.f32.mxu0 0.0
      %2459 = vmatmul.mubr.f32.gmra.mrb[0].mxu0 %v2323
      %v2460 = vpop.f32.mrb[0].mxu0
      %v2461 = vadd.f32 0.0, %v2460
      %v2462 = vpop.f32.mrb[0].mxu0
      %2463 = vmatprep.mubr.f32.mxu0 0.0
      %2464 = vmatmul.mubr.f32.gmra.mrb[0].mxu0 %v2326
      %v2465 = vpop.f32.mrb[0].mxu0
      %v2466 = vadd.f32 0.0, %v2465
      %v2467 = vpop.f32.mrb[0].mxu0
      %2468 = vmatprep.mubr.f32.mxu0 0.0
      %2469 = vmatmul.mubr.f32.gmra.mrb[0].mxu0 %v2329
      %v2470 = vpop.f32.mrb[0].mxu0
      %v2471 = vadd.f32 0.0, %v2470
      %v2472 = vpop.f32.mrb[0].mxu0
      %2473 = vmatprep.mubr.f32.mxu0 0.0
      %2474 = vmatmul.mubr.f32.gmra.mrb[0].mxu0 %v2332
      %v2475 = vpop.f32.mrb[0].mxu0
      %v2476 = vadd.f32 0.0, %v2475
      %v2477 = vpop.f32.mrb[0].mxu0
      %2478 = vdwg.mxu0
      %v2479 = vld [vmem:[%s10] sm:$0x1]
      %v2480 = vld [vmem:[%s11] sm:$0x1]
      %v2482 = vlaneseq
      %v2483 = vshrl.u32 %v2482, 7
      %v2484 = vsub.s32 0, %v2483
      %v2485 = vrot.slane %v2479, %v2484
      %v2487 = vmul.f32 %v2401, %v2485
      %v2488 = vmul.f32 %v2406, %v2485
      %v2489 = vmul.f32 %v2411, %v2485
      %v2490 = vmul.f32 %v2416, %v2485
      %v2491 = vmul.f32 %v2421, %v2485
      %v2492 = vmul.f32 %v2426, %v2485
      %v2493 = vmul.f32 %v2431, %v2485
      %v2494 = vmul.f32 %v2436, %v2485
      %v2495 = vmul.f32 %v2441, %v2485
      %v2496 = vmul.f32 %v2446, %v2485
      %v2497 = vmul.f32 %v2451, %v2485
      %v2498 = vmul.f32 %v2456, %v2485
      %v2499 = vmul.f32 %v2461, %v2485
      %v2500 = vmul.f32 %v2466, %v2485
      %v2501 = vmul.f32 %v2471, %v2485
      %v2502 = vmul.f32 %v2476, %v2485
      %v2504 = vlaneseq
      %v2505 = vshrl.u32 %v2504, 7
      %v2506 = vsub.s32 0, %v2505
      %v2507 = vrot.slane %v2480, %v2506
      %v2509 = vadd.f32 %v2487, %v2507
      %v2510 = vadd.f32 %v2488, %v2507
      %v2511 = vadd.f32 %v2489, %v2507
      %v2512 = vadd.f32 %v2490, %v2507
      %v2513 = vadd.f32 %v2491, %v2507
      %v2514 = vadd.f32 %v2492, %v2507
      %v2515 = vadd.f32 %v2493, %v2507
      %v2516 = vadd.f32 %v2494, %v2507
      %v2517 = vadd.f32 %v2495, %v2507
      %v2518 = vadd.f32 %v2496, %v2507
      %v2519 = vadd.f32 %v2497, %v2507
      %v2520 = vadd.f32 %v2498, %v2507
      %v2521 = vadd.f32 %v2499, %v2507
      %v2522 = vadd.f32 %v2500, %v2507
      %v2523 = vadd.f32 %v2501, %v2507
      %v2524 = vadd.f32 %v2502, %v2507
      %v2525 = vmax.f32 %v2509, 0.0
      %v2526 = vmax.f32 %v2510, 0.0
      %v2527 = vmax.f32 %v2511, 0.0
      %v2528 = vmax.f32 %v2512, 0.0
      %v2529 = vmax.f32 %v2513, 0.0
      %v2530 = vmax.f32 %v2514, 0.0
      %v2531 = vmax.f32 %v2515, 0.0
      %v2532 = vmax.f32 %v2516, 0.0
      %v2533 = vmax.f32 %v2517, 0.0
      %v2534 = vmax.f32 %v2518, 0.0
      %v2535 = vmax.f32 %v2519, 0.0
      %v2536 = vmax.f32 %v2520, 0.0
      %v2537 = vmax.f32 %v2521, 0.0
      %v2538 = vmax.f32 %v2522, 0.0
      %v2539 = vmax.f32 %v2523, 0.0
      %v2540 = vmax.f32 %v2524, 0.0
      %v2541 = vld [vmem:[%s12] sm:$0xff]
      %v2542 = vld [vmem:[%s12 + $0x8] sm:$0xff]
      %v2544 = vsel %vm2285, %v2525, 0
      %v2547 = vsel %vm2285, %v2526, 0
      %v2550 = vsel %vm2285, %v2527, 0
      %v2553 = vsel %vm2285, %v2528, 0
      %v2556 = vsel %vm2285, %v2529, 0
      %v2559 = vsel %vm2285, %v2530, 0
      %v2562 = vsel %vm2285, %v2531, 0
      %v2565 = vsel %vm2285, %v2532, 0
      %v2568 = vsel %vm2285, %v2533, 0
      %v2571 = vsel %vm2285, %v2534, 0
      %v2574 = vsel %vm2285, %v2535, 0
      %v2577 = vsel %vm2285, %v2536, 0
      %v2580 = vsel %vm2285, %v2537, 0
      %v2583 = vsel %vm2285, %v2538, 0
      %v2586 = vsel %vm2285, %v2539, 0
      %v2589 = vsel %vm2285, %v2540, 0
      %2591 = vmatprep.subr.mxu0 0.0
      %2592 = vmatpush1.msra.mxu0 %v2541
      %2593 = vmatprep.subr.mxu0 0.0
      %2594 = vmatpush1.msra.mxu0 %v2542
      %2595 = vmatprep.subr.mxu0 0.0
      %2596 = vmatpush1.msra.mxu0 0.0
      %2597 = vmatprep.subr.mxu0 0.0
      %2598 = vmatpush1.msra.mxu0 0.0
      %2599 = vmatprep.subr.mxu0 0.0
      %2600 = vmatpush1.msra.mxu0 0.0
      %2601 = vmatprep.subr.mxu0 0.0
      %2602 = vmatpush1.msra.mxu0 0.0
      %2603 = vmatprep.subr.mxu0 0.0
      %2604 = vmatpush1.msra.mxu0 0.0
      %2605 = vmatprep.subr.mxu0 0.0
      %2606 = vmatpush1.msra.mxu0 0.0
      %2607 = vmatprep.subr.mxu0 0.0
      %2608 = vmatpush1.msra.mxu0 0.0
      %2609 = vmatprep.subr.mxu0 0.0
      %2610 = vmatpush1.msra.mxu0 0.0
      %2611 = vmatprep.subr.mxu0 0.0
      %2612 = vmatpush1.msra.mxu0 0.0
      %2613 = vmatprep.subr.mxu0 0.0
      %2614 = vmatpush1.msra.mxu0 0.0
      %2615 = vmatprep.subr.mxu0 0.0
      %2616 = vmatpush1.msra.mxu0 0.0
      %2617 = vmatprep.subr.mxu0 0.0
      %2618 = vmatpush1.msra.mxu0 0.0
      %2619 = vmatprep.subr.mxu0 0.0
      %2620 = vmatpush1.msra.mxu0 0.0
      %2621 = vmatprep.subr.mxu0 0.0
      %2622 = vmatpush1.msra.mxu0 0.0
      %2623 = vmatprep.subr.mxu0 0.0
      %2624 = vmatpush1.msra.mxu0 0.0
      %2625 = vmatprep.subr.mxu0 0.0
      %2626 = vmatpush1.msra.mxu0 0.0
      %2627 = vmatprep.subr.mxu0 0.0
      %2628 = vmatpush1.msra.mxu0 0.0
      %2629 = vmatprep.subr.mxu0 0.0
      %2630 = vmatpush1.msra.mxu0 0.0
      %2631 = vmatprep.subr.mxu0 0.0
      %2632 = vmatpush1.msra.mxu0 0.0
      %2633 = vmatprep.subr.mxu0 0.0
      %2634 = vmatpush1.msra.mxu0 0.0
      %2635 = vmatprep.subr.mxu0 0.0
      %2636 = vmatpush1.msra.mxu0 0.0
      %2637 = vmatprep.subr.mxu0 0.0
      %2638 = vmatpush1.msra.mxu0 0.0
      %2639 = vmatprep.subr.mxu0 0.0
      %2640 = vmatpush1.msra.mxu0 0.0
      %2641 = vmatprep.subr.mxu0 0.0
      %2642 = vmatpush1.msra.mxu0 0.0
      %2643 = vmatprep.subr.mxu0 0.0
      %2644 = vmatpush1.msra.mxu0 0.0
      %2645 = vmatprep.subr.mxu0 0.0
      %2646 = vmatpush1.msra.mxu0 0.0
      %2647 = vmatprep.subr.mxu0 0.0
      %2648 = vmatpush1.msra.mxu0 0.0
      %2649 = vmatprep.subr.mxu0 0.0
      %2650 = vmatpush1.msra.mxu0 0.0
      %2651 = vmatprep.subr.mxu0 0.0
      %2652 = vmatpush1.msra.mxu0 0.0
      %2653 = vmatprep.subr.mxu0 0.0
      %2654 = vmatpush1.msra.mxu0 0.0
      %2655 = vmatprep.mubr.f32.mxu0 0.0
      %2656 = vmatmul.mubr.f32.gmra.mrb[0].mxu0 %v2544
      %v2657 = vpop.f32.mrb[0].mxu0
      %v2658 = vadd.f32 0.0, %v2657
      %v2659 = vpop.f32.mrb[0].mxu0
      %2660 = vmatprep.mubr.f32.mxu0 0.0
      %2661 = vmatmul.mubr.f32.gmra.mrb[0].mxu0 %v2547
      %v2662 = vpop.f32.mrb[0].mxu0
      %v2663 = vadd.f32 0.0, %v2662
      %v2664 = vpop.f32.mrb[0].mxu0
      %2665 = vmatprep.mubr.f32.mxu0 0.0
      %2666 = vmatmul.mubr.f32.gmra.mrb[0].mxu0 %v2550
      %v2667 = vpop.f32.mrb[0].mxu0
      %v2668 = vadd.f32 0.0, %v2667
      %v2669 = vpop.f32.mrb[0].mxu0
      %2670 = vmatprep.mubr.f32.mxu0 0.0
      %2671 = vmatmul.mubr.f32.gmra.mrb[0].mxu0 %v2553
      %v2672 = vpop.f32.mrb[0].mxu0
      %v2673 = vadd.f32 0.0, %v2672
      %v2674 = vpop.f32.mrb[0].mxu0
      %2675 = vmatprep.mubr.f32.mxu0 0.0
      %2676 = vmatmul.mubr.f32.gmra.mrb[0].mxu0 %v2556
      %v2677 = vpop.f32.mrb[0].mxu0
      %v2678 = vadd.f32 0.0, %v2677
      %v2679 = vpop.f32.mrb[0].mxu0
      %2680 = vmatprep.mubr.f32.mxu0 0.0
      %2681 = vmatmul.mubr.f32.gmra.mrb[0].mxu0 %v2559
      %v2682 = vpop.f32.mrb[0].mxu0
      %v2683 = vadd.f32 0.0, %v2682
      %v2684 = vpop.f32.mrb[0].mxu0
      %2685 = vmatprep.mubr.f32.mxu0 0.0
      %2686 = vmatmul.mubr.f32.gmra.mrb[0].mxu0 %v2562
      %v2687 = vpop.f32.mrb[0].mxu0
      %v2688 = vadd.f32 0.0, %v2687
      %v2689 = vpop.f32.mrb[0].mxu0
      %2690 = vmatprep.mubr.f32.mxu0 0.0
      %2691 = vmatmul.mubr.f32.gmra.mrb[0].mxu0 %v2565
      %v2692 = vpop.f32.mrb[0].mxu0
      %v2693 = vadd.f32 0.0, %v2692
      %v2694 = vpop.f32.mrb[0].mxu0
      %2695 = vmatprep.mubr.f32.mxu0 0.0
      %2696 = vmatmul.mubr.f32.gmra.mrb[0].mxu0 %v2568
      %v2697 = vpop.f32.mrb[0].mxu0
      %v2698 = vadd.f32 0.0, %v2697
      %v2699 = vpop.f32.mrb[0].mxu0
      %2700 = vmatprep.mubr.f32.mxu0 0.0
      %2701 = vmatmul.mubr.f32.gmra.mrb[0].mxu0 %v2571
      %v2702 = vpop.f32.mrb[0].mxu0
      %v2703 = vadd.f32 0.0, %v2702
      %v2704 = vpop.f32.mrb[0].mxu0
      %2705 = vmatprep.mubr.f32.mxu0 0.0
      %2706 = vmatmul.mubr.f32.gmra.mrb[0].mxu0 %v2574
      %v2707 = vpop.f32.mrb[0].mxu0
      %v2708 = vadd.f32 0.0, %v2707
      %v2709 = vpop.f32.mrb[0].mxu0
      %2710 = vmatprep.mubr.f32.mxu0 0.0
      %2711 = vmatmul.mubr.f32.gmra.mrb[0].mxu0 %v2577
      %v2712 = vpop.f32.mrb[0].mxu0
      %v2713 = vadd.f32 0.0, %v2712
      %v2714 = vpop.f32.mrb[0].mxu0
      %2715 = vmatprep.mubr.f32.mxu0 0.0
      %2716 = vmatmul.mubr.f32.gmra.mrb[0].mxu0 %v2580
      %v2717 = vpop.f32.mrb[0].mxu0
      %v2718 = vadd.f32 0.0, %v2717
      %v2719 = vpop.f32.mrb[0].mxu0
      %2720 = vmatprep.mubr.f32.mxu0 0.0
      %2721 = vmatmul.mubr.f32.gmra.mrb[0].mxu0 %v2583
      %v2722 = vpop.f32.mrb[0].mxu0
      %v2723 = vadd.f32 0.0, %v2722
      %v2724 = vpop.f32.mrb[0].mxu0
      %2725 = vmatprep.mubr.f32.mxu0 0.0
      %2726 = vmatmul.mubr.f32.gmra.mrb[0].mxu0 %v2586
      %v2727 = vpop.f32.mrb[0].mxu0
      %v2728 = vadd.f32 0.0, %v2727
      %v2729 = vpop.f32.mrb[0].mxu0
      %2730 = vmatprep.mubr.f32.mxu0 0.0
      %2731 = vmatmul.mubr.f32.gmra.mrb[0].mxu0 %v2589
      %v2732 = vpop.f32.mrb[0].mxu0
      %v2733 = vadd.f32 0.0, %v2732
      %v2734 = vpop.f32.mrb[0].mxu0
      %2735 = vdwg.mxu0
      %v2736 = vld [vmem:[%s13] sm:$0x1]
      %v2738 = vlaneseq
      %v2739 = vshrl.u32 %v2738, 7
      %v2740 = vsub.s32 0, %v2739
      %v2741 = vrot.slane %v2736, %v2740
      %v2743 = vmul.f32 %v2658, %v2741
      %v2744 = vmul.f32 %v2663, %v2741
      %v2745 = vmul.f32 %v2668, %v2741
      %v2746 = vmul.f32 %v2673, %v2741
      %v2747 = vmul.f32 %v2678, %v2741
      %v2748 = vmul.f32 %v2683, %v2741
      %v2749 = vmul.f32 %v2688, %v2741
      %v2750 = vmul.f32 %v2693, %v2741
      %v2751 = vmul.f32 %v2698, %v2741
      %v2752 = vmul.f32 %v2703, %v2741
      %v2753 = vmul.f32 %v2708, %v2741
      %v2754 = vmul.f32 %v2713, %v2741
      %v2755 = vmul.f32 %v2718, %v2741
      %v2756 = vmul.f32 %v2723, %v2741
      %v2757 = vmul.f32 %v2728, %v2741
      %v2758 = vmul.f32 %v2733, %v2741
      %v2759 = vld [vmem:[%s14] sm:$0x1]
      %v2761 = vlaneseq
      %v2762 = vshrl.u32 %v2761, 7
      %v2763 = vsub.s32 0, %v2762
      %v2764 = vrot.slane %v2759, %v2763
      %v2766 = vadd.f32 %v2743, %v2764
      %v2767 = vadd.f32 %v2744, %v2764
      %v2768 = vadd.f32 %v2745, %v2764
      %v2769 = vadd.f32 %v2746, %v2764
      %v2770 = vadd.f32 %v2747, %v2764
      %v2771 = vadd.f32 %v2748, %v2764
      %v2772 = vadd.f32 %v2749, %v2764
      %v2773 = vadd.f32 %v2750, %v2764
      %v2774 = vadd.f32 %v2751, %v2764
      %v2775 = vadd.f32 %v2752, %v2764
      %v2776 = vadd.f32 %v2753, %v2764
      %v2777 = vadd.f32 %v2754, %v2764
      %v2778 = vadd.f32 %v2755, %v2764
      %v2779 = vadd.f32 %v2756, %v2764
      %v2780 = vadd.f32 %v2757, %v2764
      %v2781 = vadd.f32 %v2758, %v2764
      %v2782 = vadd.f32 %v2766, %v652
      %v2783 = vadd.f32 %v2767, %v653
      %v2784 = vadd.f32 %v2768, %v654
      %v2785 = vadd.f32 %v2769, %v655
      %v2786 = vadd.f32 %v2770, %v656
      %v2787 = vadd.f32 %v2771, %v657
      %v2788 = vadd.f32 %v2772, %v658
      %v2789 = vadd.f32 %v2773, %v659
      %v2790 = vadd.f32 %v2774, %v660
      %v2791 = vadd.f32 %v2775, %v661
      %v2792 = vadd.f32 %v2776, %v662
      %v2793 = vadd.f32 %v2777, %v663
      %v2794 = vadd.f32 %v2778, %v664
      %v2795 = vadd.f32 %v2779, %v665
      %v2796 = vadd.f32 %v2780, %v666
      %v2797 = vadd.f32 %v2781, %v667
      %2798 = vst.msk [vmem:[%s646] sm:$0xff] %vm669, %v2782
      %2799 = vst.msk [vmem:[%s646 + $0x8] sm:$0xff] %vm669, %v2783
      %2800 = vst.msk [vmem:[%s646 + $0x10] sm:$0xff] %vm669, %v2784
      %2801 = vst.msk [vmem:[%s646 + $0x18] sm:$0xff] %vm669, %v2785
      %2802 = vst.msk [vmem:[%s646 + $0x20] sm:$0xff] %vm669, %v2786
      %2803 = vst.msk [vmem:[%s646 + $0x28] sm:$0xff] %vm669, %v2787
      %2804 = vst.msk [vmem:[%s646 + $0x30] sm:$0xff] %vm669, %v2788
      %2805 = vst.msk [vmem:[%s646 + $0x38] sm:$0xff] %vm669, %v2789
      %2806 = vst.msk [vmem:[%s646 + $0x40] sm:$0xff] %vm669, %v2790
      %2807 = vst.msk [vmem:[%s646 + $0x48] sm:$0xff] %vm669, %v2791
      %2808 = vst.msk [vmem:[%s646 + $0x50] sm:$0xff] %vm669, %v2792
      %2809 = vst.msk [vmem:[%s646 + $0x58] sm:$0xff] %vm669, %v2793
      %2810 = vst.msk [vmem:[%s646 + $0x60] sm:$0xff] %vm669, %v2794
      %2811 = vst.msk [vmem:[%s646 + $0x68] sm:$0xff] %vm669, %v2795
      %2812 = vst.msk [vmem:[%s646 + $0x70] sm:$0xff] %vm669, %v2796
      %2813 = vst.msk [vmem:[%s646 + $0x78] sm:$0xff] %vm669, %v2797
      %s2814 = smul.u32 16, %s31
      %p2815 = scmp.lt.s32.totalorder %s30, 1
      %s2816 = scalar_select %p2815, %s30, 1
      %p2817 = scmp.lt.s32.totalorder %s2814, 31
      %s2818 = scalar_select %p2817, %s2814, 31
      %s2819 = smul.addr %s2816, 32
      %s2820 = sadd.s32 %s2818, %s2819
      %s2821 = smul.addr %s2820, 8
      %s2822 = scalar_lea.vmem %s15, %s2821
      // Predicated region
      $region81: #{block_forward.3} parent=79 // pred_check
        %p2823 = pneg %p406
      $region82: #{block_forward.3} parent=79 // pred_check_branch
        %2825 = sbr.rel (%p2823) target = $region84
      $region83: #{block_forward.3} parent=79 // pred_region
        %s2826 = smul.u32 16, %s31
      $region84: #{block_forward.3} parent=79 // pred_fallthru
        _
    $region80: #{block_forward.3} parent=5 // pred_fallthru
      _
    %p2827 = scmp.le.s32.totalorder 2, %s21
    // Predicated region
    $region85: #{block_forward.3} parent=5 // pred_check
      %p2828 = pneg %p2827
    $region86: #{block_forward.3} parent=5 // pred_check_branch
      %2830 = sbr.rel (%p2828) target = $region88
    $region87: #{block_forward.3} parent=5 // pred_region
      %s2831 = ssub.s32 %s21, 2
      // Predicated region
      $region89: #{block_forward.3} parent=87 // pred_check
        %p2832 = pneg %p412
      $region90: #{block_forward.3} parent=87 // pred_check_branch
        %2834 = sbr.rel (%p2832) target = $region92
      $region91: #{block_forward.3} parent=87 // pred_region
        %s2835 = smul.u32 16, %s33
        %p2836 = scmp.lt.s32.totalorder %s32, 1
        %s2837 = scalar_select %p2836, %s32, 1
        %p2838 = scmp.lt.s32.totalorder %s2835, 31
        %s2839 = scalar_select %p2838, %s2835, 31
        %s2840 = smul.addr %s2837, 32
        %s2841 = sadd.s32 %s2839, %s2840
        %s2842 = smul.addr %s2841, 8
        %s2843 = scalar_lea.vmem %s15, %s2842
      $region92: #{block_forward.3} parent=87 // pred_fallthru
        _
    $region88: #{block_forward.3} parent=5 // pred_fallthru
      _
  $region6: #{block_forward.3} parent=0 // loop_footer
    %s25 = sadd.s32 1, %s21
  $region7: #{block_forward.3} parent=0 // loop_footer_branch
    %20 = sbr.rel target = $region3
  $region8: #{block_forward.3} parent=0 // loop_exit
    _

</llo_original>
